<compile_context>
chip_gen: v7x
topology: tpu7x:2x2x1
jax: 0.10.0
libtpu: 0.0.40
codegen_flags: <defaults>
</compile_context>

<pallas_src>
import functools

import jax
import jax.numpy as jnp
from jax.experimental import pallas as pl
from jax.experimental.pallas import tpu as pltpu

# ----------------------- model config (small, synthetic) -----------------------
NUM_CLASSES = 10
EMBEDDING_SIZE = 10
LATENT_DIM = 32
CHANNELS = 1
IMG_SIZE = 16
IMG_SHAPE = (CHANNELS, IMG_SIZE, IMG_SIZE)
IMG_PROD = CHANNELS * IMG_SIZE * IMG_SIZE          # 256
IN_FEAT = LATENT_DIM + EMBEDDING_SIZE              # 42
BN_EPS = 0.8
LRELU_SLOPE = 0.2
VEC_PAD = 1024                                     # lane width of packed vector slab


def _leaky_relu(x):
    return jnp.where(x > 0, x, LRELU_SLOPE * x)


def _generator_kernel(
    lab_ref,                    # (rows, 1)  int32 labels
    lat_ref,                    # (rows, LATENT_DIM) f32 latents
    ltab_ref,                   # (NUM_CLASSES, 128) f32  = emb @ w1[32:] + b1
    w1a_ref,                    # bf16: (LATENT_DIM, 128)
    w2_ref,                     # bf16: (128, 256)
    w3_ref,                     # bf16: (256, 512)
    w4_ref,                     # bf16: (512, 1024)
    w5_ref,                     # bf16: (1024, IMG_PROD)
    vec_ref,                    # (8, VEC_PAD) f32 packed [g2, be2, g3, be3, g4, be4, b5, 0]
    o_ref,                      # (rows, IMG_PROD) f32
    *,
    group_size,                 # BN batch size of one original forward call
):
    rows = lat_ref.shape[0]
    n_groups = rows // group_size
    inv_g = 1.0 / group_size

    # Packed per-layer vectors: narrow static ref slices (no full 8-row load).
    g2, be2 = vec_ref[0:1, 0:256], vec_ref[1:2, 0:256]
    g3, be3 = vec_ref[2:3, 0:512], vec_ref[3:4, 0:512]
    g4, be4 = vec_ref[4:5, 0:1024], vec_ref[5:6, 0:1024]
    b5 = vec_ref[6:7, 0:IMG_PROD]

    # Fused embedding lookup + label contribution of layer 1 (incl. b1), exact:
    # onehot @ (emb @ w1b + b1) == emb(labels) @ w1b + b1.
    class_ids = jax.lax.broadcasted_iota(jnp.int32, (rows, NUM_CLASSES), 1)
    onehot = (class_ids == lab_ref[...]).astype(jnp.float32)          # (rows, 10)

    # Layer 1: Linear(42 -> 128) + LeakyReLU (no BN), as a split dot.
    h = (jnp.dot(lat_ref[...].astype(jnp.bfloat16), w1a_ref[...],
                 preferred_element_type=jnp.float32)
         + jnp.dot(onehot, ltab_ref[...], preferred_element_type=jnp.float32))
    h = _leaky_relu(h)

    def bn_block(h, w_ref, gamma, beta):
        # Linear bias omitted: it cancels exactly in (z - batch_mean).
        z = jnp.dot(h.astype(jnp.bfloat16), w_ref[...],
                    preferred_element_type=jnp.float32)               # (rows, F)
        feat = z.shape[1]
        # Per-group statistics: each group of `group_size` rows is one
        # independent forward call, so BN reduces over exactly those rows.
        z3 = z.reshape(n_groups, group_size, feat)
        mu = jnp.sum(z3, axis=1, keepdims=True) * inv_g
        d = z3 - mu
        var = jnp.sum(d * d, axis=1, keepdims=True) * inv_g           # biased var (training BN)
        zn = (d * jax.lax.rsqrt(var + BN_EPS)).reshape(rows, feat)
        return _leaky_relu(zn * gamma + beta)

    h = bn_block(h, w2_ref, g2, be2)
    h = bn_block(h, w3_ref, g3, be3)
    h = bn_block(h, w4_ref, g4, be4)

    out = jnp.dot(h.astype(jnp.bfloat16), w5_ref[...],
                  preferred_element_type=jnp.float32) + b5
    o_ref[...] = jnp.tanh(out)


def init_params(key):
    """Deterministic synthetic parameters (shapes match the PyTorch module)."""
    sizes = [(IN_FEAT, 128), (128, 256), (256, 512), (512, 1024), (1024, IMG_PROD)]
    keys = jax.random.split(key, 2 * len(sizes) + 1)
    params = {}
    for li, (fin, fout) in enumerate(sizes, start=1):
        bound = 1.0 / (fin ** 0.5)
        params[f"w{li}"] = jax.random.uniform(
            keys[2 * li - 2], (fin, fout), jnp.float32, -bound, bound)
        params[f"b{li}"] = jax.random.uniform(
            keys[2 * li - 1], (1, fout), jnp.float32, -bound, bound)
    # BatchNorm affine params (fresh init: gamma=1, beta=0) for layers 2..4
    for li, fout in zip((2, 3, 4), (256, 512, 1024)):
        params[f"g{li}"] = jnp.ones((1, fout), jnp.float32)
        params[f"be{li}"] = jnp.zeros((1, fout), jnp.float32)
    # Embedding table ~ N(0, 1) like nn.Embedding
    params["emb"] = jax.random.normal(keys[-1], (NUM_CLASSES, EMBEDDING_SIZE), jnp.float32)
    return params


def pack_params(params):
    """One-time prep: bf16 weights, fold label path, pack per-layer vectors."""
    w1 = params["w1"]
    # label_table[c] = emb[c] @ w1[LATENT_DIM:] + b1 ; exact fold of the label path.
    label_table = (params["emb"] @ w1[LATENT_DIM:] + params["b1"]).astype(jnp.float32)

    kp = {
        "ltab": label_table,                                    # (10, 128) f32
        "w1a": w1[:LATENT_DIM].astype(jnp.bfloat16),            # (32, 128)
        "w2": params["w2"].astype(jnp.bfloat16),
        "w3": params["w3"].astype(jnp.bfloat16),
        "w4": params["w4"].astype(jnp.bfloat16),
        "w5": params["w5"].astype(jnp.bfloat16),
    }

    def pad_row(v):
        return jnp.pad(v, ((0, 0), (0, VEC_PAD - v.shape[1])))

    # b2/b3/b4 are intentionally dropped: a bias before BatchNorm has no effect.
    rows = [
        pad_row(params["g2"]), pad_row(params["be2"]),
        pad_row(params["g3"]), pad_row(params["be3"]),
        pad_row(params["g4"]), pad_row(params["be4"]),
        pad_row(params["b5"]),
        jnp.zeros((1, VEC_PAD), jnp.float32),                   # pad to 8 sublanes
    ]
    kp["vec"] = jnp.concatenate(rows, axis=0).astype(jnp.float32)   # (8, 1024)
    return kp


def generator_forward(latents, labels, kparams, *, group_size=None,
                      target_rows_per_step=128):
    """Run the generator on `total` rows.

    Rows are treated as `total // group_size` independent forward calls of the
    PyTorch module (BatchNorm statistics are computed per group of
    `group_size` rows).  If group_size is None, the entire batch is one call.
    """
    total = latents.shape[0]
    if group_size is None:
        group_size = total
    assert total % group_size == 0, "batch must be a multiple of group_size"
    groups_total = total // group_size

    # Pack several BN groups into each grid step (big M tile for the MXU),
    # keeping the step row count a divisor of the total.
    gps = max(1, min(groups_total, target_rows_per_step // group_size))
    while groups_total % gps != 0:
        gps -= 1
    rows_per_step = gps * group_size
    if rows_per_step % 8 != 0 and rows_per_step != total:
        rows_per_step = total            # fall back to a single step
    grid = (total // rows_per_step,)

    labels_2d = labels.astype(jnp.int32).reshape(total, 1)

    # Advisory cost hint for XLA scheduling around the custom call.
    dot_flops_per_row = 2 * (LATENT_DIM * 128 + NUM_CLASSES * 128 + 128 * 256
                             + 256 * 512 + 512 * 1024 + 1024 * IMG_PROD)
    weight_bytes = (2 * (LATENT_DIM * 128 + 128 * 256 + 256 * 512
                         + 512 * 1024 + 1024 * IMG_PROD)
                    + 4 * NUM_CLASSES * 128 + 4 * 8 * VEC_PAD)
    io_bytes = total * (LATENT_DIM * 4 + 4 + IMG_PROD * 4)
    cost = pl.CostEstimate(
        flops=dot_flops_per_row * total,
        transcendentals=total * (IMG_PROD + (256 + 512 + 1024) // group_size),
        bytes_accessed=weight_bytes + io_bytes,
    )

    kernel = functools.partial(_generator_kernel, group_size=group_size)

    # Weights: full-array blocks with constant index_map -> DMA'd once, held
    # VMEM-resident across all grid steps.  Only activations are tiled.
    resident = lambda shape: pl.BlockSpec(shape, lambda i: (0, 0))

    flat = pl.pallas_call(
        kernel,
        out_shape=jax.ShapeDtypeStruct((total, IMG_PROD), jnp.float32),
        grid=grid,
        in_specs=[
            pl.BlockSpec((rows_per_step, 1), lambda i: (i, 0)),            # labels
            pl.BlockSpec((rows_per_step, LATENT_DIM), lambda i: (i, 0)),   # latents
            resident((NUM_CLASSES, 128)),                                  # label table
            resident((LATENT_DIM, 128)),                                   # w1a
            resident((128, 256)),                                          # w2
            resident((256, 512)),                                          # w3
            resident((512, 1024)),                                         # w4
            resident((1024, IMG_PROD)),                                    # w5
            resident((8, VEC_PAD)),                                        # packed vectors
        ],
        out_specs=pl.BlockSpec((rows_per_step, IMG_PROD), lambda i: (i, 0)),
        compiler_params=pltpu.CompilerParams(
            dimension_semantics=("parallel",)),                            # megacore on v7x
        cost_estimate=cost,
    )(labels_2d, latents, kparams["ltab"], kparams["w1a"],
      kparams["w2"], kparams["w3"], kparams["w4"], kparams["w5"], kparams["vec"])

    # NCHW, matching img.view(B, *img_shape)
    return flat.reshape(total, *IMG_SHAPE)


if __name__ == "__main__":
    key = jax.random.PRNGKey(0)
    k_param, k_lat, k_lab = jax.random.split(key, 3)

    GROUP = 8         # BN batch of one original forward call
    N_GROUPS = 32     # 32 independent 8-image batches fused into one launch
    total = GROUP * N_GROUPS

    params = init_params(k_param)
    kparams = pack_params(params)          # one-time weight prep (bf16 + folding)
    latents = jax.random.normal(k_lat, (total, LATENT_DIM), jnp.float32)
    labels = jax.random.randint(k_lab, (total,), 0, NUM_CLASSES)

    img = generator_forward(latents, labels, kparams, group_size=GROUP)
    jax.block_until_ready(img)

    assert img.shape == (total, CHANNELS, IMG_SIZE, IMG_SIZE)
    assert img.dtype == jnp.float32
    assert bool(jnp.all(jnp.abs(img) <= 1.0))   # tanh output range sanity check
    print("KERNEL_OK")
</pallas_src>

<mosaic_0001>
module attributes {stable_mosaic.version = 11 : i64} {
  func.func @_generator_kernel(%arg0: i32, %arg1: memref<128x1xi32, #tpu.memory_space<vmem>>, %arg2: memref<128x32xf32, #tpu.memory_space<vmem>>, %arg3: memref<10x128xf32, #tpu.memory_space<vmem>>, %arg4: memref<32x128xbf16, #tpu.memory_space<vmem>>, %arg5: memref<128x256xbf16, #tpu.memory_space<vmem>>, %arg6: memref<256x512xbf16, #tpu.memory_space<vmem>>, %arg7: memref<512x1024xbf16, #tpu.memory_space<vmem>>, %arg8: memref<1024x256xbf16, #tpu.memory_space<vmem>>, %arg9: memref<8x1024xf32, #tpu.memory_space<vmem>>, %arg10: memref<128x256xf32, #tpu.memory_space<vmem>>) attributes {dimension_semantics = [#tpu.dimension_semantics<parallel>], iteration_bounds = array<i64: 2>, scalar_prefetch = 0 : i64, scratch_operands = 0 : i64, tpu.core_type = #tpu.core_type<tc>, window_params = [{transform_indices = @transform_0, window_bounds = array<i64: 128, 1>}, {transform_indices = @transform_1, window_bounds = array<i64: 128, 32>}, {pipeline_mode = #tpu.pipeline_mode<synchronous>, transform_indices = @transform_2, window_bounds = array<i64: 10, 128>}, {pipeline_mode = #tpu.pipeline_mode<synchronous>, transform_indices = @transform_3, window_bounds = array<i64: 32, 128>}, {pipeline_mode = #tpu.pipeline_mode<synchronous>, transform_indices = @transform_4, window_bounds = array<i64: 128, 256>}, {pipeline_mode = #tpu.pipeline_mode<synchronous>, transform_indices = @transform_5, window_bounds = array<i64: 256, 512>}, {pipeline_mode = #tpu.pipeline_mode<synchronous>, transform_indices = @transform_6, window_bounds = array<i64: 512, 1024>}, {pipeline_mode = #tpu.pipeline_mode<synchronous>, transform_indices = @transform_7, window_bounds = array<i64: 1024, 256>}, {pipeline_mode = #tpu.pipeline_mode<synchronous>, transform_indices = @transform_8, window_bounds = array<i64: 8, 1024>}, {transform_indices = @transform_9, window_bounds = array<i64: 128, 256>}]} {
    %c0 = arith.constant 0 : index
    %c0_0 = arith.constant 0 : index
    %0 = vector.load %arg9[%c0, %c0_0] : memref<8x1024xf32, #tpu.memory_space<vmem>>, vector<1x256xf32>
    %c1 = arith.constant 1 : index
    %c0_1 = arith.constant 0 : index
    %1 = vector.load %arg9[%c1, %c0_1] : memref<8x1024xf32, #tpu.memory_space<vmem>>, vector<1x256xf32>
    %c2 = arith.constant 2 : index
    %c0_2 = arith.constant 0 : index
    %2 = vector.load %arg9[%c2, %c0_2] : memref<8x1024xf32, #tpu.memory_space<vmem>>, vector<1x512xf32>
    %c3 = arith.constant 3 : index
    %c0_3 = arith.constant 0 : index
    %3 = vector.load %arg9[%c3, %c0_3] : memref<8x1024xf32, #tpu.memory_space<vmem>>, vector<1x512xf32>
    %c4 = arith.constant 4 : index
    %c0_4 = arith.constant 0 : index
    %4 = vector.load %arg9[%c4, %c0_4] : memref<8x1024xf32, #tpu.memory_space<vmem>>, vector<1x1024xf32>
    %c5 = arith.constant 5 : index
    %c0_5 = arith.constant 0 : index
    %5 = vector.load %arg9[%c5, %c0_5] : memref<8x1024xf32, #tpu.memory_space<vmem>>, vector<1x1024xf32>
    %c6 = arith.constant 6 : index
    %c0_6 = arith.constant 0 : index
    %6 = vector.load %arg9[%c6, %c0_6] : memref<8x1024xf32, #tpu.memory_space<vmem>>, vector<1x256xf32>
    %7 = tpu.iota {dimensions = array<i32: 1>} : vector<128x10xi32>
    %c0_7 = arith.constant 0 : index
    %c0_8 = arith.constant 0 : index
    %8 = vector.load %arg1[%c0_7, %c0_8] : memref<128x1xi32, #tpu.memory_space<vmem>>, vector<128x1xi32>
    %9 = vector.broadcast %8 : vector<128x1xi32> to vector<128x10xi32>
    %10 = arith.cmpi eq, %7, %9 : vector<128x10xi32>
    %11 = arith.extui %10 : vector<128x10xi1> to vector<128x10xi32>
    %12 = arith.sitofp %11 : vector<128x10xi32> to vector<128x10xf32>
    %c0_9 = arith.constant 0 : index
    %c0_10 = arith.constant 0 : index
    %13 = vector.load %arg2[%c0_9, %c0_10] : memref<128x32xf32, #tpu.memory_space<vmem>>, vector<128x32xf32>
    %14 = arith.truncf %13 : vector<128x32xf32> to vector<128x32xbf16>
    %c0_11 = arith.constant 0 : index
    %c0_12 = arith.constant 0 : index
    %15 = vector.load %arg4[%c0_11, %c0_12] : memref<32x128xbf16, #tpu.memory_space<vmem>>, vector<32x128xbf16>
    %cst = arith.constant dense<0.000000e+00> : vector<128x128xf32>
    %16 = tpu.matmul %14, %15, %cst {dimension_numbers = #tpu.dot_dimension_numbers<[1], [0], [0], [1], [0, 0, 1, 1], [], []>} : vector<128x32xbf16>, vector<32x128xbf16>, vector<128x128xf32> -> vector<128x128xf32>
    %c0_13 = arith.constant 0 : index
    %c0_14 = arith.constant 0 : index
    %17 = vector.load %arg3[%c0_13, %c0_14] : memref<10x128xf32, #tpu.memory_space<vmem>>, vector<10x128xf32>
    %cst_15 = arith.constant dense<0.000000e+00> : vector<128x128xf32>
    %18 = tpu.matmul %12, %17, %cst_15 {dimension_numbers = #tpu.dot_dimension_numbers<[1], [0], [0], [1], [0, 0, 1, 1], [], []>} : vector<128x10xf32>, vector<10x128xf32>, vector<128x128xf32> -> vector<128x128xf32>
    %19 = arith.addf %16, %18 : vector<128x128xf32>
    %cst_16 = arith.constant 0.000000e+00 : f32
    %20 = vector.broadcast %cst_16 : f32 to vector<128x128xf32>
    %21 = arith.cmpf ogt, %19, %20 : vector<128x128xf32>
    %cst_17 = arith.constant 2.000000e-01 : f32
    %22 = vector.broadcast %cst_17 : f32 to vector<128x128xf32>
    %23 = arith.mulf %22, %19 : vector<128x128xf32>
    %24 = arith.select %21, %19, %23 : vector<128x128xi1>, vector<128x128xf32>
    %25 = arith.truncf %24 : vector<128x128xf32> to vector<128x128xbf16>
    %c0_18 = arith.constant 0 : index
    %c0_19 = arith.constant 0 : index
    %26 = vector.load %arg5[%c0_18, %c0_19] : memref<128x256xbf16, #tpu.memory_space<vmem>>, vector<128x256xbf16>
    %cst_20 = arith.constant dense<0.000000e+00> : vector<128x256xf32>
    %27 = tpu.matmul %25, %26, %cst_20 {dimension_numbers = #tpu.dot_dimension_numbers<[1], [0], [0], [1], [0, 0, 1, 1], [], []>} : vector<128x128xbf16>, vector<128x256xbf16>, vector<128x256xf32> -> vector<128x256xf32>
    %28 = vector.shape_cast %27 : vector<128x256xf32> to vector<16x8x256xf32>
    %cst_21 = arith.constant dense<0.000000e+00> : vector<16x256xf32>
    %29 = vector.multi_reduction <add>, %28, %cst_21 [1] : vector<16x8x256xf32> to vector<16x256xf32>
    %30 = vector.shape_cast %29 : vector<16x256xf32> to vector<16x1x256xf32>
    %cst_22 = arith.constant 1.250000e-01 : f32
    %31 = vector.broadcast %cst_22 : f32 to vector<16x1x256xf32>
    %32 = arith.mulf %30, %31 : vector<16x1x256xf32>
    %33 = vector.broadcast %32 : vector<16x1x256xf32> to vector<16x8x256xf32>
    %34 = arith.subf %28, %33 : vector<16x8x256xf32>
    %35 = arith.mulf %34, %34 : vector<16x8x256xf32>
    %cst_23 = arith.constant dense<0.000000e+00> : vector<16x256xf32>
    %36 = vector.multi_reduction <add>, %35, %cst_23 [1] : vector<16x8x256xf32> to vector<16x256xf32>
    %37 = vector.shape_cast %36 : vector<16x256xf32> to vector<16x1x256xf32>
    %cst_24 = arith.constant 1.250000e-01 : f32
    %38 = vector.broadcast %cst_24 : f32 to vector<16x1x256xf32>
    %39 = arith.mulf %37, %38 : vector<16x1x256xf32>
    %cst_25 = arith.constant 8.000000e-01 : f32
    %40 = vector.broadcast %cst_25 : f32 to vector<16x1x256xf32>
    %41 = arith.addf %39, %40 : vector<16x1x256xf32>
    %42 = math.rsqrt %41 : vector<16x1x256xf32>
    %43 = vector.broadcast %42 : vector<16x1x256xf32> to vector<16x8x256xf32>
    %44 = arith.mulf %34, %43 : vector<16x8x256xf32>
    %45 = vector.shape_cast %44 : vector<16x8x256xf32> to vector<128x256xf32>
    %46 = vector.broadcast %0 : vector<1x256xf32> to vector<128x256xf32>
    %47 = arith.mulf %45, %46 : vector<128x256xf32>
    %48 = vector.broadcast %1 : vector<1x256xf32> to vector<128x256xf32>
    %49 = arith.addf %47, %48 : vector<128x256xf32>
    %cst_26 = arith.constant 0.000000e+00 : f32
    %50 = vector.broadcast %cst_26 : f32 to vector<128x256xf32>
    %51 = arith.cmpf ogt, %49, %50 : vector<128x256xf32>
    %cst_27 = arith.constant 2.000000e-01 : f32
    %52 = vector.broadcast %cst_27 : f32 to vector<128x256xf32>
    %53 = arith.mulf %52, %49 : vector<128x256xf32>
    %54 = arith.select %51, %49, %53 : vector<128x256xi1>, vector<128x256xf32>
    %55 = arith.truncf %54 : vector<128x256xf32> to vector<128x256xbf16>
    %c0_28 = arith.constant 0 : index
    %c0_29 = arith.constant 0 : index
    %56 = vector.load %arg6[%c0_28, %c0_29] : memref<256x512xbf16, #tpu.memory_space<vmem>>, vector<256x512xbf16>
    %cst_30 = arith.constant dense<0.000000e+00> : vector<128x512xf32>
    %57 = tpu.matmul %55, %56, %cst_30 {dimension_numbers = #tpu.dot_dimension_numbers<[1], [0], [0], [1], [0, 0, 1, 1], [], []>} : vector<128x256xbf16>, vector<256x512xbf16>, vector<128x512xf32> -> vector<128x512xf32>
    %58 = vector.shape_cast %57 : vector<128x512xf32> to vector<16x8x512xf32>
    %cst_31 = arith.constant dense<0.000000e+00> : vector<16x512xf32>
    %59 = vector.multi_reduction <add>, %58, %cst_31 [1] : vector<16x8x512xf32> to vector<16x512xf32>
    %60 = vector.shape_cast %59 : vector<16x512xf32> to vector<16x1x512xf32>
    %cst_32 = arith.constant 1.250000e-01 : f32
    %61 = vector.broadcast %cst_32 : f32 to vector<16x1x512xf32>
    %62 = arith.mulf %60, %61 : vector<16x1x512xf32>
    %63 = vector.broadcast %62 : vector<16x1x512xf32> to vector<16x8x512xf32>
    %64 = arith.subf %58, %63 : vector<16x8x512xf32>
    %65 = arith.mulf %64, %64 : vector<16x8x512xf32>
    %cst_33 = arith.constant dense<0.000000e+00> : vector<16x512xf32>
    %66 = vector.multi_reduction <add>, %65, %cst_33 [1] : vector<16x8x512xf32> to vector<16x512xf32>
    %67 = vector.shape_cast %66 : vector<16x512xf32> to vector<16x1x512xf32>
    %cst_34 = arith.constant 1.250000e-01 : f32
    %68 = vector.broadcast %cst_34 : f32 to vector<16x1x512xf32>
    %69 = arith.mulf %67, %68 : vector<16x1x512xf32>
    %cst_35 = arith.constant 8.000000e-01 : f32
    %70 = vector.broadcast %cst_35 : f32 to vector<16x1x512xf32>
    %71 = arith.addf %69, %70 : vector<16x1x512xf32>
    %72 = math.rsqrt %71 : vector<16x1x512xf32>
    %73 = vector.broadcast %72 : vector<16x1x512xf32> to vector<16x8x512xf32>
    %74 = arith.mulf %64, %73 : vector<16x8x512xf32>
    %75 = vector.shape_cast %74 : vector<16x8x512xf32> to vector<128x512xf32>
    %76 = vector.broadcast %2 : vector<1x512xf32> to vector<128x512xf32>
    %77 = arith.mulf %75, %76 : vector<128x512xf32>
    %78 = vector.broadcast %3 : vector<1x512xf32> to vector<128x512xf32>
    %79 = arith.addf %77, %78 : vector<128x512xf32>
    %cst_36 = arith.constant 0.000000e+00 : f32
    %80 = vector.broadcast %cst_36 : f32 to vector<128x512xf32>
    %81 = arith.cmpf ogt, %79, %80 : vector<128x512xf32>
    %cst_37 = arith.constant 2.000000e-01 : f32
    %82 = vector.broadcast %cst_37 : f32 to vector<128x512xf32>
    %83 = arith.mulf %82, %79 : vector<128x512xf32>
    %84 = arith.select %81, %79, %83 : vector<128x512xi1>, vector<128x512xf32>
    %85 = arith.truncf %84 : vector<128x512xf32> to vector<128x512xbf16>
    %c0_38 = arith.constant 0 : index
    %c0_39 = arith.constant 0 : index
    %86 = vector.load %arg7[%c0_38, %c0_39] : memref<512x1024xbf16, #tpu.memory_space<vmem>>, vector<512x1024xbf16>
    %cst_40 = arith.constant dense<0.000000e+00> : vector<128x1024xf32>
    %87 = tpu.matmul %85, %86, %cst_40 {dimension_numbers = #tpu.dot_dimension_numbers<[1], [0], [0], [1], [0, 0, 1, 1], [], []>} : vector<128x512xbf16>, vector<512x1024xbf16>, vector<128x1024xf32> -> vector<128x1024xf32>
    %88 = vector.shape_cast %87 : vector<128x1024xf32> to vector<16x8x1024xf32>
    %cst_41 = arith.constant dense<0.000000e+00> : vector<16x1024xf32>
    %89 = vector.multi_reduction <add>, %88, %cst_41 [1] : vector<16x8x1024xf32> to vector<16x1024xf32>
    %90 = vector.shape_cast %89 : vector<16x1024xf32> to vector<16x1x1024xf32>
    %cst_42 = arith.constant 1.250000e-01 : f32
    %91 = vector.broadcast %cst_42 : f32 to vector<16x1x1024xf32>
    %92 = arith.mulf %90, %91 : vector<16x1x1024xf32>
    %93 = vector.broadcast %92 : vector<16x1x1024xf32> to vector<16x8x1024xf32>
    %94 = arith.subf %88, %93 : vector<16x8x1024xf32>
    %95 = arith.mulf %94, %94 : vector<16x8x1024xf32>
    %cst_43 = arith.constant dense<0.000000e+00> : vector<16x1024xf32>
    %96 = vector.multi_reduction <add>, %95, %cst_43 [1] : vector<16x8x1024xf32> to vector<16x1024xf32>
    %97 = vector.shape_cast %96 : vector<16x1024xf32> to vector<16x1x1024xf32>
    %cst_44 = arith.constant 1.250000e-01 : f32
    %98 = vector.broadcast %cst_44 : f32 to vector<16x1x1024xf32>
    %99 = arith.mulf %97, %98 : vector<16x1x1024xf32>
    %cst_45 = arith.constant 8.000000e-01 : f32
    %100 = vector.broadcast %cst_45 : f32 to vector<16x1x1024xf32>
    %101 = arith.addf %99, %100 : vector<16x1x1024xf32>
    %102 = math.rsqrt %101 : vector<16x1x1024xf32>
    %103 = vector.broadcast %102 : vector<16x1x1024xf32> to vector<16x8x1024xf32>
    %104 = arith.mulf %94, %103 : vector<16x8x1024xf32>
    %105 = vector.shape_cast %104 : vector<16x8x1024xf32> to vector<128x1024xf32>
    %106 = vector.broadcast %4 : vector<1x1024xf32> to vector<128x1024xf32>
    %107 = arith.mulf %105, %106 : vector<128x1024xf32>
    %108 = vector.broadcast %5 : vector<1x1024xf32> to vector<128x1024xf32>
    %109 = arith.addf %107, %108 : vector<128x1024xf32>
    %cst_46 = arith.constant 0.000000e+00 : f32
    %110 = vector.broadcast %cst_46 : f32 to vector<128x1024xf32>
    %111 = arith.cmpf ogt, %109, %110 : vector<128x1024xf32>
    %cst_47 = arith.constant 2.000000e-01 : f32
    %112 = vector.broadcast %cst_47 : f32 to vector<128x1024xf32>
    %113 = arith.mulf %112, %109 : vector<128x1024xf32>
    %114 = arith.select %111, %109, %113 : vector<128x1024xi1>, vector<128x1024xf32>
    %115 = arith.truncf %114 : vector<128x1024xf32> to vector<128x1024xbf16>
    %c0_48 = arith.constant 0 : index
    %c0_49 = arith.constant 0 : index
    %116 = vector.load %arg8[%c0_48, %c0_49] : memref<1024x256xbf16, #tpu.memory_space<vmem>>, vector<1024x256xbf16>
    %cst_50 = arith.constant dense<0.000000e+00> : vector<128x256xf32>
    %117 = tpu.matmul %115, %116, %cst_50 {dimension_numbers = #tpu.dot_dimension_numbers<[1], [0], [0], [1], [0, 0, 1, 1], [], []>} : vector<128x1024xbf16>, vector<1024x256xbf16>, vector<128x256xf32> -> vector<128x256xf32>
    %118 = vector.broadcast %6 : vector<1x256xf32> to vector<128x256xf32>
    %119 = arith.addf %117, %118 : vector<128x256xf32>
    %120 = math.tanh %119 : vector<128x256xf32>
    %c0_51 = arith.constant 0 : index
    %c0_52 = arith.constant 0 : index
    %121 = vector.load %arg10[%c0_51, %c0_52] : memref<128x256xf32, #tpu.memory_space<vmem>>, vector<128x256xf32>
    tpu.vector_store %arg10[%c0_51, %c0_52], %120 {strides = array<i32>} : memref<128x256xf32, #tpu.memory_space<vmem>>, vector<128x256xf32>,
    return
  }
  func.func @transform_0(%arg0: i32) -> (i32, i32) {
    %c0_i32 = arith.constant 0 : i32
    %c0_i32_0 = arith.constant 0 : i32
    return %arg0, %c0_i32 : i32, i32
  }
  func.func @transform_1(%arg0: i32) -> (i32, i32) {
    %c0_i32 = arith.constant 0 : i32
    %c0_i32_0 = arith.constant 0 : i32
    return %arg0, %c0_i32 : i32, i32
  }
  func.func @transform_2(%arg0: i32) -> (i32, i32) {
    %c0_i32 = arith.constant 0 : i32
    %c0_i32_0 = arith.constant 0 : i32
    %c0_i32_1 = arith.constant 0 : i32
    return %c0_i32, %c0_i32_0 : i32, i32
  }
  func.func @transform_3(%arg0: i32) -> (i32, i32) {
    %c0_i32 = arith.constant 0 : i32
    %c0_i32_0 = arith.constant 0 : i32
    %c0_i32_1 = arith.constant 0 : i32
    return %c0_i32, %c0_i32_0 : i32, i32
  }
  func.func @transform_4(%arg0: i32) -> (i32, i32) {
    %c0_i32 = arith.constant 0 : i32
    %c0_i32_0 = arith.constant 0 : i32
    %c0_i32_1 = arith.constant 0 : i32
    return %c0_i32, %c0_i32_0 : i32, i32
  }
  func.func @transform_5(%arg0: i32) -> (i32, i32) {
    %c0_i32 = arith.constant 0 : i32
    %c0_i32_0 = arith.constant 0 : i32
    %c0_i32_1 = arith.constant 0 : i32
    return %c0_i32, %c0_i32_0 : i32, i32
  }
  func.func @transform_6(%arg0: i32) -> (i32, i32) {
    %c0_i32 = arith.constant 0 : i32
    %c0_i32_0 = arith.constant 0 : i32
    %c0_i32_1 = arith.constant 0 : i32
    return %c0_i32, %c0_i32_0 : i32, i32
  }
  func.func @transform_7(%arg0: i32) -> (i32, i32) {
    %c0_i32 = arith.constant 0 : i32
    %c0_i32_0 = arith.constant 0 : i32
    %c0_i32_1 = arith.constant 0 : i32
    return %c0_i32, %c0_i32_0 : i32, i32
  }
  func.func @transform_8(%arg0: i32) -> (i32, i32) {
    %c0_i32 = arith.constant 0 : i32
    %c0_i32_0 = arith.constant 0 : i32
    %c0_i32_1 = arith.constant 0 : i32
    return %c0_i32, %c0_i32_0 : i32, i32
  }
  func.func @transform_9(%arg0: i32) -> (i32, i32) {
    %c0_i32 = arith.constant 0 : i32
    %c0_i32_0 = arith.constant 0 : i32
    return %arg0, %c0_i32 : i32, i32
  }
}

</mosaic_0001>

<llo_original>
// kernel: tpu_custom_call.1
$region0: #{tpu_custom_call.1}
  #allocation0 [shape = 'u32[]', space=smem, size = 0x4, offset = 0x4, fixed_abs, tag = 'smem constant byte address 0x4 - core index']
  #allocation1 [shape = 'u32[144,128]{1,0:T(1,128)}', space=vmem, size = 0x12000, scoped, tag = 'internal scratch']
  %s0 = inlined_call_operand.vmem [shape: s32[256,1], index: 0, kind: input, shape index: {}]
  %s1 = inlined_call_operand.vmem [shape: f32[256,32], index: 1, kind: input, shape index: {}]
  %s2 = inlined_call_operand.vmem [shape: f32[10,128], index: 2, kind: input, shape index: {}]
  %s3 = inlined_call_operand.hbm [shape: bf16[32,128], index: 3, kind: input, shape index: {}]
  %s4 = inlined_call_operand.hbm [shape: bf16[128,256], index: 4, kind: input, shape index: {}]
  %s5 = inlined_call_operand.vmem [shape: bf16[256,512], index: 5, kind: input, shape index: {}]
  %s6 = inlined_call_operand.hbm [shape: bf16[512,1024], index: 6, kind: input, shape index: {}]
  %s7 = inlined_call_operand.hbm [shape: bf16[1024,256], index: 7, kind: input, shape index: {}]
  %s8 = inlined_call_operand.vmem [shape: f32[8,1024], index: 8, kind: input, shape index: {}]
  %s9 = inlined_call_operand.hbm [shape: f32[256,256], index: 9, kind: output, shape index: {}]
  %s10 = sld [smem:[#allocation0]]
  $region85: #{tpu_custom_call.1} parent=0
    _
  %s12 = ssub.s32 1, %s10
  %s13 = scalar_select 0, %s12, %s10
  $region1: #{tpu_custom_call.1} parent=0
    #allocation2 [shape = 'u8[8192]{0}', space=vmem, size = 0x2000, scoped, tag = 'input window, operand 3, single buffered']
    #allocation3 [shape = 's32[2]{0}', space=sflag, size = 0x8, scoped, tag = 'scoped memory for tpu_custom_call.1']
    #allocation4 [shape = 's32[2]{0}', space=sflag, size = 0x8, scoped, tag = 'scoped memory for tpu_custom_call.1']
    #allocation5 [shape = 'u8[65536]{0}', space=vmem, size = 0x10000, scoped, tag = 'input window, operand 4, single buffered']
    #allocation6 [shape = 's32[1]{0}', space=sflag, size = 0x4, scoped, tag = 'scoped memory for tpu_custom_call.1']
    #allocation7 [shape = 'u8[1048576]{0}', space=vmem, size = 0x100000, scoped, tag = 'input window, operand 6, single buffered']
    #allocation8 [shape = 'u8[524288]{0}', space=vmem, size = 0x80000, scoped, tag = 'input window, operand 7, single buffered']
    #allocation9 [shape = 's32[1]{0}', space=sflag, size = 0x4, scoped, tag = 'scoped memory for tpu_custom_call.1']
    #allocation10 [shape = 'u8[262144]{0}', space=vmem, size = 0x40000, scoped, tag = 'output window, operand 0']
    %14 = vsyncpa [#allocation3], 0
    %15 = vsyncpa [#allocation6], 0
    %16 = vsyncpa [#allocation9], 0
    %17 = vsyncpa [#allocation4], 0
    %s18 = scalar_lea.sflag [#allocation4], 1
    %19 = vsyncpa %s18, 0
    loop: start=0, step=1, limit=4
    $region2: #{tpu_custom_call.1} parent=1 // loop_pre_header
      _
    $region3: #{tpu_custom_call.1} parent=1 // loop_header
      %s21 = sphi 0, %s25
      %p22 = scmp.ge.s32.totalorder %s21, 4
      %s31 = sphi 0, %s33
      %s34 = sphi 0, %s31
      %s35 = sphi 0, %s34
      %s51 = sphi 0, %s35
      %s57 = sphi 0, %s59
      %s60 = sphi 0, %s57
      %s61 = sphi 0, %s60
      %s77 = sphi 0, %s61
      %s81 = sphi 0, %s81
      %s83 = sphi 0, %s81
      %s84 = sphi 0, %s83
      %s98 = sphi 0, %s84
      %s102 = sphi 0, %s102
      %s104 = sphi 0, %s102
      %s105 = sphi 0, %s104
      %s119 = sphi 0, %s105
      %s123 = sphi 0, %s123
      %s125 = sphi 0, %s123
      %s126 = sphi 0, %s125
      %s140 = sphi 0, %s126
      %s144 = sphi 0, %s144
      %s146 = sphi 0, %s144
      %s147 = sphi 0, %s146
      %s161 = sphi 0, %s147
      %s165 = sphi 0, %s165
      %s167 = sphi 0, %s165
      %s168 = sphi 0, %s167
      %s182 = sphi 0, %s168
      %s186 = sphi 0, %s186
      %s188 = sphi 0, %s186
      %s189 = sphi 0, %s188
      %s203 = sphi 0, %s189
      %s207 = sphi 0, %s207
      %s209 = sphi 0, %s207
      %s210 = sphi 0, %s209
      %s224 = sphi 0, %s210
      %s230 = sphi 0, %s232
      %s233 = sphi 0, %s230
      %s234 = sphi 0, %s233
      %s250 = sphi 0, %s234
    $region4: #{tpu_custom_call.1} parent=1 // loop_header_branch
      %24 = sbr.rel (%p22) target = $region8
    $region5: #{tpu_custom_call.1} parent=1 // loop_body
      %s26 = ssub.s32 %s21, 1
      %s27 = ssub.s32 %s21, 2
      %s28 = sadd.s32 %s21, 1
      %s29 = ssub.s32 %s21, %s28
      %p30 = scmp.eq.s32.totalorder %s29, 0
      %s32 = sadd.s32 %s31, 1
      %s33 = scalar_select %p30, %s31, %s32
      %p36 = pneg %p30
      %p37 = scmp.eq.s32.totalorder %s21, 1
      %p38 = por %p36, %p37
      %p39 = scmp.ne.s32.totalorder %s31, %s34
      %p40 = scmp.eq.s32.totalorder %s21, 0
      %p41 = por %p39, %p40
      %p42 = scmp.ne.s32.totalorder %s31, %s34
      %p43 = scmp.eq.s32.totalorder %s26, 1
      %p44 = por %p42, %p43
      %p45 = scmp.ne.s32.totalorder %s34, %s35
      %p46 = scmp.eq.s32.totalorder %s26, 0
      %p47 = por %p45, %p46
      %p48 = scmp.ne.s32.totalorder %s34, %s35
      %p49 = scmp.eq.s32.totalorder %s27, 1
      %p50 = por %p48, %p49
      %p52 = scmp.ne.s32.totalorder %s35, %s51
      %p53 = scmp.eq.s32.totalorder %s27, 0
      %p54 = por %p52, %p53
      %s55 = ssub.s32 %s21, %s28
      %p56 = scmp.eq.s32.totalorder %s55, 0
      %s58 = sadd.s32 %s57, 1
      %s59 = scalar_select %p56, %s57, %s58
      %p62 = pneg %p56
      %p63 = scmp.eq.s32.totalorder %s21, 1
      %p64 = por %p62, %p63
      %p65 = scmp.ne.s32.totalorder %s57, %s60
      %p66 = scmp.eq.s32.totalorder %s21, 0
      %p67 = por %p65, %p66
      %p68 = scmp.ne.s32.totalorder %s57, %s60
      %p69 = scmp.eq.s32.totalorder %s26, 1
      %p70 = por %p68, %p69
      %p71 = scmp.ne.s32.totalorder %s60, %s61
      %p72 = scmp.eq.s32.totalorder %s26, 0
      %p73 = por %p71, %p72
      %p74 = scmp.ne.s32.totalorder %s60, %s61
      %p75 = scmp.eq.s32.totalorder %s27, 1
      %p76 = por %p74, %p75
      %p78 = scmp.ne.s32.totalorder %s61, %s77
      %p79 = scmp.eq.s32.totalorder %s27, 0
      %p80 = por %p78, %p79
      %s82 = sadd.s32 %s81, 1
      %p85 = scmp.eq.s32.totalorder %s21, 1
      %p86 = scmp.ne.s32.totalorder %s81, %s83
      %p87 = scmp.eq.s32.totalorder %s21, 0
      %p88 = por %p86, %p87
      %p89 = scmp.ne.s32.totalorder %s81, %s83
      %p90 = scmp.eq.s32.totalorder %s26, 1
      %p91 = por %p89, %p90
      %p92 = scmp.ne.s32.totalorder %s83, %s84
      %p93 = scmp.eq.s32.totalorder %s26, 0
      %p94 = por %p92, %p93
      %p95 = scmp.ne.s32.totalorder %s83, %s84
      %p96 = scmp.eq.s32.totalorder %s27, 1
      %p97 = por %p95, %p96
      %p99 = scmp.ne.s32.totalorder %s84, %s98
      %p100 = scmp.eq.s32.totalorder %s27, 0
      %p101 = por %p99, %p100
      %s103 = sadd.s32 %s102, 1
      %p106 = scmp.eq.s32.totalorder %s21, 1
      %p107 = scmp.ne.s32.totalorder %s102, %s104
      %p108 = scmp.eq.s32.totalorder %s21, 0
      %p109 = por %p107, %p108
      %p110 = scmp.ne.s32.totalorder %s102, %s104
      %p111 = scmp.eq.s32.totalorder %s26, 1
      %p112 = por %p110, %p111
      %p113 = scmp.ne.s32.totalorder %s104, %s105
      %p114 = scmp.eq.s32.totalorder %s26, 0
      %p115 = por %p113, %p114
      %p116 = scmp.ne.s32.totalorder %s104, %s105
      %p117 = scmp.eq.s32.totalorder %s27, 1
      %p118 = por %p116, %p117
      %p120 = scmp.ne.s32.totalorder %s105, %s119
      %p121 = scmp.eq.s32.totalorder %s27, 0
      %p122 = por %p120, %p121
      %s124 = sadd.s32 %s123, 1
      %p127 = scmp.eq.s32.totalorder %s21, 1
      %p128 = scmp.ne.s32.totalorder %s123, %s125
      %p129 = scmp.eq.s32.totalorder %s21, 0
      %p130 = por %p128, %p129
      %p131 = scmp.ne.s32.totalorder %s123, %s125
      %p132 = scmp.eq.s32.totalorder %s26, 1
      %p133 = por %p131, %p132
      %p134 = scmp.ne.s32.totalorder %s125, %s126
      %p135 = scmp.eq.s32.totalorder %s26, 0
      %p136 = por %p134, %p135
      %p137 = scmp.ne.s32.totalorder %s125, %s126
      %p138 = scmp.eq.s32.totalorder %s27, 1
      %p139 = por %p137, %p138
      %p141 = scmp.ne.s32.totalorder %s126, %s140
      %p142 = scmp.eq.s32.totalorder %s27, 0
      %p143 = por %p141, %p142
      %s145 = sadd.s32 %s144, 1
      %p148 = scmp.eq.s32.totalorder %s21, 1
      %p149 = scmp.ne.s32.totalorder %s144, %s146
      %p150 = scmp.eq.s32.totalorder %s21, 0
      %p151 = por %p149, %p150
      %p152 = scmp.ne.s32.totalorder %s144, %s146
      %p153 = scmp.eq.s32.totalorder %s26, 1
      %p154 = por %p152, %p153
      %p155 = scmp.ne.s32.totalorder %s146, %s147
      %p156 = scmp.eq.s32.totalorder %s26, 0
      %p157 = por %p155, %p156
      %p158 = scmp.ne.s32.totalorder %s146, %s147
      %p159 = scmp.eq.s32.totalorder %s27, 1
      %p160 = por %p158, %p159
      %p162 = scmp.ne.s32.totalorder %s147, %s161
      %p163 = scmp.eq.s32.totalorder %s27, 0
      %p164 = por %p162, %p163
      %s166 = sadd.s32 %s165, 1
      %p169 = scmp.eq.s32.totalorder %s21, 1
      %p170 = scmp.ne.s32.totalorder %s165, %s167
      %p171 = scmp.eq.s32.totalorder %s21, 0
      %p172 = por %p170, %p171
      %p173 = scmp.ne.s32.totalorder %s165, %s167
      %p174 = scmp.eq.s32.totalorder %s26, 1
      %p175 = por %p173, %p174
      %p176 = scmp.ne.s32.totalorder %s167, %s168
      %p177 = scmp.eq.s32.totalorder %s26, 0
      %p178 = por %p176, %p177
      %p179 = scmp.ne.s32.totalorder %s167, %s168
      %p180 = scmp.eq.s32.totalorder %s27, 1
      %p181 = por %p179, %p180
      %p183 = scmp.ne.s32.totalorder %s168, %s182
      %p184 = scmp.eq.s32.totalorder %s27, 0
      %p185 = por %p183, %p184
      %s187 = sadd.s32 %s186, 1
      %p190 = scmp.eq.s32.totalorder %s21, 1
      %p191 = scmp.ne.s32.totalorder %s186, %s188
      %p192 = scmp.eq.s32.totalorder %s21, 0
      %p193 = por %p191, %p192
      %p194 = scmp.ne.s32.totalorder %s186, %s188
      %p195 = scmp.eq.s32.totalorder %s26, 1
      %p196 = por %p194, %p195
      %p197 = scmp.ne.s32.totalorder %s188, %s189
      %p198 = scmp.eq.s32.totalorder %s26, 0
      %p199 = por %p197, %p198
      %p200 = scmp.ne.s32.totalorder %s188, %s189
      %p201 = scmp.eq.s32.totalorder %s27, 1
      %p202 = por %p200, %p201
      %p204 = scmp.ne.s32.totalorder %s189, %s203
      %p205 = scmp.eq.s32.totalorder %s27, 0
      %p206 = por %p204, %p205
      %s208 = sadd.s32 %s207, 1
      %p211 = scmp.eq.s32.totalorder %s21, 1
      %p212 = scmp.ne.s32.totalorder %s207, %s209
      %p213 = scmp.eq.s32.totalorder %s21, 0
      %p214 = por %p212, %p213
      %p215 = scmp.ne.s32.totalorder %s207, %s209
      %p216 = scmp.eq.s32.totalorder %s26, 1
      %p217 = por %p215, %p216
      %p218 = scmp.ne.s32.totalorder %s209, %s210
      %p219 = scmp.eq.s32.totalorder %s26, 0
      %p220 = por %p218, %p219
      %p221 = scmp.ne.s32.totalorder %s209, %s210
      %p222 = scmp.eq.s32.totalorder %s27, 1
      %p223 = por %p221, %p222
      %p225 = scmp.ne.s32.totalorder %s210, %s224
      %p226 = scmp.eq.s32.totalorder %s27, 0
      %p227 = por %p225, %p226
      %s228 = ssub.s32 %s21, %s28
      %p229 = scmp.eq.s32.totalorder %s228, 0
      %s231 = sadd.s32 %s230, 1
      %s232 = scalar_select %p229, %s230, %s231
      %p235 = pneg %p229
      %p236 = scmp.eq.s32.totalorder %s21, 1
      %p237 = por %p235, %p236
      %p238 = scmp.ne.s32.totalorder %s230, %s233
      %p239 = scmp.eq.s32.totalorder %s21, 0
      %p240 = por %p238, %p239
      %p241 = scmp.ne.s32.totalorder %s230, %s233
      %p242 = scmp.eq.s32.totalorder %s26, 1
      %p243 = por %p241, %p242
      %p244 = scmp.ne.s32.totalorder %s233, %s234
      %p245 = scmp.eq.s32.totalorder %s26, 0
      %p246 = por %p244, %p245
      %p247 = scmp.ne.s32.totalorder %s233, %s234
      %p248 = scmp.eq.s32.totalorder %s27, 1
      %p249 = por %p247, %p248
      %p251 = scmp.ne.s32.totalorder %s234, %s250
      %p252 = scmp.eq.s32.totalorder %s27, 0
      %p253 = por %p251, %p252
      %p254 = scmp.le.s32.totalorder 1, %s21
      %p255 = scmp.lt.s32.totalorder %s21, 3
      %p256 = pnand %p254, %p255
      %p257 = pneg %p256
      // Predicated region
      $region9: #{tpu_custom_call.1} parent=5 // pred_check
        _
      $region10: #{tpu_custom_call.1} parent=5 // pred_check_branch
        %259 = sbr.rel (%p256) target = $region12
      $region11: #{tpu_custom_call.1} parent=5 // pred_region
        %s260 = ssub.s32 %s21, 1
        // Predicated region
        $region13: #{tpu_custom_call.1} parent=11 // pred_check
          %p261 = pneg %p94
        $region14: #{tpu_custom_call.1} parent=11 // pred_check_branch
          %263 = sbr.rel (%p261) target = $region16
        $region15: #{tpu_custom_call.1} parent=11 // pred_region
          _
        $region16: #{tpu_custom_call.1} parent=11 // pred_fallthru
          _
        // Predicated region
        $region17: #{tpu_custom_call.1} parent=11 // pred_check
          %p264 = pneg %p115
        $region18: #{tpu_custom_call.1} parent=11 // pred_check_branch
          %266 = sbr.rel (%p264) target = $region20
        $region19: #{tpu_custom_call.1} parent=11 // pred_region
          %s268 = ssub.s32 256, 256
          %269 = vsyncadd [#allocation3], %s268
          %s270 = sshll.u32 [#allocation2], 4
          %s271 = int_to_ptr.vmem [resolvable:$true] %s270
          %276 = dma.hbm_to_vmem [thread:$0]  %s3, 256, %s271, [#allocation3], 64, 64, 4
        $region20: #{tpu_custom_call.1} parent=11 // pred_fallthru
          _
        // Predicated region
        $region21: #{tpu_custom_call.1} parent=11 // pred_check
          %p277 = pneg %p136
        $region22: #{tpu_custom_call.1} parent=11 // pred_check_branch
          %279 = sbr.rel (%p277) target = $region24
        $region23: #{tpu_custom_call.1} parent=11 // pred_region
          %s281 = ssub.s32 2048, 2048
          %282 = vsyncadd [#allocation6], %s281
          %s283 = sshll.u32 [#allocation5], 4
          %s284 = int_to_ptr.vmem [resolvable:$true] %s283
          %289 = dma.hbm_to_vmem [thread:$0]  %s4, 2048, %s284, [#allocation6], 128, 128, 8
        $region24: #{tpu_custom_call.1} parent=11 // pred_fallthru
          _
        // Predicated region
        $region25: #{tpu_custom_call.1} parent=11 // pred_check
          %p290 = pneg %p157
        $region26: #{tpu_custom_call.1} parent=11 // pred_check_branch
          %292 = sbr.rel (%p290) target = $region28
        $region27: #{tpu_custom_call.1} parent=11 // pred_region
          _
        $region28: #{tpu_custom_call.1} parent=11 // pred_fallthru
          _
        // Predicated region
        $region29: #{tpu_custom_call.1} parent=11 // pred_check
          %p293 = pneg %p178
        $region30: #{tpu_custom_call.1} parent=11 // pred_check_branch
          %295 = sbr.rel (%p293) target = $region32
        $region31: #{tpu_custom_call.1} parent=11 // pred_region
          %s297 = ssub.s32 32768, 32768
          %298 = vsyncadd [#allocation6], %s297
          %s299 = sshll.u32 [#allocation7], 4
          %s300 = int_to_ptr.vmem [resolvable:$true] %s299
          %305 = dma.hbm_to_vmem [thread:$0]  %s6, 32768, %s300, [#allocation6], 512, 512, 32
        $region32: #{tpu_custom_call.1} parent=11 // pred_fallthru
          _
        // Predicated region
        $region33: #{tpu_custom_call.1} parent=11 // pred_check
          %p306 = pneg %p199
        $region34: #{tpu_custom_call.1} parent=11 // pred_check_branch
          %308 = sbr.rel (%p306) target = $region36
        $region35: #{tpu_custom_call.1} parent=11 // pred_region
          %s310 = ssub.s32 16384, 16384
          %311 = vsyncadd [#allocation9], %s310
          %s312 = sshll.u32 [#allocation8], 4
          %s313 = int_to_ptr.vmem [resolvable:$true] %s312
          %318 = dma.hbm_to_vmem [thread:$0]  %s7, 16384, %s313, [#allocation9], 128, 128, 8
        $region36: #{tpu_custom_call.1} parent=11 // pred_fallthru
          _
        // Predicated region
        $region37: #{tpu_custom_call.1} parent=11 // pred_check
          %p319 = pneg %p220
        $region38: #{tpu_custom_call.1} parent=11 // pred_check_branch
          %321 = sbr.rel (%p319) target = $region40
        $region39: #{tpu_custom_call.1} parent=11 // pred_region
          _
        $region40: #{tpu_custom_call.1} parent=11 // pred_fallthru
          _
      $region12: #{tpu_custom_call.1} parent=5 // pred_fallthru
        _
      %p322 = scmp.lt.s32.totalorder %s21, 2
      // Predicated region
      $region41: #{tpu_custom_call.1} parent=5 // pred_check
        %p323 = pneg %p322
      $region42: #{tpu_custom_call.1} parent=5 // pred_check_branch
        %325 = sbr.rel (%p323) target = $region44
      $region43: #{tpu_custom_call.1} parent=5 // pred_region
        // Predicated region
        $region45: #{tpu_custom_call.1} parent=43 // pred_check
          %p326 = pneg %p41
        $region46: #{tpu_custom_call.1} parent=43 // pred_check_branch
          %328 = sbr.rel (%p326) target = $region48
        $region47: #{tpu_custom_call.1} parent=43 // pred_region
          %s329 = smul.u32 16, %s21
          %p330 = scmp.lt.s32.totalorder %s329, 31
          %s331 = scalar_select %p330, %s329, 31
          %s332 = smul.addr %s331, 8
          %s333 = scalar_lea.vmem %s0, %s332
          %s334 = smul.u32 16, %s21
        $region48: #{tpu_custom_call.1} parent=43 // pred_fallthru
          _
        // Predicated region
        $region49: #{tpu_custom_call.1} parent=43 // pred_check
          %p335 = pneg %p67
        $region50: #{tpu_custom_call.1} parent=43 // pred_check_branch
          %337 = sbr.rel (%p335) target = $region52
        $region51: #{tpu_custom_call.1} parent=43 // pred_region
          %s338 = smul.u32 16, %s21
          %p339 = scmp.lt.s32.totalorder %s338, 31
          %s340 = scalar_select %p339, %s338, 31
          %s341 = smul.addr %s340, 8
          %s342 = scalar_lea.vmem %s1, %s341
          %s343 = smul.u32 16, %s21
        $region52: #{tpu_custom_call.1} parent=43 // pred_fallthru
          _
      $region44: #{tpu_custom_call.1} parent=5 // pred_fallthru
        _
      %p344 = scmp.le.s32.totalorder 1, %s21
      %p345 = scmp.lt.s32.totalorder %s21, 3
      %p346 = pnand %p344, %p345
      %p347 = pneg %p346
      // Predicated region
      $region53: #{tpu_custom_call.1} parent=5 // pred_check
        _
      $region54: #{tpu_custom_call.1} parent=5 // pred_check_branch
        %349 = sbr.rel (%p346) target = $region56
      $region55: #{tpu_custom_call.1} parent=5 // pred_region
        %s350 = ssub.s32 %s21, 1
        // Predicated region
        $region57: #{tpu_custom_call.1} parent=55 // pred_check
          %p351 = pneg %p115
        $region58: #{tpu_custom_call.1} parent=55 // pred_check_branch
          %353 = sbr.rel (%p351) target = $region60
        $region59: #{tpu_custom_call.1} parent=55 // pred_region
          %354 = dma.done [#allocation3], 256
        $region60: #{tpu_custom_call.1} parent=55 // pred_fallthru
          _
        // Predicated region
        $region61: #{tpu_custom_call.1} parent=55 // pred_check
          %p355 = pneg %p136
        $region62: #{tpu_custom_call.1} parent=55 // pred_check_branch
          %357 = sbr.rel (%p355) target = $region64
        $region63: #{tpu_custom_call.1} parent=55 // pred_region
          %358 = dma.done [#allocation6], 2048
        $region64: #{tpu_custom_call.1} parent=55 // pred_fallthru
          _
        // Predicated region
        $region65: #{tpu_custom_call.1} parent=55 // pred_check
          %p359 = pneg %p178
        $region66: #{tpu_custom_call.1} parent=55 // pred_check_branch
          %361 = sbr.rel (%p359) target = $region68
        $region67: #{tpu_custom_call.1} parent=55 // pred_region
          %362 = dma.done [#allocation6], 32768
        $region68: #{tpu_custom_call.1} parent=55 // pred_fallthru
          _
        // Predicated region
        $region69: #{tpu_custom_call.1} parent=55 // pred_check
          %p363 = pneg %p199
        $region70: #{tpu_custom_call.1} parent=55 // pred_check_branch
          %365 = sbr.rel (%p363) target = $region72
        $region71: #{tpu_custom_call.1} parent=55 // pred_region
          %366 = dma.done [#allocation9], 16384
        $region72: #{tpu_custom_call.1} parent=55 // pred_fallthru
          _
        %s367 = smul.u32 16, %s26
        %p368 = scmp.lt.s32.totalorder %s367, 31
        %s369 = scalar_select %p368, %s367, 31
        %s370 = smul.addr %s369, 8
        %s371 = scalar_lea.vmem %s0, %s370
        %p372 = pneg %p47
        %p373 = pneg %p44
        %s374 = smul.u32 16, %s26
        %p375 = scmp.lt.s32.totalorder %s374, 31
        %s376 = scalar_select %p375, %s374, 31
        %s377 = smul.addr %s376, 8
        %s378 = scalar_lea.vmem %s1, %s377
        %p379 = pneg %p73
        %p380 = pneg %p70
        %p381 = pneg %p94
        %p382 = pneg %p91
        %p383 = pneg %p115
        %p384 = pneg %p112
        %p385 = pneg %p136
        %p386 = pneg %p133
        %p387 = pneg %p157
        %p388 = pneg %p154
        %p389 = pneg %p178
        %p390 = pneg %p175
        %p391 = pneg %p199
        %p392 = pneg %p196
        %p393 = pneg %p220
        %p394 = pneg %p217
        %p395 = pneg %p246
        %p396 = pneg %p243
        %s397 = sand.u32 %s233, 1
        %s398 = scalar_lea.sflag [#allocation4], %s397
        %s399 = sand.u32 %s233, 1
        %s400 = smul.addr %s399, 256
        %s401 = scalar_lea.vmem [#allocation10], %s400
        %s402 = smul.u32 16, %s26
        %p403 = scmp.lt.s32.totalorder %s402, 31
        %s404 = scalar_select %p403, %s402, 31
        %s405 = smul.addr %s404, 8
        %s406 = scalar_lea.vmem %s0, %s405
        %s407 = smul.u32 16, %s26
        %s408 = smul.u32 16, %s26
        %p409 = scmp.lt.s32.totalorder %s408, 31
        %s410 = scalar_select %p409, %s408, 31
        %s411 = smul.addr %s410, 8
        %s412 = scalar_lea.vmem %s1, %s411
        %s413 = smul.u32 16, %s26
        %s414 = smul.u32 16, %s26
        %v416 = vld [vmem:[%s8] ss:$8 sm:$0x3]
        %s417 = scalar_lea.vmem %s8, 1
        %v418 = vld [vmem:[%s417] ss:$8 sm:$0x3]
        %s419 = scalar_lea.vmem %s8, 2
        %v420 = vld [vmem:[%s419] ss:$8 sm:$0xf]
        %s421 = scalar_lea.vmem %s8, 3
        %v422 = vld [vmem:[%s421] ss:$8 sm:$0xf]
        %s423 = scalar_lea.vmem %s8, 4
        %v424 = vld [vmem:[%s423] ss:$8 sm:$0xf]
        %v425 = vld [vmem:[%s423] ss:$8 sm:$0xf0]
        %v426 = vor.u32 %v424, %v425
        %s427 = scalar_lea.vmem %s8, 5
        %v428 = vld [vmem:[%s427] ss:$8 sm:$0xf]
        %v429 = vld [vmem:[%s427] ss:$8 sm:$0xf0]
        %v430 = vor.u32 %v428, %v429
        %s431 = scalar_lea.vmem %s8, 6
        %v432 = vld [vmem:[%s431] ss:$8 sm:$0x3]
        %v433 = vlaneseq
        %v434 = vand.u32 %v433, 127
        %v435 = vld [vmem:[%s406] sm:$0xff]
        %v436 = vld [vmem:[%s406 + $0x8] sm:$0xff]
        %v437 = vld [vmem:[%s406 + $0x10] sm:$0xff]
        %v438 = vld [vmem:[%s406 + $0x18] sm:$0xff]
        %v439 = vld [vmem:[%s406 + $0x20] sm:$0xff]
        %v440 = vld [vmem:[%s406 + $0x28] sm:$0xff]
        %v441 = vld [vmem:[%s406 + $0x30] sm:$0xff]
        %v442 = vld [vmem:[%s406 + $0x38] sm:$0xff]
        %v443 = vld [vmem:[%s406 + $0x40] sm:$0xff]
        %v444 = vld [vmem:[%s406 + $0x48] sm:$0xff]
        %v445 = vld [vmem:[%s406 + $0x50] sm:$0xff]
        %v446 = vld [vmem:[%s406 + $0x58] sm:$0xff]
        %v447 = vld [vmem:[%s406 + $0x60] sm:$0xff]
        %v448 = vld [vmem:[%s406 + $0x68] sm:$0xff]
        %v449 = vld [vmem:[%s406 + $0x70] sm:$0xff]
        %v450 = vld [vmem:[%s406 + $0x78] sm:$0xff]
        %451 = vset.pattern.permute.xlu0 0
        %452 = vperm.xlu0 %451, %v435
        %v453 = vpop.permute.xlu0 %452
        %454 = vset.pattern.permute.xlu0 0
        %455 = vperm.xlu0 %454, %v436
        %v456 = vpop.permute.xlu0 %455
        %457 = vset.pattern.permute.xlu0 0
        %458 = vperm.xlu0 %457, %v437
        %v459 = vpop.permute.xlu0 %458
        %460 = vset.pattern.permute.xlu0 0
        %461 = vperm.xlu0 %460, %v438
        %v462 = vpop.permute.xlu0 %461
        %463 = vset.pattern.permute.xlu0 0
        %464 = vperm.xlu0 %463, %v439
        %v465 = vpop.permute.xlu0 %464
        %466 = vset.pattern.permute.xlu0 0
        %467 = vperm.xlu0 %466, %v440
        %v468 = vpop.permute.xlu0 %467
        %469 = vset.pattern.permute.xlu0 0
        %470 = vperm.xlu0 %469, %v441
        %v471 = vpop.permute.xlu0 %470
        %472 = vset.pattern.permute.xlu0 0
        %473 = vperm.xlu0 %472, %v442
        %v474 = vpop.permute.xlu0 %473
        %475 = vset.pattern.permute.xlu0 0
        %476 = vperm.xlu0 %475, %v443
        %v477 = vpop.permute.xlu0 %476
        %478 = vset.pattern.permute.xlu0 0
        %479 = vperm.xlu0 %478, %v444
        %v480 = vpop.permute.xlu0 %479
        %481 = vset.pattern.permute.xlu0 0
        %482 = vperm.xlu0 %481, %v445
        %v483 = vpop.permute.xlu0 %482
        %484 = vset.pattern.permute.xlu0 0
        %485 = vperm.xlu0 %484, %v446
        %v486 = vpop.permute.xlu0 %485
        %487 = vset.pattern.permute.xlu0 0
        %488 = vperm.xlu0 %487, %v447
        %v489 = vpop.permute.xlu0 %488
        %490 = vset.pattern.permute.xlu0 0
        %491 = vperm.xlu0 %490, %v448
        %v492 = vpop.permute.xlu0 %491
        %493 = vset.pattern.permute.xlu0 0
        %494 = vperm.xlu0 %493, %v449
        %v495 = vpop.permute.xlu0 %494
        %496 = vset.pattern.permute.xlu0 0
        %497 = vperm.xlu0 %496, %v450
        %v498 = vpop.permute.xlu0 %497
        %vm499 = vcmp.eq.s32.totalorder %v434, %v453
        %vm500 = vcmp.eq.s32.totalorder %v434, %v456
        %vm501 = vcmp.eq.s32.totalorder %v434, %v459
        %vm502 = vcmp.eq.s32.totalorder %v434, %v462
        %vm503 = vcmp.eq.s32.totalorder %v434, %v465
        %vm504 = vcmp.eq.s32.totalorder %v434, %v468
        %vm505 = vcmp.eq.s32.totalorder %v434, %v471
        %vm506 = vcmp.eq.s32.totalorder %v434, %v474
        %vm507 = vcmp.eq.s32.totalorder %v434, %v477
        %vm508 = vcmp.eq.s32.totalorder %v434, %v480
        %vm509 = vcmp.eq.s32.totalorder %v434, %v483
        %vm510 = vcmp.eq.s32.totalorder %v434, %v486
        %vm511 = vcmp.eq.s32.totalorder %v434, %v489
        %vm512 = vcmp.eq.s32.totalorder %v434, %v492
        %vm513 = vcmp.eq.s32.totalorder %v434, %v495
        %vm514 = vcmp.eq.s32.totalorder %v434, %v498
        %v515 = vsel %vm499, 1, 0
        %v516 = vsel %vm500, 1, 0
        %v517 = vsel %vm501, 1, 0
        %v518 = vsel %vm502, 1, 0
        %v519 = vsel %vm503, 1, 0
        %v520 = vsel %vm504, 1, 0
        %v521 = vsel %vm505, 1, 0
        %v522 = vsel %vm506, 1, 0
        %v523 = vsel %vm507, 1, 0
        %v524 = vsel %vm508, 1, 0
        %v525 = vsel %vm509, 1, 0
        %v526 = vsel %vm510, 1, 0
        %v527 = vsel %vm511, 1, 0
        %v528 = vsel %vm512, 1, 0
        %v529 = vsel %vm513, 1, 0
        %v530 = vsel %vm514, 1, 0
        %v531 = vcvt.s32.f32 %v515
        %v532 = vcvt.s32.f32 %v516
        %v533 = vcvt.s32.f32 %v517
        %v534 = vcvt.s32.f32 %v518
        %v535 = vcvt.s32.f32 %v519
        %v536 = vcvt.s32.f32 %v520
        %v537 = vcvt.s32.f32 %v521
        %v538 = vcvt.s32.f32 %v522
        %v539 = vcvt.s32.f32 %v523
        %v540 = vcvt.s32.f32 %v524
        %v541 = vcvt.s32.f32 %v525
        %v542 = vcvt.s32.f32 %v526
        %v543 = vcvt.s32.f32 %v527
        %v544 = vcvt.s32.f32 %v528
        %v545 = vcvt.s32.f32 %v529
        %v546 = vcvt.s32.f32 %v530
        %v547 = vld [vmem:[%s412] sm:$0xff]
        %v548 = vld [vmem:[%s412 + $0x8] sm:$0xff]
        %v549 = vld [vmem:[%s412 + $0x10] sm:$0xff]
        %v550 = vld [vmem:[%s412 + $0x18] sm:$0xff]
        %v551 = vld [vmem:[%s412 + $0x20] sm:$0xff]
        %v552 = vld [vmem:[%s412 + $0x28] sm:$0xff]
        %v553 = vld [vmem:[%s412 + $0x30] sm:$0xff]
        %v554 = vld [vmem:[%s412 + $0x38] sm:$0xff]
        %v555 = vld [vmem:[%s412 + $0x40] sm:$0xff]
        %v556 = vld [vmem:[%s412 + $0x48] sm:$0xff]
        %v557 = vld [vmem:[%s412 + $0x50] sm:$0xff]
        %v558 = vld [vmem:[%s412 + $0x58] sm:$0xff]
        %v559 = vld [vmem:[%s412 + $0x60] sm:$0xff]
        %v560 = vld [vmem:[%s412 + $0x68] sm:$0xff]
        %v561 = vld [vmem:[%s412 + $0x70] sm:$0xff]
        %v562 = vld [vmem:[%s412 + $0x78] sm:$0xff]
        %v563 = vpack.c.bf16 %v548, %v547
        %v564 = vpack.c.bf16 %v550, %v549
        %v565 = vpack.c.bf16 %v552, %v551
        %v566 = vpack.c.bf16 %v554, %v553
        %v567 = vpack.c.bf16 %v556, %v555
        %v568 = vpack.c.bf16 %v558, %v557
        %v569 = vpack.c.bf16 %v560, %v559
        %v570 = vpack.c.bf16 %v562, %v561
        %v571 = vld [vmem:[#allocation2] sm:$0xf]
        %v572 = vld [vmem:[#allocation2 + $0x4] sm:$0xf]
        %v573 = vld [vmem:[#allocation2 + $0x8] sm:$0xf]
        %v574 = vld [vmem:[#allocation2 + $0xc] sm:$0xf]
        %v575 = vld [vmem:[%s2] sm:$0xff]
        %v576 = vld [vmem:[%s2 + $0x8] sm:$0x3]
        %vm577 = vcmask 80896
        %v579 = vsel %vm577, %v531, 0
        %v582 = vsel %vm577, %v532, 0
        %v585 = vsel %vm577, %v533, 0
        %v588 = vsel %vm577, %v534, 0
        %v591 = vsel %vm577, %v535, 0
        %v594 = vsel %vm577, %v536, 0
        %v597 = vsel %vm577, %v537, 0
        %v600 = vsel %vm577, %v538, 0
        %v603 = vsel %vm577, %v539, 0
        %v606 = vsel %vm577, %v540, 0
        %v609 = vsel %vm577, %v541, 0
        %v612 = vsel %vm577, %v542, 0
        %v615 = vsel %vm577, %v543, 0
        %v618 = vsel %vm577, %v544, 0
        %v621 = vsel %vm577, %v545, 0
        %v624 = vsel %vm577, %v546, 0
        %vm626 = vcmask 1041408
        %v628 = vsel %vm626, %v576, 0
        %630 = vmatprep.subr.mxu0 0.0
        %631 = vmatpush1.msra.mxu0 %v575
        %632 = vmatprep.subr.mxu0 0.0
        %633 = vmatpush1.msra.mxu0 %v628
        %634 = vmatprep.subr.mxu0 0.0
        %635 = vmatpush1.msra.mxu0 0.0
        %636 = vmatprep.subr.mxu0 0.0
        %637 = vmatpush1.msra.mxu0 0.0
        %638 = vmatprep.subr.mxu0 0.0
        %639 = vmatpush1.msra.mxu0 0.0
        %640 = vmatprep.subr.mxu0 0.0
        %641 = vmatpush1.msra.mxu0 0.0
        %642 = vmatprep.subr.mxu0 0.0
        %643 = vmatpush1.msra.mxu0 0.0
        %644 = vmatprep.subr.mxu0 0.0
        %645 = vmatpush1.msra.mxu0 0.0
        %646 = vmatprep.subr.mxu0 0.0
        %647 = vmatpush1.msra.mxu0 0.0
        %648 = vmatprep.subr.mxu0 0.0
        %649 = vmatpush1.msra.mxu0 0.0
        %650 = vmatprep.subr.mxu0 0.0
        %651 = vmatpush1.msra.mxu0 0.0
        %652 = vmatprep.subr.mxu0 0.0
        %653 = vmatpush1.msra.mxu0 0.0
        %654 = vmatprep.subr.mxu0 0.0
        %655 = vmatpush1.msra.mxu0 0.0
        %656 = vmatprep.subr.mxu0 0.0
        %657 = vmatpush1.msra.mxu0 0.0
        %658 = vmatprep.subr.mxu0 0.0
        %659 = vmatpush1.msra.mxu0 0.0
        %660 = vmatprep.subr.mxu0 0.0
        %661 = vmatpush1.msra.mxu0 0.0
        %662 = vmatprep.subr.mxu0 0.0
        %663 = vmatpush1.msra.mxu0 0.0
        %664 = vmatprep.subr.mxu0 0.0
        %665 = vmatpush1.msra.mxu0 0.0
        %666 = vmatprep.subr.mxu0 0.0
        %667 = vmatpush1.msra.mxu0 0.0
        %668 = vmatprep.subr.mxu0 0.0
        %669 = vmatpush1.msra.mxu0 0.0
        %670 = vmatprep.subr.mxu0 0.0
        %671 = vmatpush1.msra.mxu0 0.0
        %672 = vmatprep.subr.mxu0 0.0
        %673 = vmatpush1.msra.mxu0 0.0
        %674 = vmatprep.subr.mxu0 0.0
        %675 = vmatpush1.msra.mxu0 0.0
        %676 = vmatprep.subr.mxu0 0.0
        %677 = vmatpush1.msra.mxu0 0.0
        %678 = vmatprep.subr.mxu0 0.0
        %679 = vmatpush1.msra.mxu0 0.0
        %680 = vmatprep.subr.mxu0 0.0
        %681 = vmatpush1.msra.mxu0 0.0
        %682 = vmatprep.subr.mxu0 0.0
        %683 = vmatpush1.msra.mxu0 0.0
        %684 = vmatprep.subr.mxu0 0.0
        %685 = vmatpush1.msra.mxu0 0.0
        %686 = vmatprep.subr.mxu0 0.0
        %687 = vmatpush1.msra.mxu0 0.0
        %688 = vmatprep.subr.mxu0 0.0
        %689 = vmatpush1.msra.mxu0 0.0
        %690 = vmatprep.subr.mxu0 0.0
        %691 = vmatpush1.msra.mxu0 0.0
        %692 = vmatprep.subr.mxu0 0.0
        %693 = vmatpush1.msra.mxu0 0.0
        %694 = vmatprep.mubr.f32.mxu0 0.0
        %695 = vmatmul.mubr.f32.gmra.mrb[0].mxu0 %v579
        %v696 = vpop.f32.mrb[0].mxu0
        %v697 = vadd.f32 0.0, %v696
        %v698 = vpop.f32.mrb[0].mxu0
        %699 = vmatprep.mubr.f32.mxu0 0.0
        %700 = vmatmul.mubr.f32.gmra.mrb[0].mxu0 %v582
        %v701 = vpop.f32.mrb[0].mxu0
        %v702 = vadd.f32 0.0, %v701
        %v703 = vpop.f32.mrb[0].mxu0
        %704 = vmatprep.mubr.f32.mxu0 0.0
        %705 = vmatmul.mubr.f32.gmra.mrb[0].mxu0 %v585
        %v706 = vpop.f32.mrb[0].mxu0
        %v707 = vadd.f32 0.0, %v706
        %v708 = vpop.f32.mrb[0].mxu0
        %709 = vmatprep.mubr.f32.mxu0 0.0
        %710 = vmatmul.mubr.f32.gmra.mrb[0].mxu0 %v588
        %v711 = vpop.f32.mrb[0].mxu0
        %v712 = vadd.f32 0.0, %v711
        %v713 = vpop.f32.mrb[0].mxu0
        %714 = vmatprep.mubr.f32.mxu0 0.0
        %715 = vmatmul.mubr.f32.gmra.mrb[0].mxu0 %v591
        %v716 = vpop.f32.mrb[0].mxu0
        %v717 = vadd.f32 0.0, %v716
        %v718 = vpop.f32.mrb[0].mxu0
        %719 = vmatprep.mubr.f32.mxu0 0.0
        %720 = vmatmul.mubr.f32.gmra.mrb[0].mxu0 %v594
        %v721 = vpop.f32.mrb[0].mxu0
        %v722 = vadd.f32 0.0, %v721
        %v723 = vpop.f32.mrb[0].mxu0
        %724 = vmatprep.mubr.f32.mxu0 0.0
        %725 = vmatmul.mubr.f32.gmra.mrb[0].mxu0 %v597
        %v726 = vpop.f32.mrb[0].mxu0
        %v727 = vadd.f32 0.0, %v726
        %v728 = vpop.f32.mrb[0].mxu0
        %729 = vmatprep.mubr.f32.mxu0 0.0
        %730 = vmatmul.mubr.f32.gmra.mrb[0].mxu0 %v600
        %v731 = vpop.f32.mrb[0].mxu0
        %v732 = vadd.f32 0.0, %v731
        %v733 = vpop.f32.mrb[0].mxu0
        %734 = vmatprep.mubr.f32.mxu0 0.0
        %735 = vmatmul.mubr.f32.gmra.mrb[0].mxu0 %v603
        %v736 = vpop.f32.mrb[0].mxu0
        %v737 = vadd.f32 0.0, %v736
        %v738 = vpop.f32.mrb[0].mxu0
        %739 = vmatprep.mubr.f32.mxu0 0.0
        %740 = vmatmul.mubr.f32.gmra.mrb[0].mxu0 %v606
        %v741 = vpop.f32.mrb[0].mxu0
        %v742 = vadd.f32 0.0, %v741
        %v743 = vpop.f32.mrb[0].mxu0
        %744 = vmatprep.mubr.f32.mxu0 0.0
        %745 = vmatmul.mubr.f32.gmra.mrb[0].mxu0 %v609
        %v746 = vpop.f32.mrb[0].mxu0
        %v747 = vadd.f32 0.0, %v746
        %v748 = vpop.f32.mrb[0].mxu0
        %749 = vmatprep.mubr.f32.mxu0 0.0
        %750 = vmatmul.mubr.f32.gmra.mrb[0].mxu0 %v612
        %v751 = vpop.f32.mrb[0].mxu0
        %v752 = vadd.f32 0.0, %v751
        %v753 = vpop.f32.mrb[0].mxu0
        %754 = vmatprep.mubr.f32.mxu0 0.0
        %755 = vmatmul.mubr.f32.gmra.mrb[0].mxu0 %v615
        %v756 = vpop.f32.mrb[0].mxu0
        %v757 = vadd.f32 0.0, %v756
        %v758 = vpop.f32.mrb[0].mxu0
        %759 = vmatprep.mubr.f32.mxu0 0.0
        %760 = vmatmul.mubr.f32.gmra.mrb[0].mxu0 %v618
        %v761 = vpop.f32.mrb[0].mxu0
        %v762 = vadd.f32 0.0, %v761
        %v763 = vpop.f32.mrb[0].mxu0
        %764 = vmatprep.mubr.f32.mxu0 0.0
        %765 = vmatmul.mubr.f32.gmra.mrb[0].mxu0 %v621
        %v766 = vpop.f32.mrb[0].mxu0
        %v767 = vadd.f32 0.0, %v766
        %v768 = vpop.f32.mrb[0].mxu0
        %769 = vmatprep.mubr.f32.mxu0 0.0
        %770 = vmatmul.mubr.f32.gmra.mrb[0].mxu0 %v624
        %v771 = vpop.f32.mrb[0].mxu0
        %v772 = vadd.f32 0.0, %v771
        %v773 = vpop.f32.mrb[0].mxu0
        %774 = vdwg.mxu0
        %v779 = vunpack.c.l.b16 %v571
        %v780 = vunpack.c.l.b16 %v572
        %v781 = vunpack.c.l.b16 %v573
        %v782 = vunpack.c.l.b16 %v574
        %v783 = vpack.c.b16 %v780, %v779
        %v784 = vpack.c.b16 %v782, %v781
        %vm787 = vcmask 261120
        %v789 = vsel %vm787, %v563, 0
        %v792 = vsel %vm787, %v564, 0
        %v795 = vsel %vm787, %v565, 0
        %v798 = vsel %vm787, %v566, 0
        %v801 = vsel %vm787, %v567, 0
        %v804 = vsel %vm787, %v568, 0
        %v807 = vsel %vm787, %v569, 0
        %v810 = vsel %vm787, %v570, 0
        %812 = vmatprep.subr.bf16.mxu0 0
        %813 = vmatpush1.bf16.msra.mxu0 %v783
        %814 = vmatprep.subr.bf16.mxu0 0
        %815 = vmatpush1.bf16.msra.mxu0 %v784
        %816 = vmatprep.subr.bf16.mxu0 0
        %817 = vmatpush1.bf16.msra.mxu0 0
        %818 = vmatprep.subr.bf16.mxu0 0
        %819 = vmatpush1.bf16.msra.mxu0 0
        %820 = vmatprep.subr.bf16.mxu0 0
        %821 = vmatpush1.bf16.msra.mxu0 0
        %822 = vmatprep.subr.bf16.mxu0 0
        %823 = vmatpush1.bf16.msra.mxu0 0
        %824 = vmatprep.subr.bf16.mxu0 0
        %825 = vmatpush1.bf16.msra.mxu0 0
        %826 = vmatprep.subr.bf16.mxu0 0
        %827 = vmatpush1.bf16.msra.mxu0 0
        %828 = vmatprep.subr.bf16.mxu0 0
        %829 = vmatpush1.bf16.msra.mxu0 0
        %830 = vmatprep.subr.bf16.mxu0 0
        %831 = vmatpush1.bf16.msra.mxu0 0
        %832 = vmatprep.subr.bf16.mxu0 0
        %833 = vmatpush1.bf16.msra.mxu0 0
        %834 = vmatprep.subr.bf16.mxu0 0
        %835 = vmatpush1.bf16.msra.mxu0 0
        %836 = vmatprep.subr.bf16.mxu0 0
        %837 = vmatpush1.bf16.msra.mxu0 0
        %838 = vmatprep.subr.bf16.mxu0 0
        %839 = vmatpush1.bf16.msra.mxu0 0
        %840 = vmatprep.subr.bf16.mxu0 0
        %841 = vmatpush1.bf16.msra.mxu0 0
        %842 = vmatprep.subr.bf16.mxu0 0
        %843 = vmatpush1.bf16.msra.mxu0 0
        %844 = vmatprep.mubr.bf16.mxu0 0
        %845 = vmatmul.mubr.bf16.gmra.mrb[0].mxu0 %v789
        %v846 = vpop.f32.mrb[0].mxu0
        %v847 = vadd.f32 %v697, %v846
        %v848 = vpop.f32.mrb[0].mxu0
        %v849 = vpop.f32.mrb[0].mxu0
        %v850 = vadd.f32 %v702, %v849
        %v851 = vpop.f32.mrb[0].mxu0
        %852 = vmatprep.mubr.bf16.mxu0 0
        %853 = vmatmul.mubr.bf16.gmra.mrb[0].mxu0 %v792
        %v854 = vpop.f32.mrb[0].mxu0
        %v855 = vadd.f32 %v707, %v854
        %v856 = vpop.f32.mrb[0].mxu0
        %v857 = vpop.f32.mrb[0].mxu0
        %v858 = vadd.f32 %v712, %v857
        %v859 = vpop.f32.mrb[0].mxu0
        %860 = vmatprep.mubr.bf16.mxu0 0
        %861 = vmatmul.mubr.bf16.gmra.mrb[0].mxu0 %v795
        %v862 = vpop.f32.mrb[0].mxu0
        %v863 = vadd.f32 %v717, %v862
        %v864 = vpop.f32.mrb[0].mxu0
        %v865 = vpop.f32.mrb[0].mxu0
        %v866 = vadd.f32 %v722, %v865
        %v867 = vpop.f32.mrb[0].mxu0
        %868 = vmatprep.mubr.bf16.mxu0 0
        %869 = vmatmul.mubr.bf16.gmra.mrb[0].mxu0 %v798
        %v870 = vpop.f32.mrb[0].mxu0
        %v871 = vadd.f32 %v727, %v870
        %v872 = vpop.f32.mrb[0].mxu0
        %v873 = vpop.f32.mrb[0].mxu0
        %v874 = vadd.f32 %v732, %v873
        %v875 = vpop.f32.mrb[0].mxu0
        %876 = vmatprep.mubr.bf16.mxu0 0
        %877 = vmatmul.mubr.bf16.gmra.mrb[0].mxu0 %v801
        %v878 = vpop.f32.mrb[0].mxu0
        %v879 = vadd.f32 %v737, %v878
        %v880 = vpop.f32.mrb[0].mxu0
        %v881 = vpop.f32.mrb[0].mxu0
        %v882 = vadd.f32 %v742, %v881
        %v883 = vpop.f32.mrb[0].mxu0
        %884 = vmatprep.mubr.bf16.mxu0 0
        %885 = vmatmul.mubr.bf16.gmra.mrb[0].mxu0 %v804
        %v886 = vpop.f32.mrb[0].mxu0
        %v887 = vadd.f32 %v747, %v886
        %v888 = vpop.f32.mrb[0].mxu0
        %v889 = vpop.f32.mrb[0].mxu0
        %v890 = vadd.f32 %v752, %v889
        %v891 = vpop.f32.mrb[0].mxu0
        %892 = vmatprep.mubr.bf16.mxu0 0
        %893 = vmatmul.mubr.bf16.gmra.mrb[0].mxu0 %v807
        %v894 = vpop.f32.mrb[0].mxu0
        %v895 = vadd.f32 %v757, %v894
        %v896 = vpop.f32.mrb[0].mxu0
        %v897 = vpop.f32.mrb[0].mxu0
        %v898 = vadd.f32 %v762, %v897
        %v899 = vpop.f32.mrb[0].mxu0
        %900 = vmatprep.mubr.bf16.mxu0 0
        %901 = vmatmul.mubr.bf16.gmra.mrb[0].mxu0 %v810
        %v902 = vpop.f32.mrb[0].mxu0
        %v903 = vadd.f32 %v767, %v902
        %v904 = vpop.f32.mrb[0].mxu0
        %v905 = vpop.f32.mrb[0].mxu0
        %v906 = vadd.f32 %v772, %v905
        %v907 = vpop.f32.mrb[0].mxu0
        %908 = vdwg.mxu0
        %vm909 = vcmp.gt.f32.partialorder %v847, 0.0
        %vm910 = vcmp.gt.f32.partialorder %v850, 0.0
        %vm911 = vcmp.gt.f32.partialorder %v855, 0.0
        %vm912 = vcmp.gt.f32.partialorder %v858, 0.0
        %vm913 = vcmp.gt.f32.partialorder %v863, 0.0
        %vm914 = vcmp.gt.f32.partialorder %v866, 0.0
        %vm915 = vcmp.gt.f32.partialorder %v871, 0.0
        %vm916 = vcmp.gt.f32.partialorder %v874, 0.0
        %vm917 = vcmp.gt.f32.partialorder %v879, 0.0
        %vm918 = vcmp.gt.f32.partialorder %v882, 0.0
        %vm919 = vcmp.gt.f32.partialorder %v887, 0.0
        %vm920 = vcmp.gt.f32.partialorder %v890, 0.0
        %vm921 = vcmp.gt.f32.partialorder %v895, 0.0
        %vm922 = vcmp.gt.f32.partialorder %v898, 0.0
        %vm923 = vcmp.gt.f32.partialorder %v903, 0.0
        %vm924 = vcmp.gt.f32.partialorder %v906, 0.0
        %v925 = vmul.f32 %v847, 0.2
        %v926 = vmul.f32 %v850, 0.2
        %v927 = vmul.f32 %v855, 0.2
        %v928 = vmul.f32 %v858, 0.2
        %v929 = vmul.f32 %v863, 0.2
        %v930 = vmul.f32 %v866, 0.2
        %v931 = vmul.f32 %v871, 0.2
        %v932 = vmul.f32 %v874, 0.2
        %v933 = vmul.f32 %v879, 0.2
        %v934 = vmul.f32 %v882, 0.2
        %v935 = vmul.f32 %v887, 0.2
        %v936 = vmul.f32 %v890, 0.2
        %v937 = vmul.f32 %v895, 0.2
        %v938 = vmul.f32 %v898, 0.2
        %v939 = vmul.f32 %v903, 0.2
        %v940 = vmul.f32 %v906, 0.2
        %v941 = vsel %vm909, %v847, %v925
        %v942 = vsel %vm910, %v850, %v926
        %v943 = vsel %vm911, %v855, %v927
        %v944 = vsel %vm912, %v858, %v928
        %v945 = vsel %vm913, %v863, %v929
        %v946 = vsel %vm914, %v866, %v930
        %v947 = vsel %vm915, %v871, %v931
        %v948 = vsel %vm916, %v874, %v932
        %v949 = vsel %vm917, %v879, %v933
        %v950 = vsel %vm918, %v882, %v934
        %v951 = vsel %vm919, %v887, %v935
        %v952 = vsel %vm920, %v890, %v936
        %v953 = vsel %vm921, %v895, %v937
        %v954 = vsel %vm922, %v898, %v938
        %v955 = vsel %vm923, %v903, %v939
        %v956 = vsel %vm924, %v906, %v940
        %v957 = vpack.c.bf16 %v942, %v941
        %v958 = vpack.c.bf16 %v944, %v943
        %v959 = vpack.c.bf16 %v946, %v945
        %v960 = vpack.c.bf16 %v948, %v947
        %v961 = vpack.c.bf16 %v950, %v949
        %v962 = vpack.c.bf16 %v952, %v951
        %v963 = vpack.c.bf16 %v954, %v953
        %v964 = vpack.c.bf16 %v956, %v955
        %v965 = vld [vmem:[#allocation5] sm:$0xff]
        %v966 = vld [vmem:[#allocation5 + $0x8] sm:$0xff]
        %v967 = vld [vmem:[#allocation5 + $0x10] sm:$0xff]
        %v968 = vld [vmem:[#allocation5 + $0x18] sm:$0xff]
        %v969 = vld [vmem:[#allocation5 + $0x20] sm:$0xff]
        %v970 = vld [vmem:[#allocation5 + $0x28] sm:$0xff]
        %v971 = vld [vmem:[#allocation5 + $0x30] sm:$0xff]
        %v972 = vld [vmem:[#allocation5 + $0x38] sm:$0xff]
        %v973 = vld [vmem:[#allocation5 + $0x40] sm:$0xff]
        %v974 = vld [vmem:[#allocation5 + $0x48] sm:$0xff]
        %v975 = vld [vmem:[#allocation5 + $0x50] sm:$0xff]
        %v976 = vld [vmem:[#allocation5 + $0x58] sm:$0xff]
        %v977 = vld [vmem:[#allocation5 + $0x60] sm:$0xff]
        %v978 = vld [vmem:[#allocation5 + $0x68] sm:$0xff]
        %v979 = vld [vmem:[#allocation5 + $0x70] sm:$0xff]
        %v980 = vld [vmem:[#allocation5 + $0x78] sm:$0xff]
        %v997 = vunpack.c.l.b16 %v965
        %v998 = vunpack.c.h.b16 %v965
        %v999 = vunpack.c.l.b16 %v966
        %v1000 = vunpack.c.h.b16 %v966
        %v1001 = vunpack.c.l.b16 %v967
        %v1002 = vunpack.c.h.b16 %v967
        %v1003 = vunpack.c.l.b16 %v968
        %v1004 = vunpack.c.h.b16 %v968
        %v1005 = vunpack.c.l.b16 %v969
        %v1006 = vunpack.c.h.b16 %v969
        %v1007 = vunpack.c.l.b16 %v970
        %v1008 = vunpack.c.h.b16 %v970
        %v1009 = vunpack.c.l.b16 %v971
        %v1010 = vunpack.c.h.b16 %v971
        %v1011 = vunpack.c.l.b16 %v972
        %v1012 = vunpack.c.h.b16 %v972
        %v1013 = vunpack.c.l.b16 %v973
        %v1014 = vunpack.c.h.b16 %v973
        %v1015 = vunpack.c.l.b16 %v974
        %v1016 = vunpack.c.h.b16 %v974
        %v1017 = vunpack.c.l.b16 %v975
        %v1018 = vunpack.c.h.b16 %v975
        %v1019 = vunpack.c.l.b16 %v976
        %v1020 = vunpack.c.h.b16 %v976
        %v1021 = vunpack.c.l.b16 %v977
        %v1022 = vunpack.c.h.b16 %v977
        %v1023 = vunpack.c.l.b16 %v978
        %v1024 = vunpack.c.h.b16 %v978
        %v1025 = vunpack.c.l.b16 %v979
        %v1026 = vunpack.c.h.b16 %v979
        %v1027 = vunpack.c.l.b16 %v980
        %v1028 = vunpack.c.h.b16 %v980
        %v1029 = vpack.c.b16 %v999, %v997
        %v1030 = vpack.c.b16 %v1000, %v998
        %v1031 = vpack.c.b16 %v1003, %v1001
        %v1032 = vpack.c.b16 %v1004, %v1002
        %v1033 = vpack.c.b16 %v1007, %v1005
        %v1034 = vpack.c.b16 %v1008, %v1006
        %v1035 = vpack.c.b16 %v1011, %v1009
        %v1036 = vpack.c.b16 %v1012, %v1010
        %v1037 = vpack.c.b16 %v1015, %v1013
        %v1038 = vpack.c.b16 %v1016, %v1014
        %v1039 = vpack.c.b16 %v1019, %v1017
        %v1040 = vpack.c.b16 %v1020, %v1018
        %v1041 = vpack.c.b16 %v1023, %v1021
        %v1042 = vpack.c.b16 %v1024, %v1022
        %v1043 = vpack.c.b16 %v1027, %v1025
        %v1044 = vpack.c.b16 %v1028, %v1026
        %1061 = vmatprep.subr.bf16.mxu0 %v1030
        %1062 = vmatpush1.bf16.msra.mxu0 %v1029
        %1063 = vmatprep.subr.bf16.mxu0 %v1032
        %1064 = vmatpush1.bf16.msra.mxu0 %v1031
        %1065 = vmatprep.subr.bf16.mxu0 %v1034
        %1066 = vmatpush1.bf16.msra.mxu0 %v1033
        %1067 = vmatprep.subr.bf16.mxu0 %v1036
        %1068 = vmatpush1.bf16.msra.mxu0 %v1035
        %1069 = vmatprep.subr.bf16.mxu0 %v1038
        %1070 = vmatpush1.bf16.msra.mxu0 %v1037
        %1071 = vmatprep.subr.bf16.mxu0 %v1040
        %1072 = vmatpush1.bf16.msra.mxu0 %v1039
        %1073 = vmatprep.subr.bf16.mxu0 %v1042
        %1074 = vmatpush1.bf16.msra.mxu0 %v1041
        %1075 = vmatprep.subr.bf16.mxu0 %v1044
        %1076 = vmatpush1.bf16.msra.mxu0 %v1043
        %1077 = vmatprep.subr.bf16.mxu0 0
        %1078 = vmatpush1.bf16.msra.mxu0 0
        %1079 = vmatprep.subr.bf16.mxu0 0
        %1080 = vmatpush1.bf16.msra.mxu0 0
        %1081 = vmatprep.subr.bf16.mxu0 0
        %1082 = vmatpush1.bf16.msra.mxu0 0
        %1083 = vmatprep.subr.bf16.mxu0 0
        %1084 = vmatpush1.bf16.msra.mxu0 0
        %1085 = vmatprep.subr.bf16.mxu0 0
        %1086 = vmatpush1.bf16.msra.mxu0 0
        %1087 = vmatprep.subr.bf16.mxu0 0
        %1088 = vmatpush1.bf16.msra.mxu0 0
        %1089 = vmatprep.subr.bf16.mxu0 0
        %1090 = vmatpush1.bf16.msra.mxu0 0
        %1091 = vmatprep.subr.bf16.mxu0 0
        %1092 = vmatpush1.bf16.msra.mxu0 0
        %1093 = vmatprep.mubr.bf16.mxu0 0
        %1094 = vmatmul.mubr.bf16.gmra.mrb[0].mxu0 %v957
        %v1095 = vpop.f32.mrb[0].mxu0
        %v1096 = vadd.f32 0.0, %v1095
        %v1097 = vpop.f32.mrb[0].mxu0
        %v1098 = vadd.f32 0.0, %v1097
        %v1099 = vpop.f32.mrb[0].mxu0
        %v1100 = vadd.f32 0.0, %v1099
        %v1101 = vpop.f32.mrb[0].mxu0
        %v1102 = vadd.f32 0.0, %v1101
        %1103 = vmatprep.mubr.bf16.mxu0 0
        %1104 = vmatmul.mubr.bf16.gmra.mrb[0].mxu0 %v958
        %v1105 = vpop.f32.mrb[0].mxu0
        %v1106 = vadd.f32 0.0, %v1105
        %v1107 = vpop.f32.mrb[0].mxu0
        %v1108 = vadd.f32 0.0, %v1107
        %v1109 = vpop.f32.mrb[0].mxu0
        %v1110 = vadd.f32 0.0, %v1109
        %v1111 = vpop.f32.mrb[0].mxu0
        %v1112 = vadd.f32 0.0, %v1111
        %1113 = vmatprep.mubr.bf16.mxu0 0
        %1114 = vmatmul.mubr.bf16.gmra.mrb[0].mxu0 %v959
        %v1115 = vpop.f32.mrb[0].mxu0
        %v1116 = vadd.f32 0.0, %v1115
        %v1117 = vpop.f32.mrb[0].mxu0
        %v1118 = vadd.f32 0.0, %v1117
        %v1119 = vpop.f32.mrb[0].mxu0
        %v1120 = vadd.f32 0.0, %v1119
        %v1121 = vpop.f32.mrb[0].mxu0
        %v1122 = vadd.f32 0.0, %v1121
        %1123 = vmatprep.mubr.bf16.mxu0 0
        %1124 = vmatmul.mubr.bf16.gmra.mrb[0].mxu0 %v960
        %v1125 = vpop.f32.mrb[0].mxu0
        %v1126 = vadd.f32 0.0, %v1125
        %v1127 = vpop.f32.mrb[0].mxu0
        %v1128 = vadd.f32 0.0, %v1127
        %v1129 = vpop.f32.mrb[0].mxu0
        %v1130 = vadd.f32 0.0, %v1129
        %v1131 = vpop.f32.mrb[0].mxu0
        %v1132 = vadd.f32 0.0, %v1131
        %1133 = vmatprep.mubr.bf16.mxu0 0
        %1134 = vmatmul.mubr.bf16.gmra.mrb[0].mxu0 %v961
        %v1135 = vpop.f32.mrb[0].mxu0
        %v1136 = vadd.f32 0.0, %v1135
        %v1137 = vpop.f32.mrb[0].mxu0
        %v1138 = vadd.f32 0.0, %v1137
        %v1139 = vpop.f32.mrb[0].mxu0
        %v1140 = vadd.f32 0.0, %v1139
        %v1141 = vpop.f32.mrb[0].mxu0
        %v1142 = vadd.f32 0.0, %v1141
        %1143 = vmatprep.mubr.bf16.mxu0 0
        %1144 = vmatmul.mubr.bf16.gmra.mrb[0].mxu0 %v962
        %v1145 = vpop.f32.mrb[0].mxu0
        %v1146 = vadd.f32 0.0, %v1145
        %v1147 = vpop.f32.mrb[0].mxu0
        %v1148 = vadd.f32 0.0, %v1147
        %v1149 = vpop.f32.mrb[0].mxu0
        %v1150 = vadd.f32 0.0, %v1149
        %v1151 = vpop.f32.mrb[0].mxu0
        %v1152 = vadd.f32 0.0, %v1151
        %1153 = vmatprep.mubr.bf16.mxu0 0
        %1154 = vmatmul.mubr.bf16.gmra.mrb[0].mxu0 %v963
        %v1155 = vpop.f32.mrb[0].mxu0
        %v1156 = vadd.f32 0.0, %v1155
        %v1157 = vpop.f32.mrb[0].mxu0
        %v1158 = vadd.f32 0.0, %v1157
        %v1159 = vpop.f32.mrb[0].mxu0
        %v1160 = vadd.f32 0.0, %v1159
        %v1161 = vpop.f32.mrb[0].mxu0
        %v1162 = vadd.f32 0.0, %v1161
        %1163 = vmatprep.mubr.bf16.mxu0 0
        %1164 = vmatmul.mubr.bf16.gmra.mrb[0].mxu0 %v964
        %v1165 = vpop.f32.mrb[0].mxu0
        %v1166 = vadd.f32 0.0, %v1165
        %v1167 = vpop.f32.mrb[0].mxu0
        %v1168 = vadd.f32 0.0, %v1167
        %v1169 = vpop.f32.mrb[0].mxu0
        %v1170 = vadd.f32 0.0, %v1169
        %v1171 = vpop.f32.mrb[0].mxu0
        %v1172 = vadd.f32 0.0, %v1171
        %1173 = vdwg.mxu0
        %v1174 = vrot.slane %v1096, 4
        %v1175 = vadd.f32 %v1096, %v1174
        %v1176 = vrot.slane %v1175, 2
        %v1177 = vadd.f32 %v1175, %v1176
        %v1178 = vrot.slane %v1177, 1
        %v1179 = vadd.f32 %v1177, %v1178
        %v1180 = vrot.slane %v1098, 4
        %v1181 = vadd.f32 %v1098, %v1180
        %v1182 = vrot.slane %v1181, 2
        %v1183 = vadd.f32 %v1181, %v1182
        %v1184 = vrot.slane %v1183, 1
        %v1185 = vadd.f32 %v1183, %v1184
        %v1186 = vrot.slane %v1100, 4
        %v1187 = vadd.f32 %v1100, %v1186
        %v1188 = vrot.slane %v1187, 2
        %v1189 = vadd.f32 %v1187, %v1188
        %v1190 = vrot.slane %v1189, 1
        %v1191 = vadd.f32 %v1189, %v1190
        %v1192 = vrot.slane %v1102, 4
        %v1193 = vadd.f32 %v1102, %v1192
        %v1194 = vrot.slane %v1193, 2
        %v1195 = vadd.f32 %v1193, %v1194
        %v1196 = vrot.slane %v1195, 1
        %v1197 = vadd.f32 %v1195, %v1196
        %v1198 = vrot.slane %v1106, 4
        %v1199 = vadd.f32 %v1106, %v1198
        %v1200 = vrot.slane %v1199, 2
        %v1201 = vadd.f32 %v1199, %v1200
        %v1202 = vrot.slane %v1201, 1
        %v1203 = vadd.f32 %v1201, %v1202
        %v1204 = vrot.slane %v1108, 4
        %v1205 = vadd.f32 %v1108, %v1204
        %v1206 = vrot.slane %v1205, 2
        %v1207 = vadd.f32 %v1205, %v1206
        %v1208 = vrot.slane %v1207, 1
        %v1209 = vadd.f32 %v1207, %v1208
        %v1210 = vrot.slane %v1110, 4
        %v1211 = vadd.f32 %v1110, %v1210
        %v1212 = vrot.slane %v1211, 2
        %v1213 = vadd.f32 %v1211, %v1212
        %v1214 = vrot.slane %v1213, 1
        %v1215 = vadd.f32 %v1213, %v1214
        %v1216 = vrot.slane %v1112, 4
        %v1217 = vadd.f32 %v1112, %v1216
        %v1218 = vrot.slane %v1217, 2
        %v1219 = vadd.f32 %v1217, %v1218
        %v1220 = vrot.slane %v1219, 1
        %v1221 = vadd.f32 %v1219, %v1220
        %v1222 = vrot.slane %v1116, 4
        %v1223 = vadd.f32 %v1116, %v1222
        %v1224 = vrot.slane %v1223, 2
        %v1225 = vadd.f32 %v1223, %v1224
        %v1226 = vrot.slane %v1225, 1
        %v1227 = vadd.f32 %v1225, %v1226
        %v1228 = vrot.slane %v1118, 4
        %v1229 = vadd.f32 %v1118, %v1228
        %v1230 = vrot.slane %v1229, 2
        %v1231 = vadd.f32 %v1229, %v1230
        %v1232 = vrot.slane %v1231, 1
        %v1233 = vadd.f32 %v1231, %v1232
        %v1234 = vrot.slane %v1120, 4
        %v1235 = vadd.f32 %v1120, %v1234
        %v1236 = vrot.slane %v1235, 2
        %v1237 = vadd.f32 %v1235, %v1236
        %v1238 = vrot.slane %v1237, 1
        %v1239 = vadd.f32 %v1237, %v1238
        %v1240 = vrot.slane %v1122, 4
        %v1241 = vadd.f32 %v1122, %v1240
        %v1242 = vrot.slane %v1241, 2
        %v1243 = vadd.f32 %v1241, %v1242
        %v1244 = vrot.slane %v1243, 1
        %v1245 = vadd.f32 %v1243, %v1244
        %v1246 = vrot.slane %v1126, 4
        %v1247 = vadd.f32 %v1126, %v1246
        %v1248 = vrot.slane %v1247, 2
        %v1249 = vadd.f32 %v1247, %v1248
        %v1250 = vrot.slane %v1249, 1
        %v1251 = vadd.f32 %v1249, %v1250
        %v1252 = vrot.slane %v1128, 4
        %v1253 = vadd.f32 %v1128, %v1252
        %v1254 = vrot.slane %v1253, 2
        %v1255 = vadd.f32 %v1253, %v1254
        %v1256 = vrot.slane %v1255, 1
        %v1257 = vadd.f32 %v1255, %v1256
        %v1258 = vrot.slane %v1130, 4
        %v1259 = vadd.f32 %v1130, %v1258
        %v1260 = vrot.slane %v1259, 2
        %v1261 = vadd.f32 %v1259, %v1260
        %v1262 = vrot.slane %v1261, 1
        %v1263 = vadd.f32 %v1261, %v1262
        %v1264 = vrot.slane %v1132, 4
        %v1265 = vadd.f32 %v1132, %v1264
        %v1266 = vrot.slane %v1265, 2
        %v1267 = vadd.f32 %v1265, %v1266
        %v1268 = vrot.slane %v1267, 1
        %v1269 = vadd.f32 %v1267, %v1268
        %v1270 = vrot.slane %v1136, 4
        %v1271 = vadd.f32 %v1136, %v1270
        %v1272 = vrot.slane %v1271, 2
        %v1273 = vadd.f32 %v1271, %v1272
        %v1274 = vrot.slane %v1273, 1
        %v1275 = vadd.f32 %v1273, %v1274
        %v1276 = vrot.slane %v1138, 4
        %v1277 = vadd.f32 %v1138, %v1276
        %v1278 = vrot.slane %v1277, 2
        %v1279 = vadd.f32 %v1277, %v1278
        %v1280 = vrot.slane %v1279, 1
        %v1281 = vadd.f32 %v1279, %v1280
        %v1282 = vrot.slane %v1140, 4
        %v1283 = vadd.f32 %v1140, %v1282
        %v1284 = vrot.slane %v1283, 2
        %v1285 = vadd.f32 %v1283, %v1284
        %v1286 = vrot.slane %v1285, 1
        %v1287 = vadd.f32 %v1285, %v1286
        %v1288 = vrot.slane %v1142, 4
        %v1289 = vadd.f32 %v1142, %v1288
        %v1290 = vrot.slane %v1289, 2
        %v1291 = vadd.f32 %v1289, %v1290
        %v1292 = vrot.slane %v1291, 1
        %v1293 = vadd.f32 %v1291, %v1292
        %v1294 = vrot.slane %v1146, 4
        %v1295 = vadd.f32 %v1146, %v1294
        %v1296 = vrot.slane %v1295, 2
        %v1297 = vadd.f32 %v1295, %v1296
        %v1298 = vrot.slane %v1297, 1
        %v1299 = vadd.f32 %v1297, %v1298
        %v1300 = vrot.slane %v1148, 4
        %v1301 = vadd.f32 %v1148, %v1300
        %v1302 = vrot.slane %v1301, 2
        %v1303 = vadd.f32 %v1301, %v1302
        %v1304 = vrot.slane %v1303, 1
        %v1305 = vadd.f32 %v1303, %v1304
        %v1306 = vrot.slane %v1150, 4
        %v1307 = vadd.f32 %v1150, %v1306
        %v1308 = vrot.slane %v1307, 2
        %v1309 = vadd.f32 %v1307, %v1308
        %v1310 = vrot.slane %v1309, 1
        %v1311 = vadd.f32 %v1309, %v1310
        %v1312 = vrot.slane %v1152, 4
        %v1313 = vadd.f32 %v1152, %v1312
        %v1314 = vrot.slane %v1313, 2
        %v1315 = vadd.f32 %v1313, %v1314
        %v1316 = vrot.slane %v1315, 1
        %v1317 = vadd.f32 %v1315, %v1316
        %v1318 = vrot.slane %v1156, 4
        %v1319 = vadd.f32 %v1156, %v1318
        %v1320 = vrot.slane %v1319, 2
        %v1321 = vadd.f32 %v1319, %v1320
        %v1322 = vrot.slane %v1321, 1
        %v1323 = vadd.f32 %v1321, %v1322
        %v1324 = vrot.slane %v1158, 4
        %v1325 = vadd.f32 %v1158, %v1324
        %v1326 = vrot.slane %v1325, 2
        %v1327 = vadd.f32 %v1325, %v1326
        %v1328 = vrot.slane %v1327, 1
        %v1329 = vadd.f32 %v1327, %v1328
        %v1330 = vrot.slane %v1160, 4
        %v1331 = vadd.f32 %v1160, %v1330
        %v1332 = vrot.slane %v1331, 2
        %v1333 = vadd.f32 %v1331, %v1332
        %v1334 = vrot.slane %v1333, 1
        %v1335 = vadd.f32 %v1333, %v1334
        %v1336 = vrot.slane %v1162, 4
        %v1337 = vadd.f32 %v1162, %v1336
        %v1338 = vrot.slane %v1337, 2
        %v1339 = vadd.f32 %v1337, %v1338
        %v1340 = vrot.slane %v1339, 1
        %v1341 = vadd.f32 %v1339, %v1340
        %v1342 = vrot.slane %v1166, 4
        %v1343 = vadd.f32 %v1166, %v1342
        %v1344 = vrot.slane %v1343, 2
        %v1345 = vadd.f32 %v1343, %v1344
        %v1346 = vrot.slane %v1345, 1
        %v1347 = vadd.f32 %v1345, %v1346
        %v1348 = vrot.slane %v1168, 4
        %v1349 = vadd.f32 %v1168, %v1348
        %v1350 = vrot.slane %v1349, 2
        %v1351 = vadd.f32 %v1349, %v1350
        %v1352 = vrot.slane %v1351, 1
        %v1353 = vadd.f32 %v1351, %v1352
        %v1354 = vrot.slane %v1170, 4
        %v1355 = vadd.f32 %v1170, %v1354
        %v1356 = vrot.slane %v1355, 2
        %v1357 = vadd.f32 %v1355, %v1356
        %v1358 = vrot.slane %v1357, 1
        %v1359 = vadd.f32 %v1357, %v1358
        %v1360 = vrot.slane %v1172, 4
        %v1361 = vadd.f32 %v1172, %v1360
        %v1362 = vrot.slane %v1361, 2
        %v1363 = vadd.f32 %v1361, %v1362
        %v1364 = vrot.slane %v1363, 1
        %v1365 = vadd.f32 %v1363, %v1364
        %v1366 = vmul.f32 %v1179, 0.125
        %v1367 = vmul.f32 %v1185, 0.125
        %v1368 = vmul.f32 %v1191, 0.125
        %v1369 = vmul.f32 %v1197, 0.125
        %v1370 = vmul.f32 %v1203, 0.125
        %v1371 = vmul.f32 %v1209, 0.125
        %v1372 = vmul.f32 %v1215, 0.125
        %v1373 = vmul.f32 %v1221, 0.125
        %v1374 = vmul.f32 %v1227, 0.125
        %v1375 = vmul.f32 %v1233, 0.125
        %v1376 = vmul.f32 %v1239, 0.125
        %v1377 = vmul.f32 %v1245, 0.125
        %v1378 = vmul.f32 %v1251, 0.125
        %v1379 = vmul.f32 %v1257, 0.125
        %v1380 = vmul.f32 %v1263, 0.125
        %v1381 = vmul.f32 %v1269, 0.125
        %v1382 = vmul.f32 %v1275, 0.125
        %v1383 = vmul.f32 %v1281, 0.125
        %v1384 = vmul.f32 %v1287, 0.125
        %v1385 = vmul.f32 %v1293, 0.125
        %v1386 = vmul.f32 %v1299, 0.125
        %v1387 = vmul.f32 %v1305, 0.125
        %v1388 = vmul.f32 %v1311, 0.125
        %v1389 = vmul.f32 %v1317, 0.125
        %v1390 = vmul.f32 %v1323, 0.125
        %v1391 = vmul.f32 %v1329, 0.125
        %v1392 = vmul.f32 %v1335, 0.125
        %v1393 = vmul.f32 %v1341, 0.125
        %v1394 = vmul.f32 %v1347, 0.125
        %v1395 = vmul.f32 %v1353, 0.125
        %v1396 = vmul.f32 %v1359, 0.125
        %v1397 = vmul.f32 %v1365, 0.125
        %v1398 = vsub.f32 %v1096, %v1366
        %v1399 = vsub.f32 %v1098, %v1367
        %v1400 = vsub.f32 %v1100, %v1368
        %v1401 = vsub.f32 %v1102, %v1369
        %v1402 = vsub.f32 %v1106, %v1370
        %v1403 = vsub.f32 %v1108, %v1371
        %v1404 = vsub.f32 %v1110, %v1372
        %v1405 = vsub.f32 %v1112, %v1373
        %v1406 = vsub.f32 %v1116, %v1374
        %v1407 = vsub.f32 %v1118, %v1375
        %v1408 = vsub.f32 %v1120, %v1376
        %v1409 = vsub.f32 %v1122, %v1377
        %v1410 = vsub.f32 %v1126, %v1378
        %v1411 = vsub.f32 %v1128, %v1379
        %v1412 = vsub.f32 %v1130, %v1380
        %v1413 = vsub.f32 %v1132, %v1381
        %v1414 = vsub.f32 %v1136, %v1382
        %v1415 = vsub.f32 %v1138, %v1383
        %v1416 = vsub.f32 %v1140, %v1384
        %v1417 = vsub.f32 %v1142, %v1385
        %v1418 = vsub.f32 %v1146, %v1386
        %v1419 = vsub.f32 %v1148, %v1387
        %v1420 = vsub.f32 %v1150, %v1388
        %v1421 = vsub.f32 %v1152, %v1389
        %v1422 = vsub.f32 %v1156, %v1390
        %v1423 = vsub.f32 %v1158, %v1391
        %v1424 = vsub.f32 %v1160, %v1392
        %v1425 = vsub.f32 %v1162, %v1393
        %v1426 = vsub.f32 %v1166, %v1394
        %v1427 = vsub.f32 %v1168, %v1395
        %v1428 = vsub.f32 %v1170, %v1396
        %v1429 = vsub.f32 %v1172, %v1397
        %v1430 = vmul.f32 %v1398, %v1398
        %v1431 = vmul.f32 %v1399, %v1399
        %v1432 = vmul.f32 %v1400, %v1400
        %v1433 = vmul.f32 %v1401, %v1401
        %v1434 = vmul.f32 %v1402, %v1402
        %v1435 = vmul.f32 %v1403, %v1403
        %v1436 = vmul.f32 %v1404, %v1404
        %v1437 = vmul.f32 %v1405, %v1405
        %v1438 = vmul.f32 %v1406, %v1406
        %v1439 = vmul.f32 %v1407, %v1407
        %v1440 = vmul.f32 %v1408, %v1408
        %v1441 = vmul.f32 %v1409, %v1409
        %v1442 = vmul.f32 %v1410, %v1410
        %v1443 = vmul.f32 %v1411, %v1411
        %v1444 = vmul.f32 %v1412, %v1412
        %v1445 = vmul.f32 %v1413, %v1413
        %v1446 = vmul.f32 %v1414, %v1414
        %v1447 = vmul.f32 %v1415, %v1415
        %v1448 = vmul.f32 %v1416, %v1416
        %v1449 = vmul.f32 %v1417, %v1417
        %v1450 = vmul.f32 %v1418, %v1418
        %v1451 = vmul.f32 %v1419, %v1419
        %v1452 = vmul.f32 %v1420, %v1420
        %v1453 = vmul.f32 %v1421, %v1421
        %v1454 = vmul.f32 %v1422, %v1422
        %v1455 = vmul.f32 %v1423, %v1423
        %v1456 = vmul.f32 %v1424, %v1424
        %v1457 = vmul.f32 %v1425, %v1425
        %v1458 = vmul.f32 %v1426, %v1426
        %v1459 = vmul.f32 %v1427, %v1427
        %v1460 = vmul.f32 %v1428, %v1428
        %v1461 = vmul.f32 %v1429, %v1429
        %v1462 = vrot.slane %v1430, 4
        %v1463 = vadd.f32 %v1430, %v1462
        %v1464 = vrot.slane %v1463, 2
        %v1465 = vadd.f32 %v1463, %v1464
        %v1466 = vrot.slane %v1465, 1
        %v1467 = vadd.f32 %v1465, %v1466
        %v1468 = vrot.slane %v1431, 4
        %v1469 = vadd.f32 %v1431, %v1468
        %v1470 = vrot.slane %v1469, 2
        %v1471 = vadd.f32 %v1469, %v1470
        %v1472 = vrot.slane %v1471, 1
        %v1473 = vadd.f32 %v1471, %v1472
        %v1474 = vrot.slane %v1432, 4
        %v1475 = vadd.f32 %v1432, %v1474
        %v1476 = vrot.slane %v1475, 2
        %v1477 = vadd.f32 %v1475, %v1476
        %v1478 = vrot.slane %v1477, 1
        %v1479 = vadd.f32 %v1477, %v1478
        %v1480 = vrot.slane %v1433, 4
        %v1481 = vadd.f32 %v1433, %v1480
        %v1482 = vrot.slane %v1481, 2
        %v1483 = vadd.f32 %v1481, %v1482
        %v1484 = vrot.slane %v1483, 1
        %v1485 = vadd.f32 %v1483, %v1484
        %v1486 = vrot.slane %v1434, 4
        %v1487 = vadd.f32 %v1434, %v1486
        %v1488 = vrot.slane %v1487, 2
        %v1489 = vadd.f32 %v1487, %v1488
        %v1490 = vrot.slane %v1489, 1
        %v1491 = vadd.f32 %v1489, %v1490
        %v1492 = vrot.slane %v1435, 4
        %v1493 = vadd.f32 %v1435, %v1492
        %v1494 = vrot.slane %v1493, 2
        %v1495 = vadd.f32 %v1493, %v1494
        %v1496 = vrot.slane %v1495, 1
        %v1497 = vadd.f32 %v1495, %v1496
        %v1498 = vrot.slane %v1436, 4
        %v1499 = vadd.f32 %v1436, %v1498
        %v1500 = vrot.slane %v1499, 2
        %v1501 = vadd.f32 %v1499, %v1500
        %v1502 = vrot.slane %v1501, 1
        %v1503 = vadd.f32 %v1501, %v1502
        %v1504 = vrot.slane %v1437, 4
        %v1505 = vadd.f32 %v1437, %v1504
        %v1506 = vrot.slane %v1505, 2
        %v1507 = vadd.f32 %v1505, %v1506
        %v1508 = vrot.slane %v1507, 1
        %v1509 = vadd.f32 %v1507, %v1508
        %v1510 = vrot.slane %v1438, 4
        %v1511 = vadd.f32 %v1438, %v1510
        %v1512 = vrot.slane %v1511, 2
        %v1513 = vadd.f32 %v1511, %v1512
        %v1514 = vrot.slane %v1513, 1
        %v1515 = vadd.f32 %v1513, %v1514
        %v1516 = vrot.slane %v1439, 4
        %v1517 = vadd.f32 %v1439, %v1516
        %v1518 = vrot.slane %v1517, 2
        %v1519 = vadd.f32 %v1517, %v1518
        %v1520 = vrot.slane %v1519, 1
        %v1521 = vadd.f32 %v1519, %v1520
        %v1522 = vrot.slane %v1440, 4
        %v1523 = vadd.f32 %v1440, %v1522
        %v1524 = vrot.slane %v1523, 2
        %v1525 = vadd.f32 %v1523, %v1524
        %v1526 = vrot.slane %v1525, 1
        %v1527 = vadd.f32 %v1525, %v1526
        %v1528 = vrot.slane %v1441, 4
        %v1529 = vadd.f32 %v1441, %v1528
        %v1530 = vrot.slane %v1529, 2
        %v1531 = vadd.f32 %v1529, %v1530
        %v1532 = vrot.slane %v1531, 1
        %v1533 = vadd.f32 %v1531, %v1532
        %v1534 = vrot.slane %v1442, 4
        %v1535 = vadd.f32 %v1442, %v1534
        %v1536 = vrot.slane %v1535, 2
        %v1537 = vadd.f32 %v1535, %v1536
        %v1538 = vrot.slane %v1537, 1
        %v1539 = vadd.f32 %v1537, %v1538
        %v1540 = vrot.slane %v1443, 4
        %v1541 = vadd.f32 %v1443, %v1540
        %v1542 = vrot.slane %v1541, 2
        %v1543 = vadd.f32 %v1541, %v1542
        %v1544 = vrot.slane %v1543, 1
        %v1545 = vadd.f32 %v1543, %v1544
        %v1546 = vrot.slane %v1444, 4
        %v1547 = vadd.f32 %v1444, %v1546
        %v1548 = vrot.slane %v1547, 2
        %v1549 = vadd.f32 %v1547, %v1548
        %v1550 = vrot.slane %v1549, 1
        %v1551 = vadd.f32 %v1549, %v1550
        %v1552 = vrot.slane %v1445, 4
        %v1553 = vadd.f32 %v1445, %v1552
        %v1554 = vrot.slane %v1553, 2
        %v1555 = vadd.f32 %v1553, %v1554
        %v1556 = vrot.slane %v1555, 1
        %v1557 = vadd.f32 %v1555, %v1556
        %v1558 = vrot.slane %v1446, 4
        %v1559 = vadd.f32 %v1446, %v1558
        %v1560 = vrot.slane %v1559, 2
        %v1561 = vadd.f32 %v1559, %v1560
        %v1562 = vrot.slane %v1561, 1
        %v1563 = vadd.f32 %v1561, %v1562
        %v1564 = vrot.slane %v1447, 4
        %v1565 = vadd.f32 %v1447, %v1564
        %v1566 = vrot.slane %v1565, 2
        %v1567 = vadd.f32 %v1565, %v1566
        %v1568 = vrot.slane %v1567, 1
        %v1569 = vadd.f32 %v1567, %v1568
        %v1570 = vrot.slane %v1448, 4
        %v1571 = vadd.f32 %v1448, %v1570
        %v1572 = vrot.slane %v1571, 2
        %v1573 = vadd.f32 %v1571, %v1572
        %v1574 = vrot.slane %v1573, 1
        %v1575 = vadd.f32 %v1573, %v1574
        %v1576 = vrot.slane %v1449, 4
        %v1577 = vadd.f32 %v1449, %v1576
        %v1578 = vrot.slane %v1577, 2
        %v1579 = vadd.f32 %v1577, %v1578
        %v1580 = vrot.slane %v1579, 1
        %v1581 = vadd.f32 %v1579, %v1580
        %v1582 = vrot.slane %v1450, 4
        %v1583 = vadd.f32 %v1450, %v1582
        %v1584 = vrot.slane %v1583, 2
        %v1585 = vadd.f32 %v1583, %v1584
        %v1586 = vrot.slane %v1585, 1
        %v1587 = vadd.f32 %v1585, %v1586
        %v1588 = vrot.slane %v1451, 4
        %v1589 = vadd.f32 %v1451, %v1588
        %v1590 = vrot.slane %v1589, 2
        %v1591 = vadd.f32 %v1589, %v1590
        %v1592 = vrot.slane %v1591, 1
        %v1593 = vadd.f32 %v1591, %v1592
        %v1594 = vrot.slane %v1452, 4
        %v1595 = vadd.f32 %v1452, %v1594
        %v1596 = vrot.slane %v1595, 2
        %v1597 = vadd.f32 %v1595, %v1596
        %v1598 = vrot.slane %v1597, 1
        %v1599 = vadd.f32 %v1597, %v1598
        %v1600 = vrot.slane %v1453, 4
        %v1601 = vadd.f32 %v1453, %v1600
        %v1602 = vrot.slane %v1601, 2
        %v1603 = vadd.f32 %v1601, %v1602
        %v1604 = vrot.slane %v1603, 1
        %v1605 = vadd.f32 %v1603, %v1604
        %v1606 = vrot.slane %v1454, 4
        %v1607 = vadd.f32 %v1454, %v1606
        %v1608 = vrot.slane %v1607, 2
        %v1609 = vadd.f32 %v1607, %v1608
        %v1610 = vrot.slane %v1609, 1
        %v1611 = vadd.f32 %v1609, %v1610
        %v1612 = vrot.slane %v1455, 4
        %v1613 = vadd.f32 %v1455, %v1612
        %v1614 = vrot.slane %v1613, 2
        %v1615 = vadd.f32 %v1613, %v1614
        %v1616 = vrot.slane %v1615, 1
        %v1617 = vadd.f32 %v1615, %v1616
        %v1618 = vrot.slane %v1456, 4
        %v1619 = vadd.f32 %v1456, %v1618
        %v1620 = vrot.slane %v1619, 2
        %v1621 = vadd.f32 %v1619, %v1620
        %v1622 = vrot.slane %v1621, 1
        %v1623 = vadd.f32 %v1621, %v1622
        %v1624 = vrot.slane %v1457, 4
        %v1625 = vadd.f32 %v1457, %v1624
        %v1626 = vrot.slane %v1625, 2
        %v1627 = vadd.f32 %v1625, %v1626
        %v1628 = vrot.slane %v1627, 1
        %v1629 = vadd.f32 %v1627, %v1628
        %v1630 = vrot.slane %v1458, 4
        %v1631 = vadd.f32 %v1458, %v1630
        %v1632 = vrot.slane %v1631, 2
        %v1633 = vadd.f32 %v1631, %v1632
        %v1634 = vrot.slane %v1633, 1
        %v1635 = vadd.f32 %v1633, %v1634
        %v1636 = vrot.slane %v1459, 4
        %v1637 = vadd.f32 %v1459, %v1636
        %v1638 = vrot.slane %v1637, 2
        %v1639 = vadd.f32 %v1637, %v1638
        %v1640 = vrot.slane %v1639, 1
        %v1641 = vadd.f32 %v1639, %v1640
        %v1642 = vrot.slane %v1460, 4
        %v1643 = vadd.f32 %v1460, %v1642
        %v1644 = vrot.slane %v1643, 2
        %v1645 = vadd.f32 %v1643, %v1644
        %v1646 = vrot.slane %v1645, 1
        %v1647 = vadd.f32 %v1645, %v1646
        %v1648 = vrot.slane %v1461, 4
        %v1649 = vadd.f32 %v1461, %v1648
        %v1650 = vrot.slane %v1649, 2
        %v1651 = vadd.f32 %v1649, %v1650
        %v1652 = vrot.slane %v1651, 1
        %v1653 = vadd.f32 %v1651, %v1652
        %v1654 = vmul.f32 %v1467, 0.125
        %v1655 = vmul.f32 %v1473, 0.125
        %v1656 = vmul.f32 %v1479, 0.125
        %v1657 = vmul.f32 %v1485, 0.125
        %v1658 = vmul.f32 %v1491, 0.125
        %v1659 = vmul.f32 %v1497, 0.125
        %v1660 = vmul.f32 %v1503, 0.125
        %v1661 = vmul.f32 %v1509, 0.125
        %v1662 = vmul.f32 %v1515, 0.125
        %v1663 = vmul.f32 %v1521, 0.125
        %v1664 = vmul.f32 %v1527, 0.125
        %v1665 = vmul.f32 %v1533, 0.125
        %v1666 = vmul.f32 %v1539, 0.125
        %v1667 = vmul.f32 %v1545, 0.125
        %v1668 = vmul.f32 %v1551, 0.125
        %v1669 = vmul.f32 %v1557, 0.125
        %v1670 = vmul.f32 %v1563, 0.125
        %v1671 = vmul.f32 %v1569, 0.125
        %v1672 = vmul.f32 %v1575, 0.125
        %v1673 = vmul.f32 %v1581, 0.125
        %v1674 = vmul.f32 %v1587, 0.125
        %v1675 = vmul.f32 %v1593, 0.125
        %v1676 = vmul.f32 %v1599, 0.125
        %v1677 = vmul.f32 %v1605, 0.125
        %v1678 = vmul.f32 %v1611, 0.125
        %v1679 = vmul.f32 %v1617, 0.125
        %v1680 = vmul.f32 %v1623, 0.125
        %v1681 = vmul.f32 %v1629, 0.125
        %v1682 = vmul.f32 %v1635, 0.125
        %v1683 = vmul.f32 %v1641, 0.125
        %v1684 = vmul.f32 %v1647, 0.125
        %v1685 = vmul.f32 %v1653, 0.125
        %v1686 = vadd.f32 %v1654, 0.8
        %v1687 = vadd.f32 %v1655, 0.8
        %v1688 = vadd.f32 %v1656, 0.8
        %v1689 = vadd.f32 %v1657, 0.8
        %v1690 = vadd.f32 %v1658, 0.8
        %v1691 = vadd.f32 %v1659, 0.8
        %v1692 = vadd.f32 %v1660, 0.8
        %v1693 = vadd.f32 %v1661, 0.8
        %v1694 = vadd.f32 %v1662, 0.8
        %v1695 = vadd.f32 %v1663, 0.8
        %v1696 = vadd.f32 %v1664, 0.8
        %v1697 = vadd.f32 %v1665, 0.8
        %v1698 = vadd.f32 %v1666, 0.8
        %v1699 = vadd.f32 %v1667, 0.8
        %v1700 = vadd.f32 %v1668, 0.8
        %v1701 = vadd.f32 %v1669, 0.8
        %v1702 = vadd.f32 %v1670, 0.8
        %v1703 = vadd.f32 %v1671, 0.8
        %v1704 = vadd.f32 %v1672, 0.8
        %v1705 = vadd.f32 %v1673, 0.8
        %v1706 = vadd.f32 %v1674, 0.8
        %v1707 = vadd.f32 %v1675, 0.8
        %v1708 = vadd.f32 %v1676, 0.8
        %v1709 = vadd.f32 %v1677, 0.8
        %v1710 = vadd.f32 %v1678, 0.8
        %v1711 = vadd.f32 %v1679, 0.8
        %v1712 = vadd.f32 %v1680, 0.8
        %v1713 = vadd.f32 %v1681, 0.8
        %v1714 = vadd.f32 %v1682, 0.8
        %v1715 = vadd.f32 %v1683, 0.8
        %v1716 = vadd.f32 %v1684, 0.8
        %v1717 = vadd.f32 %v1685, 0.8
        %v1718 = vrsqrt.pop %v1686
        %v1719 = vrsqrt.pop %v1687
        %v1720 = vrsqrt.pop %v1688
        %v1721 = vrsqrt.pop %v1689
        %v1722 = vrsqrt.pop %v1690
        %v1723 = vrsqrt.pop %v1691
        %v1724 = vrsqrt.pop %v1692
        %v1725 = vrsqrt.pop %v1693
        %v1726 = vrsqrt.pop %v1694
        %v1727 = vrsqrt.pop %v1695
        %v1728 = vrsqrt.pop %v1696
        %v1729 = vrsqrt.pop %v1697
        %v1730 = vrsqrt.pop %v1698
        %v1731 = vrsqrt.pop %v1699
        %v1732 = vrsqrt.pop %v1700
        %v1733 = vrsqrt.pop %v1701
        %v1734 = vrsqrt.pop %v1702
        %v1735 = vrsqrt.pop %v1703
        %v1736 = vrsqrt.pop %v1704
        %v1737 = vrsqrt.pop %v1705
        %v1738 = vrsqrt.pop %v1706
        %v1739 = vrsqrt.pop %v1707
        %v1740 = vrsqrt.pop %v1708
        %v1741 = vrsqrt.pop %v1709
        %v1742 = vrsqrt.pop %v1710
        %v1743 = vrsqrt.pop %v1711
        %v1744 = vrsqrt.pop %v1712
        %v1745 = vrsqrt.pop %v1713
        %v1746 = vrsqrt.pop %v1714
        %v1747 = vrsqrt.pop %v1715
        %v1748 = vrsqrt.pop %v1716
        %v1749 = vrsqrt.pop %v1717
        %v1750 = vmul.f32 %v1398, %v1718
        %v1751 = vmul.f32 %v1399, %v1719
        %v1752 = vmul.f32 %v1400, %v1720
        %v1753 = vmul.f32 %v1401, %v1721
        %v1754 = vmul.f32 %v1402, %v1722
        %v1755 = vmul.f32 %v1403, %v1723
        %v1756 = vmul.f32 %v1404, %v1724
        %v1757 = vmul.f32 %v1405, %v1725
        %v1758 = vmul.f32 %v1406, %v1726
        %v1759 = vmul.f32 %v1407, %v1727
        %v1760 = vmul.f32 %v1408, %v1728
        %v1761 = vmul.f32 %v1409, %v1729
        %v1762 = vmul.f32 %v1410, %v1730
        %v1763 = vmul.f32 %v1411, %v1731
        %v1764 = vmul.f32 %v1412, %v1732
        %v1765 = vmul.f32 %v1413, %v1733
        %v1766 = vmul.f32 %v1414, %v1734
        %v1767 = vmul.f32 %v1415, %v1735
        %v1768 = vmul.f32 %v1416, %v1736
        %v1769 = vmul.f32 %v1417, %v1737
        %v1770 = vmul.f32 %v1418, %v1738
        %v1771 = vmul.f32 %v1419, %v1739
        %v1772 = vmul.f32 %v1420, %v1740
        %v1773 = vmul.f32 %v1421, %v1741
        %v1774 = vmul.f32 %v1422, %v1742
        %v1775 = vmul.f32 %v1423, %v1743
        %v1776 = vmul.f32 %v1424, %v1744
        %v1777 = vmul.f32 %v1425, %v1745
        %v1778 = vmul.f32 %v1426, %v1746
        %v1779 = vmul.f32 %v1427, %v1747
        %v1780 = vmul.f32 %v1428, %v1748
        %v1781 = vmul.f32 %v1429, %v1749
        %v1783 = vlaneseq
        %v1784 = vshrl.u32 %v1783, 7
        %v1785 = vsub.s32 0, %v1784
        %v1786 = vrot.slane %v416, %v1785
        %v1787 = vlaneseq
        %v1788 = vshrl.u32 %v1787, 7
        %v1789 = vsub.s32 1, %v1788
        %v1790 = vrot.slane %v416, %v1789
        %v1793 = vmul.f32 %v1750, %v1786
        %v1794 = vmul.f32 %v1751, %v1790
        %v1795 = vmul.f32 %v1752, %v1786
        %v1796 = vmul.f32 %v1753, %v1790
        %v1797 = vmul.f32 %v1754, %v1786
        %v1798 = vmul.f32 %v1755, %v1790
        %v1799 = vmul.f32 %v1756, %v1786
        %v1800 = vmul.f32 %v1757, %v1790
        %v1801 = vmul.f32 %v1758, %v1786
        %v1802 = vmul.f32 %v1759, %v1790
        %v1803 = vmul.f32 %v1760, %v1786
        %v1804 = vmul.f32 %v1761, %v1790
        %v1805 = vmul.f32 %v1762, %v1786
        %v1806 = vmul.f32 %v1763, %v1790
        %v1807 = vmul.f32 %v1764, %v1786
        %v1808 = vmul.f32 %v1765, %v1790
        %v1809 = vmul.f32 %v1766, %v1786
        %v1810 = vmul.f32 %v1767, %v1790
        %v1811 = vmul.f32 %v1768, %v1786
        %v1812 = vmul.f32 %v1769, %v1790
        %v1813 = vmul.f32 %v1770, %v1786
        %v1814 = vmul.f32 %v1771, %v1790
        %v1815 = vmul.f32 %v1772, %v1786
        %v1816 = vmul.f32 %v1773, %v1790
        %v1817 = vmul.f32 %v1774, %v1786
        %v1818 = vmul.f32 %v1775, %v1790
        %v1819 = vmul.f32 %v1776, %v1786
        %v1820 = vmul.f32 %v1777, %v1790
        %v1821 = vmul.f32 %v1778, %v1786
        %v1822 = vmul.f32 %v1779, %v1790
        %v1823 = vmul.f32 %v1780, %v1786
        %v1824 = vmul.f32 %v1781, %v1790
        %v1826 = vlaneseq
        %v1827 = vshrl.u32 %v1826, 7
        %v1828 = vsub.s32 0, %v1827
        %v1829 = vrot.slane %v418, %v1828
        %v1830 = vlaneseq
        %v1831 = vshrl.u32 %v1830, 7
        %v1832 = vsub.s32 1, %v1831
        %v1833 = vrot.slane %v418, %v1832
        %v1836 = vadd.f32 %v1793, %v1829
        %v1837 = vadd.f32 %v1794, %v1833
        %v1838 = vadd.f32 %v1795, %v1829
        %v1839 = vadd.f32 %v1796, %v1833
        %v1840 = vadd.f32 %v1797, %v1829
        %v1841 = vadd.f32 %v1798, %v1833
        %v1842 = vadd.f32 %v1799, %v1829
        %v1843 = vadd.f32 %v1800, %v1833
        %v1844 = vadd.f32 %v1801, %v1829
        %v1845 = vadd.f32 %v1802, %v1833
        %v1846 = vadd.f32 %v1803, %v1829
        %v1847 = vadd.f32 %v1804, %v1833
        %v1848 = vadd.f32 %v1805, %v1829
        %v1849 = vadd.f32 %v1806, %v1833
        %v1850 = vadd.f32 %v1807, %v1829
        %v1851 = vadd.f32 %v1808, %v1833
        %v1852 = vadd.f32 %v1809, %v1829
        %v1853 = vadd.f32 %v1810, %v1833
        %v1854 = vadd.f32 %v1811, %v1829
        %v1855 = vadd.f32 %v1812, %v1833
        %v1856 = vadd.f32 %v1813, %v1829
        %v1857 = vadd.f32 %v1814, %v1833
        %v1858 = vadd.f32 %v1815, %v1829
        %v1859 = vadd.f32 %v1816, %v1833
        %v1860 = vadd.f32 %v1817, %v1829
        %v1861 = vadd.f32 %v1818, %v1833
        %v1862 = vadd.f32 %v1819, %v1829
        %v1863 = vadd.f32 %v1820, %v1833
        %v1864 = vadd.f32 %v1821, %v1829
        %v1865 = vadd.f32 %v1822, %v1833
        %v1866 = vadd.f32 %v1823, %v1829
        %v1867 = vadd.f32 %v1824, %v1833
        %vm1868 = vcmp.gt.f32.partialorder %v1836, 0.0
        %vm1869 = vcmp.gt.f32.partialorder %v1837, 0.0
        %vm1870 = vcmp.gt.f32.partialorder %v1838, 0.0
        %vm1871 = vcmp.gt.f32.partialorder %v1839, 0.0
        %vm1872 = vcmp.gt.f32.partialorder %v1840, 0.0
        %vm1873 = vcmp.gt.f32.partialorder %v1841, 0.0
        %vm1874 = vcmp.gt.f32.partialorder %v1842, 0.0
        %vm1875 = vcmp.gt.f32.partialorder %v1843, 0.0
        %vm1876 = vcmp.gt.f32.partialorder %v1844, 0.0
        %vm1877 = vcmp.gt.f32.partialorder %v1845, 0.0
        %vm1878 = vcmp.gt.f32.partialorder %v1846, 0.0
        %vm1879 = vcmp.gt.f32.partialorder %v1847, 0.0
        %vm1880 = vcmp.gt.f32.partialorder %v1848, 0.0
        %vm1881 = vcmp.gt.f32.partialorder %v1849, 0.0
        %vm1882 = vcmp.gt.f32.partialorder %v1850, 0.0
        %vm1883 = vcmp.gt.f32.partialorder %v1851, 0.0
        %vm1884 = vcmp.gt.f32.partialorder %v1852, 0.0
        %vm1885 = vcmp.gt.f32.partialorder %v1853, 0.0
        %vm1886 = vcmp.gt.f32.partialorder %v1854, 0.0
        %vm1887 = vcmp.gt.f32.partialorder %v1855, 0.0
        %vm1888 = vcmp.gt.f32.partialorder %v1856, 0.0
        %vm1889 = vcmp.gt.f32.partialorder %v1857, 0.0
        %vm1890 = vcmp.gt.f32.partialorder %v1858, 0.0
        %vm1891 = vcmp.gt.f32.partialorder %v1859, 0.0
        %vm1892 = vcmp.gt.f32.partialorder %v1860, 0.0
        %vm1893 = vcmp.gt.f32.partialorder %v1861, 0.0
        %vm1894 = vcmp.gt.f32.partialorder %v1862, 0.0
        %vm1895 = vcmp.gt.f32.partialorder %v1863, 0.0
        %vm1896 = vcmp.gt.f32.partialorder %v1864, 0.0
        %vm1897 = vcmp.gt.f32.partialorder %v1865, 0.0
        %vm1898 = vcmp.gt.f32.partialorder %v1866, 0.0
        %vm1899 = vcmp.gt.f32.partialorder %v1867, 0.0
        %v1900 = vmul.f32 %v1836, 0.2
        %v1901 = vmul.f32 %v1837, 0.2
        %v1902 = vmul.f32 %v1838, 0.2
        %v1903 = vmul.f32 %v1839, 0.2
        %v1904 = vmul.f32 %v1840, 0.2
        %v1905 = vmul.f32 %v1841, 0.2
        %v1906 = vmul.f32 %v1842, 0.2
        %v1907 = vmul.f32 %v1843, 0.2
        %v1908 = vmul.f32 %v1844, 0.2
        %v1909 = vmul.f32 %v1845, 0.2
        %v1910 = vmul.f32 %v1846, 0.2
        %v1911 = vmul.f32 %v1847, 0.2
        %v1912 = vmul.f32 %v1848, 0.2
        %v1913 = vmul.f32 %v1849, 0.2
        %v1914 = vmul.f32 %v1850, 0.2
        %v1915 = vmul.f32 %v1851, 0.2
        %v1916 = vmul.f32 %v1852, 0.2
        %v1917 = vmul.f32 %v1853, 0.2
        %v1918 = vmul.f32 %v1854, 0.2
        %v1919 = vmul.f32 %v1855, 0.2
        %v1920 = vmul.f32 %v1856, 0.2
        %v1921 = vmul.f32 %v1857, 0.2
        %v1922 = vmul.f32 %v1858, 0.2
        %v1923 = vmul.f32 %v1859, 0.2
        %v1924 = vmul.f32 %v1860, 0.2
        %v1925 = vmul.f32 %v1861, 0.2
        %v1926 = vmul.f32 %v1862, 0.2
        %v1927 = vmul.f32 %v1863, 0.2
        %v1928 = vmul.f32 %v1864, 0.2
        %v1929 = vmul.f32 %v1865, 0.2
        %v1930 = vmul.f32 %v1866, 0.2
        %v1931 = vmul.f32 %v1867, 0.2
        %v1932 = vsel %vm1868, %v1836, %v1900
        %v1933 = vsel %vm1869, %v1837, %v1901
        %v1934 = vsel %vm1870, %v1838, %v1902
        %v1935 = vsel %vm1871, %v1839, %v1903
        %v1936 = vsel %vm1872, %v1840, %v1904
        %v1937 = vsel %vm1873, %v1841, %v1905
        %v1938 = vsel %vm1874, %v1842, %v1906
        %v1939 = vsel %vm1875, %v1843, %v1907
        %v1940 = vsel %vm1876, %v1844, %v1908
        %v1941 = vsel %vm1877, %v1845, %v1909
        %v1942 = vsel %vm1878, %v1846, %v1910
        %v1943 = vsel %vm1879, %v1847, %v1911
        %v1944 = vsel %vm1880, %v1848, %v1912
        %v1945 = vsel %vm1881, %v1849, %v1913
        %v1946 = vsel %vm1882, %v1850, %v1914
        %v1947 = vsel %vm1883, %v1851, %v1915
        %v1948 = vsel %vm1884, %v1852, %v1916
        %v1949 = vsel %vm1885, %v1853, %v1917
        %v1950 = vsel %vm1886, %v1854, %v1918
        %v1951 = vsel %vm1887, %v1855, %v1919
        %v1952 = vsel %vm1888, %v1856, %v1920
        %v1953 = vsel %vm1889, %v1857, %v1921
        %v1954 = vsel %vm1890, %v1858, %v1922
        %v1955 = vsel %vm1891, %v1859, %v1923
        %v1956 = vsel %vm1892, %v1860, %v1924
        %v1957 = vsel %vm1893, %v1861, %v1925
        %v1958 = vsel %vm1894, %v1862, %v1926
        %v1959 = vsel %vm1895, %v1863, %v1927
        %v1960 = vsel %vm1896, %v1864, %v1928
        %v1961 = vsel %vm1897, %v1865, %v1929
        %v1962 = vsel %vm1898, %v1866, %v1930
        %v1963 = vsel %vm1899, %v1867, %v1931
        %v1964 = vpack.c.bf16 %v1934, %v1932
        %v1965 = vpack.c.bf16 %v1935, %v1933
        %v1966 = vpack.c.bf16 %v1938, %v1936
        %v1967 = vpack.c.bf16 %v1939, %v1937
        %v1968 = vpack.c.bf16 %v1942, %v1940
        %v1969 = vpack.c.bf16 %v1943, %v1941
        %v1970 = vpack.c.bf16 %v1946, %v1944
        %v1971 = vpack.c.bf16 %v1947, %v1945
        %v1972 = vpack.c.bf16 %v1950, %v1948
        %v1973 = vpack.c.bf16 %v1951, %v1949
        %v1974 = vpack.c.bf16 %v1954, %v1952
        %v1975 = vpack.c.bf16 %v1955, %v1953
        %v1976 = vpack.c.bf16 %v1958, %v1956
        %v1977 = vpack.c.bf16 %v1959, %v1957
        %v1978 = vpack.c.bf16 %v1962, %v1960
        %v1979 = vpack.c.bf16 %v1963, %v1961
        %v1980 = vld [vmem:[%s5] sm:$0xff]
        %v1981 = vld [vmem:[%s5 + $0x8] sm:$0xff]
        %v1982 = vld [vmem:[%s5 + $0x10] sm:$0xff]
        %v1983 = vld [vmem:[%s5 + $0x18] sm:$0xff]
        %v1984 = vld [vmem:[%s5 + $0x20] sm:$0xff]
        %v1985 = vld [vmem:[%s5 + $0x28] sm:$0xff]
        %v1986 = vld [vmem:[%s5 + $0x30] sm:$0xff]
        %v1987 = vld [vmem:[%s5 + $0x38] sm:$0xff]
        %v1988 = vld [vmem:[%s5 + $0x40] sm:$0xff]
        %v1989 = vld [vmem:[%s5 + $0x48] sm:$0xff]
        %v1990 = vld [vmem:[%s5 + $0x50] sm:$0xff]
        %v1991 = vld [vmem:[%s5 + $0x58] sm:$0xff]
        %v1992 = vld [vmem:[%s5 + $0x60] sm:$0xff]
        %v1993 = vld [vmem:[%s5 + $0x68] sm:$0xff]
        %v1994 = vld [vmem:[%s5 + $0x70] sm:$0xff]
        %v1995 = vld [vmem:[%s5 + $0x78] sm:$0xff]
        %v1996 = vld [vmem:[%s5 + $0x80] sm:$0xff]
        %v1997 = vld [vmem:[%s5 + $0x88] sm:$0xff]
        %v1998 = vld [vmem:[%s5 + $0x90] sm:$0xff]
        %v1999 = vld [vmem:[%s5 + $0x98] sm:$0xff]
        %v2000 = vld [vmem:[%s5 + $0xa0] sm:$0xff]
        %v2001 = vld [vmem:[%s5 + $0xa8] sm:$0xff]
        %v2002 = vld [vmem:[%s5 + $0xb0] sm:$0xff]
        %v2003 = vld [vmem:[%s5 + $0xb8] sm:$0xff]
        %v2004 = vld [vmem:[%s5 + $0xc0] sm:$0xff]
        %v2005 = vld [vmem:[%s5 + $0xc8] sm:$0xff]
        %v2006 = vld [vmem:[%s5 + $0xd0] sm:$0xff]
        %v2007 = vld [vmem:[%s5 + $0xd8] sm:$0xff]
        %v2008 = vld [vmem:[%s5 + $0xe0] sm:$0xff]
        %v2009 = vld [vmem:[%s5 + $0xe8] sm:$0xff]
        %v2010 = vld [vmem:[%s5 + $0xf0] sm:$0xff]
        %v2011 = vld [vmem:[%s5 + $0xf8] sm:$0xff]
        %v2012 = vld [vmem:[%s5 + $0x100] sm:$0xff]
        %v2013 = vld [vmem:[%s5 + $0x108] sm:$0xff]
        %v2014 = vld [vmem:[%s5 + $0x110] sm:$0xff]
        %v2015 = vld [vmem:[%s5 + $0x118] sm:$0xff]
        %v2016 = vld [vmem:[%s5 + $0x120] sm:$0xff]
        %v2017 = vld [vmem:[%s5 + $0x128] sm:$0xff]
        %v2018 = vld [vmem:[%s5 + $0x130] sm:$0xff]
        %v2019 = vld [vmem:[%s5 + $0x138] sm:$0xff]
        %v2020 = vld [vmem:[%s5 + $0x140] sm:$0xff]
        %v2021 = vld [vmem:[%s5 + $0x148] sm:$0xff]
        %v2022 = vld [vmem:[%s5 + $0x150] sm:$0xff]
        %v2023 = vld [vmem:[%s5 + $0x158] sm:$0xff]
        %v2024 = vld [vmem:[%s5 + $0x160] sm:$0xff]
        %v2025 = vld [vmem:[%s5 + $0x168] sm:$0xff]
        %v2026 = vld [vmem:[%s5 + $0x170] sm:$0xff]
        %v2027 = vld [vmem:[%s5 + $0x178] sm:$0xff]
        %v2028 = vld [vmem:[%s5 + $0x180] sm:$0xff]
        %v2029 = vld [vmem:[%s5 + $0x188] sm:$0xff]
        %v2030 = vld [vmem:[%s5 + $0x190] sm:$0xff]
        %v2031 = vld [vmem:[%s5 + $0x198] sm:$0xff]
        %v2032 = vld [vmem:[%s5 + $0x1a0] sm:$0xff]
        %v2033 = vld [vmem:[%s5 + $0x1a8] sm:$0xff]
        %v2034 = vld [vmem:[%s5 + $0x1b0] sm:$0xff]
        %v2035 = vld [vmem:[%s5 + $0x1b8] sm:$0xff]
        %v2036 = vld [vmem:[%s5 + $0x1c0] sm:$0xff]
        %v2037 = vld [vmem:[%s5 + $0x1c8] sm:$0xff]
        %v2038 = vld [vmem:[%s5 + $0x1d0] sm:$0xff]
        %v2039 = vld [vmem:[%s5 + $0x1d8] sm:$0xff]
        %v2040 = vld [vmem:[%s5 + $0x1e0] sm:$0xff]
        %v2041 = vld [vmem:[%s5 + $0x1e8] sm:$0xff]
        %v2042 = vld [vmem:[%s5 + $0x1f0] sm:$0xff]
        %v2043 = vld [vmem:[%s5 + $0x1f8] sm:$0xff]
        %v2108 = vunpack.c.l.b16 %v1980
        %v2109 = vunpack.c.h.b16 %v1980
        %v2110 = vunpack.c.l.b16 %v1981
        %v2111 = vunpack.c.h.b16 %v1981
        %v2112 = vunpack.c.l.b16 %v1982
        %v2113 = vunpack.c.h.b16 %v1982
        %v2114 = vunpack.c.l.b16 %v1983
        %v2115 = vunpack.c.h.b16 %v1983
        %v2116 = vunpack.c.l.b16 %v1984
        %v2117 = vunpack.c.h.b16 %v1984
        %v2118 = vunpack.c.l.b16 %v1985
        %v2119 = vunpack.c.h.b16 %v1985
        %v2120 = vunpack.c.l.b16 %v1986
        %v2121 = vunpack.c.h.b16 %v1986
        %v2122 = vunpack.c.l.b16 %v1987
        %v2123 = vunpack.c.h.b16 %v1987
        %v2124 = vunpack.c.l.b16 %v1988
        %v2125 = vunpack.c.h.b16 %v1988
        %v2126 = vunpack.c.l.b16 %v1989
        %v2127 = vunpack.c.h.b16 %v1989
        %v2128 = vunpack.c.l.b16 %v1990
        %v2129 = vunpack.c.h.b16 %v1990
        %v2130 = vunpack.c.l.b16 %v1991
        %v2131 = vunpack.c.h.b16 %v1991
        %v2132 = vunpack.c.l.b16 %v1992
        %v2133 = vunpack.c.h.b16 %v1992
        %v2134 = vunpack.c.l.b16 %v1993
        %v2135 = vunpack.c.h.b16 %v1993
        %v2136 = vunpack.c.l.b16 %v1994
        %v2137 = vunpack.c.h.b16 %v1994
        %v2138 = vunpack.c.l.b16 %v1995
        %v2139 = vunpack.c.h.b16 %v1995
        %v2140 = vunpack.c.l.b16 %v1996
        %v2141 = vunpack.c.h.b16 %v1996
        %v2142 = vunpack.c.l.b16 %v1997
        %v2143 = vunpack.c.h.b16 %v1997
        %v2144 = vunpack.c.l.b16 %v1998
        %v2145 = vunpack.c.h.b16 %v1998
        %v2146 = vunpack.c.l.b16 %v1999
        %v2147 = vunpack.c.h.b16 %v1999
        %v2148 = vunpack.c.l.b16 %v2000
        %v2149 = vunpack.c.h.b16 %v2000
        %v2150 = vunpack.c.l.b16 %v2001
        %v2151 = vunpack.c.h.b16 %v2001
        %v2152 = vunpack.c.l.b16 %v2002
        %v2153 = vunpack.c.h.b16 %v2002
        %v2154 = vunpack.c.l.b16 %v2003
        %v2155 = vunpack.c.h.b16 %v2003
        %v2156 = vunpack.c.l.b16 %v2004
        %v2157 = vunpack.c.h.b16 %v2004
        %v2158 = vunpack.c.l.b16 %v2005
        %v2159 = vunpack.c.h.b16 %v2005
        %v2160 = vunpack.c.l.b16 %v2006
        %v2161 = vunpack.c.h.b16 %v2006
        %v2162 = vunpack.c.l.b16 %v2007
        %v2163 = vunpack.c.h.b16 %v2007
        %v2164 = vunpack.c.l.b16 %v2008
        %v2165 = vunpack.c.h.b16 %v2008
        %v2166 = vunpack.c.l.b16 %v2009
        %v2167 = vunpack.c.h.b16 %v2009
        %v2168 = vunpack.c.l.b16 %v2010
        %v2169 = vunpack.c.h.b16 %v2010
        %v2170 = vunpack.c.l.b16 %v2011
        %v2171 = vunpack.c.h.b16 %v2011
        %v2172 = vunpack.c.l.b16 %v2012
        %v2173 = vunpack.c.h.b16 %v2012
        %v2174 = vunpack.c.l.b16 %v2013
        %v2175 = vunpack.c.h.b16 %v2013
        %v2176 = vunpack.c.l.b16 %v2014
        %v2177 = vunpack.c.h.b16 %v2014
        %v2178 = vunpack.c.l.b16 %v2015
        %v2179 = vunpack.c.h.b16 %v2015
        %v2180 = vunpack.c.l.b16 %v2016
        %v2181 = vunpack.c.h.b16 %v2016
        %v2182 = vunpack.c.l.b16 %v2017
        %v2183 = vunpack.c.h.b16 %v2017
        %v2184 = vunpack.c.l.b16 %v2018
        %v2185 = vunpack.c.h.b16 %v2018
        %v2186 = vunpack.c.l.b16 %v2019
        %v2187 = vunpack.c.h.b16 %v2019
        %v2188 = vunpack.c.l.b16 %v2020
        %v2189 = vunpack.c.h.b16 %v2020
        %v2190 = vunpack.c.l.b16 %v2021
        %v2191 = vunpack.c.h.b16 %v2021
        %v2192 = vunpack.c.l.b16 %v2022
        %v2193 = vunpack.c.h.b16 %v2022
        %v2194 = vunpack.c.l.b16 %v2023
        %v2195 = vunpack.c.h.b16 %v2023
        %v2196 = vunpack.c.l.b16 %v2024
        %v2197 = vunpack.c.h.b16 %v2024
        %v2198 = vunpack.c.l.b16 %v2025
        %v2199 = vunpack.c.h.b16 %v2025
        %v2200 = vunpack.c.l.b16 %v2026
        %v2201 = vunpack.c.h.b16 %v2026
        %v2202 = vunpack.c.l.b16 %v2027
        %v2203 = vunpack.c.h.b16 %v2027
        %v2204 = vunpack.c.l.b16 %v2028
        %v2205 = vunpack.c.h.b16 %v2028
        %v2206 = vunpack.c.l.b16 %v2029
        %v2207 = vunpack.c.h.b16 %v2029
        %v2208 = vunpack.c.l.b16 %v2030
        %v2209 = vunpack.c.h.b16 %v2030
        %v2210 = vunpack.c.l.b16 %v2031
        %v2211 = vunpack.c.h.b16 %v2031
        %v2212 = vunpack.c.l.b16 %v2032
        %v2213 = vunpack.c.h.b16 %v2032
        %v2214 = vunpack.c.l.b16 %v2033
        %v2215 = vunpack.c.h.b16 %v2033
        %v2216 = vunpack.c.l.b16 %v2034
        %v2217 = vunpack.c.h.b16 %v2034
        %v2218 = vunpack.c.l.b16 %v2035
        %v2219 = vunpack.c.h.b16 %v2035
        %v2220 = vunpack.c.l.b16 %v2036
        %v2221 = vunpack.c.h.b16 %v2036
        %v2222 = vunpack.c.l.b16 %v2037
        %v2223 = vunpack.c.h.b16 %v2037
        %v2224 = vunpack.c.l.b16 %v2038
        %v2225 = vunpack.c.h.b16 %v2038
        %v2226 = vunpack.c.l.b16 %v2039
        %v2227 = vunpack.c.h.b16 %v2039
        %v2228 = vunpack.c.l.b16 %v2040
        %v2229 = vunpack.c.h.b16 %v2040
        %v2230 = vunpack.c.l.b16 %v2041
        %v2231 = vunpack.c.h.b16 %v2041
        %v2232 = vunpack.c.l.b16 %v2042
        %v2233 = vunpack.c.h.b16 %v2042
        %v2234 = vunpack.c.l.b16 %v2043
        %v2235 = vunpack.c.h.b16 %v2043
        %v2236 = vpack.c.b16 %v2112, %v2108
        %v2237 = vpack.c.b16 %v2113, %v2109
        %v2238 = vpack.c.b16 %v2114, %v2110
        %v2239 = vpack.c.b16 %v2115, %v2111
        %v2240 = vpack.c.b16 %v2120, %v2116
        %v2241 = vpack.c.b16 %v2121, %v2117
        %v2242 = vpack.c.b16 %v2122, %v2118
        %v2243 = vpack.c.b16 %v2123, %v2119
        %v2244 = vpack.c.b16 %v2128, %v2124
        %v2245 = vpack.c.b16 %v2129, %v2125
        %v2246 = vpack.c.b16 %v2130, %v2126
        %v2247 = vpack.c.b16 %v2131, %v2127
        %v2248 = vpack.c.b16 %v2136, %v2132
        %v2249 = vpack.c.b16 %v2137, %v2133
        %v2250 = vpack.c.b16 %v2138, %v2134
        %v2251 = vpack.c.b16 %v2139, %v2135
        %v2252 = vpack.c.b16 %v2144, %v2140
        %v2253 = vpack.c.b16 %v2145, %v2141
        %v2254 = vpack.c.b16 %v2146, %v2142
        %v2255 = vpack.c.b16 %v2147, %v2143
        %v2256 = vpack.c.b16 %v2152, %v2148
        %v2257 = vpack.c.b16 %v2153, %v2149
        %v2258 = vpack.c.b16 %v2154, %v2150
        %v2259 = vpack.c.b16 %v2155, %v2151
        %v2260 = vpack.c.b16 %v2160, %v2156
        %v2261 = vpack.c.b16 %v2161, %v2157
        %v2262 = vpack.c.b16 %v2162, %v2158
        %v2263 = vpack.c.b16 %v2163, %v2159
        %v2264 = vpack.c.b16 %v2168, %v2164
        %v2265 = vpack.c.b16 %v2169, %v2165
        %v2266 = vpack.c.b16 %v2170, %v2166
        %v2267 = vpack.c.b16 %v2171, %v2167
        %v2268 = vpack.c.b16 %v2176, %v2172
        %v2269 = vpack.c.b16 %v2177, %v2173
        %v2270 = vpack.c.b16 %v2178, %v2174
        %v2271 = vpack.c.b16 %v2179, %v2175
        %v2272 = vpack.c.b16 %v2184, %v2180
        %v2273 = vpack.c.b16 %v2185, %v2181
        %v2274 = vpack.c.b16 %v2186, %v2182
        %v2275 = vpack.c.b16 %v2187, %v2183
        %v2276 = vpack.c.b16 %v2192, %v2188
        %v2277 = vpack.c.b16 %v2193, %v2189
        %v2278 = vpack.c.b16 %v2194, %v2190
        %v2279 = vpack.c.b16 %v2195, %v2191
        %v2280 = vpack.c.b16 %v2200, %v2196
        %v2281 = vpack.c.b16 %v2201, %v2197
        %v2282 = vpack.c.b16 %v2202, %v2198
        %v2283 = vpack.c.b16 %v2203, %v2199
        %v2284 = vpack.c.b16 %v2208, %v2204
        %v2285 = vpack.c.b16 %v2209, %v2205
        %v2286 = vpack.c.b16 %v2210, %v2206
        %v2287 = vpack.c.b16 %v2211, %v2207
        %v2288 = vpack.c.b16 %v2216, %v2212
        %v2289 = vpack.c.b16 %v2217, %v2213
        %v2290 = vpack.c.b16 %v2218, %v2214
        %v2291 = vpack.c.b16 %v2219, %v2215
        %v2292 = vpack.c.b16 %v2224, %v2220
        %v2293 = vpack.c.b16 %v2225, %v2221
        %v2294 = vpack.c.b16 %v2226, %v2222
        %v2295 = vpack.c.b16 %v2227, %v2223
        %v2296 = vpack.c.b16 %v2232, %v2228
        %v2297 = vpack.c.b16 %v2233, %v2229
        %v2298 = vpack.c.b16 %v2234, %v2230
        %v2299 = vpack.c.b16 %v2235, %v2231
        %2364 = vmatprep.subr.bf16.mxu0 %v2237
        %2365 = vmatpush1.bf16.msra.mxu0 %v2236
        %2366 = vmatprep.subr.bf16.mxu0 %v2241
        %2367 = vmatpush1.bf16.msra.mxu0 %v2240
        %2368 = vmatprep.subr.bf16.mxu0 %v2245
        %2369 = vmatpush1.bf16.msra.mxu0 %v2244
        %2370 = vmatprep.subr.bf16.mxu0 %v2249
        %2371 = vmatpush1.bf16.msra.mxu0 %v2248
        %2372 = vmatprep.subr.bf16.mxu0 %v2253
        %2373 = vmatpush1.bf16.msra.mxu0 %v2252
        %2374 = vmatprep.subr.bf16.mxu0 %v2257
        %2375 = vmatpush1.bf16.msra.mxu0 %v2256
        %2376 = vmatprep.subr.bf16.mxu0 %v2261
        %2377 = vmatpush1.bf16.msra.mxu0 %v2260
        %2378 = vmatprep.subr.bf16.mxu0 %v2265
        %2379 = vmatpush1.bf16.msra.mxu0 %v2264
        %2380 = vmatprep.subr.bf16.mxu0 %v2269
        %2381 = vmatpush1.bf16.msra.mxu0 %v2268
        %2382 = vmatprep.subr.bf16.mxu0 %v2273
        %2383 = vmatpush1.bf16.msra.mxu0 %v2272
        %2384 = vmatprep.subr.bf16.mxu0 %v2277
        %2385 = vmatpush1.bf16.msra.mxu0 %v2276
        %2386 = vmatprep.subr.bf16.mxu0 %v2281
        %2387 = vmatpush1.bf16.msra.mxu0 %v2280
        %2388 = vmatprep.subr.bf16.mxu0 %v2285
        %2389 = vmatpush1.bf16.msra.mxu0 %v2284
        %2390 = vmatprep.subr.bf16.mxu0 %v2289
        %2391 = vmatpush1.bf16.msra.mxu0 %v2288
        %2392 = vmatprep.subr.bf16.mxu0 %v2293
        %2393 = vmatpush1.bf16.msra.mxu0 %v2292
        %2394 = vmatprep.subr.bf16.mxu0 %v2297
        %2395 = vmatpush1.bf16.msra.mxu0 %v2296
        %2396 = vmatprep.mubr.bf16.mxu0 %v1965
        %2397 = vmatmul.mubr.bf16.gmra.mrb[0].mxu0 %v1964
        %v2398 = vpop.f32.mrb[0].mxu0
        %v2399 = vadd.f32 0.0, %v2398
        %v2400 = vpop.f32.mrb[0].mxu0
        %v2401 = vadd.f32 0.0, %v2400
        %v2402 = vpop.f32.mrb[0].mxu0
        %v2403 = vadd.f32 0.0, %v2402
        %v2404 = vpop.f32.mrb[0].mxu0
        %v2405 = vadd.f32 0.0, %v2404
        %2406 = vmatprep.mubr.bf16.mxu0 %v1967
        %2407 = vmatmul.mubr.bf16.gmra.mrb[0].mxu0 %v1966
        %v2408 = vpop.f32.mrb[0].mxu0
        %v2409 = vadd.f32 0.0, %v2408
        %v2410 = vpop.f32.mrb[0].mxu0
        %v2411 = vadd.f32 0.0, %v2410
        %v2412 = vpop.f32.mrb[0].mxu0
        %v2413 = vadd.f32 0.0, %v2412
        %v2414 = vpop.f32.mrb[0].mxu0
        %v2415 = vadd.f32 0.0, %v2414
        %2416 = vmatprep.mubr.bf16.mxu0 %v1969
        %2417 = vmatmul.mubr.bf16.gmra.mrb[0].mxu0 %v1968
        %v2418 = vpop.f32.mrb[0].mxu0
        %v2419 = vadd.f32 0.0, %v2418
        %v2420 = vpop.f32.mrb[0].mxu0
        %v2421 = vadd.f32 0.0, %v2420
        %v2422 = vpop.f32.mrb[0].mxu0
        %v2423 = vadd.f32 0.0, %v2422
        %v2424 = vpop.f32.mrb[0].mxu0
        %v2425 = vadd.f32 0.0, %v2424
        %2426 = vmatprep.mubr.bf16.mxu0 %v1971
        %2427 = vmatmul.mubr.bf16.gmra.mrb[0].mxu0 %v1970
        %v2428 = vpop.f32.mrb[0].mxu0
        %v2429 = vadd.f32 0.0, %v2428
        %v2430 = vpop.f32.mrb[0].mxu0
        %v2431 = vadd.f32 0.0, %v2430
        %v2432 = vpop.f32.mrb[0].mxu0
        %v2433 = vadd.f32 0.0, %v2432
        %v2434 = vpop.f32.mrb[0].mxu0
        %v2435 = vadd.f32 0.0, %v2434
        %2436 = vmatprep.mubr.bf16.mxu0 %v1973
        %2437 = vmatmul.mubr.bf16.gmra.mrb[0].mxu0 %v1972
        %v2438 = vpop.f32.mrb[0].mxu0
        %v2439 = vadd.f32 0.0, %v2438
        %v2440 = vpop.f32.mrb[0].mxu0
        %v2441 = vadd.f32 0.0, %v2440
        %v2442 = vpop.f32.mrb[0].mxu0
        %v2443 = vadd.f32 0.0, %v2442
        %v2444 = vpop.f32.mrb[0].mxu0
        %v2445 = vadd.f32 0.0, %v2444
        %2446 = vmatprep.mubr.bf16.mxu0 %v1975
        %2447 = vmatmul.mubr.bf16.gmra.mrb[0].mxu0 %v1974
        %v2448 = vpop.f32.mrb[0].mxu0
        %v2449 = vadd.f32 0.0, %v2448
        %v2450 = vpop.f32.mrb[0].mxu0
        %v2451 = vadd.f32 0.0, %v2450
        %v2452 = vpop.f32.mrb[0].mxu0
        %v2453 = vadd.f32 0.0, %v2452
        %v2454 = vpop.f32.mrb[0].mxu0
        %v2455 = vadd.f32 0.0, %v2454
        %2456 = vmatprep.mubr.bf16.mxu0 %v1977
        %2457 = vmatmul.mubr.bf16.gmra.mrb[0].mxu0 %v1976
        %v2458 = vpop.f32.mrb[0].mxu0
        %v2459 = vadd.f32 0.0, %v2458
        %v2460 = vpop.f32.mrb[0].mxu0
        %v2461 = vadd.f32 0.0, %v2460
        %v2462 = vpop.f32.mrb[0].mxu0
        %v2463 = vadd.f32 0.0, %v2462
        %v2464 = vpop.f32.mrb[0].mxu0
        %v2465 = vadd.f32 0.0, %v2464
        %2466 = vmatprep.mubr.bf16.mxu0 %v1979
        %2467 = vmatmul.mubr.bf16.gmra.mrb[0].mxu0 %v1978
        %v2468 = vpop.f32.mrb[0].mxu0
        %v2469 = vadd.f32 0.0, %v2468
        %v2470 = vpop.f32.mrb[0].mxu0
        %v2471 = vadd.f32 0.0, %v2470
        %v2472 = vpop.f32.mrb[0].mxu0
        %v2473 = vadd.f32 0.0, %v2472
        %v2474 = vpop.f32.mrb[0].mxu0
        %v2475 = vadd.f32 0.0, %v2474
        %2476 = vdwg.mxu0
        %2477 = vmatprep.subr.bf16.mxu0 %v2239
        %2478 = vmatpush1.bf16.msra.mxu0 %v2238
        %2479 = vmatprep.subr.bf16.mxu0 %v2243
        %2480 = vmatpush1.bf16.msra.mxu0 %v2242
        %2481 = vmatprep.subr.bf16.mxu0 %v2247
        %2482 = vmatpush1.bf16.msra.mxu0 %v2246
        %2483 = vmatprep.subr.bf16.mxu0 %v2251
        %2484 = vmatpush1.bf16.msra.mxu0 %v2250
        %2485 = vmatprep.subr.bf16.mxu0 %v2255
        %2486 = vmatpush1.bf16.msra.mxu0 %v2254
        %2487 = vmatprep.subr.bf16.mxu0 %v2259
        %2488 = vmatpush1.bf16.msra.mxu0 %v2258
        %2489 = vmatprep.subr.bf16.mxu0 %v2263
        %2490 = vmatpush1.bf16.msra.mxu0 %v2262
        %2491 = vmatprep.subr.bf16.mxu0 %v2267
        %2492 = vmatpush1.bf16.msra.mxu0 %v2266
        %2493 = vmatprep.subr.bf16.mxu0 %v2271
        %2494 = vmatpush1.bf16.msra.mxu0 %v2270
        %2495 = vmatprep.subr.bf16.mxu0 %v2275
        %2496 = vmatpush1.bf16.msra.mxu0 %v2274
        %2497 = vmatprep.subr.bf16.mxu0 %v2279
        %2498 = vmatpush1.bf16.msra.mxu0 %v2278
        %2499 = vmatprep.subr.bf16.mxu0 %v2283
        %2500 = vmatpush1.bf16.msra.mxu0 %v2282
        %2501 = vmatprep.subr.bf16.mxu0 %v2287
        %2502 = vmatpush1.bf16.msra.mxu0 %v2286
        %2503 = vmatprep.subr.bf16.mxu0 %v2291
        %2504 = vmatpush1.bf16.msra.mxu0 %v2290
        %2505 = vmatprep.subr.bf16.mxu0 %v2295
        %2506 = vmatpush1.bf16.msra.mxu0 %v2294
        %2507 = vmatprep.subr.bf16.mxu0 %v2299
        %2508 = vmatpush1.bf16.msra.mxu0 %v2298
        %2509 = vmatprep.mubr.bf16.mxu0 %v1965
        %2510 = vmatmul.mubr.bf16.gmra.mrb[0].mxu0 %v1964
        %v2511 = vpop.f32.mrb[0].mxu0
        %v2512 = vadd.f32 0.0, %v2511
        %v2513 = vpop.f32.mrb[0].mxu0
        %v2514 = vadd.f32 0.0, %v2513
        %v2515 = vpop.f32.mrb[0].mxu0
        %v2516 = vadd.f32 0.0, %v2515
        %v2517 = vpop.f32.mrb[0].mxu0
        %v2518 = vadd.f32 0.0, %v2517
        %2519 = vmatprep.mubr.bf16.mxu0 %v1967
        %2520 = vmatmul.mubr.bf16.gmra.mrb[0].mxu0 %v1966
        %v2521 = vpop.f32.mrb[0].mxu0
        %v2522 = vadd.f32 0.0, %v2521
        %v2523 = vpop.f32.mrb[0].mxu0
        %v2524 = vadd.f32 0.0, %v2523
        %v2525 = vpop.f32.mrb[0].mxu0
        %v2526 = vadd.f32 0.0, %v2525
        %v2527 = vpop.f32.mrb[0].mxu0
        %v2528 = vadd.f32 0.0, %v2527
        %2529 = vmatprep.mubr.bf16.mxu0 %v1969
        %2530 = vmatmul.mubr.bf16.gmra.mrb[0].mxu0 %v1968
        %v2531 = vpop.f32.mrb[0].mxu0
        %v2532 = vadd.f32 0.0, %v2531
        %v2533 = vpop.f32.mrb[0].mxu0
        %v2534 = vadd.f32 0.0, %v2533
        %v2535 = vpop.f32.mrb[0].mxu0
        %v2536 = vadd.f32 0.0, %v2535
        %v2537 = vpop.f32.mrb[0].mxu0
        %v2538 = vadd.f32 0.0, %v2537
        %2539 = vmatprep.mubr.bf16.mxu0 %v1971
        %2540 = vmatmul.mubr.bf16.gmra.mrb[0].mxu0 %v1970
        %v2541 = vpop.f32.mrb[0].mxu0
        %v2542 = vadd.f32 0.0, %v2541
        %v2543 = vpop.f32.mrb[0].mxu0
        %v2544 = vadd.f32 0.0, %v2543
        %v2545 = vpop.f32.mrb[0].mxu0
        %v2546 = vadd.f32 0.0, %v2545
        %v2547 = vpop.f32.mrb[0].mxu0
        %v2548 = vadd.f32 0.0, %v2547
        %2549 = vmatprep.mubr.bf16.mxu0 %v1973
        %2550 = vmatmul.mubr.bf16.gmra.mrb[0].mxu0 %v1972
        %v2551 = vpop.f32.mrb[0].mxu0
        %v2552 = vadd.f32 0.0, %v2551
        %v2553 = vpop.f32.mrb[0].mxu0
        %v2554 = vadd.f32 0.0, %v2553
        %v2555 = vpop.f32.mrb[0].mxu0
        %v2556 = vadd.f32 0.0, %v2555
        %v2557 = vpop.f32.mrb[0].mxu0
        %v2558 = vadd.f32 0.0, %v2557
        %2559 = vmatprep.mubr.bf16.mxu0 %v1975
        %2560 = vmatmul.mubr.bf16.gmra.mrb[0].mxu0 %v1974
        %v2561 = vpop.f32.mrb[0].mxu0
        %v2562 = vadd.f32 0.0, %v2561
        %v2563 = vpop.f32.mrb[0].mxu0
        %v2564 = vadd.f32 0.0, %v2563
        %v2565 = vpop.f32.mrb[0].mxu0
        %v2566 = vadd.f32 0.0, %v2565
        %v2567 = vpop.f32.mrb[0].mxu0
        %v2568 = vadd.f32 0.0, %v2567
        %2569 = vmatprep.mubr.bf16.mxu0 %v1977
        %2570 = vmatmul.mubr.bf16.gmra.mrb[0].mxu0 %v1976
        %v2571 = vpop.f32.mrb[0].mxu0
        %v2572 = vadd.f32 0.0, %v2571
        %v2573 = vpop.f32.mrb[0].mxu0
        %v2574 = vadd.f32 0.0, %v2573
        %v2575 = vpop.f32.mrb[0].mxu0
        %v2576 = vadd.f32 0.0, %v2575
        %v2577 = vpop.f32.mrb[0].mxu0
        %v2578 = vadd.f32 0.0, %v2577
        %2579 = vmatprep.mubr.bf16.mxu0 %v1979
        %2580 = vmatmul.mubr.bf16.gmra.mrb[0].mxu0 %v1978
        %v2581 = vpop.f32.mrb[0].mxu0
        %v2582 = vadd.f32 0.0, %v2581
        %v2583 = vpop.f32.mrb[0].mxu0
        %v2584 = vadd.f32 0.0, %v2583
        %v2585 = vpop.f32.mrb[0].mxu0
        %v2586 = vadd.f32 0.0, %v2585
        %v2587 = vpop.f32.mrb[0].mxu0
        %v2588 = vadd.f32 0.0, %v2587
        %2589 = vdwg.mxu0
        %v2590 = vrot.slane %v2399, 4
        %v2591 = vadd.f32 %v2399, %v2590
        %v2592 = vrot.slane %v2591, 2
        %v2593 = vadd.f32 %v2591, %v2592
        %v2594 = vrot.slane %v2593, 1
        %v2595 = vadd.f32 %v2593, %v2594
        %v2596 = vrot.slane %v2401, 4
        %v2597 = vadd.f32 %v2401, %v2596
        %v2598 = vrot.slane %v2597, 2
        %v2599 = vadd.f32 %v2597, %v2598
        %v2600 = vrot.slane %v2599, 1
        %v2601 = vadd.f32 %v2599, %v2600
        %v2602 = vrot.slane %v2512, 4
        %v2603 = vadd.f32 %v2512, %v2602
        %v2604 = vrot.slane %v2603, 2
        %v2605 = vadd.f32 %v2603, %v2604
        %v2606 = vrot.slane %v2605, 1
        %v2607 = vadd.f32 %v2605, %v2606
        %v2608 = vrot.slane %v2514, 4
        %v2609 = vadd.f32 %v2514, %v2608
        %v2610 = vrot.slane %v2609, 2
        %v2611 = vadd.f32 %v2609, %v2610
        %v2612 = vrot.slane %v2611, 1
        %v2613 = vadd.f32 %v2611, %v2612
        %v2614 = vrot.slane %v2403, 4
        %v2615 = vadd.f32 %v2403, %v2614
        %v2616 = vrot.slane %v2615, 2
        %v2617 = vadd.f32 %v2615, %v2616
        %v2618 = vrot.slane %v2617, 1
        %v2619 = vadd.f32 %v2617, %v2618
        %v2620 = vrot.slane %v2405, 4
        %v2621 = vadd.f32 %v2405, %v2620
        %v2622 = vrot.slane %v2621, 2
        %v2623 = vadd.f32 %v2621, %v2622
        %v2624 = vrot.slane %v2623, 1
        %v2625 = vadd.f32 %v2623, %v2624
        %v2626 = vrot.slane %v2516, 4
        %v2627 = vadd.f32 %v2516, %v2626
        %v2628 = vrot.slane %v2627, 2
        %v2629 = vadd.f32 %v2627, %v2628
        %v2630 = vrot.slane %v2629, 1
        %v2631 = vadd.f32 %v2629, %v2630
        %v2632 = vrot.slane %v2518, 4
        %v2633 = vadd.f32 %v2518, %v2632
        %v2634 = vrot.slane %v2633, 2
        %v2635 = vadd.f32 %v2633, %v2634
        %v2636 = vrot.slane %v2635, 1
        %v2637 = vadd.f32 %v2635, %v2636
        %v2638 = vrot.slane %v2409, 4
        %v2639 = vadd.f32 %v2409, %v2638
        %v2640 = vrot.slane %v2639, 2
        %v2641 = vadd.f32 %v2639, %v2640
        %v2642 = vrot.slane %v2641, 1
        %v2643 = vadd.f32 %v2641, %v2642
        %v2644 = vrot.slane %v2411, 4
        %v2645 = vadd.f32 %v2411, %v2644
        %v2646 = vrot.slane %v2645, 2
        %v2647 = vadd.f32 %v2645, %v2646
        %v2648 = vrot.slane %v2647, 1
        %v2649 = vadd.f32 %v2647, %v2648
        %v2650 = vrot.slane %v2522, 4
        %v2651 = vadd.f32 %v2522, %v2650
        %v2652 = vrot.slane %v2651, 2
        %v2653 = vadd.f32 %v2651, %v2652
        %v2654 = vrot.slane %v2653, 1
        %v2655 = vadd.f32 %v2653, %v2654
        %v2656 = vrot.slane %v2524, 4
        %v2657 = vadd.f32 %v2524, %v2656
        %v2658 = vrot.slane %v2657, 2
        %v2659 = vadd.f32 %v2657, %v2658
        %v2660 = vrot.slane %v2659, 1
        %v2661 = vadd.f32 %v2659, %v2660
        %v2662 = vrot.slane %v2413, 4
        %v2663 = vadd.f32 %v2413, %v2662
        %v2664 = vrot.slane %v2663, 2
        %v2665 = vadd.f32 %v2663, %v2664
        %v2666 = vrot.slane %v2665, 1
        %v2667 = vadd.f32 %v2665, %v2666
        %v2668 = vrot.slane %v2415, 4
        %v2669 = vadd.f32 %v2415, %v2668
        %v2670 = vrot.slane %v2669, 2
        %v2671 = vadd.f32 %v2669, %v2670
        %v2672 = vrot.slane %v2671, 1
        %v2673 = vadd.f32 %v2671, %v2672
        %v2674 = vrot.slane %v2526, 4
        %v2675 = vadd.f32 %v2526, %v2674
        %v2676 = vrot.slane %v2675, 2
        %v2677 = vadd.f32 %v2675, %v2676
        %v2678 = vrot.slane %v2677, 1
        %v2679 = vadd.f32 %v2677, %v2678
        %v2680 = vrot.slane %v2528, 4
        %v2681 = vadd.f32 %v2528, %v2680
        %v2682 = vrot.slane %v2681, 2
        %v2683 = vadd.f32 %v2681, %v2682
        %v2684 = vrot.slane %v2683, 1
        %v2685 = vadd.f32 %v2683, %v2684
        %v2686 = vrot.slane %v2419, 4
        %v2687 = vadd.f32 %v2419, %v2686
        %v2688 = vrot.slane %v2687, 2
        %v2689 = vadd.f32 %v2687, %v2688
        %v2690 = vrot.slane %v2689, 1
        %v2691 = vadd.f32 %v2689, %v2690
        %v2692 = vrot.slane %v2421, 4
        %v2693 = vadd.f32 %v2421, %v2692
        %v2694 = vrot.slane %v2693, 2
        %v2695 = vadd.f32 %v2693, %v2694
        %v2696 = vrot.slane %v2695, 1
        %v2697 = vadd.f32 %v2695, %v2696
        %v2698 = vrot.slane %v2532, 4
        %v2699 = vadd.f32 %v2532, %v2698
        %v2700 = vrot.slane %v2699, 2
        %v2701 = vadd.f32 %v2699, %v2700
        %v2702 = vrot.slane %v2701, 1
        %v2703 = vadd.f32 %v2701, %v2702
        %v2704 = vrot.slane %v2534, 4
        %v2705 = vadd.f32 %v2534, %v2704
        %v2706 = vrot.slane %v2705, 2
        %v2707 = vadd.f32 %v2705, %v2706
        %v2708 = vrot.slane %v2707, 1
        %v2709 = vadd.f32 %v2707, %v2708
        %v2710 = vrot.slane %v2423, 4
        %v2711 = vadd.f32 %v2423, %v2710
        %v2712 = vrot.slane %v2711, 2
        %v2713 = vadd.f32 %v2711, %v2712
        %v2714 = vrot.slane %v2713, 1
        %v2715 = vadd.f32 %v2713, %v2714
        %v2716 = vrot.slane %v2425, 4
        %v2717 = vadd.f32 %v2425, %v2716
        %v2718 = vrot.slane %v2717, 2
        %v2719 = vadd.f32 %v2717, %v2718
        %v2720 = vrot.slane %v2719, 1
        %v2721 = vadd.f32 %v2719, %v2720
        %v2722 = vrot.slane %v2536, 4
        %v2723 = vadd.f32 %v2536, %v2722
        %v2724 = vrot.slane %v2723, 2
        %v2725 = vadd.f32 %v2723, %v2724
        %v2726 = vrot.slane %v2725, 1
        %v2727 = vadd.f32 %v2725, %v2726
        %v2728 = vrot.slane %v2538, 4
        %v2729 = vadd.f32 %v2538, %v2728
        %v2730 = vrot.slane %v2729, 2
        %v2731 = vadd.f32 %v2729, %v2730
        %v2732 = vrot.slane %v2731, 1
        %v2733 = vadd.f32 %v2731, %v2732
        %v2734 = vrot.slane %v2429, 4
        %v2735 = vadd.f32 %v2429, %v2734
        %v2736 = vrot.slane %v2735, 2
        %v2737 = vadd.f32 %v2735, %v2736
        %v2738 = vrot.slane %v2737, 1
        %v2739 = vadd.f32 %v2737, %v2738
        %v2740 = vrot.slane %v2431, 4
        %v2741 = vadd.f32 %v2431, %v2740
        %v2742 = vrot.slane %v2741, 2
        %v2743 = vadd.f32 %v2741, %v2742
        %v2744 = vrot.slane %v2743, 1
        %v2745 = vadd.f32 %v2743, %v2744
        %v2746 = vrot.slane %v2542, 4
        %v2747 = vadd.f32 %v2542, %v2746
        %v2748 = vrot.slane %v2747, 2
        %v2749 = vadd.f32 %v2747, %v2748
        %v2750 = vrot.slane %v2749, 1
        %v2751 = vadd.f32 %v2749, %v2750
        %v2752 = vrot.slane %v2544, 4
        %v2753 = vadd.f32 %v2544, %v2752
        %v2754 = vrot.slane %v2753, 2
        %v2755 = vadd.f32 %v2753, %v2754
        %v2756 = vrot.slane %v2755, 1
        %v2757 = vadd.f32 %v2755, %v2756
        %v2758 = vrot.slane %v2433, 4
        %v2759 = vadd.f32 %v2433, %v2758
        %v2760 = vrot.slane %v2759, 2
        %v2761 = vadd.f32 %v2759, %v2760
        %v2762 = vrot.slane %v2761, 1
        %v2763 = vadd.f32 %v2761, %v2762
        %v2764 = vrot.slane %v2435, 4
        %v2765 = vadd.f32 %v2435, %v2764
        %v2766 = vrot.slane %v2765, 2
        %v2767 = vadd.f32 %v2765, %v2766
        %v2768 = vrot.slane %v2767, 1
        %v2769 = vadd.f32 %v2767, %v2768
        %v2770 = vrot.slane %v2546, 4
        %v2771 = vadd.f32 %v2546, %v2770
        %v2772 = vrot.slane %v2771, 2
        %v2773 = vadd.f32 %v2771, %v2772
        %v2774 = vrot.slane %v2773, 1
        %v2775 = vadd.f32 %v2773, %v2774
        %v2776 = vrot.slane %v2548, 4
        %v2777 = vadd.f32 %v2548, %v2776
        %v2778 = vrot.slane %v2777, 2
        %v2779 = vadd.f32 %v2777, %v2778
        %v2780 = vrot.slane %v2779, 1
        %v2781 = vadd.f32 %v2779, %v2780
        %v2782 = vrot.slane %v2439, 4
        %v2783 = vadd.f32 %v2439, %v2782
        %v2784 = vrot.slane %v2783, 2
        %v2785 = vadd.f32 %v2783, %v2784
        %v2786 = vrot.slane %v2785, 1
        %v2787 = vadd.f32 %v2785, %v2786
        %v2788 = vrot.slane %v2441, 4
        %v2789 = vadd.f32 %v2441, %v2788
        %v2790 = vrot.slane %v2789, 2
        %v2791 = vadd.f32 %v2789, %v2790
        %v2792 = vrot.slane %v2791, 1
        %v2793 = vadd.f32 %v2791, %v2792
        %v2794 = vrot.slane %v2552, 4
        %v2795 = vadd.f32 %v2552, %v2794
        %v2796 = vrot.slane %v2795, 2
        %v2797 = vadd.f32 %v2795, %v2796
        %v2798 = vrot.slane %v2797, 1
        %v2799 = vadd.f32 %v2797, %v2798
        %v2800 = vrot.slane %v2554, 4
        %v2801 = vadd.f32 %v2554, %v2800
        %v2802 = vrot.slane %v2801, 2
        %v2803 = vadd.f32 %v2801, %v2802
        %v2804 = vrot.slane %v2803, 1
        %v2805 = vadd.f32 %v2803, %v2804
        %v2806 = vrot.slane %v2443, 4
        %v2807 = vadd.f32 %v2443, %v2806
        %v2808 = vrot.slane %v2807, 2
        %v2809 = vadd.f32 %v2807, %v2808
        %v2810 = vrot.slane %v2809, 1
        %v2811 = vadd.f32 %v2809, %v2810
        %v2812 = vrot.slane %v2445, 4
        %v2813 = vadd.f32 %v2445, %v2812
        %v2814 = vrot.slane %v2813, 2
        %v2815 = vadd.f32 %v2813, %v2814
        %v2816 = vrot.slane %v2815, 1
        %v2817 = vadd.f32 %v2815, %v2816
        %v2818 = vrot.slane %v2556, 4
        %v2819 = vadd.f32 %v2556, %v2818
        %v2820 = vrot.slane %v2819, 2
        %v2821 = vadd.f32 %v2819, %v2820
        %v2822 = vrot.slane %v2821, 1
        %v2823 = vadd.f32 %v2821, %v2822
        %v2824 = vrot.slane %v2558, 4
        %v2825 = vadd.f32 %v2558, %v2824
        %v2826 = vrot.slane %v2825, 2
        %v2827 = vadd.f32 %v2825, %v2826
        %v2828 = vrot.slane %v2827, 1
        %v2829 = vadd.f32 %v2827, %v2828
        %v2830 = vrot.slane %v2449, 4
        %v2831 = vadd.f32 %v2449, %v2830
        %v2832 = vrot.slane %v2831, 2
        %v2833 = vadd.f32 %v2831, %v2832
        %v2834 = vrot.slane %v2833, 1
        %v2835 = vadd.f32 %v2833, %v2834
        %v2836 = vrot.slane %v2451, 4
        %v2837 = vadd.f32 %v2451, %v2836
        %v2838 = vrot.slane %v2837, 2
        %v2839 = vadd.f32 %v2837, %v2838
        %v2840 = vrot.slane %v2839, 1
        %v2841 = vadd.f32 %v2839, %v2840
        %v2842 = vrot.slane %v2562, 4
        %v2843 = vadd.f32 %v2562, %v2842
        %v2844 = vrot.slane %v2843, 2
        %v2845 = vadd.f32 %v2843, %v2844
        %v2846 = vrot.slane %v2845, 1
        %v2847 = vadd.f32 %v2845, %v2846
        %v2848 = vrot.slane %v2564, 4
        %v2849 = vadd.f32 %v2564, %v2848
        %v2850 = vrot.slane %v2849, 2
        %v2851 = vadd.f32 %v2849, %v2850
        %v2852 = vrot.slane %v2851, 1
        %v2853 = vadd.f32 %v2851, %v2852
        %v2854 = vrot.slane %v2453, 4
        %v2855 = vadd.f32 %v2453, %v2854
        %v2856 = vrot.slane %v2855, 2
        %v2857 = vadd.f32 %v2855, %v2856
        %v2858 = vrot.slane %v2857, 1
        %v2859 = vadd.f32 %v2857, %v2858
        %v2860 = vrot.slane %v2455, 4
        %v2861 = vadd.f32 %v2455, %v2860
        %v2862 = vrot.slane %v2861, 2
        %v2863 = vadd.f32 %v2861, %v2862
        %v2864 = vrot.slane %v2863, 1
        %v2865 = vadd.f32 %v2863, %v2864
        %v2866 = vrot.slane %v2566, 4
        %v2867 = vadd.f32 %v2566, %v2866
        %v2868 = vrot.slane %v2867, 2
        %v2869 = vadd.f32 %v2867, %v2868
        %v2870 = vrot.slane %v2869, 1
        %v2871 = vadd.f32 %v2869, %v2870
        %v2872 = vrot.slane %v2568, 4
        %v2873 = vadd.f32 %v2568, %v2872
        %v2874 = vrot.slane %v2873, 2
        %v2875 = vadd.f32 %v2873, %v2874
        %v2876 = vrot.slane %v2875, 1
        %v2877 = vadd.f32 %v2875, %v2876
        %v2878 = vrot.slane %v2459, 4
        %v2879 = vadd.f32 %v2459, %v2878
        %v2880 = vrot.slane %v2879, 2
        %v2881 = vadd.f32 %v2879, %v2880
        %v2882 = vrot.slane %v2881, 1
        %v2883 = vadd.f32 %v2881, %v2882
        %v2884 = vrot.slane %v2461, 4
        %v2885 = vadd.f32 %v2461, %v2884
        %v2886 = vrot.slane %v2885, 2
        %v2887 = vadd.f32 %v2885, %v2886
        %v2888 = vrot.slane %v2887, 1
        %v2889 = vadd.f32 %v2887, %v2888
        %v2890 = vrot.slane %v2572, 4
        %v2891 = vadd.f32 %v2572, %v2890
        %v2892 = vrot.slane %v2891, 2
        %v2893 = vadd.f32 %v2891, %v2892
        %v2894 = vrot.slane %v2893, 1
        %v2895 = vadd.f32 %v2893, %v2894
        %v2896 = vrot.slane %v2574, 4
        %v2897 = vadd.f32 %v2574, %v2896
        %v2898 = vrot.slane %v2897, 2
        %v2899 = vadd.f32 %v2897, %v2898
        %v2900 = vrot.slane %v2899, 1
        %v2901 = vadd.f32 %v2899, %v2900
        %v2902 = vrot.slane %v2463, 4
        %v2903 = vadd.f32 %v2463, %v2902
        %v2904 = vrot.slane %v2903, 2
        %v2905 = vadd.f32 %v2903, %v2904
        %v2906 = vrot.slane %v2905, 1
        %v2907 = vadd.f32 %v2905, %v2906
        %v2908 = vrot.slane %v2465, 4
        %v2909 = vadd.f32 %v2465, %v2908
        %v2910 = vrot.slane %v2909, 2
        %v2911 = vadd.f32 %v2909, %v2910
        %v2912 = vrot.slane %v2911, 1
        %v2913 = vadd.f32 %v2911, %v2912
        %v2914 = vrot.slane %v2576, 4
        %v2915 = vadd.f32 %v2576, %v2914
        %v2916 = vrot.slane %v2915, 2
        %v2917 = vadd.f32 %v2915, %v2916
        %v2918 = vrot.slane %v2917, 1
        %v2919 = vadd.f32 %v2917, %v2918
        %v2920 = vrot.slane %v2578, 4
        %v2921 = vadd.f32 %v2578, %v2920
        %v2922 = vrot.slane %v2921, 2
        %v2923 = vadd.f32 %v2921, %v2922
        %v2924 = vrot.slane %v2923, 1
        %v2925 = vadd.f32 %v2923, %v2924
        %v2926 = vrot.slane %v2469, 4
        %v2927 = vadd.f32 %v2469, %v2926
        %v2928 = vrot.slane %v2927, 2
        %v2929 = vadd.f32 %v2927, %v2928
        %v2930 = vrot.slane %v2929, 1
        %v2931 = vadd.f32 %v2929, %v2930
        %v2932 = vrot.slane %v2471, 4
        %v2933 = vadd.f32 %v2471, %v2932
        %v2934 = vrot.slane %v2933, 2
        %v2935 = vadd.f32 %v2933, %v2934
        %v2936 = vrot.slane %v2935, 1
        %v2937 = vadd.f32 %v2935, %v2936
        %v2938 = vrot.slane %v2582, 4
        %v2939 = vadd.f32 %v2582, %v2938
        %v2940 = vrot.slane %v2939, 2
        %v2941 = vadd.f32 %v2939, %v2940
        %v2942 = vrot.slane %v2941, 1
        %v2943 = vadd.f32 %v2941, %v2942
        %v2944 = vrot.slane %v2584, 4
        %v2945 = vadd.f32 %v2584, %v2944
        %v2946 = vrot.slane %v2945, 2
        %v2947 = vadd.f32 %v2945, %v2946
        %v2948 = vrot.slane %v2947, 1
        %v2949 = vadd.f32 %v2947, %v2948
        %v2950 = vrot.slane %v2473, 4
        %v2951 = vadd.f32 %v2473, %v2950
        %v2952 = vrot.slane %v2951, 2
        %v2953 = vadd.f32 %v2951, %v2952
        %v2954 = vrot.slane %v2953, 1
        %v2955 = vadd.f32 %v2953, %v2954
        %v2956 = vrot.slane %v2475, 4
        %v2957 = vadd.f32 %v2475, %v2956
        %v2958 = vrot.slane %v2957, 2
        %v2959 = vadd.f32 %v2957, %v2958
        %v2960 = vrot.slane %v2959, 1
        %v2961 = vadd.f32 %v2959, %v2960
        %v2962 = vrot.slane %v2586, 4
        %v2963 = vadd.f32 %v2586, %v2962
        %v2964 = vrot.slane %v2963, 2
        %v2965 = vadd.f32 %v2963, %v2964
        %v2966 = vrot.slane %v2965, 1
        %v2967 = vadd.f32 %v2965, %v2966
        %v2968 = vrot.slane %v2588, 4
        %v2969 = vadd.f32 %v2588, %v2968
        %v2970 = vrot.slane %v2969, 2
        %v2971 = vadd.f32 %v2969, %v2970
        %v2972 = vrot.slane %v2971, 1
        %v2973 = vadd.f32 %v2971, %v2972
        %v2974 = vmul.f32 %v2595, 0.125
        %v2975 = vmul.f32 %v2601, 0.125
        %v2976 = vmul.f32 %v2607, 0.125
        %v2977 = vmul.f32 %v2613, 0.125
        %v2978 = vmul.f32 %v2619, 0.125
        %v2979 = vmul.f32 %v2625, 0.125
        %v2980 = vmul.f32 %v2631, 0.125
        %v2981 = vmul.f32 %v2637, 0.125
        %v2982 = vmul.f32 %v2643, 0.125
        %v2983 = vmul.f32 %v2649, 0.125
        %v2984 = vmul.f32 %v2655, 0.125
        %v2985 = vmul.f32 %v2661, 0.125
        %v2986 = vmul.f32 %v2667, 0.125
        %v2987 = vmul.f32 %v2673, 0.125
        %v2988 = vmul.f32 %v2679, 0.125
        %v2989 = vmul.f32 %v2685, 0.125
        %v2990 = vmul.f32 %v2691, 0.125
        %v2991 = vmul.f32 %v2697, 0.125
        %v2992 = vmul.f32 %v2703, 0.125
        %v2993 = vmul.f32 %v2709, 0.125
        %v2994 = vmul.f32 %v2715, 0.125
        %v2995 = vmul.f32 %v2721, 0.125
        %v2996 = vmul.f32 %v2727, 0.125
        %v2997 = vmul.f32 %v2733, 0.125
        %v2998 = vmul.f32 %v2739, 0.125
        %v2999 = vmul.f32 %v2745, 0.125
        %v3000 = vmul.f32 %v2751, 0.125
        %v3001 = vmul.f32 %v2757, 0.125
        %v3002 = vmul.f32 %v2763, 0.125
        %v3003 = vmul.f32 %v2769, 0.125
        %v3004 = vmul.f32 %v2775, 0.125
        %v3005 = vmul.f32 %v2781, 0.125
        %v3006 = vmul.f32 %v2787, 0.125
        %v3007 = vmul.f32 %v2793, 0.125
        %v3008 = vmul.f32 %v2799, 0.125
        %v3009 = vmul.f32 %v2805, 0.125
        %v3010 = vmul.f32 %v2811, 0.125
        %v3011 = vmul.f32 %v2817, 0.125
        %v3012 = vmul.f32 %v2823, 0.125
        %v3013 = vmul.f32 %v2829, 0.125
        %v3014 = vmul.f32 %v2835, 0.125
        %v3015 = vmul.f32 %v2841, 0.125
        %v3016 = vmul.f32 %v2847, 0.125
        %v3017 = vmul.f32 %v2853, 0.125
        %v3018 = vmul.f32 %v2859, 0.125
        %v3019 = vmul.f32 %v2865, 0.125
        %v3020 = vmul.f32 %v2871, 0.125
        %v3021 = vmul.f32 %v2877, 0.125
        %v3022 = vmul.f32 %v2883, 0.125
        %v3023 = vmul.f32 %v2889, 0.125
        %v3024 = vmul.f32 %v2895, 0.125
        %v3025 = vmul.f32 %v2901, 0.125
        %v3026 = vmul.f32 %v2907, 0.125
        %v3027 = vmul.f32 %v2913, 0.125
        %v3028 = vmul.f32 %v2919, 0.125
        %v3029 = vmul.f32 %v2925, 0.125
        %v3030 = vmul.f32 %v2931, 0.125
        %v3031 = vmul.f32 %v2937, 0.125
        %v3032 = vmul.f32 %v2943, 0.125
        %v3033 = vmul.f32 %v2949, 0.125
        %v3034 = vmul.f32 %v2955, 0.125
        %v3035 = vmul.f32 %v2961, 0.125
        %v3036 = vmul.f32 %v2967, 0.125
        %v3037 = vmul.f32 %v2973, 0.125
        %v3038 = vsub.f32 %v2399, %v2974
        %v3039 = vsub.f32 %v2401, %v2975
        %v3040 = vsub.f32 %v2512, %v2976
        %v3041 = vsub.f32 %v2514, %v2977
        %v3042 = vsub.f32 %v2403, %v2978
        %v3043 = vsub.f32 %v2405, %v2979
        %v3044 = vsub.f32 %v2516, %v2980
        %v3045 = vsub.f32 %v2518, %v2981
        %v3046 = vsub.f32 %v2409, %v2982
        %v3047 = vsub.f32 %v2411, %v2983
        %v3048 = vsub.f32 %v2522, %v2984
        %v3049 = vsub.f32 %v2524, %v2985
        %v3050 = vsub.f32 %v2413, %v2986
        %v3051 = vsub.f32 %v2415, %v2987
        %v3052 = vsub.f32 %v2526, %v2988
        %v3053 = vsub.f32 %v2528, %v2989
        %v3054 = vsub.f32 %v2419, %v2990
        %v3055 = vsub.f32 %v2421, %v2991
        %v3056 = vsub.f32 %v2532, %v2992
        %v3057 = vsub.f32 %v2534, %v2993
        %v3058 = vsub.f32 %v2423, %v2994
        %v3059 = vsub.f32 %v2425, %v2995
        %v3060 = vsub.f32 %v2536, %v2996
        %v3061 = vsub.f32 %v2538, %v2997
        %v3062 = vsub.f32 %v2429, %v2998
        %v3063 = vsub.f32 %v2431, %v2999
        %v3064 = vsub.f32 %v2542, %v3000
        %v3065 = vsub.f32 %v2544, %v3001
        %v3066 = vsub.f32 %v2433, %v3002
        %v3067 = vsub.f32 %v2435, %v3003
        %v3068 = vsub.f32 %v2546, %v3004
        %v3069 = vsub.f32 %v2548, %v3005
        %v3070 = vsub.f32 %v2439, %v3006
        %v3071 = vsub.f32 %v2441, %v3007
        %v3072 = vsub.f32 %v2552, %v3008
        %v3073 = vsub.f32 %v2554, %v3009
        %v3074 = vsub.f32 %v2443, %v3010
        %v3075 = vsub.f32 %v2445, %v3011
        %v3076 = vsub.f32 %v2556, %v3012
        %v3077 = vsub.f32 %v2558, %v3013
        %v3078 = vsub.f32 %v2449, %v3014
        %v3079 = vsub.f32 %v2451, %v3015
        %v3080 = vsub.f32 %v2562, %v3016
        %v3081 = vsub.f32 %v2564, %v3017
        %v3082 = vsub.f32 %v2453, %v3018
        %v3083 = vsub.f32 %v2455, %v3019
        %v3084 = vsub.f32 %v2566, %v3020
        %v3085 = vsub.f32 %v2568, %v3021
        %v3086 = vsub.f32 %v2459, %v3022
        %v3087 = vsub.f32 %v2461, %v3023
        %v3088 = vsub.f32 %v2572, %v3024
        %v3089 = vsub.f32 %v2574, %v3025
        %v3090 = vsub.f32 %v2463, %v3026
        %v3091 = vsub.f32 %v2465, %v3027
        %v3092 = vsub.f32 %v2576, %v3028
        %v3093 = vsub.f32 %v2578, %v3029
        %v3094 = vsub.f32 %v2469, %v3030
        %v3095 = vsub.f32 %v2471, %v3031
        %v3096 = vsub.f32 %v2582, %v3032
        %v3097 = vsub.f32 %v2584, %v3033
        %v3098 = vsub.f32 %v2473, %v3034
        %v3099 = vsub.f32 %v2475, %v3035
        %v3100 = vsub.f32 %v2586, %v3036
        %v3101 = vsub.f32 %v2588, %v3037
        %v3102 = vmul.f32 %v3038, %v3038
        %v3103 = vmul.f32 %v3039, %v3039
        %v3104 = vmul.f32 %v3040, %v3040
        %v3105 = vmul.f32 %v3041, %v3041
        %v3106 = vmul.f32 %v3042, %v3042
        %v3107 = vmul.f32 %v3043, %v3043
        %v3108 = vmul.f32 %v3044, %v3044
        %v3109 = vmul.f32 %v3045, %v3045
        %v3110 = vmul.f32 %v3046, %v3046
        %v3111 = vmul.f32 %v3047, %v3047
        %v3112 = vmul.f32 %v3048, %v3048
        %v3113 = vmul.f32 %v3049, %v3049
        %v3114 = vmul.f32 %v3050, %v3050
        %v3115 = vmul.f32 %v3051, %v3051
        %v3116 = vmul.f32 %v3052, %v3052
        %v3117 = vmul.f32 %v3053, %v3053
        %v3118 = vmul.f32 %v3054, %v3054
        %v3119 = vmul.f32 %v3055, %v3055
        %v3120 = vmul.f32 %v3056, %v3056
        %v3121 = vmul.f32 %v3057, %v3057
        %v3122 = vmul.f32 %v3058, %v3058
        %v3123 = vmul.f32 %v3059, %v3059
        %v3124 = vmul.f32 %v3060, %v3060
        %v3125 = vmul.f32 %v3061, %v3061
        %v3126 = vmul.f32 %v3062, %v3062
        %v3127 = vmul.f32 %v3063, %v3063
        %v3128 = vmul.f32 %v3064, %v3064
        %v3129 = vmul.f32 %v3065, %v3065
        %v3130 = vmul.f32 %v3066, %v3066
        %v3131 = vmul.f32 %v3067, %v3067
        %v3132 = vmul.f32 %v3068, %v3068
        %v3133 = vmul.f32 %v3069, %v3069
        %v3134 = vmul.f32 %v3070, %v3070
        %v3135 = vmul.f32 %v3071, %v3071
        %v3136 = vmul.f32 %v3072, %v3072
        %v3137 = vmul.f32 %v3073, %v3073
        %v3138 = vmul.f32 %v3074, %v3074
        %v3139 = vmul.f32 %v3075, %v3075
        %v3140 = vmul.f32 %v3076, %v3076
        %v3141 = vmul.f32 %v3077, %v3077
        %v3142 = vmul.f32 %v3078, %v3078
        %v3143 = vmul.f32 %v3079, %v3079
        %v3144 = vmul.f32 %v3080, %v3080
        %v3145 = vmul.f32 %v3081, %v3081
        %v3146 = vmul.f32 %v3082, %v3082
        %v3147 = vmul.f32 %v3083, %v3083
        %v3148 = vmul.f32 %v3084, %v3084
        %v3149 = vmul.f32 %v3085, %v3085
        %v3150 = vmul.f32 %v3086, %v3086
        %v3151 = vmul.f32 %v3087, %v3087
        %v3152 = vmul.f32 %v3088, %v3088
        %v3153 = vmul.f32 %v3089, %v3089
        %v3154 = vmul.f32 %v3090, %v3090
        %v3155 = vmul.f32 %v3091, %v3091
        %v3156 = vmul.f32 %v3092, %v3092
        %v3157 = vmul.f32 %v3093, %v3093
        %v3158 = vmul.f32 %v3094, %v3094
        %v3159 = vmul.f32 %v3095, %v3095
        %v3160 = vmul.f32 %v3096, %v3096
        %v3161 = vmul.f32 %v3097, %v3097
        %v3162 = vmul.f32 %v3098, %v3098
        %v3163 = vmul.f32 %v3099, %v3099
        %v3164 = vmul.f32 %v3100, %v3100
        %v3165 = vmul.f32 %v3101, %v3101
        %v3166 = vrot.slane %v3102, 4
        %v3167 = vadd.f32 %v3102, %v3166
        %v3168 = vrot.slane %v3167, 2
        %v3169 = vadd.f32 %v3167, %v3168
        %v3170 = vrot.slane %v3169, 1
        %v3171 = vadd.f32 %v3169, %v3170
        %v3172 = vrot.slane %v3103, 4
        %v3173 = vadd.f32 %v3103, %v3172
        %v3174 = vrot.slane %v3173, 2
        %v3175 = vadd.f32 %v3173, %v3174
        %v3176 = vrot.slane %v3175, 1
        %v3177 = vadd.f32 %v3175, %v3176
        %v3178 = vrot.slane %v3104, 4
        %v3179 = vadd.f32 %v3104, %v3178
        %v3180 = vrot.slane %v3179, 2
        %v3181 = vadd.f32 %v3179, %v3180
        %v3182 = vrot.slane %v3181, 1
        %v3183 = vadd.f32 %v3181, %v3182
        %v3184 = vrot.slane %v3105, 4
        %v3185 = vadd.f32 %v3105, %v3184
        %v3186 = vrot.slane %v3185, 2
        %v3187 = vadd.f32 %v3185, %v3186
        %v3188 = vrot.slane %v3187, 1
        %v3189 = vadd.f32 %v3187, %v3188
        %v3190 = vrot.slane %v3106, 4
        %v3191 = vadd.f32 %v3106, %v3190
        %v3192 = vrot.slane %v3191, 2
        %v3193 = vadd.f32 %v3191, %v3192
        %v3194 = vrot.slane %v3193, 1
        %v3195 = vadd.f32 %v3193, %v3194
        %v3196 = vrot.slane %v3107, 4
        %v3197 = vadd.f32 %v3107, %v3196
        %v3198 = vrot.slane %v3197, 2
        %v3199 = vadd.f32 %v3197, %v3198
        %v3200 = vrot.slane %v3199, 1
        %v3201 = vadd.f32 %v3199, %v3200
        %v3202 = vrot.slane %v3108, 4
        %v3203 = vadd.f32 %v3108, %v3202
        %v3204 = vrot.slane %v3203, 2
        %v3205 = vadd.f32 %v3203, %v3204
        %v3206 = vrot.slane %v3205, 1
        %v3207 = vadd.f32 %v3205, %v3206
        %v3208 = vrot.slane %v3109, 4
        %v3209 = vadd.f32 %v3109, %v3208
        %v3210 = vrot.slane %v3209, 2
        %v3211 = vadd.f32 %v3209, %v3210
        %v3212 = vrot.slane %v3211, 1
        %v3213 = vadd.f32 %v3211, %v3212
        %v3214 = vrot.slane %v3110, 4
        %v3215 = vadd.f32 %v3110, %v3214
        %v3216 = vrot.slane %v3215, 2
        %v3217 = vadd.f32 %v3215, %v3216
        %v3218 = vrot.slane %v3217, 1
        %v3219 = vadd.f32 %v3217, %v3218
        %v3220 = vrot.slane %v3111, 4
        %v3221 = vadd.f32 %v3111, %v3220
        %v3222 = vrot.slane %v3221, 2
        %v3223 = vadd.f32 %v3221, %v3222
        %v3224 = vrot.slane %v3223, 1
        %v3225 = vadd.f32 %v3223, %v3224
        %v3226 = vrot.slane %v3112, 4
        %v3227 = vadd.f32 %v3112, %v3226
        %v3228 = vrot.slane %v3227, 2
        %v3229 = vadd.f32 %v3227, %v3228
        %v3230 = vrot.slane %v3229, 1
        %v3231 = vadd.f32 %v3229, %v3230
        %v3232 = vrot.slane %v3113, 4
        %v3233 = vadd.f32 %v3113, %v3232
        %v3234 = vrot.slane %v3233, 2
        %v3235 = vadd.f32 %v3233, %v3234
        %v3236 = vrot.slane %v3235, 1
        %v3237 = vadd.f32 %v3235, %v3236
        %v3238 = vrot.slane %v3114, 4
        %v3239 = vadd.f32 %v3114, %v3238
        %v3240 = vrot.slane %v3239, 2
        %v3241 = vadd.f32 %v3239, %v3240
        %v3242 = vrot.slane %v3241, 1
        %v3243 = vadd.f32 %v3241, %v3242
        %v3244 = vrot.slane %v3115, 4
        %v3245 = vadd.f32 %v3115, %v3244
        %v3246 = vrot.slane %v3245, 2
        %v3247 = vadd.f32 %v3245, %v3246
        %v3248 = vrot.slane %v3247, 1
        %v3249 = vadd.f32 %v3247, %v3248
        %v3250 = vrot.slane %v3116, 4
        %v3251 = vadd.f32 %v3116, %v3250
        %v3252 = vrot.slane %v3251, 2
        %v3253 = vadd.f32 %v3251, %v3252
        %v3254 = vrot.slane %v3253, 1
        %v3255 = vadd.f32 %v3253, %v3254
        %v3256 = vrot.slane %v3117, 4
        %v3257 = vadd.f32 %v3117, %v3256
        %v3258 = vrot.slane %v3257, 2
        %v3259 = vadd.f32 %v3257, %v3258
        %v3260 = vrot.slane %v3259, 1
        %v3261 = vadd.f32 %v3259, %v3260
        %v3262 = vrot.slane %v3118, 4
        %v3263 = vadd.f32 %v3118, %v3262
        %v3264 = vrot.slane %v3263, 2
        %v3265 = vadd.f32 %v3263, %v3264
        %v3266 = vrot.slane %v3265, 1
        %v3267 = vadd.f32 %v3265, %v3266
        %v3268 = vrot.slane %v3119, 4
        %v3269 = vadd.f32 %v3119, %v3268
        %v3270 = vrot.slane %v3269, 2
        %v3271 = vadd.f32 %v3269, %v3270
        %v3272 = vrot.slane %v3271, 1
        %v3273 = vadd.f32 %v3271, %v3272
        %v3274 = vrot.slane %v3120, 4
        %v3275 = vadd.f32 %v3120, %v3274
        %v3276 = vrot.slane %v3275, 2
        %v3277 = vadd.f32 %v3275, %v3276
        %v3278 = vrot.slane %v3277, 1
        %v3279 = vadd.f32 %v3277, %v3278
        %v3280 = vrot.slane %v3121, 4
        %v3281 = vadd.f32 %v3121, %v3280
        %v3282 = vrot.slane %v3281, 2
        %v3283 = vadd.f32 %v3281, %v3282
        %v3284 = vrot.slane %v3283, 1
        %v3285 = vadd.f32 %v3283, %v3284
        %v3286 = vrot.slane %v3122, 4
        %v3287 = vadd.f32 %v3122, %v3286
        %v3288 = vrot.slane %v3287, 2
        %v3289 = vadd.f32 %v3287, %v3288
        %v3290 = vrot.slane %v3289, 1
        %v3291 = vadd.f32 %v3289, %v3290
        %v3292 = vrot.slane %v3123, 4
        %v3293 = vadd.f32 %v3123, %v3292
        %v3294 = vrot.slane %v3293, 2
        %v3295 = vadd.f32 %v3293, %v3294
        %v3296 = vrot.slane %v3295, 1
        %v3297 = vadd.f32 %v3295, %v3296
        %v3298 = vrot.slane %v3124, 4
        %v3299 = vadd.f32 %v3124, %v3298
        %v3300 = vrot.slane %v3299, 2
        %v3301 = vadd.f32 %v3299, %v3300
        %v3302 = vrot.slane %v3301, 1
        %v3303 = vadd.f32 %v3301, %v3302
        %v3304 = vrot.slane %v3125, 4
        %v3305 = vadd.f32 %v3125, %v3304
        %v3306 = vrot.slane %v3305, 2
        %v3307 = vadd.f32 %v3305, %v3306
        %v3308 = vrot.slane %v3307, 1
        %v3309 = vadd.f32 %v3307, %v3308
        %v3310 = vrot.slane %v3126, 4
        %v3311 = vadd.f32 %v3126, %v3310
        %v3312 = vrot.slane %v3311, 2
        %v3313 = vadd.f32 %v3311, %v3312
        %v3314 = vrot.slane %v3313, 1
        %v3315 = vadd.f32 %v3313, %v3314
        %v3316 = vrot.slane %v3127, 4
        %v3317 = vadd.f32 %v3127, %v3316
        %v3318 = vrot.slane %v3317, 2
        %v3319 = vadd.f32 %v3317, %v3318
        %v3320 = vrot.slane %v3319, 1
        %v3321 = vadd.f32 %v3319, %v3320
        %v3322 = vrot.slane %v3128, 4
        %v3323 = vadd.f32 %v3128, %v3322
        %v3324 = vrot.slane %v3323, 2
        %v3325 = vadd.f32 %v3323, %v3324
        %v3326 = vrot.slane %v3325, 1
        %v3327 = vadd.f32 %v3325, %v3326
        %v3328 = vrot.slane %v3129, 4
        %v3329 = vadd.f32 %v3129, %v3328
        %v3330 = vrot.slane %v3329, 2
        %v3331 = vadd.f32 %v3329, %v3330
        %v3332 = vrot.slane %v3331, 1
        %v3333 = vadd.f32 %v3331, %v3332
        %v3334 = vrot.slane %v3130, 4
        %v3335 = vadd.f32 %v3130, %v3334
        %v3336 = vrot.slane %v3335, 2
        %v3337 = vadd.f32 %v3335, %v3336
        %v3338 = vrot.slane %v3337, 1
        %v3339 = vadd.f32 %v3337, %v3338
        %v3340 = vrot.slane %v3131, 4
        %v3341 = vadd.f32 %v3131, %v3340
        %v3342 = vrot.slane %v3341, 2
        %v3343 = vadd.f32 %v3341, %v3342
        %v3344 = vrot.slane %v3343, 1
        %v3345 = vadd.f32 %v3343, %v3344
        %v3346 = vrot.slane %v3132, 4
        %v3347 = vadd.f32 %v3132, %v3346
        %v3348 = vrot.slane %v3347, 2
        %v3349 = vadd.f32 %v3347, %v3348
        %v3350 = vrot.slane %v3349, 1
        %v3351 = vadd.f32 %v3349, %v3350
        %v3352 = vrot.slane %v3133, 4
        %v3353 = vadd.f32 %v3133, %v3352
        %v3354 = vrot.slane %v3353, 2
        %v3355 = vadd.f32 %v3353, %v3354
        %v3356 = vrot.slane %v3355, 1
        %v3357 = vadd.f32 %v3355, %v3356
        %v3358 = vrot.slane %v3134, 4
        %v3359 = vadd.f32 %v3134, %v3358
        %v3360 = vrot.slane %v3359, 2
        %v3361 = vadd.f32 %v3359, %v3360
        %v3362 = vrot.slane %v3361, 1
        %v3363 = vadd.f32 %v3361, %v3362
        %v3364 = vrot.slane %v3135, 4
        %v3365 = vadd.f32 %v3135, %v3364
        %v3366 = vrot.slane %v3365, 2
        %v3367 = vadd.f32 %v3365, %v3366
        %v3368 = vrot.slane %v3367, 1
        %v3369 = vadd.f32 %v3367, %v3368
        %v3370 = vrot.slane %v3136, 4
        %v3371 = vadd.f32 %v3136, %v3370
        %v3372 = vrot.slane %v3371, 2
        %v3373 = vadd.f32 %v3371, %v3372
        %v3374 = vrot.slane %v3373, 1
        %v3375 = vadd.f32 %v3373, %v3374
        %v3376 = vrot.slane %v3137, 4
        %v3377 = vadd.f32 %v3137, %v3376
        %v3378 = vrot.slane %v3377, 2
        %v3379 = vadd.f32 %v3377, %v3378
        %v3380 = vrot.slane %v3379, 1
        %v3381 = vadd.f32 %v3379, %v3380
        %v3382 = vrot.slane %v3138, 4
        %v3383 = vadd.f32 %v3138, %v3382
        %v3384 = vrot.slane %v3383, 2
        %v3385 = vadd.f32 %v3383, %v3384
        %v3386 = vrot.slane %v3385, 1
        %v3387 = vadd.f32 %v3385, %v3386
        %v3388 = vrot.slane %v3139, 4
        %v3389 = vadd.f32 %v3139, %v3388
        %v3390 = vrot.slane %v3389, 2
        %v3391 = vadd.f32 %v3389, %v3390
        %v3392 = vrot.slane %v3391, 1
        %v3393 = vadd.f32 %v3391, %v3392
        %v3394 = vrot.slane %v3140, 4
        %v3395 = vadd.f32 %v3140, %v3394
        %v3396 = vrot.slane %v3395, 2
        %v3397 = vadd.f32 %v3395, %v3396
        %v3398 = vrot.slane %v3397, 1
        %v3399 = vadd.f32 %v3397, %v3398
        %v3400 = vrot.slane %v3141, 4
        %v3401 = vadd.f32 %v3141, %v3400
        %v3402 = vrot.slane %v3401, 2
        %v3403 = vadd.f32 %v3401, %v3402
        %v3404 = vrot.slane %v3403, 1
        %v3405 = vadd.f32 %v3403, %v3404
        %v3406 = vrot.slane %v3142, 4
        %v3407 = vadd.f32 %v3142, %v3406
        %v3408 = vrot.slane %v3407, 2
        %v3409 = vadd.f32 %v3407, %v3408
        %v3410 = vrot.slane %v3409, 1
        %v3411 = vadd.f32 %v3409, %v3410
        %v3412 = vrot.slane %v3143, 4
        %v3413 = vadd.f32 %v3143, %v3412
        %v3414 = vrot.slane %v3413, 2
        %v3415 = vadd.f32 %v3413, %v3414
        %v3416 = vrot.slane %v3415, 1
        %v3417 = vadd.f32 %v3415, %v3416
        %v3418 = vrot.slane %v3144, 4
        %v3419 = vadd.f32 %v3144, %v3418
        %v3420 = vrot.slane %v3419, 2
        %v3421 = vadd.f32 %v3419, %v3420
        %v3422 = vrot.slane %v3421, 1
        %v3423 = vadd.f32 %v3421, %v3422
        %v3424 = vrot.slane %v3145, 4
        %v3425 = vadd.f32 %v3145, %v3424
        %v3426 = vrot.slane %v3425, 2
        %v3427 = vadd.f32 %v3425, %v3426
        %v3428 = vrot.slane %v3427, 1
        %v3429 = vadd.f32 %v3427, %v3428
        %v3430 = vrot.slane %v3146, 4
        %v3431 = vadd.f32 %v3146, %v3430
        %v3432 = vrot.slane %v3431, 2
        %v3433 = vadd.f32 %v3431, %v3432
        %v3434 = vrot.slane %v3433, 1
        %v3435 = vadd.f32 %v3433, %v3434
        %v3436 = vrot.slane %v3147, 4
        %v3437 = vadd.f32 %v3147, %v3436
        %v3438 = vrot.slane %v3437, 2
        %v3439 = vadd.f32 %v3437, %v3438
        %v3440 = vrot.slane %v3439, 1
        %v3441 = vadd.f32 %v3439, %v3440
        %v3442 = vrot.slane %v3148, 4
        %v3443 = vadd.f32 %v3148, %v3442
        %v3444 = vrot.slane %v3443, 2
        %v3445 = vadd.f32 %v3443, %v3444
        %v3446 = vrot.slane %v3445, 1
        %v3447 = vadd.f32 %v3445, %v3446
        %v3448 = vrot.slane %v3149, 4
        %v3449 = vadd.f32 %v3149, %v3448
        %v3450 = vrot.slane %v3449, 2
        %v3451 = vadd.f32 %v3449, %v3450
        %v3452 = vrot.slane %v3451, 1
        %v3453 = vadd.f32 %v3451, %v3452
        %v3454 = vrot.slane %v3150, 4
        %v3455 = vadd.f32 %v3150, %v3454
        %v3456 = vrot.slane %v3455, 2
        %v3457 = vadd.f32 %v3455, %v3456
        %v3458 = vrot.slane %v3457, 1
        %v3459 = vadd.f32 %v3457, %v3458
        %v3460 = vrot.slane %v3151, 4
        %v3461 = vadd.f32 %v3151, %v3460
        %v3462 = vrot.slane %v3461, 2
        %v3463 = vadd.f32 %v3461, %v3462
        %v3464 = vrot.slane %v3463, 1
        %v3465 = vadd.f32 %v3463, %v3464
        %v3466 = vrot.slane %v3152, 4
        %v3467 = vadd.f32 %v3152, %v3466
        %v3468 = vrot.slane %v3467, 2
        %v3469 = vadd.f32 %v3467, %v3468
        %v3470 = vrot.slane %v3469, 1
        %v3471 = vadd.f32 %v3469, %v3470
        %v3472 = vrot.slane %v3153, 4
        %v3473 = vadd.f32 %v3153, %v3472
        %v3474 = vrot.slane %v3473, 2
        %v3475 = vadd.f32 %v3473, %v3474
        %v3476 = vrot.slane %v3475, 1
        %v3477 = vadd.f32 %v3475, %v3476
        %v3478 = vrot.slane %v3154, 4
        %v3479 = vadd.f32 %v3154, %v3478
        %v3480 = vrot.slane %v3479, 2
        %v3481 = vadd.f32 %v3479, %v3480
        %v3482 = vrot.slane %v3481, 1
        %v3483 = vadd.f32 %v3481, %v3482
        %v3484 = vrot.slane %v3155, 4
        %v3485 = vadd.f32 %v3155, %v3484
        %v3486 = vrot.slane %v3485, 2
        %v3487 = vadd.f32 %v3485, %v3486
        %v3488 = vrot.slane %v3487, 1
        %v3489 = vadd.f32 %v3487, %v3488
        %v3490 = vrot.slane %v3156, 4
        %v3491 = vadd.f32 %v3156, %v3490
        %v3492 = vrot.slane %v3491, 2
        %v3493 = vadd.f32 %v3491, %v3492
        %v3494 = vrot.slane %v3493, 1
        %v3495 = vadd.f32 %v3493, %v3494
        %v3496 = vrot.slane %v3157, 4
        %v3497 = vadd.f32 %v3157, %v3496
        %v3498 = vrot.slane %v3497, 2
        %v3499 = vadd.f32 %v3497, %v3498
        %v3500 = vrot.slane %v3499, 1
        %v3501 = vadd.f32 %v3499, %v3500
        %v3502 = vrot.slane %v3158, 4
        %v3503 = vadd.f32 %v3158, %v3502
        %v3504 = vrot.slane %v3503, 2
        %v3505 = vadd.f32 %v3503, %v3504
        %v3506 = vrot.slane %v3505, 1
        %v3507 = vadd.f32 %v3505, %v3506
        %v3508 = vrot.slane %v3159, 4
        %v3509 = vadd.f32 %v3159, %v3508
        %v3510 = vrot.slane %v3509, 2
        %v3511 = vadd.f32 %v3509, %v3510
        %v3512 = vrot.slane %v3511, 1
        %v3513 = vadd.f32 %v3511, %v3512
        %v3514 = vrot.slane %v3160, 4
        %v3515 = vadd.f32 %v3160, %v3514
        %v3516 = vrot.slane %v3515, 2
        %v3517 = vadd.f32 %v3515, %v3516
        %v3518 = vrot.slane %v3517, 1
        %v3519 = vadd.f32 %v3517, %v3518
        %v3520 = vrot.slane %v3161, 4
        %v3521 = vadd.f32 %v3161, %v3520
        %v3522 = vrot.slane %v3521, 2
        %v3523 = vadd.f32 %v3521, %v3522
        %v3524 = vrot.slane %v3523, 1
        %v3525 = vadd.f32 %v3523, %v3524
        %v3526 = vrot.slane %v3162, 4
        %v3527 = vadd.f32 %v3162, %v3526
        %v3528 = vrot.slane %v3527, 2
        %v3529 = vadd.f32 %v3527, %v3528
        %v3530 = vrot.slane %v3529, 1
        %v3531 = vadd.f32 %v3529, %v3530
        %v3532 = vrot.slane %v3163, 4
        %v3533 = vadd.f32 %v3163, %v3532
        %v3534 = vrot.slane %v3533, 2
        %v3535 = vadd.f32 %v3533, %v3534
        %v3536 = vrot.slane %v3535, 1
        %v3537 = vadd.f32 %v3535, %v3536
        %v3538 = vrot.slane %v3164, 4
        %v3539 = vadd.f32 %v3164, %v3538
        %v3540 = vrot.slane %v3539, 2
        %v3541 = vadd.f32 %v3539, %v3540
        %v3542 = vrot.slane %v3541, 1
        %v3543 = vadd.f32 %v3541, %v3542
        %v3544 = vrot.slane %v3165, 4
        %v3545 = vadd.f32 %v3165, %v3544
        %v3546 = vrot.slane %v3545, 2
        %v3547 = vadd.f32 %v3545, %v3546
        %v3548 = vrot.slane %v3547, 1
        %v3549 = vadd.f32 %v3547, %v3548
        %v3550 = vmul.f32 %v3171, 0.125
        %v3551 = vmul.f32 %v3177, 0.125
        %v3552 = vmul.f32 %v3183, 0.125
        %v3553 = vmul.f32 %v3189, 0.125
        %v3554 = vmul.f32 %v3195, 0.125
        %v3555 = vmul.f32 %v3201, 0.125
        %v3556 = vmul.f32 %v3207, 0.125
        %v3557 = vmul.f32 %v3213, 0.125
        %v3558 = vmul.f32 %v3219, 0.125
        %v3559 = vmul.f32 %v3225, 0.125
        %v3560 = vmul.f32 %v3231, 0.125
        %v3561 = vmul.f32 %v3237, 0.125
        %v3562 = vmul.f32 %v3243, 0.125
        %v3563 = vmul.f32 %v3249, 0.125
        %v3564 = vmul.f32 %v3255, 0.125
        %v3565 = vmul.f32 %v3261, 0.125
        %v3566 = vmul.f32 %v3267, 0.125
        %v3567 = vmul.f32 %v3273, 0.125
        %v3568 = vmul.f32 %v3279, 0.125
        %v3569 = vmul.f32 %v3285, 0.125
        %v3570 = vmul.f32 %v3291, 0.125
        %v3571 = vmul.f32 %v3297, 0.125
        %v3572 = vmul.f32 %v3303, 0.125
        %v3573 = vmul.f32 %v3309, 0.125
        %v3574 = vmul.f32 %v3315, 0.125
        %v3575 = vmul.f32 %v3321, 0.125
        %v3576 = vmul.f32 %v3327, 0.125
        %v3577 = vmul.f32 %v3333, 0.125
        %v3578 = vmul.f32 %v3339, 0.125
        %v3579 = vmul.f32 %v3345, 0.125
        %v3580 = vmul.f32 %v3351, 0.125
        %v3581 = vmul.f32 %v3357, 0.125
        %v3582 = vmul.f32 %v3363, 0.125
        %v3583 = vmul.f32 %v3369, 0.125
        %v3584 = vmul.f32 %v3375, 0.125
        %v3585 = vmul.f32 %v3381, 0.125
        %v3586 = vmul.f32 %v3387, 0.125
        %v3587 = vmul.f32 %v3393, 0.125
        %v3588 = vmul.f32 %v3399, 0.125
        %v3589 = vmul.f32 %v3405, 0.125
        %v3590 = vmul.f32 %v3411, 0.125
        %v3591 = vmul.f32 %v3417, 0.125
        %v3592 = vmul.f32 %v3423, 0.125
        %v3593 = vmul.f32 %v3429, 0.125
        %v3594 = vmul.f32 %v3435, 0.125
        %v3595 = vmul.f32 %v3441, 0.125
        %v3596 = vmul.f32 %v3447, 0.125
        %v3597 = vmul.f32 %v3453, 0.125
        %v3598 = vmul.f32 %v3459, 0.125
        %v3599 = vmul.f32 %v3465, 0.125
        %v3600 = vmul.f32 %v3471, 0.125
        %v3601 = vmul.f32 %v3477, 0.125
        %v3602 = vmul.f32 %v3483, 0.125
        %v3603 = vmul.f32 %v3489, 0.125
        %v3604 = vmul.f32 %v3495, 0.125
        %v3605 = vmul.f32 %v3501, 0.125
        %v3606 = vmul.f32 %v3507, 0.125
        %v3607 = vmul.f32 %v3513, 0.125
        %v3608 = vmul.f32 %v3519, 0.125
        %v3609 = vmul.f32 %v3525, 0.125
        %v3610 = vmul.f32 %v3531, 0.125
        %v3611 = vmul.f32 %v3537, 0.125
        %v3612 = vmul.f32 %v3543, 0.125
        %v3613 = vmul.f32 %v3549, 0.125
        %v3614 = vadd.f32 %v3550, 0.8
        %v3615 = vadd.f32 %v3551, 0.8
        %v3616 = vadd.f32 %v3552, 0.8
        %v3617 = vadd.f32 %v3553, 0.8
        %v3618 = vadd.f32 %v3554, 0.8
        %v3619 = vadd.f32 %v3555, 0.8
        %v3620 = vadd.f32 %v3556, 0.8
        %v3621 = vadd.f32 %v3557, 0.8
        %v3622 = vadd.f32 %v3558, 0.8
        %v3623 = vadd.f32 %v3559, 0.8
        %v3624 = vadd.f32 %v3560, 0.8
        %v3625 = vadd.f32 %v3561, 0.8
        %v3626 = vadd.f32 %v3562, 0.8
        %v3627 = vadd.f32 %v3563, 0.8
        %v3628 = vadd.f32 %v3564, 0.8
        %v3629 = vadd.f32 %v3565, 0.8
        %v3630 = vadd.f32 %v3566, 0.8
        %v3631 = vadd.f32 %v3567, 0.8
        %v3632 = vadd.f32 %v3568, 0.8
        %v3633 = vadd.f32 %v3569, 0.8
        %v3634 = vadd.f32 %v3570, 0.8
        %v3635 = vadd.f32 %v3571, 0.8
        %v3636 = vadd.f32 %v3572, 0.8
        %v3637 = vadd.f32 %v3573, 0.8
        %v3638 = vadd.f32 %v3574, 0.8
        %v3639 = vadd.f32 %v3575, 0.8
        %v3640 = vadd.f32 %v3576, 0.8
        %v3641 = vadd.f32 %v3577, 0.8
        %v3642 = vadd.f32 %v3578, 0.8
        %v3643 = vadd.f32 %v3579, 0.8
        %v3644 = vadd.f32 %v3580, 0.8
        %v3645 = vadd.f32 %v3581, 0.8
        %v3646 = vadd.f32 %v3582, 0.8
        %v3647 = vadd.f32 %v3583, 0.8
        %v3648 = vadd.f32 %v3584, 0.8
        %v3649 = vadd.f32 %v3585, 0.8
        %v3650 = vadd.f32 %v3586, 0.8
        %v3651 = vadd.f32 %v3587, 0.8
        %v3652 = vadd.f32 %v3588, 0.8
        %v3653 = vadd.f32 %v3589, 0.8
        %v3654 = vadd.f32 %v3590, 0.8
        %v3655 = vadd.f32 %v3591, 0.8
        %v3656 = vadd.f32 %v3592, 0.8
        %v3657 = vadd.f32 %v3593, 0.8
        %v3658 = vadd.f32 %v3594, 0.8
        %v3659 = vadd.f32 %v3595, 0.8
        %v3660 = vadd.f32 %v3596, 0.8
        %v3661 = vadd.f32 %v3597, 0.8
        %v3662 = vadd.f32 %v3598, 0.8
        %v3663 = vadd.f32 %v3599, 0.8
        %v3664 = vadd.f32 %v3600, 0.8
        %v3665 = vadd.f32 %v3601, 0.8
        %v3666 = vadd.f32 %v3602, 0.8
        %v3667 = vadd.f32 %v3603, 0.8
        %v3668 = vadd.f32 %v3604, 0.8
        %v3669 = vadd.f32 %v3605, 0.8
        %v3670 = vadd.f32 %v3606, 0.8
        %v3671 = vadd.f32 %v3607, 0.8
        %v3672 = vadd.f32 %v3608, 0.8
        %v3673 = vadd.f32 %v3609, 0.8
        %v3674 = vadd.f32 %v3610, 0.8
        %v3675 = vadd.f32 %v3611, 0.8
        %v3676 = vadd.f32 %v3612, 0.8
        %v3677 = vadd.f32 %v3613, 0.8
        %v3678 = vrsqrt.pop %v3614
        %v3679 = vrsqrt.pop %v3615
        %v3680 = vrsqrt.pop %v3616
        %v3681 = vrsqrt.pop %v3617
        %v3682 = vrsqrt.pop %v3618
        %v3683 = vrsqrt.pop %v3619
        %v3684 = vrsqrt.pop %v3620
        %v3685 = vrsqrt.pop %v3621
        %v3686 = vrsqrt.pop %v3622
        %v3687 = vrsqrt.pop %v3623
        %v3688 = vrsqrt.pop %v3624
        %v3689 = vrsqrt.pop %v3625
        %v3690 = vrsqrt.pop %v3626
        %v3691 = vrsqrt.pop %v3627
        %v3692 = vrsqrt.pop %v3628
        %v3693 = vrsqrt.pop %v3629
        %v3694 = vrsqrt.pop %v3630
        %v3695 = vrsqrt.pop %v3631
        %v3696 = vrsqrt.pop %v3632
        %v3697 = vrsqrt.pop %v3633
        %v3698 = vrsqrt.pop %v3634
        %v3699 = vrsqrt.pop %v3635
        %v3700 = vrsqrt.pop %v3636
        %v3701 = vrsqrt.pop %v3637
        %v3702 = vrsqrt.pop %v3638
        %v3703 = vrsqrt.pop %v3639
        %v3704 = vrsqrt.pop %v3640
        %v3705 = vrsqrt.pop %v3641
        %v3706 = vrsqrt.pop %v3642
        %v3707 = vrsqrt.pop %v3643
        %v3708 = vrsqrt.pop %v3644
        %v3709 = vrsqrt.pop %v3645
        %v3710 = vrsqrt.pop %v3646
        %v3711 = vrsqrt.pop %v3647
        %v3712 = vrsqrt.pop %v3648
        %v3713 = vrsqrt.pop %v3649
        %v3714 = vrsqrt.pop %v3650
        %v3715 = vrsqrt.pop %v3651
        %v3716 = vrsqrt.pop %v3652
        %v3717 = vrsqrt.pop %v3653
        %v3718 = vrsqrt.pop %v3654
        %v3719 = vrsqrt.pop %v3655
        %v3720 = vrsqrt.pop %v3656
        %v3721 = vrsqrt.pop %v3657
        %v3722 = vrsqrt.pop %v3658
        %v3723 = vrsqrt.pop %v3659
        %v3724 = vrsqrt.pop %v3660
        %v3725 = vrsqrt.pop %v3661
        %v3726 = vrsqrt.pop %v3662
        %v3727 = vrsqrt.pop %v3663
        %v3728 = vrsqrt.pop %v3664
        %v3729 = vrsqrt.pop %v3665
        %v3730 = vrsqrt.pop %v3666
        %v3731 = vrsqrt.pop %v3667
        %v3732 = vrsqrt.pop %v3668
        %v3733 = vrsqrt.pop %v3669
        %v3734 = vrsqrt.pop %v3670
        %v3735 = vrsqrt.pop %v3671
        %v3736 = vrsqrt.pop %v3672
        %v3737 = vrsqrt.pop %v3673
        %v3738 = vrsqrt.pop %v3674
        %v3739 = vrsqrt.pop %v3675
        %v3740 = vrsqrt.pop %v3676
        %v3741 = vrsqrt.pop %v3677
        %v3742 = vmul.f32 %v3038, %v3678
        %v3743 = vmul.f32 %v3039, %v3679
        %v3744 = vmul.f32 %v3040, %v3680
        %v3745 = vmul.f32 %v3041, %v3681
        %v3746 = vmul.f32 %v3042, %v3682
        %v3747 = vmul.f32 %v3043, %v3683
        %v3748 = vmul.f32 %v3044, %v3684
        %v3749 = vmul.f32 %v3045, %v3685
        %v3750 = vmul.f32 %v3046, %v3686
        %v3751 = vmul.f32 %v3047, %v3687
        %v3752 = vmul.f32 %v3048, %v3688
        %v3753 = vmul.f32 %v3049, %v3689
        %v3754 = vmul.f32 %v3050, %v3690
        %v3755 = vmul.f32 %v3051, %v3691
        %v3756 = vmul.f32 %v3052, %v3692
        %v3757 = vmul.f32 %v3053, %v3693
        %v3758 = vmul.f32 %v3054, %v3694
        %v3759 = vmul.f32 %v3055, %v3695
        %v3760 = vmul.f32 %v3056, %v3696
        %v3761 = vmul.f32 %v3057, %v3697
        %v3762 = vmul.f32 %v3058, %v3698
        %v3763 = vmul.f32 %v3059, %v3699
        %v3764 = vmul.f32 %v3060, %v3700
        %v3765 = vmul.f32 %v3061, %v3701
        %v3766 = vmul.f32 %v3062, %v3702
        %v3767 = vmul.f32 %v3063, %v3703
        %v3768 = vmul.f32 %v3064, %v3704
        %v3769 = vmul.f32 %v3065, %v3705
        %v3770 = vmul.f32 %v3066, %v3706
        %v3771 = vmul.f32 %v3067, %v3707
        %v3772 = vmul.f32 %v3068, %v3708
        %v3773 = vmul.f32 %v3069, %v3709
        %v3774 = vmul.f32 %v3070, %v3710
        %v3775 = vmul.f32 %v3071, %v3711
        %v3776 = vmul.f32 %v3072, %v3712
        %v3777 = vmul.f32 %v3073, %v3713
        %v3778 = vmul.f32 %v3074, %v3714
        %v3779 = vmul.f32 %v3075, %v3715
        %v3780 = vmul.f32 %v3076, %v3716
        %v3781 = vmul.f32 %v3077, %v3717
        %v3782 = vmul.f32 %v3078, %v3718
        %v3783 = vmul.f32 %v3079, %v3719
        %v3784 = vmul.f32 %v3080, %v3720
        %v3785 = vmul.f32 %v3081, %v3721
        %v3786 = vmul.f32 %v3082, %v3722
        %v3787 = vmul.f32 %v3083, %v3723
        %v3788 = vmul.f32 %v3084, %v3724
        %v3789 = vmul.f32 %v3085, %v3725
        %v3790 = vmul.f32 %v3086, %v3726
        %v3791 = vmul.f32 %v3087, %v3727
        %v3792 = vmul.f32 %v3088, %v3728
        %v3793 = vmul.f32 %v3089, %v3729
        %v3794 = vmul.f32 %v3090, %v3730
        %v3795 = vmul.f32 %v3091, %v3731
        %v3796 = vmul.f32 %v3092, %v3732
        %v3797 = vmul.f32 %v3093, %v3733
        %v3798 = vmul.f32 %v3094, %v3734
        %v3799 = vmul.f32 %v3095, %v3735
        %v3800 = vmul.f32 %v3096, %v3736
        %v3801 = vmul.f32 %v3097, %v3737
        %v3802 = vmul.f32 %v3098, %v3738
        %v3803 = vmul.f32 %v3099, %v3739
        %v3804 = vmul.f32 %v3100, %v3740
        %v3805 = vmul.f32 %v3101, %v3741
        %v3807 = vlaneseq
        %v3808 = vshrl.u32 %v3807, 7
        %v3809 = vsub.s32 0, %v3808
        %v3810 = vrot.slane %v420, %v3809
        %v3811 = vlaneseq
        %v3812 = vshrl.u32 %v3811, 7
        %v3813 = vsub.s32 1, %v3812
        %v3814 = vrot.slane %v420, %v3813
        %v3815 = vlaneseq
        %v3816 = vshrl.u32 %v3815, 7
        %v3817 = vsub.s32 2, %v3816
        %v3818 = vrot.slane %v420, %v3817
        %v3819 = vlaneseq
        %v3820 = vshrl.u32 %v3819, 7
        %v3821 = vsub.s32 3, %v3820
        %v3822 = vrot.slane %v420, %v3821
        %v3827 = vmul.f32 %v3742, %v3810
        %v3828 = vmul.f32 %v3743, %v3814
        %v3829 = vmul.f32 %v3744, %v3818
        %v3830 = vmul.f32 %v3745, %v3822
        %v3831 = vmul.f32 %v3746, %v3810
        %v3832 = vmul.f32 %v3747, %v3814
        %v3833 = vmul.f32 %v3748, %v3818
        %v3834 = vmul.f32 %v3749, %v3822
        %v3835 = vmul.f32 %v3750, %v3810
        %v3836 = vmul.f32 %v3751, %v3814
        %v3837 = vmul.f32 %v3752, %v3818
        %v3838 = vmul.f32 %v3753, %v3822
        %v3839 = vmul.f32 %v3754, %v3810
        %v3840 = vmul.f32 %v3755, %v3814
        %v3841 = vmul.f32 %v3756, %v3818
        %v3842 = vmul.f32 %v3757, %v3822
        %v3843 = vmul.f32 %v3758, %v3810
        %v3844 = vmul.f32 %v3759, %v3814
        %v3845 = vmul.f32 %v3760, %v3818
        %v3846 = vmul.f32 %v3761, %v3822
        %v3847 = vmul.f32 %v3762, %v3810
        %v3848 = vmul.f32 %v3763, %v3814
        %v3849 = vmul.f32 %v3764, %v3818
        %v3850 = vmul.f32 %v3765, %v3822
        %v3851 = vmul.f32 %v3766, %v3810
        %v3852 = vmul.f32 %v3767, %v3814
        %v3853 = vmul.f32 %v3768, %v3818
        %v3854 = vmul.f32 %v3769, %v3822
        %v3855 = vmul.f32 %v3770, %v3810
        %v3856 = vmul.f32 %v3771, %v3814
        %v3857 = vmul.f32 %v3772, %v3818
        %v3858 = vmul.f32 %v3773, %v3822
        %v3859 = vmul.f32 %v3774, %v3810
        %v3860 = vmul.f32 %v3775, %v3814
        %v3861 = vmul.f32 %v3776, %v3818
        %v3862 = vmul.f32 %v3777, %v3822
        %v3863 = vmul.f32 %v3778, %v3810
        %v3864 = vmul.f32 %v3779, %v3814
        %v3865 = vmul.f32 %v3780, %v3818
        %v3866 = vmul.f32 %v3781, %v3822
        %v3867 = vmul.f32 %v3782, %v3810
        %v3868 = vmul.f32 %v3783, %v3814
        %v3869 = vmul.f32 %v3784, %v3818
        %v3870 = vmul.f32 %v3785, %v3822
        %v3871 = vmul.f32 %v3786, %v3810
        %v3872 = vmul.f32 %v3787, %v3814
        %v3873 = vmul.f32 %v3788, %v3818
        %v3874 = vmul.f32 %v3789, %v3822
        %v3875 = vmul.f32 %v3790, %v3810
        %v3876 = vmul.f32 %v3791, %v3814
        %v3877 = vmul.f32 %v3792, %v3818
        %v3878 = vmul.f32 %v3793, %v3822
        %v3879 = vmul.f32 %v3794, %v3810
        %v3880 = vmul.f32 %v3795, %v3814
        %v3881 = vmul.f32 %v3796, %v3818
        %v3882 = vmul.f32 %v3797, %v3822
        %v3883 = vmul.f32 %v3798, %v3810
        %v3884 = vmul.f32 %v3799, %v3814
        %v3885 = vmul.f32 %v3800, %v3818
        %v3886 = vmul.f32 %v3801, %v3822
        %v3887 = vmul.f32 %v3802, %v3810
        %v3888 = vmul.f32 %v3803, %v3814
        %v3889 = vmul.f32 %v3804, %v3818
        %v3890 = vmul.f32 %v3805, %v3822
        %v3892 = vlaneseq
        %v3893 = vshrl.u32 %v3892, 7
        %v3894 = vsub.s32 0, %v3893
        %v3895 = vrot.slane %v422, %v3894
        %v3896 = vlaneseq
        %v3897 = vshrl.u32 %v3896, 7
        %v3898 = vsub.s32 1, %v3897
        %v3899 = vrot.slane %v422, %v3898
        %v3900 = vlaneseq
        %v3901 = vshrl.u32 %v3900, 7
        %v3902 = vsub.s32 2, %v3901
        %v3903 = vrot.slane %v422, %v3902
        %v3904 = vlaneseq
        %v3905 = vshrl.u32 %v3904, 7
        %v3906 = vsub.s32 3, %v3905
        %v3907 = vrot.slane %v422, %v3906
        %v3912 = vadd.f32 %v3827, %v3895
        %v3913 = vadd.f32 %v3828, %v3899
        %v3914 = vadd.f32 %v3829, %v3903
        %v3915 = vadd.f32 %v3830, %v3907
        %v3916 = vadd.f32 %v3831, %v3895
        %v3917 = vadd.f32 %v3832, %v3899
        %v3918 = vadd.f32 %v3833, %v3903
        %v3919 = vadd.f32 %v3834, %v3907
        %v3920 = vadd.f32 %v3835, %v3895
        %v3921 = vadd.f32 %v3836, %v3899
        %v3922 = vadd.f32 %v3837, %v3903
        %v3923 = vadd.f32 %v3838, %v3907
        %v3924 = vadd.f32 %v3839, %v3895
        %v3925 = vadd.f32 %v3840, %v3899
        %v3926 = vadd.f32 %v3841, %v3903
        %v3927 = vadd.f32 %v3842, %v3907
        %v3928 = vadd.f32 %v3843, %v3895
        %v3929 = vadd.f32 %v3844, %v3899
        %v3930 = vadd.f32 %v3845, %v3903
        %v3931 = vadd.f32 %v3846, %v3907
        %v3932 = vadd.f32 %v3847, %v3895
        %v3933 = vadd.f32 %v3848, %v3899
        %v3934 = vadd.f32 %v3849, %v3903
        %v3935 = vadd.f32 %v3850, %v3907
        %v3936 = vadd.f32 %v3851, %v3895
        %v3937 = vadd.f32 %v3852, %v3899
        %v3938 = vadd.f32 %v3853, %v3903
        %v3939 = vadd.f32 %v3854, %v3907
        %v3940 = vadd.f32 %v3855, %v3895
        %v3941 = vadd.f32 %v3856, %v3899
        %v3942 = vadd.f32 %v3857, %v3903
        %v3943 = vadd.f32 %v3858, %v3907
        %v3944 = vadd.f32 %v3859, %v3895
        %v3945 = vadd.f32 %v3860, %v3899
        %v3946 = vadd.f32 %v3861, %v3903
        %v3947 = vadd.f32 %v3862, %v3907
        %v3948 = vadd.f32 %v3863, %v3895
        %v3949 = vadd.f32 %v3864, %v3899
        %v3950 = vadd.f32 %v3865, %v3903
        %v3951 = vadd.f32 %v3866, %v3907
        %v3952 = vadd.f32 %v3867, %v3895
        %v3953 = vadd.f32 %v3868, %v3899
        %v3954 = vadd.f32 %v3869, %v3903
        %v3955 = vadd.f32 %v3870, %v3907
        %v3956 = vadd.f32 %v3871, %v3895
        %v3957 = vadd.f32 %v3872, %v3899
        %v3958 = vadd.f32 %v3873, %v3903
        %v3959 = vadd.f32 %v3874, %v3907
        %v3960 = vadd.f32 %v3875, %v3895
        %v3961 = vadd.f32 %v3876, %v3899
        %v3962 = vadd.f32 %v3877, %v3903
        %v3963 = vadd.f32 %v3878, %v3907
        %v3964 = vadd.f32 %v3879, %v3895
        %v3965 = vadd.f32 %v3880, %v3899
        %v3966 = vadd.f32 %v3881, %v3903
        %v3967 = vadd.f32 %v3882, %v3907
        %v3968 = vadd.f32 %v3883, %v3895
        %v3969 = vadd.f32 %v3884, %v3899
        %v3970 = vadd.f32 %v3885, %v3903
        %v3971 = vadd.f32 %v3886, %v3907
        %v3972 = vadd.f32 %v3887, %v3895
        %v3973 = vadd.f32 %v3888, %v3899
        %v3974 = vadd.f32 %v3889, %v3903
        %v3975 = vadd.f32 %v3890, %v3907
        %vm3976 = vcmp.gt.f32.partialorder %v3912, 0.0
        %vm3977 = vcmp.gt.f32.partialorder %v3913, 0.0
        %vm3978 = vcmp.gt.f32.partialorder %v3914, 0.0
        %vm3979 = vcmp.gt.f32.partialorder %v3915, 0.0
        %vm3980 = vcmp.gt.f32.partialorder %v3916, 0.0
        %vm3981 = vcmp.gt.f32.partialorder %v3917, 0.0
        %vm3982 = vcmp.gt.f32.partialorder %v3918, 0.0
        %vm3983 = vcmp.gt.f32.partialorder %v3919, 0.0
        %vm3984 = vcmp.gt.f32.partialorder %v3920, 0.0
        %vm3985 = vcmp.gt.f32.partialorder %v3921, 0.0
        %vm3986 = vcmp.gt.f32.partialorder %v3922, 0.0
        %vm3987 = vcmp.gt.f32.partialorder %v3923, 0.0
        %vm3988 = vcmp.gt.f32.partialorder %v3924, 0.0
        %vm3989 = vcmp.gt.f32.partialorder %v3925, 0.0
        %vm3990 = vcmp.gt.f32.partialorder %v3926, 0.0
        %vm3991 = vcmp.gt.f32.partialorder %v3927, 0.0
        %vm3992 = vcmp.gt.f32.partialorder %v3928, 0.0
        %vm3993 = vcmp.gt.f32.partialorder %v3929, 0.0
        %vm3994 = vcmp.gt.f32.partialorder %v3930, 0.0
        %vm3995 = vcmp.gt.f32.partialorder %v3931, 0.0
        %vm3996 = vcmp.gt.f32.partialorder %v3932, 0.0
        %vm3997 = vcmp.gt.f32.partialorder %v3933, 0.0
        %vm3998 = vcmp.gt.f32.partialorder %v3934, 0.0
        %vm3999 = vcmp.gt.f32.partialorder %v3935, 0.0
        %vm4000 = vcmp.gt.f32.partialorder %v3936, 0.0
        %vm4001 = vcmp.gt.f32.partialorder %v3937, 0.0
        %vm4002 = vcmp.gt.f32.partialorder %v3938, 0.0
        %vm4003 = vcmp.gt.f32.partialorder %v3939, 0.0
        %vm4004 = vcmp.gt.f32.partialorder %v3940, 0.0
        %vm4005 = vcmp.gt.f32.partialorder %v3941, 0.0
        %vm4006 = vcmp.gt.f32.partialorder %v3942, 0.0
        %vm4007 = vcmp.gt.f32.partialorder %v3943, 0.0
        %vm4008 = vcmp.gt.f32.partialorder %v3944, 0.0
        %vm4009 = vcmp.gt.f32.partialorder %v3945, 0.0
        %vm4010 = vcmp.gt.f32.partialorder %v3946, 0.0
        %vm4011 = vcmp.gt.f32.partialorder %v3947, 0.0
        %vm4012 = vcmp.gt.f32.partialorder %v3948, 0.0
        %vm4013 = vcmp.gt.f32.partialorder %v3949, 0.0
        %vm4014 = vcmp.gt.f32.partialorder %v3950, 0.0
        %vm4015 = vcmp.gt.f32.partialorder %v3951, 0.0
        %vm4016 = vcmp.gt.f32.partialorder %v3952, 0.0
        %vm4017 = vcmp.gt.f32.partialorder %v3953, 0.0
        %vm4018 = vcmp.gt.f32.partialorder %v3954, 0.0
        %vm4019 = vcmp.gt.f32.partialorder %v3955, 0.0
        %vm4020 = vcmp.gt.f32.partialorder %v3956, 0.0
        %vm4021 = vcmp.gt.f32.partialorder %v3957, 0.0
        %vm4022 = vcmp.gt.f32.partialorder %v3958, 0.0
        %vm4023 = vcmp.gt.f32.partialorder %v3959, 0.0
        %vm4024 = vcmp.gt.f32.partialorder %v3960, 0.0
        %vm4025 = vcmp.gt.f32.partialorder %v3961, 0.0
        %vm4026 = vcmp.gt.f32.partialorder %v3962, 0.0
        %vm4027 = vcmp.gt.f32.partialorder %v3963, 0.0
        %vm4028 = vcmp.gt.f32.partialorder %v3964, 0.0
        %vm4029 = vcmp.gt.f32.partialorder %v3965, 0.0
        %vm4030 = vcmp.gt.f32.partialorder %v3966, 0.0
        %vm4031 = vcmp.gt.f32.partialorder %v3967, 0.0
        %vm4032 = vcmp.gt.f32.partialorder %v3968, 0.0
        %vm4033 = vcmp.gt.f32.partialorder %v3969, 0.0
        %vm4034 = vcmp.gt.f32.partialorder %v3970, 0.0
        %vm4035 = vcmp.gt.f32.partialorder %v3971, 0.0
        %vm4036 = vcmp.gt.f32.partialorder %v3972, 0.0
        %vm4037 = vcmp.gt.f32.partialorder %v3973, 0.0
        %vm4038 = vcmp.gt.f32.partialorder %v3974, 0.0
        %vm4039 = vcmp.gt.f32.partialorder %v3975, 0.0
        %v4040 = vmul.f32 %v3912, 0.2
        %v4041 = vmul.f32 %v3913, 0.2
        %v4042 = vmul.f32 %v3914, 0.2
        %v4043 = vmul.f32 %v3915, 0.2
        %v4044 = vmul.f32 %v3916, 0.2
        %v4045 = vmul.f32 %v3917, 0.2
        %v4046 = vmul.f32 %v3918, 0.2
        %v4047 = vmul.f32 %v3919, 0.2
        %v4048 = vmul.f32 %v3920, 0.2
        %v4049 = vmul.f32 %v3921, 0.2
        %v4050 = vmul.f32 %v3922, 0.2
        %v4051 = vmul.f32 %v3923, 0.2
        %v4052 = vmul.f32 %v3924, 0.2
        %v4053 = vmul.f32 %v3925, 0.2
        %v4054 = vmul.f32 %v3926, 0.2
        %v4055 = vmul.f32 %v3927, 0.2
        %v4056 = vmul.f32 %v3928, 0.2
        %v4057 = vmul.f32 %v3929, 0.2
        %v4058 = vmul.f32 %v3930, 0.2
        %v4059 = vmul.f32 %v3931, 0.2
        %v4060 = vmul.f32 %v3932, 0.2
        %v4061 = vmul.f32 %v3933, 0.2
        %v4062 = vmul.f32 %v3934, 0.2
        %v4063 = vmul.f32 %v3935, 0.2
        %v4064 = vmul.f32 %v3936, 0.2
        %v4065 = vmul.f32 %v3937, 0.2
        %v4066 = vmul.f32 %v3938, 0.2
        %v4067 = vmul.f32 %v3939, 0.2
        %v4068 = vmul.f32 %v3940, 0.2
        %v4069 = vmul.f32 %v3941, 0.2
        %v4070 = vmul.f32 %v3942, 0.2
        %v4071 = vmul.f32 %v3943, 0.2
        %v4072 = vmul.f32 %v3944, 0.2
        %v4073 = vmul.f32 %v3945, 0.2
        %v4074 = vmul.f32 %v3946, 0.2
        %v4075 = vmul.f32 %v3947, 0.2
        %v4076 = vmul.f32 %v3948, 0.2
        %v4077 = vmul.f32 %v3949, 0.2
        %v4078 = vmul.f32 %v3950, 0.2
        %v4079 = vmul.f32 %v3951, 0.2
        %v4080 = vmul.f32 %v3952, 0.2
        %v4081 = vmul.f32 %v3953, 0.2
        %v4082 = vmul.f32 %v3954, 0.2
        %v4083 = vmul.f32 %v3955, 0.2
        %v4084 = vmul.f32 %v3956, 0.2
        %v4085 = vmul.f32 %v3957, 0.2
        %v4086 = vmul.f32 %v3958, 0.2
        %v4087 = vmul.f32 %v3959, 0.2
        %v4088 = vmul.f32 %v3960, 0.2
        %v4089 = vmul.f32 %v3961, 0.2
        %v4090 = vmul.f32 %v3962, 0.2
        %v4091 = vmul.f32 %v3963, 0.2
        %v4092 = vmul.f32 %v3964, 0.2
        %v4093 = vmul.f32 %v3965, 0.2
        %v4094 = vmul.f32 %v3966, 0.2
        %v4095 = vmul.f32 %v3967, 0.2
        %v4096 = vmul.f32 %v3968, 0.2
        %v4097 = vmul.f32 %v3969, 0.2
        %v4098 = vmul.f32 %v3970, 0.2
        %v4099 = vmul.f32 %v3971, 0.2
        %v4100 = vmul.f32 %v3972, 0.2
        %v4101 = vmul.f32 %v3973, 0.2
        %v4102 = vmul.f32 %v3974, 0.2
        %v4103 = vmul.f32 %v3975, 0.2
        %v4104 = vsel %vm3976, %v3912, %v4040
        %v4105 = vsel %vm3977, %v3913, %v4041
        %v4106 = vsel %vm3978, %v3914, %v4042
        %v4107 = vsel %vm3979, %v3915, %v4043
        %v4108 = vsel %vm3980, %v3916, %v4044
        %v4109 = vsel %vm3981, %v3917, %v4045
        %v4110 = vsel %vm3982, %v3918, %v4046
        %v4111 = vsel %vm3983, %v3919, %v4047
        %v4112 = vsel %vm3984, %v3920, %v4048
        %v4113 = vsel %vm3985, %v3921, %v4049
        %v4114 = vsel %vm3986, %v3922, %v4050
        %v4115 = vsel %vm3987, %v3923, %v4051
        %v4116 = vsel %vm3988, %v3924, %v4052
        %v4117 = vsel %vm3989, %v3925, %v4053
        %v4118 = vsel %vm3990, %v3926, %v4054
        %v4119 = vsel %vm3991, %v3927, %v4055
        %v4120 = vsel %vm3992, %v3928, %v4056
        %v4121 = vsel %vm3993, %v3929, %v4057
        %v4122 = vsel %vm3994, %v3930, %v4058
        %v4123 = vsel %vm3995, %v3931, %v4059
        %v4124 = vsel %vm3996, %v3932, %v4060
        %v4125 = vsel %vm3997, %v3933, %v4061
        %v4126 = vsel %vm3998, %v3934, %v4062
        %v4127 = vsel %vm3999, %v3935, %v4063
        %v4128 = vsel %vm4000, %v3936, %v4064
        %v4129 = vsel %vm4001, %v3937, %v4065
        %v4130 = vsel %vm4002, %v3938, %v4066
        %v4131 = vsel %vm4003, %v3939, %v4067
        %v4132 = vsel %vm4004, %v3940, %v4068
        %v4133 = vsel %vm4005, %v3941, %v4069
        %v4134 = vsel %vm4006, %v3942, %v4070
        %v4135 = vsel %vm4007, %v3943, %v4071
        %v4136 = vsel %vm4008, %v3944, %v4072
        %v4137 = vsel %vm4009, %v3945, %v4073
        %v4138 = vsel %vm4010, %v3946, %v4074
        %v4139 = vsel %vm4011, %v3947, %v4075
        %v4140 = vsel %vm4012, %v3948, %v4076
        %v4141 = vsel %vm4013, %v3949, %v4077
        %v4142 = vsel %vm4014, %v3950, %v4078
        %v4143 = vsel %vm4015, %v3951, %v4079
        %v4144 = vsel %vm4016, %v3952, %v4080
        %v4145 = vsel %vm4017, %v3953, %v4081
        %v4146 = vsel %vm4018, %v3954, %v4082
        %v4147 = vsel %vm4019, %v3955, %v4083
        %v4148 = vsel %vm4020, %v3956, %v4084
        %v4149 = vsel %vm4021, %v3957, %v4085
        %v4150 = vsel %vm4022, %v3958, %v4086
        %v4151 = vsel %vm4023, %v3959, %v4087
        %v4152 = vsel %vm4024, %v3960, %v4088
        %v4153 = vsel %vm4025, %v3961, %v4089
        %v4154 = vsel %vm4026, %v3962, %v4090
        %v4155 = vsel %vm4027, %v3963, %v4091
        %v4156 = vsel %vm4028, %v3964, %v4092
        %v4157 = vsel %vm4029, %v3965, %v4093
        %v4158 = vsel %vm4030, %v3966, %v4094
        %v4159 = vsel %vm4031, %v3967, %v4095
        %v4160 = vsel %vm4032, %v3968, %v4096
        %v4161 = vsel %vm4033, %v3969, %v4097
        %v4162 = vsel %vm4034, %v3970, %v4098
        %v4163 = vsel %vm4035, %v3971, %v4099
        %v4164 = vsel %vm4036, %v3972, %v4100
        %v4165 = vsel %vm4037, %v3973, %v4101
        %v4166 = vsel %vm4038, %v3974, %v4102
        %v4167 = vsel %vm4039, %v3975, %v4103
        %v4168 = vpack.c.bf16 %v4108, %v4104
        %v4169 = vpack.c.bf16 %v4109, %v4105
        %v4170 = vpack.c.bf16 %v4110, %v4106
        %v4171 = vpack.c.bf16 %v4111, %v4107
        %v4172 = vpack.c.bf16 %v4116, %v4112
        %v4173 = vpack.c.bf16 %v4117, %v4113
        %v4174 = vpack.c.bf16 %v4118, %v4114
        %v4175 = vpack.c.bf16 %v4119, %v4115
        %v4176 = vpack.c.bf16 %v4124, %v4120
        %v4177 = vpack.c.bf16 %v4125, %v4121
        %v4178 = vpack.c.bf16 %v4126, %v4122
        %v4179 = vpack.c.bf16 %v4127, %v4123
        %v4180 = vpack.c.bf16 %v4132, %v4128
        %v4181 = vpack.c.bf16 %v4133, %v4129
        %v4182 = vpack.c.bf16 %v4134, %v4130
        %v4183 = vpack.c.bf16 %v4135, %v4131
        %v4184 = vpack.c.bf16 %v4140, %v4136
        %v4185 = vpack.c.bf16 %v4141, %v4137
        %v4186 = vpack.c.bf16 %v4142, %v4138
        %v4187 = vpack.c.bf16 %v4143, %v4139
        %v4188 = vpack.c.bf16 %v4148, %v4144
        %v4189 = vpack.c.bf16 %v4149, %v4145
        %v4190 = vpack.c.bf16 %v4150, %v4146
        %v4191 = vpack.c.bf16 %v4151, %v4147
        %v4192 = vpack.c.bf16 %v4156, %v4152
        %v4193 = vpack.c.bf16 %v4157, %v4153
        %v4194 = vpack.c.bf16 %v4158, %v4154
        %v4195 = vpack.c.bf16 %v4159, %v4155
        %v4196 = vpack.c.bf16 %v4164, %v4160
        %v4197 = vpack.c.bf16 %v4165, %v4161
        %v4198 = vpack.c.bf16 %v4166, %v4162
        %v4199 = vpack.c.bf16 %v4167, %v4163
        %v4200 = vld [vmem:[#allocation7] sm:$0xff]
        %v4201 = vld [vmem:[#allocation7 + $0x8] sm:$0xff]
        %v4202 = vld [vmem:[#allocation7 + $0x10] sm:$0xff]
        %v4203 = vld [vmem:[#allocation7 + $0x18] sm:$0xff]
        %v4204 = vld [vmem:[#allocation7 + $0x20] sm:$0xff]
        %v4205 = vld [vmem:[#allocation7 + $0x28] sm:$0xff]
        %v4206 = vld [vmem:[#allocation7 + $0x30] sm:$0xff]
        %v4207 = vld [vmem:[#allocation7 + $0x38] sm:$0xff]
        %v4208 = vld [vmem:[#allocation7 + $0x40] sm:$0xff]
        %v4209 = vld [vmem:[#allocation7 + $0x48] sm:$0xff]
        %v4210 = vld [vmem:[#allocation7 + $0x50] sm:$0xff]
        %v4211 = vld [vmem:[#allocation7 + $0x58] sm:$0xff]
        %v4212 = vld [vmem:[#allocation7 + $0x60] sm:$0xff]
        %v4213 = vld [vmem:[#allocation7 + $0x68] sm:$0xff]
        %v4214 = vld [vmem:[#allocation7 + $0x70] sm:$0xff]
        %v4215 = vld [vmem:[#allocation7 + $0x78] sm:$0xff]
        %v4216 = vld [vmem:[#allocation7 + $0x80] sm:$0xff]
        %v4217 = vld [vmem:[#allocation7 + $0x88] sm:$0xff]
        %v4218 = vld [vmem:[#allocation7 + $0x90] sm:$0xff]
        %v4219 = vld [vmem:[#allocation7 + $0x98] sm:$0xff]
        %v4220 = vld [vmem:[#allocation7 + $0xa0] sm:$0xff]
        %v4221 = vld [vmem:[#allocation7 + $0xa8] sm:$0xff]
        %v4222 = vld [vmem:[#allocation7 + $0xb0] sm:$0xff]
        %v4223 = vld [vmem:[#allocation7 + $0xb8] sm:$0xff]
        %v4224 = vld [vmem:[#allocation7 + $0xc0] sm:$0xff]
        %v4225 = vld [vmem:[#allocation7 + $0xc8] sm:$0xff]
        %v4226 = vld [vmem:[#allocation7 + $0xd0] sm:$0xff]
        %v4227 = vld [vmem:[#allocation7 + $0xd8] sm:$0xff]
        %v4228 = vld [vmem:[#allocation7 + $0xe0] sm:$0xff]
        %v4229 = vld [vmem:[#allocation7 + $0xe8] sm:$0xff]
        %v4230 = vld [vmem:[#allocation7 + $0xf0] sm:$0xff]
        %v4231 = vld [vmem:[#allocation7 + $0xf8] sm:$0xff]
        %v4232 = vld [vmem:[#allocation7 + $0x100] sm:$0xff]
        %v4233 = vld [vmem:[#allocation7 + $0x108] sm:$0xff]
        %v4234 = vld [vmem:[#allocation7 + $0x110] sm:$0xff]
        %v4235 = vld [vmem:[#allocation7 + $0x118] sm:$0xff]
        %v4236 = vld [vmem:[#allocation7 + $0x120] sm:$0xff]
        %v4237 = vld [vmem:[#allocation7 + $0x128] sm:$0xff]
        %v4238 = vld [vmem:[#allocation7 + $0x130] sm:$0xff]
        %v4239 = vld [vmem:[#allocation7 + $0x138] sm:$0xff]
        %v4240 = vld [vmem:[#allocation7 + $0x140] sm:$0xff]
        %v4241 = vld [vmem:[#allocation7 + $0x148] sm:$0xff]
        %v4242 = vld [vmem:[#allocation7 + $0x150] sm:$0xff]
        %v4243 = vld [vmem:[#allocation7 + $0x158] sm:$0xff]
        %v4244 = vld [vmem:[#allocation7 + $0x160] sm:$0xff]
        %v4245 = vld [vmem:[#allocation7 + $0x168] sm:$0xff]
        %v4246 = vld [vmem:[#allocation7 + $0x170] sm:$0xff]
        %v4247 = vld [vmem:[#allocation7 + $0x178] sm:$0xff]
        %v4248 = vld [vmem:[#allocation7 + $0x180] sm:$0xff]
        %v4249 = vld [vmem:[#allocation7 + $0x188] sm:$0xff]
        %v4250 = vld [vmem:[#allocation7 + $0x190] sm:$0xff]
        %v4251 = vld [vmem:[#allocation7 + $0x198] sm:$0xff]
        %v4252 = vld [vmem:[#allocation7 + $0x1a0] sm:$0xff]
        %v4253 = vld [vmem:[#allocation7 + $0x1a8] sm:$0xff]
        %v4254 = vld [vmem:[#allocation7 + $0x1b0] sm:$0xff]
        %v4255 = vld [vmem:[#allocation7 + $0x1b8] sm:$0xff]
        %v4256 = vld [vmem:[#allocation7 + $0x1c0] sm:$0xff]
        %v4257 = vld [vmem:[#allocation7 + $0x1c8] sm:$0xff]
        %v4258 = vld [vmem:[#allocation7 + $0x1d0] sm:$0xff]
        %v4259 = vld [vmem:[#allocation7 + $0x1d8] sm:$0xff]
        %v4260 = vld [vmem:[#allocation7 + $0x1e0] sm:$0xff]
        %v4261 = vld [vmem:[#allocation7 + $0x1e8] sm:$0xff]
        %v4262 = vld [vmem:[#allocation7 + $0x1f0] sm:$0xff]
        %v4263 = vld [vmem:[#allocation7 + $0x1f8] sm:$0xff]
        %v4264 = vld [vmem:[#allocation7 + $0x200] sm:$0xff]
        %v4265 = vld [vmem:[#allocation7 + $0x208] sm:$0xff]
        %v4266 = vld [vmem:[#allocation7 + $0x210] sm:$0xff]
        %v4267 = vld [vmem:[#allocation7 + $0x218] sm:$0xff]
        %v4268 = vld [vmem:[#allocation7 + $0x220] sm:$0xff]
        %v4269 = vld [vmem:[#allocation7 + $0x228] sm:$0xff]
        %v4270 = vld [vmem:[#allocation7 + $0x230] sm:$0xff]
        %v4271 = vld [vmem:[#allocation7 + $0x238] sm:$0xff]
        %v4272 = vld [vmem:[#allocation7 + $0x240] sm:$0xff]
        %v4273 = vld [vmem:[#allocation7 + $0x248] sm:$0xff]
        %v4274 = vld [vmem:[#allocation7 + $0x250] sm:$0xff]
        %v4275 = vld [vmem:[#allocation7 + $0x258] sm:$0xff]
        %v4276 = vld [vmem:[#allocation7 + $0x260] sm:$0xff]
        %v4277 = vld [vmem:[#allocation7 + $0x268] sm:$0xff]
        %v4278 = vld [vmem:[#allocation7 + $0x270] sm:$0xff]
        %v4279 = vld [vmem:[#allocation7 + $0x278] sm:$0xff]
        %v4280 = vld [vmem:[#allocation7 + $0x280] sm:$0xff]
        %v4281 = vld [vmem:[#allocation7 + $0x288] sm:$0xff]
        %v4282 = vld [vmem:[#allocation7 + $0x290] sm:$0xff]
        %v4283 = vld [vmem:[#allocation7 + $0x298] sm:$0xff]
        %v4284 = vld [vmem:[#allocation7 + $0x2a0] sm:$0xff]
        %v4285 = vld [vmem:[#allocation7 + $0x2a8] sm:$0xff]
        %v4286 = vld [vmem:[#allocation7 + $0x2b0] sm:$0xff]
        %v4287 = vld [vmem:[#allocation7 + $0x2b8] sm:$0xff]
        %v4288 = vld [vmem:[#allocation7 + $0x2c0] sm:$0xff]
        %v4289 = vld [vmem:[#allocation7 + $0x2c8] sm:$0xff]
        %v4290 = vld [vmem:[#allocation7 + $0x2d0] sm:$0xff]
        %v4291 = vld [vmem:[#allocation7 + $0x2d8] sm:$0xff]
        %v4292 = vld [vmem:[#allocation7 + $0x2e0] sm:$0xff]
        %v4293 = vld [vmem:[#allocation7 + $0x2e8] sm:$0xff]
        %v4294 = vld [vmem:[#allocation7 + $0x2f0] sm:$0xff]
        %v4295 = vld [vmem:[#allocation7 + $0x2f8] sm:$0xff]
        %v4296 = vld [vmem:[#allocation7 + $0x300] sm:$0xff]
        %v4297 = vld [vmem:[#allocation7 + $0x308] sm:$0xff]
        %v4298 = vld [vmem:[#allocation7 + $0x310] sm:$0xff]
        %v4299 = vld [vmem:[#allocation7 + $0x318] sm:$0xff]
        %v4300 = vld [vmem:[#allocation7 + $0x320] sm:$0xff]
        %v4301 = vld [vmem:[#allocation7 + $0x328] sm:$0xff]
        %v4302 = vld [vmem:[#allocation7 + $0x330] sm:$0xff]
        %v4303 = vld [vmem:[#allocation7 + $0x338] sm:$0xff]
        %v4304 = vld [vmem:[#allocation7 + $0x340] sm:$0xff]
        %v4305 = vld [vmem:[#allocation7 + $0x348] sm:$0xff]
        %v4306 = vld [vmem:[#allocation7 + $0x350] sm:$0xff]
        %v4307 = vld [vmem:[#allocation7 + $0x358] sm:$0xff]
        %v4308 = vld [vmem:[#allocation7 + $0x360] sm:$0xff]
        %v4309 = vld [vmem:[#allocation7 + $0x368] sm:$0xff]
        %v4310 = vld [vmem:[#allocation7 + $0x370] sm:$0xff]
        %v4311 = vld [vmem:[#allocation7 + $0x378] sm:$0xff]
        %v4312 = vld [vmem:[#allocation7 + $0x380] sm:$0xff]
        %v4313 = vld [vmem:[#allocation7 + $0x388] sm:$0xff]
        %v4314 = vld [vmem:[#allocation7 + $0x390] sm:$0xff]
        %v4315 = vld [vmem:[#allocation7 + $0x398] sm:$0xff]
        %v4316 = vld [vmem:[#allocation7 + $0x3a0] sm:$0xff]
        %v4317 = vld [vmem:[#allocation7 + $0x3a8] sm:$0xff]
        %v4318 = vld [vmem:[#allocation7 + $0x3b0] sm:$0xff]
        %v4319 = vld [vmem:[#allocation7 + $0x3b8] sm:$0xff]
        %v4320 = vld [vmem:[#allocation7 + $0x3c0] sm:$0xff]
        %v4321 = vld [vmem:[#allocation7 + $0x3c8] sm:$0xff]
        %v4322 = vld [vmem:[#allocation7 + $0x3d0] sm:$0xff]
        %v4323 = vld [vmem:[#allocation7 + $0x3d8] sm:$0xff]
        %v4324 = vld [vmem:[#allocation7 + $0x3e0] sm:$0xff]
        %v4325 = vld [vmem:[#allocation7 + $0x3e8] sm:$0xff]
        %v4326 = vld [vmem:[#allocation7 + $0x3f0] sm:$0xff]
        %v4327 = vld [vmem:[#allocation7 + $0x3f8] sm:$0xff]
        %v4328 = vld [vmem:[#allocation7 + $0x400] sm:$0xff]
        %v4329 = vld [vmem:[#allocation7 + $0x408] sm:$0xff]
        %v4330 = vld [vmem:[#allocation7 + $0x410] sm:$0xff]
        %v4331 = vld [vmem:[#allocation7 + $0x418] sm:$0xff]
        %v4332 = vld [vmem:[#allocation7 + $0x420] sm:$0xff]
        %v4333 = vld [vmem:[#allocation7 + $0x428] sm:$0xff]
        %v4334 = vld [vmem:[#allocation7 + $0x430] sm:$0xff]
        %v4335 = vld [vmem:[#allocation7 + $0x438] sm:$0xff]
        %v4336 = vld [vmem:[#allocation7 + $0x440] sm:$0xff]
        %v4337 = vld [vmem:[#allocation7 + $0x448] sm:$0xff]
        %v4338 = vld [vmem:[#allocation7 + $0x450] sm:$0xff]
        %v4339 = vld [vmem:[#allocation7 + $0x458] sm:$0xff]
        %v4340 = vld [vmem:[#allocation7 + $0x460] sm:$0xff]
        %v4341 = vld [vmem:[#allocation7 + $0x468] sm:$0xff]
        %v4342 = vld [vmem:[#allocation7 + $0x470] sm:$0xff]
        %v4343 = vld [vmem:[#allocation7 + $0x478] sm:$0xff]
        %v4344 = vld [vmem:[#allocation7 + $0x480] sm:$0xff]
        %v4345 = vld [vmem:[#allocation7 + $0x488] sm:$0xff]
        %v4346 = vld [vmem:[#allocation7 + $0x490] sm:$0xff]
        %v4347 = vld [vmem:[#allocation7 + $0x498] sm:$0xff]
        %v4348 = vld [vmem:[#allocation7 + $0x4a0] sm:$0xff]
        %v4349 = vld [vmem:[#allocation7 + $0x4a8] sm:$0xff]
        %v4350 = vld [vmem:[#allocation7 + $0x4b0] sm:$0xff]
        %v4351 = vld [vmem:[#allocation7 + $0x4b8] sm:$0xff]
        %v4352 = vld [vmem:[#allocation7 + $0x4c0] sm:$0xff]
        %v4353 = vld [vmem:[#allocation7 + $0x4c8] sm:$0xff]
        %v4354 = vld [vmem:[#allocation7 + $0x4d0] sm:$0xff]
        %v4355 = vld [vmem:[#allocation7 + $0x4d8] sm:$0xff]
        %v4356 = vld [vmem:[#allocation7 + $0x4e0] sm:$0xff]
        %v4357 = vld [vmem:[#allocation7 + $0x4e8] sm:$0xff]
        %v4358 = vld [vmem:[#allocation7 + $0x4f0] sm:$0xff]
        %v4359 = vld [vmem:[#allocation7 + $0x4f8] sm:$0xff]
        %v4360 = vld [vmem:[#allocation7 + $0x500] sm:$0xff]
        %v4361 = vld [vmem:[#allocation7 + $0x508] sm:$0xff]
        %v4362 = vld [vmem:[#allocation7 + $0x510] sm:$0xff]
        %v4363 = vld [vmem:[#allocation7 + $0x518] sm:$0xff]
        %v4364 = vld [vmem:[#allocation7 + $0x520] sm:$0xff]
        %v4365 = vld [vmem:[#allocation7 + $0x528] sm:$0xff]
        %v4366 = vld [vmem:[#allocation7 + $0x530] sm:$0xff]
        %v4367 = vld [vmem:[#allocation7 + $0x538] sm:$0xff]
        %v4368 = vld [vmem:[#allocation7 + $0x540] sm:$0xff]
        %v4369 = vld [vmem:[#allocation7 + $0x548] sm:$0xff]
        %v4370 = vld [vmem:[#allocation7 + $0x550] sm:$0xff]
        %v4371 = vld [vmem:[#allocation7 + $0x558] sm:$0xff]
        %v4372 = vld [vmem:[#allocation7 + $0x560] sm:$0xff]
        %v4373 = vld [vmem:[#allocation7 + $0x568] sm:$0xff]
        %v4374 = vld [vmem:[#allocation7 + $0x570] sm:$0xff]
        %v4375 = vld [vmem:[#allocation7 + $0x578] sm:$0xff]
        %v4376 = vld [vmem:[#allocation7 + $0x580] sm:$0xff]
        %v4377 = vld [vmem:[#allocation7 + $0x588] sm:$0xff]
        %v4378 = vld [vmem:[#allocation7 + $0x590] sm:$0xff]
        %v4379 = vld [vmem:[#allocation7 + $0x598] sm:$0xff]
        %v4380 = vld [vmem:[#allocation7 + $0x5a0] sm:$0xff]
        %v4381 = vld [vmem:[#allocation7 + $0x5a8] sm:$0xff]
        %v4382 = vld [vmem:[#allocation7 + $0x5b0] sm:$0xff]
        %v4383 = vld [vmem:[#allocation7 + $0x5b8] sm:$0xff]
        %v4384 = vld [vmem:[#allocation7 + $0x5c0] sm:$0xff]
        %v4385 = vld [vmem:[#allocation7 + $0x5c8] sm:$0xff]
        %v4386 = vld [vmem:[#allocation7 + $0x5d0] sm:$0xff]
        %v4387 = vld [vmem:[#allocation7 + $0x5d8] sm:$0xff]
        %v4388 = vld [vmem:[#allocation7 + $0x5e0] sm:$0xff]
        %v4389 = vld [vmem:[#allocation7 + $0x5e8] sm:$0xff]
        %v4390 = vld [vmem:[#allocation7 + $0x5f0] sm:$0xff]
        %v4391 = vld [vmem:[#allocation7 + $0x5f8] sm:$0xff]
        %v4392 = vld [vmem:[#allocation7 + $0x600] sm:$0xff]
        %v4393 = vld [vmem:[#allocation7 + $0x608] sm:$0xff]
        %v4394 = vld [vmem:[#allocation7 + $0x610] sm:$0xff]
        %v4395 = vld [vmem:[#allocation7 + $0x618] sm:$0xff]
        %v4396 = vld [vmem:[#allocation7 + $0x620] sm:$0xff]
        %v4397 = vld [vmem:[#allocation7 + $0x628] sm:$0xff]
        %v4398 = vld [vmem:[#allocation7 + $0x630] sm:$0xff]
        %v4399 = vld [vmem:[#allocation7 + $0x638] sm:$0xff]
        %v4400 = vld [vmem:[#allocation7 + $0x640] sm:$0xff]
        %v4401 = vld [vmem:[#allocation7 + $0x648] sm:$0xff]
        %v4402 = vld [vmem:[#allocation7 + $0x650] sm:$0xff]
        %v4403 = vld [vmem:[#allocation7 + $0x658] sm:$0xff]
        %v4404 = vld [vmem:[#allocation7 + $0x660] sm:$0xff]
        %v4405 = vld [vmem:[#allocation7 + $0x668] sm:$0xff]
        %v4406 = vld [vmem:[#allocation7 + $0x670] sm:$0xff]
        %v4407 = vld [vmem:[#allocation7 + $0x678] sm:$0xff]
        %v4408 = vld [vmem:[#allocation7 + $0x680] sm:$0xff]
        %v4409 = vld [vmem:[#allocation7 + $0x688] sm:$0xff]
        %v4410 = vld [vmem:[#allocation7 + $0x690] sm:$0xff]
        %v4411 = vld [vmem:[#allocation7 + $0x698] sm:$0xff]
        %v4412 = vld [vmem:[#allocation7 + $0x6a0] sm:$0xff]
        %v4413 = vld [vmem:[#allocation7 + $0x6a8] sm:$0xff]
        %v4414 = vld [vmem:[#allocation7 + $0x6b0] sm:$0xff]
        %v4415 = vld [vmem:[#allocation7 + $0x6b8] sm:$0xff]
        %v4416 = vld [vmem:[#allocation7 + $0x6c0] sm:$0xff]
        %v4417 = vld [vmem:[#allocation7 + $0x6c8] sm:$0xff]
        %v4418 = vld [vmem:[#allocation7 + $0x6d0] sm:$0xff]
        %v4419 = vld [vmem:[#allocation7 + $0x6d8] sm:$0xff]
        %v4420 = vld [vmem:[#allocation7 + $0x6e0] sm:$0xff]
        %v4421 = vld [vmem:[#allocation7 + $0x6e8] sm:$0xff]
        %v4422 = vld [vmem:[#allocation7 + $0x6f0] sm:$0xff]
        %v4423 = vld [vmem:[#allocation7 + $0x6f8] sm:$0xff]
        %v4424 = vld [vmem:[#allocation7 + $0x700] sm:$0xff]
        %v4425 = vld [vmem:[#allocation7 + $0x708] sm:$0xff]
        %v4426 = vld [vmem:[#allocation7 + $0x710] sm:$0xff]
        %v4427 = vld [vmem:[#allocation7 + $0x718] sm:$0xff]
        %v4428 = vld [vmem:[#allocation7 + $0x720] sm:$0xff]
        %v4429 = vld [vmem:[#allocation7 + $0x728] sm:$0xff]
        %v4430 = vld [vmem:[#allocation7 + $0x730] sm:$0xff]
        %v4431 = vld [vmem:[#allocation7 + $0x738] sm:$0xff]
        %v4432 = vld [vmem:[#allocation7 + $0x740] sm:$0xff]
        %v4433 = vld [vmem:[#allocation7 + $0x748] sm:$0xff]
        %v4434 = vld [vmem:[#allocation7 + $0x750] sm:$0xff]
        %v4435 = vld [vmem:[#allocation7 + $0x758] sm:$0xff]
        %v4436 = vld [vmem:[#allocation7 + $0x760] sm:$0xff]
        %v4437 = vld [vmem:[#allocation7 + $0x768] sm:$0xff]
        %v4438 = vld [vmem:[#allocation7 + $0x770] sm:$0xff]
        %v4439 = vld [vmem:[#allocation7 + $0x778] sm:$0xff]
        %v4440 = vld [vmem:[#allocation7 + $0x780] sm:$0xff]
        %v4441 = vld [vmem:[#allocation7 + $0x788] sm:$0xff]
        %v4442 = vld [vmem:[#allocation7 + $0x790] sm:$0xff]
        %v4443 = vld [vmem:[#allocation7 + $0x798] sm:$0xff]
        %v4444 = vld [vmem:[#allocation7 + $0x7a0] sm:$0xff]
        %v4445 = vld [vmem:[#allocation7 + $0x7a8] sm:$0xff]
        %v4446 = vld [vmem:[#allocation7 + $0x7b0] sm:$0xff]
        %v4447 = vld [vmem:[#allocation7 + $0x7b8] sm:$0xff]
        %v4448 = vld [vmem:[#allocation7 + $0x7c0] sm:$0xff]
        %v4449 = vld [vmem:[#allocation7 + $0x7c8] sm:$0xff]
        %v4450 = vld [vmem:[#allocation7 + $0x7d0] sm:$0xff]
        %v4451 = vld [vmem:[#allocation7 + $0x7d8] sm:$0xff]
        %v4452 = vld [vmem:[#allocation7 + $0x7e0] sm:$0xff]
        %v4453 = vld [vmem:[#allocation7 + $0x7e8] sm:$0xff]
        %v4454 = vld [vmem:[#allocation7 + $0x7f0] sm:$0xff]
        %v4455 = vld [vmem:[#allocation7 + $0x7f8] sm:$0xff]
        %v4712 = vunpack.c.l.b16 %v4200
        %v4713 = vunpack.c.h.b16 %v4200
        %v4714 = vunpack.c.l.b16 %v4201
        %v4715 = vunpack.c.h.b16 %v4201
        %v4716 = vunpack.c.l.b16 %v4202
        %v4717 = vunpack.c.h.b16 %v4202
        %v4718 = vunpack.c.l.b16 %v4203
        %v4719 = vunpack.c.h.b16 %v4203
        %v4720 = vunpack.c.l.b16 %v4204
        %v4721 = vunpack.c.h.b16 %v4204
        %v4722 = vunpack.c.l.b16 %v4205
        %v4723 = vunpack.c.h.b16 %v4205
        %v4724 = vunpack.c.l.b16 %v4206
        %v4725 = vunpack.c.h.b16 %v4206
        %v4726 = vunpack.c.l.b16 %v4207
        %v4727 = vunpack.c.h.b16 %v4207
        %v4728 = vunpack.c.l.b16 %v4208
        %v4729 = vunpack.c.h.b16 %v4208
        %v4730 = vunpack.c.l.b16 %v4209
        %v4731 = vunpack.c.h.b16 %v4209
        %v4732 = vunpack.c.l.b16 %v4210
        %v4733 = vunpack.c.h.b16 %v4210
        %v4734 = vunpack.c.l.b16 %v4211
        %v4735 = vunpack.c.h.b16 %v4211
        %v4736 = vunpack.c.l.b16 %v4212
        %v4737 = vunpack.c.h.b16 %v4212
        %v4738 = vunpack.c.l.b16 %v4213
        %v4739 = vunpack.c.h.b16 %v4213
        %v4740 = vunpack.c.l.b16 %v4214
        %v4741 = vunpack.c.h.b16 %v4214
        %v4742 = vunpack.c.l.b16 %v4215
        %v4743 = vunpack.c.h.b16 %v4215
        %v4744 = vunpack.c.l.b16 %v4216
        %v4745 = vunpack.c.h.b16 %v4216
        %v4746 = vunpack.c.l.b16 %v4217
        %v4747 = vunpack.c.h.b16 %v4217
        %v4748 = vunpack.c.l.b16 %v4218
        %v4749 = vunpack.c.h.b16 %v4218
        %v4750 = vunpack.c.l.b16 %v4219
        %v4751 = vunpack.c.h.b16 %v4219
        %v4752 = vunpack.c.l.b16 %v4220
        %v4753 = vunpack.c.h.b16 %v4220
        %v4754 = vunpack.c.l.b16 %v4221
        %v4755 = vunpack.c.h.b16 %v4221
        %v4756 = vunpack.c.l.b16 %v4222
        %v4757 = vunpack.c.h.b16 %v4222
        %v4758 = vunpack.c.l.b16 %v4223
        %v4759 = vunpack.c.h.b16 %v4223
        %v4760 = vunpack.c.l.b16 %v4224
        %v4761 = vunpack.c.h.b16 %v4224
        %v4762 = vunpack.c.l.b16 %v4225
        %v4763 = vunpack.c.h.b16 %v4225
        %v4764 = vunpack.c.l.b16 %v4226
        %v4765 = vunpack.c.h.b16 %v4226
        %v4766 = vunpack.c.l.b16 %v4227
        %v4767 = vunpack.c.h.b16 %v4227
        %v4768 = vunpack.c.l.b16 %v4228
        %v4769 = vunpack.c.h.b16 %v4228
        %v4770 = vunpack.c.l.b16 %v4229
        %v4771 = vunpack.c.h.b16 %v4229
        %v4772 = vunpack.c.l.b16 %v4230
        %v4773 = vunpack.c.h.b16 %v4230
        %v4774 = vunpack.c.l.b16 %v4231
        %v4775 = vunpack.c.h.b16 %v4231
        %v4776 = vunpack.c.l.b16 %v4232
        %v4777 = vunpack.c.h.b16 %v4232
        %v4778 = vunpack.c.l.b16 %v4233
        %v4779 = vunpack.c.h.b16 %v4233
        %v4780 = vunpack.c.l.b16 %v4234
        %v4781 = vunpack.c.h.b16 %v4234
        %v4782 = vunpack.c.l.b16 %v4235
        %v4783 = vunpack.c.h.b16 %v4235
        %v4784 = vunpack.c.l.b16 %v4236
        %v4785 = vunpack.c.h.b16 %v4236
        %v4786 = vunpack.c.l.b16 %v4237
        %v4787 = vunpack.c.h.b16 %v4237
        %v4788 = vunpack.c.l.b16 %v4238
        %v4789 = vunpack.c.h.b16 %v4238
        %v4790 = vunpack.c.l.b16 %v4239
        %v4791 = vunpack.c.h.b16 %v4239
        %v4792 = vunpack.c.l.b16 %v4240
        %v4793 = vunpack.c.h.b16 %v4240
        %v4794 = vunpack.c.l.b16 %v4241
        %v4795 = vunpack.c.h.b16 %v4241
        %v4796 = vunpack.c.l.b16 %v4242
        %v4797 = vunpack.c.h.b16 %v4242
        %v4798 = vunpack.c.l.b16 %v4243
        %v4799 = vunpack.c.h.b16 %v4243
        %v4800 = vunpack.c.l.b16 %v4244
        %v4801 = vunpack.c.h.b16 %v4244
        %v4802 = vunpack.c.l.b16 %v4245
        %v4803 = vunpack.c.h.b16 %v4245
        %v4804 = vunpack.c.l.b16 %v4246
        %v4805 = vunpack.c.h.b16 %v4246
        %v4806 = vunpack.c.l.b16 %v4247
        %v4807 = vunpack.c.h.b16 %v4247
        %v4808 = vunpack.c.l.b16 %v4248
        %v4809 = vunpack.c.h.b16 %v4248
        %v4810 = vunpack.c.l.b16 %v4249
        %v4811 = vunpack.c.h.b16 %v4249
        %v4812 = vunpack.c.l.b16 %v4250
        %v4813 = vunpack.c.h.b16 %v4250
        %v4814 = vunpack.c.l.b16 %v4251
        %v4815 = vunpack.c.h.b16 %v4251
        %v4816 = vunpack.c.l.b16 %v4252
        %v4817 = vunpack.c.h.b16 %v4252
        %v4818 = vunpack.c.l.b16 %v4253
        %v4819 = vunpack.c.h.b16 %v4253
        %v4820 = vunpack.c.l.b16 %v4254
        %v4821 = vunpack.c.h.b16 %v4254
        %v4822 = vunpack.c.l.b16 %v4255
        %v4823 = vunpack.c.h.b16 %v4255
        %v4824 = vunpack.c.l.b16 %v4256
        %v4825 = vunpack.c.h.b16 %v4256
        %v4826 = vunpack.c.l.b16 %v4257
        %v4827 = vunpack.c.h.b16 %v4257
        %v4828 = vunpack.c.l.b16 %v4258
        %v4829 = vunpack.c.h.b16 %v4258
        %v4830 = vunpack.c.l.b16 %v4259
        %v4831 = vunpack.c.h.b16 %v4259
        %v4832 = vunpack.c.l.b16 %v4260
        %v4833 = vunpack.c.h.b16 %v4260
        %v4834 = vunpack.c.l.b16 %v4261
        %v4835 = vunpack.c.h.b16 %v4261
        %v4836 = vunpack.c.l.b16 %v4262
        %v4837 = vunpack.c.h.b16 %v4262
        %v4838 = vunpack.c.l.b16 %v4263
        %v4839 = vunpack.c.h.b16 %v4263
        %v4840 = vunpack.c.l.b16 %v4264
        %v4841 = vunpack.c.h.b16 %v4264
        %v4842 = vunpack.c.l.b16 %v4265
        %v4843 = vunpack.c.h.b16 %v4265
        %v4844 = vunpack.c.l.b16 %v4266
        %v4845 = vunpack.c.h.b16 %v4266
        %v4846 = vunpack.c.l.b16 %v4267
        %v4847 = vunpack.c.h.b16 %v4267
        %v4848 = vunpack.c.l.b16 %v4268
        %v4849 = vunpack.c.h.b16 %v4268
        %v4850 = vunpack.c.l.b16 %v4269
        %v4851 = vunpack.c.h.b16 %v4269
        %v4852 = vunpack.c.l.b16 %v4270
        %v4853 = vunpack.c.h.b16 %v4270
        %v4854 = vunpack.c.l.b16 %v4271
        %v4855 = vunpack.c.h.b16 %v4271
        %v4856 = vunpack.c.l.b16 %v4272
        %v4857 = vunpack.c.h.b16 %v4272
        %v4858 = vunpack.c.l.b16 %v4273
        %v4859 = vunpack.c.h.b16 %v4273
        %v4860 = vunpack.c.l.b16 %v4274
        %v4861 = vunpack.c.h.b16 %v4274
        %v4862 = vunpack.c.l.b16 %v4275
        %v4863 = vunpack.c.h.b16 %v4275
        %v4864 = vunpack.c.l.b16 %v4276
        %v4865 = vunpack.c.h.b16 %v4276
        %v4866 = vunpack.c.l.b16 %v4277
        %v4867 = vunpack.c.h.b16 %v4277
        %v4868 = vunpack.c.l.b16 %v4278
        %v4869 = vunpack.c.h.b16 %v4278
        %v4870 = vunpack.c.l.b16 %v4279
        %v4871 = vunpack.c.h.b16 %v4279
        %v4872 = vunpack.c.l.b16 %v4280
        %v4873 = vunpack.c.h.b16 %v4280
        %v4874 = vunpack.c.l.b16 %v4281
        %v4875 = vunpack.c.h.b16 %v4281
        %v4876 = vunpack.c.l.b16 %v4282
        %v4877 = vunpack.c.h.b16 %v4282
        %v4878 = vunpack.c.l.b16 %v4283
        %v4879 = vunpack.c.h.b16 %v4283
        %v4880 = vunpack.c.l.b16 %v4284
        %v4881 = vunpack.c.h.b16 %v4284
        %v4882 = vunpack.c.l.b16 %v4285
        %v4883 = vunpack.c.h.b16 %v4285
        %v4884 = vunpack.c.l.b16 %v4286
        %v4885 = vunpack.c.h.b16 %v4286
        %v4886 = vunpack.c.l.b16 %v4287
        %v4887 = vunpack.c.h.b16 %v4287
        %v4888 = vunpack.c.l.b16 %v4288
        %v4889 = vunpack.c.h.b16 %v4288
        %v4890 = vunpack.c.l.b16 %v4289
        %v4891 = vunpack.c.h.b16 %v4289
        %v4892 = vunpack.c.l.b16 %v4290
        %v4893 = vunpack.c.h.b16 %v4290
        %v4894 = vunpack.c.l.b16 %v4291
        %v4895 = vunpack.c.h.b16 %v4291
        %v4896 = vunpack.c.l.b16 %v4292
        %v4897 = vunpack.c.h.b16 %v4292
        %v4898 = vunpack.c.l.b16 %v4293
        %v4899 = vunpack.c.h.b16 %v4293
        %v4900 = vunpack.c.l.b16 %v4294
        %v4901 = vunpack.c.h.b16 %v4294
        %v4902 = vunpack.c.l.b16 %v4295
        %v4903 = vunpack.c.h.b16 %v4295
        %v4904 = vunpack.c.l.b16 %v4296
        %v4905 = vunpack.c.h.b16 %v4296
        %v4906 = vunpack.c.l.b16 %v4297
        %v4907 = vunpack.c.h.b16 %v4297
        %v4908 = vunpack.c.l.b16 %v4298
        %v4909 = vunpack.c.h.b16 %v4298
        %v4910 = vunpack.c.l.b16 %v4299
        %v4911 = vunpack.c.h.b16 %v4299
        %v4912 = vunpack.c.l.b16 %v4300
        %v4913 = vunpack.c.h.b16 %v4300
        %v4914 = vunpack.c.l.b16 %v4301
        %v4915 = vunpack.c.h.b16 %v4301
        %v4916 = vunpack.c.l.b16 %v4302
        %v4917 = vunpack.c.h.b16 %v4302
        %v4918 = vunpack.c.l.b16 %v4303
        %v4919 = vunpack.c.h.b16 %v4303
        %v4920 = vunpack.c.l.b16 %v4304
        %v4921 = vunpack.c.h.b16 %v4304
        %v4922 = vunpack.c.l.b16 %v4305
        %v4923 = vunpack.c.h.b16 %v4305
        %v4924 = vunpack.c.l.b16 %v4306
        %v4925 = vunpack.c.h.b16 %v4306
        %v4926 = vunpack.c.l.b16 %v4307
        %v4927 = vunpack.c.h.b16 %v4307
        %v4928 = vunpack.c.l.b16 %v4308
        %v4929 = vunpack.c.h.b16 %v4308
        %v4930 = vunpack.c.l.b16 %v4309
        %v4931 = vunpack.c.h.b16 %v4309
        %v4932 = vunpack.c.l.b16 %v4310
        %v4933 = vunpack.c.h.b16 %v4310
        %v4934 = vunpack.c.l.b16 %v4311
        %v4935 = vunpack.c.h.b16 %v4311
        %v4936 = vunpack.c.l.b16 %v4312
        %v4937 = vunpack.c.h.b16 %v4312
        %v4938 = vunpack.c.l.b16 %v4313
        %v4939 = vunpack.c.h.b16 %v4313
        %v4940 = vunpack.c.l.b16 %v4314
        %v4941 = vunpack.c.h.b16 %v4314
        %v4942 = vunpack.c.l.b16 %v4315
        %v4943 = vunpack.c.h.b16 %v4315
        %v4944 = vunpack.c.l.b16 %v4316
        %v4945 = vunpack.c.h.b16 %v4316
        %v4946 = vunpack.c.l.b16 %v4317
        %v4947 = vunpack.c.h.b16 %v4317
        %v4948 = vunpack.c.l.b16 %v4318
        %v4949 = vunpack.c.h.b16 %v4318
        %v4950 = vunpack.c.l.b16 %v4319
        %v4951 = vunpack.c.h.b16 %v4319
        %v4952 = vunpack.c.l.b16 %v4320
        %v4953 = vunpack.c.h.b16 %v4320
        %v4954 = vunpack.c.l.b16 %v4321
        %v4955 = vunpack.c.h.b16 %v4321
        %v4956 = vunpack.c.l.b16 %v4322
        %v4957 = vunpack.c.h.b16 %v4322
        %v4958 = vunpack.c.l.b16 %v4323
        %v4959 = vunpack.c.h.b16 %v4323
        %v4960 = vunpack.c.l.b16 %v4324
        %v4961 = vunpack.c.h.b16 %v4324
        %v4962 = vunpack.c.l.b16 %v4325
        %v4963 = vunpack.c.h.b16 %v4325
        %v4964 = vunpack.c.l.b16 %v4326
        %v4965 = vunpack.c.h.b16 %v4326
        %v4966 = vunpack.c.l.b16 %v4327
        %v4967 = vunpack.c.h.b16 %v4327
        %v4968 = vunpack.c.l.b16 %v4328
        %v4969 = vunpack.c.h.b16 %v4328
        %v4970 = vunpack.c.l.b16 %v4329
        %v4971 = vunpack.c.h.b16 %v4329
        %v4972 = vunpack.c.l.b16 %v4330
        %v4973 = vunpack.c.h.b16 %v4330
        %v4974 = vunpack.c.l.b16 %v4331
        %v4975 = vunpack.c.h.b16 %v4331
        %v4976 = vunpack.c.l.b16 %v4332
        %v4977 = vunpack.c.h.b16 %v4332
        %v4978 = vunpack.c.l.b16 %v4333
        %v4979 = vunpack.c.h.b16 %v4333
        %v4980 = vunpack.c.l.b16 %v4334
        %v4981 = vunpack.c.h.b16 %v4334
        %v4982 = vunpack.c.l.b16 %v4335
        %v4983 = vunpack.c.h.b16 %v4335
        %v4984 = vunpack.c.l.b16 %v4336
        %v4985 = vunpack.c.h.b16 %v4336
        %v4986 = vunpack.c.l.b16 %v4337
        %v4987 = vunpack.c.h.b16 %v4337
        %v4988 = vunpack.c.l.b16 %v4338
        %v4989 = vunpack.c.h.b16 %v4338
        %v4990 = vunpack.c.l.b16 %v4339
        %v4991 = vunpack.c.h.b16 %v4339
        %v4992 = vunpack.c.l.b16 %v4340
        %v4993 = vunpack.c.h.b16 %v4340
        %v4994 = vunpack.c.l.b16 %v4341
        %v4995 = vunpack.c.h.b16 %v4341
        %v4996 = vunpack.c.l.b16 %v4342
        %v4997 = vunpack.c.h.b16 %v4342
        %v4998 = vunpack.c.l.b16 %v4343
        %v4999 = vunpack.c.h.b16 %v4343
        %v5000 = vunpack.c.l.b16 %v4344
        %v5001 = vunpack.c.h.b16 %v4344
        %v5002 = vunpack.c.l.b16 %v4345
        %v5003 = vunpack.c.h.b16 %v4345
        %v5004 = vunpack.c.l.b16 %v4346
        %v5005 = vunpack.c.h.b16 %v4346
        %v5006 = vunpack.c.l.b16 %v4347
        %v5007 = vunpack.c.h.b16 %v4347
        %v5008 = vunpack.c.l.b16 %v4348
        %v5009 = vunpack.c.h.b16 %v4348
        %v5010 = vunpack.c.l.b16 %v4349
        %v5011 = vunpack.c.h.b16 %v4349
        %v5012 = vunpack.c.l.b16 %v4350
        %v5013 = vunpack.c.h.b16 %v4350
        %v5014 = vunpack.c.l.b16 %v4351
        %v5015 = vunpack.c.h.b16 %v4351
        %v5016 = vunpack.c.l.b16 %v4352
        %v5017 = vunpack.c.h.b16 %v4352
        %v5018 = vunpack.c.l.b16 %v4353
        %v5019 = vunpack.c.h.b16 %v4353
        %v5020 = vunpack.c.l.b16 %v4354
        %v5021 = vunpack.c.h.b16 %v4354
        %v5022 = vunpack.c.l.b16 %v4355
        %v5023 = vunpack.c.h.b16 %v4355
        %v5024 = vunpack.c.l.b16 %v4356
        %v5025 = vunpack.c.h.b16 %v4356
        %v5026 = vunpack.c.l.b16 %v4357
        %v5027 = vunpack.c.h.b16 %v4357
        %v5028 = vunpack.c.l.b16 %v4358
        %v5029 = vunpack.c.h.b16 %v4358
        %v5030 = vunpack.c.l.b16 %v4359
        %v5031 = vunpack.c.h.b16 %v4359
        %v5032 = vunpack.c.l.b16 %v4360
        %v5033 = vunpack.c.h.b16 %v4360
        %v5034 = vunpack.c.l.b16 %v4361
        %v5035 = vunpack.c.h.b16 %v4361
        %v5036 = vunpack.c.l.b16 %v4362
        %v5037 = vunpack.c.h.b16 %v4362
        %v5038 = vunpack.c.l.b16 %v4363
        %v5039 = vunpack.c.h.b16 %v4363
        %v5040 = vunpack.c.l.b16 %v4364
        %v5041 = vunpack.c.h.b16 %v4364
        %v5042 = vunpack.c.l.b16 %v4365
        %v5043 = vunpack.c.h.b16 %v4365
        %v5044 = vunpack.c.l.b16 %v4366
        %v5045 = vunpack.c.h.b16 %v4366
        %v5046 = vunpack.c.l.b16 %v4367
        %v5047 = vunpack.c.h.b16 %v4367
        %v5048 = vunpack.c.l.b16 %v4368
        %v5049 = vunpack.c.h.b16 %v4368
        %v5050 = vunpack.c.l.b16 %v4369
        %v5051 = vunpack.c.h.b16 %v4369
        %v5052 = vunpack.c.l.b16 %v4370
        %v5053 = vunpack.c.h.b16 %v4370
        %v5054 = vunpack.c.l.b16 %v4371
        %v5055 = vunpack.c.h.b16 %v4371
        %v5056 = vunpack.c.l.b16 %v4372
        %v5057 = vunpack.c.h.b16 %v4372
        %v5058 = vunpack.c.l.b16 %v4373
        %v5059 = vunpack.c.h.b16 %v4373
        %v5060 = vunpack.c.l.b16 %v4374
        %v5061 = vunpack.c.h.b16 %v4374
        %v5062 = vunpack.c.l.b16 %v4375
        %v5063 = vunpack.c.h.b16 %v4375
        %v5064 = vunpack.c.l.b16 %v4376
        %v5065 = vunpack.c.h.b16 %v4376
        %v5066 = vunpack.c.l.b16 %v4377
        %v5067 = vunpack.c.h.b16 %v4377
        %v5068 = vunpack.c.l.b16 %v4378
        %v5069 = vunpack.c.h.b16 %v4378
        %v5070 = vunpack.c.l.b16 %v4379
        %v5071 = vunpack.c.h.b16 %v4379
        %v5072 = vunpack.c.l.b16 %v4380
        %v5073 = vunpack.c.h.b16 %v4380
        %v5074 = vunpack.c.l.b16 %v4381
        %v5075 = vunpack.c.h.b16 %v4381
        %v5076 = vunpack.c.l.b16 %v4382
        %v5077 = vunpack.c.h.b16 %v4382
        %v5078 = vunpack.c.l.b16 %v4383
        %v5079 = vunpack.c.h.b16 %v4383
        %v5080 = vunpack.c.l.b16 %v4384
        %v5081 = vunpack.c.h.b16 %v4384
        %v5082 = vunpack.c.l.b16 %v4385
        %v5083 = vunpack.c.h.b16 %v4385
        %v5084 = vunpack.c.l.b16 %v4386
        %v5085 = vunpack.c.h.b16 %v4386
        %v5086 = vunpack.c.l.b16 %v4387
        %v5087 = vunpack.c.h.b16 %v4387
        %v5088 = vunpack.c.l.b16 %v4388
        %v5089 = vunpack.c.h.b16 %v4388
        %v5090 = vunpack.c.l.b16 %v4389
        %v5091 = vunpack.c.h.b16 %v4389
        %v5092 = vunpack.c.l.b16 %v4390
        %v5093 = vunpack.c.h.b16 %v4390
        %v5094 = vunpack.c.l.b16 %v4391
        %v5095 = vunpack.c.h.b16 %v4391
        %v5096 = vunpack.c.l.b16 %v4392
        %v5097 = vunpack.c.h.b16 %v4392
        %v5098 = vunpack.c.l.b16 %v4393
        %v5099 = vunpack.c.h.b16 %v4393
        %v5100 = vunpack.c.l.b16 %v4394
        %v5101 = vunpack.c.h.b16 %v4394
        %v5102 = vunpack.c.l.b16 %v4395
        %v5103 = vunpack.c.h.b16 %v4395
        %v5104 = vunpack.c.l.b16 %v4396
        %v5105 = vunpack.c.h.b16 %v4396
        %v5106 = vunpack.c.l.b16 %v4397
        %v5107 = vunpack.c.h.b16 %v4397
        %v5108 = vunpack.c.l.b16 %v4398
        %v5109 = vunpack.c.h.b16 %v4398
        %v5110 = vunpack.c.l.b16 %v4399
        %v5111 = vunpack.c.h.b16 %v4399
        %v5112 = vunpack.c.l.b16 %v4400
        %v5113 = vunpack.c.h.b16 %v4400
        %v5114 = vunpack.c.l.b16 %v4401
        %v5115 = vunpack.c.h.b16 %v4401
        %v5116 = vunpack.c.l.b16 %v4402
        %v5117 = vunpack.c.h.b16 %v4402
        %v5118 = vunpack.c.l.b16 %v4403
        %v5119 = vunpack.c.h.b16 %v4403
        %v5120 = vunpack.c.l.b16 %v4404
        %v5121 = vunpack.c.h.b16 %v4404
        %v5122 = vunpack.c.l.b16 %v4405
        %v5123 = vunpack.c.h.b16 %v4405
        %v5124 = vunpack.c.l.b16 %v4406
        %v5125 = vunpack.c.h.b16 %v4406
        %v5126 = vunpack.c.l.b16 %v4407
        %v5127 = vunpack.c.h.b16 %v4407
        %v5128 = vunpack.c.l.b16 %v4408
        %v5129 = vunpack.c.h.b16 %v4408
        %v5130 = vunpack.c.l.b16 %v4409
        %v5131 = vunpack.c.h.b16 %v4409
        %v5132 = vunpack.c.l.b16 %v4410
        %v5133 = vunpack.c.h.b16 %v4410
        %v5134 = vunpack.c.l.b16 %v4411
        %v5135 = vunpack.c.h.b16 %v4411
        %v5136 = vunpack.c.l.b16 %v4412
        %v5137 = vunpack.c.h.b16 %v4412
        %v5138 = vunpack.c.l.b16 %v4413
        %v5139 = vunpack.c.h.b16 %v4413
        %v5140 = vunpack.c.l.b16 %v4414
        %v5141 = vunpack.c.h.b16 %v4414
        %v5142 = vunpack.c.l.b16 %v4415
        %v5143 = vunpack.c.h.b16 %v4415
        %v5144 = vunpack.c.l.b16 %v4416
        %v5145 = vunpack.c.h.b16 %v4416
        %v5146 = vunpack.c.l.b16 %v4417
        %v5147 = vunpack.c.h.b16 %v4417
        %v5148 = vunpack.c.l.b16 %v4418
        %v5149 = vunpack.c.h.b16 %v4418
        %v5150 = vunpack.c.l.b16 %v4419
        %v5151 = vunpack.c.h.b16 %v4419
        %v5152 = vunpack.c.l.b16 %v4420
        %v5153 = vunpack.c.h.b16 %v4420
        %v5154 = vunpack.c.l.b16 %v4421
        %v5155 = vunpack.c.h.b16 %v4421
        %v5156 = vunpack.c.l.b16 %v4422
        %v5157 = vunpack.c.h.b16 %v4422
        %v5158 = vunpack.c.l.b16 %v4423
        %v5159 = vunpack.c.h.b16 %v4423
        %v5160 = vunpack.c.l.b16 %v4424
        %v5161 = vunpack.c.h.b16 %v4424
        %v5162 = vunpack.c.l.b16 %v4425
        %v5163 = vunpack.c.h.b16 %v4425
        %v5164 = vunpack.c.l.b16 %v4426
        %v5165 = vunpack.c.h.b16 %v4426
        %v5166 = vunpack.c.l.b16 %v4427
        %v5167 = vunpack.c.h.b16 %v4427
        %v5168 = vunpack.c.l.b16 %v4428
        %v5169 = vunpack.c.h.b16 %v4428
        %v5170 = vunpack.c.l.b16 %v4429
        %v5171 = vunpack.c.h.b16 %v4429
        %v5172 = vunpack.c.l.b16 %v4430
        %v5173 = vunpack.c.h.b16 %v4430
        %v5174 = vunpack.c.l.b16 %v4431
        %v5175 = vunpack.c.h.b16 %v4431
        %v5176 = vunpack.c.l.b16 %v4432
        %v5177 = vunpack.c.h.b16 %v4432
        %v5178 = vunpack.c.l.b16 %v4433
        %v5179 = vunpack.c.h.b16 %v4433
        %v5180 = vunpack.c.l.b16 %v4434
        %v5181 = vunpack.c.h.b16 %v4434
        %v5182 = vunpack.c.l.b16 %v4435
        %v5183 = vunpack.c.h.b16 %v4435
        %v5184 = vunpack.c.l.b16 %v4436
        %v5185 = vunpack.c.h.b16 %v4436
        %v5186 = vunpack.c.l.b16 %v4437
        %v5187 = vunpack.c.h.b16 %v4437
        %v5188 = vunpack.c.l.b16 %v4438
        %v5189 = vunpack.c.h.b16 %v4438
        %v5190 = vunpack.c.l.b16 %v4439
        %v5191 = vunpack.c.h.b16 %v4439
        %v5192 = vunpack.c.l.b16 %v4440
        %v5193 = vunpack.c.h.b16 %v4440
        %v5194 = vunpack.c.l.b16 %v4441
        %v5195 = vunpack.c.h.b16 %v4441
        %v5196 = vunpack.c.l.b16 %v4442
        %v5197 = vunpack.c.h.b16 %v4442
        %v5198 = vunpack.c.l.b16 %v4443
        %v5199 = vunpack.c.h.b16 %v4443
        %v5200 = vunpack.c.l.b16 %v4444
        %v5201 = vunpack.c.h.b16 %v4444
        %v5202 = vunpack.c.l.b16 %v4445
        %v5203 = vunpack.c.h.b16 %v4445
        %v5204 = vunpack.c.l.b16 %v4446
        %v5205 = vunpack.c.h.b16 %v4446
        %v5206 = vunpack.c.l.b16 %v4447
        %v5207 = vunpack.c.h.b16 %v4447
        %v5208 = vunpack.c.l.b16 %v4448
        %v5209 = vunpack.c.h.b16 %v4448
        %v5210 = vunpack.c.l.b16 %v4449
        %v5211 = vunpack.c.h.b16 %v4449
        %v5212 = vunpack.c.l.b16 %v4450
        %v5213 = vunpack.c.h.b16 %v4450
        %v5214 = vunpack.c.l.b16 %v4451
        %v5215 = vunpack.c.h.b16 %v4451
        %v5216 = vunpack.c.l.b16 %v4452
        %v5217 = vunpack.c.h.b16 %v4452
        %v5218 = vunpack.c.l.b16 %v4453
        %v5219 = vunpack.c.h.b16 %v4453
        %v5220 = vunpack.c.l.b16 %v4454
        %v5221 = vunpack.c.h.b16 %v4454
        %v5222 = vunpack.c.l.b16 %v4455
        %v5223 = vunpack.c.h.b16 %v4455
        %v5224 = vpack.c.b16 %v4720, %v4712
        %v5225 = vpack.c.b16 %v4721, %v4713
        %v5226 = vpack.c.b16 %v4722, %v4714
        %v5227 = vpack.c.b16 %v4723, %v4715
        %v5228 = vpack.c.b16 %v4724, %v4716
        %v5229 = vpack.c.b16 %v4725, %v4717
        %v5230 = vpack.c.b16 %v4726, %v4718
        %v5231 = vpack.c.b16 %v4727, %v4719
        %v5232 = vpack.c.b16 %v4736, %v4728
        %v5233 = vpack.c.b16 %v4737, %v4729
        %v5234 = vpack.c.b16 %v4738, %v4730
        %v5235 = vpack.c.b16 %v4739, %v4731
        %v5236 = vpack.c.b16 %v4740, %v4732
        %v5237 = vpack.c.b16 %v4741, %v4733
        %v5238 = vpack.c.b16 %v4742, %v4734
        %v5239 = vpack.c.b16 %v4743, %v4735
        %v5240 = vpack.c.b16 %v4752, %v4744
        %v5241 = vpack.c.b16 %v4753, %v4745
        %v5242 = vpack.c.b16 %v4754, %v4746
        %v5243 = vpack.c.b16 %v4755, %v4747
        %v5244 = vpack.c.b16 %v4756, %v4748
        %v5245 = vpack.c.b16 %v4757, %v4749
        %v5246 = vpack.c.b16 %v4758, %v4750
        %v5247 = vpack.c.b16 %v4759, %v4751
        %v5248 = vpack.c.b16 %v4768, %v4760
        %v5249 = vpack.c.b16 %v4769, %v4761
        %v5250 = vpack.c.b16 %v4770, %v4762
        %v5251 = vpack.c.b16 %v4771, %v4763
        %v5252 = vpack.c.b16 %v4772, %v4764
        %v5253 = vpack.c.b16 %v4773, %v4765
        %v5254 = vpack.c.b16 %v4774, %v4766
        %v5255 = vpack.c.b16 %v4775, %v4767
        %v5256 = vpack.c.b16 %v4784, %v4776
        %v5257 = vpack.c.b16 %v4785, %v4777
        %v5258 = vpack.c.b16 %v4786, %v4778
        %v5259 = vpack.c.b16 %v4787, %v4779
        %v5260 = vpack.c.b16 %v4788, %v4780
        %v5261 = vpack.c.b16 %v4789, %v4781
        %v5262 = vpack.c.b16 %v4790, %v4782
        %v5263 = vpack.c.b16 %v4791, %v4783
        %v5264 = vpack.c.b16 %v4800, %v4792
        %v5265 = vpack.c.b16 %v4801, %v4793
        %v5266 = vpack.c.b16 %v4802, %v4794
        %v5267 = vpack.c.b16 %v4803, %v4795
        %v5268 = vpack.c.b16 %v4804, %v4796
        %v5269 = vpack.c.b16 %v4805, %v4797
        %v5270 = vpack.c.b16 %v4806, %v4798
        %v5271 = vpack.c.b16 %v4807, %v4799
        %v5272 = vpack.c.b16 %v4816, %v4808
        %v5273 = vpack.c.b16 %v4817, %v4809
        %v5274 = vpack.c.b16 %v4818, %v4810
        %v5275 = vpack.c.b16 %v4819, %v4811
        %v5276 = vpack.c.b16 %v4820, %v4812
        %v5277 = vpack.c.b16 %v4821, %v4813
        %v5278 = vpack.c.b16 %v4822, %v4814
        %v5279 = vpack.c.b16 %v4823, %v4815
        %v5280 = vpack.c.b16 %v4832, %v4824
        %v5281 = vpack.c.b16 %v4833, %v4825
        %v5282 = vpack.c.b16 %v4834, %v4826
        %v5283 = vpack.c.b16 %v4835, %v4827
        %v5284 = vpack.c.b16 %v4836, %v4828
        %v5285 = vpack.c.b16 %v4837, %v4829
        %v5286 = vpack.c.b16 %v4838, %v4830
        %v5287 = vpack.c.b16 %v4839, %v4831
        %v5288 = vpack.c.b16 %v4848, %v4840
        %v5289 = vpack.c.b16 %v4849, %v4841
        %v5290 = vpack.c.b16 %v4850, %v4842
        %v5291 = vpack.c.b16 %v4851, %v4843
        %v5292 = vpack.c.b16 %v4852, %v4844
        %v5293 = vpack.c.b16 %v4853, %v4845
        %v5294 = vpack.c.b16 %v4854, %v4846
        %v5295 = vpack.c.b16 %v4855, %v4847
        %v5296 = vpack.c.b16 %v4864, %v4856
        %v5297 = vpack.c.b16 %v4865, %v4857
        %v5298 = vpack.c.b16 %v4866, %v4858
        %v5299 = vpack.c.b16 %v4867, %v4859
        %v5300 = vpack.c.b16 %v4868, %v4860
        %v5301 = vpack.c.b16 %v4869, %v4861
        %v5302 = vpack.c.b16 %v4870, %v4862
        %v5303 = vpack.c.b16 %v4871, %v4863
        %v5304 = vpack.c.b16 %v4880, %v4872
        %v5305 = vpack.c.b16 %v4881, %v4873
        %v5306 = vpack.c.b16 %v4882, %v4874
        %v5307 = vpack.c.b16 %v4883, %v4875
        %v5308 = vpack.c.b16 %v4884, %v4876
        %v5309 = vpack.c.b16 %v4885, %v4877
        %v5310 = vpack.c.b16 %v4886, %v4878
        %v5311 = vpack.c.b16 %v4887, %v4879
        %v5312 = vpack.c.b16 %v4896, %v4888
        %v5313 = vpack.c.b16 %v4897, %v4889
        %v5314 = vpack.c.b16 %v4898, %v4890
        %v5315 = vpack.c.b16 %v4899, %v4891
        %v5316 = vpack.c.b16 %v4900, %v4892
        %v5317 = vpack.c.b16 %v4901, %v4893
        %v5318 = vpack.c.b16 %v4902, %v4894
        %v5319 = vpack.c.b16 %v4903, %v4895
        %v5320 = vpack.c.b16 %v4912, %v4904
        %v5321 = vpack.c.b16 %v4913, %v4905
        %v5322 = vpack.c.b16 %v4914, %v4906
        %v5323 = vpack.c.b16 %v4915, %v4907
        %v5324 = vpack.c.b16 %v4916, %v4908
        %v5325 = vpack.c.b16 %v4917, %v4909
        %v5326 = vpack.c.b16 %v4918, %v4910
        %v5327 = vpack.c.b16 %v4919, %v4911
        %v5328 = vpack.c.b16 %v4928, %v4920
        %v5329 = vpack.c.b16 %v4929, %v4921
        %v5330 = vpack.c.b16 %v4930, %v4922
        %v5331 = vpack.c.b16 %v4931, %v4923
        %v5332 = vpack.c.b16 %v4932, %v4924
        %v5333 = vpack.c.b16 %v4933, %v4925
        %v5334 = vpack.c.b16 %v4934, %v4926
        %v5335 = vpack.c.b16 %v4935, %v4927
        %v5336 = vpack.c.b16 %v4944, %v4936
        %v5337 = vpack.c.b16 %v4945, %v4937
        %v5338 = vpack.c.b16 %v4946, %v4938
        %v5339 = vpack.c.b16 %v4947, %v4939
        %v5340 = vpack.c.b16 %v4948, %v4940
        %v5341 = vpack.c.b16 %v4949, %v4941
        %v5342 = vpack.c.b16 %v4950, %v4942
        %v5343 = vpack.c.b16 %v4951, %v4943
        %v5344 = vpack.c.b16 %v4960, %v4952
        %v5345 = vpack.c.b16 %v4961, %v4953
        %v5346 = vpack.c.b16 %v4962, %v4954
        %v5347 = vpack.c.b16 %v4963, %v4955
        %v5348 = vpack.c.b16 %v4964, %v4956
        %v5349 = vpack.c.b16 %v4965, %v4957
        %v5350 = vpack.c.b16 %v4966, %v4958
        %v5351 = vpack.c.b16 %v4967, %v4959
        %v5352 = vpack.c.b16 %v4976, %v4968
        %v5353 = vpack.c.b16 %v4977, %v4969
        %v5354 = vpack.c.b16 %v4978, %v4970
        %v5355 = vpack.c.b16 %v4979, %v4971
        %v5356 = vpack.c.b16 %v4980, %v4972
        %v5357 = vpack.c.b16 %v4981, %v4973
        %v5358 = vpack.c.b16 %v4982, %v4974
        %v5359 = vpack.c.b16 %v4983, %v4975
        %v5360 = vpack.c.b16 %v4992, %v4984
        %v5361 = vpack.c.b16 %v4993, %v4985
        %v5362 = vpack.c.b16 %v4994, %v4986
        %v5363 = vpack.c.b16 %v4995, %v4987
        %v5364 = vpack.c.b16 %v4996, %v4988
        %v5365 = vpack.c.b16 %v4997, %v4989
        %v5366 = vpack.c.b16 %v4998, %v4990
        %v5367 = vpack.c.b16 %v4999, %v4991
        %v5368 = vpack.c.b16 %v5008, %v5000
        %v5369 = vpack.c.b16 %v5009, %v5001
        %v5370 = vpack.c.b16 %v5010, %v5002
        %v5371 = vpack.c.b16 %v5011, %v5003
        %v5372 = vpack.c.b16 %v5012, %v5004
        %v5373 = vpack.c.b16 %v5013, %v5005
        %v5374 = vpack.c.b16 %v5014, %v5006
        %v5375 = vpack.c.b16 %v5015, %v5007
        %v5376 = vpack.c.b16 %v5024, %v5016
        %v5377 = vpack.c.b16 %v5025, %v5017
        %v5378 = vpack.c.b16 %v5026, %v5018
        %v5379 = vpack.c.b16 %v5027, %v5019
        %v5380 = vpack.c.b16 %v5028, %v5020
        %v5381 = vpack.c.b16 %v5029, %v5021
        %v5382 = vpack.c.b16 %v5030, %v5022
        %v5383 = vpack.c.b16 %v5031, %v5023
        %v5384 = vpack.c.b16 %v5040, %v5032
        %v5385 = vpack.c.b16 %v5041, %v5033
        %v5386 = vpack.c.b16 %v5042, %v5034
        %v5387 = vpack.c.b16 %v5043, %v5035
        %v5388 = vpack.c.b16 %v5044, %v5036
        %v5389 = vpack.c.b16 %v5045, %v5037
        %v5390 = vpack.c.b16 %v5046, %v5038
        %v5391 = vpack.c.b16 %v5047, %v5039
        %v5392 = vpack.c.b16 %v5056, %v5048
        %v5393 = vpack.c.b16 %v5057, %v5049
        %v5394 = vpack.c.b16 %v5058, %v5050
        %v5395 = vpack.c.b16 %v5059, %v5051
        %v5396 = vpack.c.b16 %v5060, %v5052
        %v5397 = vpack.c.b16 %v5061, %v5053
        %v5398 = vpack.c.b16 %v5062, %v5054
        %v5399 = vpack.c.b16 %v5063, %v5055
        %v5400 = vpack.c.b16 %v5072, %v5064
        %v5401 = vpack.c.b16 %v5073, %v5065
        %v5402 = vpack.c.b16 %v5074, %v5066
        %v5403 = vpack.c.b16 %v5075, %v5067
        %v5404 = vpack.c.b16 %v5076, %v5068
        %v5405 = vpack.c.b16 %v5077, %v5069
        %v5406 = vpack.c.b16 %v5078, %v5070
        %v5407 = vpack.c.b16 %v5079, %v5071
        %v5408 = vpack.c.b16 %v5088, %v5080
        %v5409 = vpack.c.b16 %v5089, %v5081
        %v5410 = vpack.c.b16 %v5090, %v5082
        %v5411 = vpack.c.b16 %v5091, %v5083
        %v5412 = vpack.c.b16 %v5092, %v5084
        %v5413 = vpack.c.b16 %v5093, %v5085
        %v5414 = vpack.c.b16 %v5094, %v5086
        %v5415 = vpack.c.b16 %v5095, %v5087
        %v5416 = vpack.c.b16 %v5104, %v5096
        %v5417 = vpack.c.b16 %v5105, %v5097
        %v5418 = vpack.c.b16 %v5106, %v5098
        %v5419 = vpack.c.b16 %v5107, %v5099
        %v5420 = vpack.c.b16 %v5108, %v5100
        %v5421 = vpack.c.b16 %v5109, %v5101
        %v5422 = vpack.c.b16 %v5110, %v5102
        %v5423 = vpack.c.b16 %v5111, %v5103
        %v5424 = vpack.c.b16 %v5120, %v5112
        %v5425 = vpack.c.b16 %v5121, %v5113
        %v5426 = vpack.c.b16 %v5122, %v5114
        %v5427 = vpack.c.b16 %v5123, %v5115
        %v5428 = vpack.c.b16 %v5124, %v5116
        %v5429 = vpack.c.b16 %v5125, %v5117
        %v5430 = vpack.c.b16 %v5126, %v5118
        %v5431 = vpack.c.b16 %v5127, %v5119
        %v5432 = vpack.c.b16 %v5136, %v5128
        %v5433 = vpack.c.b16 %v5137, %v5129
        %v5434 = vpack.c.b16 %v5138, %v5130
        %v5435 = vpack.c.b16 %v5139, %v5131
        %v5436 = vpack.c.b16 %v5140, %v5132
        %v5437 = vpack.c.b16 %v5141, %v5133
        %v5438 = vpack.c.b16 %v5142, %v5134
        %v5439 = vpack.c.b16 %v5143, %v5135
        %v5440 = vpack.c.b16 %v5152, %v5144
        %v5441 = vpack.c.b16 %v5153, %v5145
        %v5442 = vpack.c.b16 %v5154, %v5146
        %v5443 = vpack.c.b16 %v5155, %v5147
        %v5444 = vpack.c.b16 %v5156, %v5148
        %v5445 = vpack.c.b16 %v5157, %v5149
        %v5446 = vpack.c.b16 %v5158, %v5150
        %v5447 = vpack.c.b16 %v5159, %v5151
        %v5448 = vpack.c.b16 %v5168, %v5160
        %v5449 = vpack.c.b16 %v5169, %v5161
        %v5450 = vpack.c.b16 %v5170, %v5162
        %v5451 = vpack.c.b16 %v5171, %v5163
        %v5452 = vpack.c.b16 %v5172, %v5164
        %v5453 = vpack.c.b16 %v5173, %v5165
        %v5454 = vpack.c.b16 %v5174, %v5166
        %v5455 = vpack.c.b16 %v5175, %v5167
        %v5456 = vpack.c.b16 %v5184, %v5176
        %v5457 = vpack.c.b16 %v5185, %v5177
        %v5458 = vpack.c.b16 %v5186, %v5178
        %v5459 = vpack.c.b16 %v5187, %v5179
        %v5460 = vpack.c.b16 %v5188, %v5180
        %v5461 = vpack.c.b16 %v5189, %v5181
        %v5462 = vpack.c.b16 %v5190, %v5182
        %v5463 = vpack.c.b16 %v5191, %v5183
        %v5464 = vpack.c.b16 %v5200, %v5192
        %v5465 = vpack.c.b16 %v5201, %v5193
        %v5466 = vpack.c.b16 %v5202, %v5194
        %v5467 = vpack.c.b16 %v5203, %v5195
        %v5468 = vpack.c.b16 %v5204, %v5196
        %v5469 = vpack.c.b16 %v5205, %v5197
        %v5470 = vpack.c.b16 %v5206, %v5198
        %v5471 = vpack.c.b16 %v5207, %v5199
        %v5472 = vpack.c.b16 %v5216, %v5208
        %v5473 = vpack.c.b16 %v5217, %v5209
        %v5474 = vpack.c.b16 %v5218, %v5210
        %v5475 = vpack.c.b16 %v5219, %v5211
        %v5476 = vpack.c.b16 %v5220, %v5212
        %v5477 = vpack.c.b16 %v5221, %v5213
        %v5478 = vpack.c.b16 %v5222, %v5214
        %v5479 = vpack.c.b16 %v5223, %v5215
        %5736 = vmatprep.subr.bf16.mxu0 %v5225
        %5737 = vmatpush1.bf16.msra.mxu0 %v5224
        %5738 = vmatprep.subr.bf16.mxu0 %v5233
        %5739 = vmatpush1.bf16.msra.mxu0 %v5232
        %5740 = vmatprep.subr.bf16.mxu0 %v5241
        %5741 = vmatpush1.bf16.msra.mxu0 %v5240
        %5742 = vmatprep.subr.bf16.mxu0 %v5249
        %5743 = vmatpush1.bf16.msra.mxu0 %v5248
        %5744 = vmatprep.subr.bf16.mxu0 %v5257
        %5745 = vmatpush1.bf16.msra.mxu0 %v5256
        %5746 = vmatprep.subr.bf16.mxu0 %v5265
        %5747 = vmatpush1.bf16.msra.mxu0 %v5264
        %5748 = vmatprep.subr.bf16.mxu0 %v5273
        %5749 = vmatpush1.bf16.msra.mxu0 %v5272
        %5750 = vmatprep.subr.bf16.mxu0 %v5281
        %5751 = vmatpush1.bf16.msra.mxu0 %v5280
        %5752 = vmatprep.subr.bf16.mxu0 %v5289
        %5753 = vmatpush1.bf16.msra.mxu0 %v5288
        %5754 = vmatprep.subr.bf16.mxu0 %v5297
        %5755 = vmatpush1.bf16.msra.mxu0 %v5296
        %5756 = vmatprep.subr.bf16.mxu0 %v5305
        %5757 = vmatpush1.bf16.msra.mxu0 %v5304
        %5758 = vmatprep.subr.bf16.mxu0 %v5313
        %5759 = vmatpush1.bf16.msra.mxu0 %v5312
        %5760 = vmatprep.subr.bf16.mxu0 %v5321
        %5761 = vmatpush1.bf16.msra.mxu0 %v5320
        %5762 = vmatprep.subr.bf16.mxu0 %v5329
        %5763 = vmatpush1.bf16.msra.mxu0 %v5328
        %5764 = vmatprep.subr.bf16.mxu0 %v5337
        %5765 = vmatpush1.bf16.msra.mxu0 %v5336
        %5766 = vmatprep.subr.bf16.mxu0 %v5345
        %5767 = vmatpush1.bf16.msra.mxu0 %v5344
        %5768 = vmatprep.mubr.bf16.mxu0 %v4169
        %5769 = vmatmul.mubr.bf16.gmra.mrb[0].mxu0 %v4168
        %v5770 = vpop.f32.mrb[0].mxu0
        %v5771 = vadd.f32 0.0, %v5770
        %v5772 = vpop.f32.mrb[0].mxu0
        %v5773 = vadd.f32 0.0, %v5772
        %v5774 = vpop.f32.mrb[0].mxu0
        %v5775 = vadd.f32 0.0, %v5774
        %v5776 = vpop.f32.mrb[0].mxu0
        %v5777 = vadd.f32 0.0, %v5776
        %5778 = vmatprep.mubr.bf16.mxu0 %v4173
        %5779 = vmatmul.mubr.bf16.gmra.mrb[0].mxu0 %v4172
        %v5780 = vpop.f32.mrb[0].mxu0
        %v5781 = vadd.f32 0.0, %v5780
        %v5782 = vpop.f32.mrb[0].mxu0
        %v5783 = vadd.f32 0.0, %v5782
        %v5784 = vpop.f32.mrb[0].mxu0
        %v5785 = vadd.f32 0.0, %v5784
        %v5786 = vpop.f32.mrb[0].mxu0
        %v5787 = vadd.f32 0.0, %v5786
        %5788 = vmatprep.mubr.bf16.mxu0 %v4177
        %5789 = vmatmul.mubr.bf16.gmra.mrb[0].mxu0 %v4176
        %v5790 = vpop.f32.mrb[0].mxu0
        %v5791 = vadd.f32 0.0, %v5790
        %v5792 = vpop.f32.mrb[0].mxu0
        %v5793 = vadd.f32 0.0, %v5792
        %v5794 = vpop.f32.mrb[0].mxu0
        %v5795 = vadd.f32 0.0, %v5794
        %v5796 = vpop.f32.mrb[0].mxu0
        %v5797 = vadd.f32 0.0, %v5796
        %5798 = vmatprep.mubr.bf16.mxu0 %v4181
        %5799 = vmatmul.mubr.bf16.gmra.mrb[0].mxu0 %v4180
        %v5800 = vpop.f32.mrb[0].mxu0
        %v5801 = vadd.f32 0.0, %v5800
        %v5802 = vpop.f32.mrb[0].mxu0
        %v5803 = vadd.f32 0.0, %v5802
        %v5804 = vpop.f32.mrb[0].mxu0
        %v5805 = vadd.f32 0.0, %v5804
        %v5806 = vpop.f32.mrb[0].mxu0
        %v5807 = vadd.f32 0.0, %v5806
        %5808 = vmatprep.mubr.bf16.mxu0 %v4185
        %5809 = vmatmul.mubr.bf16.gmra.mrb[0].mxu0 %v4184
        %v5810 = vpop.f32.mrb[0].mxu0
        %v5811 = vadd.f32 0.0, %v5810
        %v5812 = vpop.f32.mrb[0].mxu0
        %v5813 = vadd.f32 0.0, %v5812
        %v5814 = vpop.f32.mrb[0].mxu0
        %v5815 = vadd.f32 0.0, %v5814
        %v5816 = vpop.f32.mrb[0].mxu0
        %v5817 = vadd.f32 0.0, %v5816
        %5818 = vmatprep.mubr.bf16.mxu0 %v4189
        %5819 = vmatmul.mubr.bf16.gmra.mrb[0].mxu0 %v4188
        %v5820 = vpop.f32.mrb[0].mxu0
        %v5821 = vadd.f32 0.0, %v5820
        %v5822 = vpop.f32.mrb[0].mxu0
        %v5823 = vadd.f32 0.0, %v5822
        %v5824 = vpop.f32.mrb[0].mxu0
        %v5825 = vadd.f32 0.0, %v5824
        %v5826 = vpop.f32.mrb[0].mxu0
        %v5827 = vadd.f32 0.0, %v5826
        %5828 = vmatprep.mubr.bf16.mxu0 %v4193
        %5829 = vmatmul.mubr.bf16.gmra.mrb[0].mxu0 %v4192
        %v5830 = vpop.f32.mrb[0].mxu0
        %v5831 = vadd.f32 0.0, %v5830
        %v5832 = vpop.f32.mrb[0].mxu0
        %v5833 = vadd.f32 0.0, %v5832
        %v5834 = vpop.f32.mrb[0].mxu0
        %v5835 = vadd.f32 0.0, %v5834
        %v5836 = vpop.f32.mrb[0].mxu0
        %v5837 = vadd.f32 0.0, %v5836
        %5838 = vmatprep.mubr.bf16.mxu0 %v4197
        %5839 = vmatmul.mubr.bf16.gmra.mrb[0].mxu0 %v4196
        %v5840 = vpop.f32.mrb[0].mxu0
        %v5841 = vadd.f32 0.0, %v5840
        %v5842 = vpop.f32.mrb[0].mxu0
        %v5843 = vadd.f32 0.0, %v5842
        %v5844 = vpop.f32.mrb[0].mxu0
        %v5845 = vadd.f32 0.0, %v5844
        %v5846 = vpop.f32.mrb[0].mxu0
        %v5847 = vadd.f32 0.0, %v5846
        %5848 = vdwg.mxu0
        %5849 = vmatprep.subr.bf16.mxu0 %v5353
        %5850 = vmatpush1.bf16.msra.mxu0 %v5352
        %5851 = vmatprep.subr.bf16.mxu0 %v5361
        %5852 = vmatpush1.bf16.msra.mxu0 %v5360
        %5853 = vmatprep.subr.bf16.mxu0 %v5369
        %5854 = vmatpush1.bf16.msra.mxu0 %v5368
        %5855 = vmatprep.subr.bf16.mxu0 %v5377
        %5856 = vmatpush1.bf16.msra.mxu0 %v5376
        %5857 = vmatprep.subr.bf16.mxu0 %v5385
        %5858 = vmatpush1.bf16.msra.mxu0 %v5384
        %5859 = vmatprep.subr.bf16.mxu0 %v5393
        %5860 = vmatpush1.bf16.msra.mxu0 %v5392
        %5861 = vmatprep.subr.bf16.mxu0 %v5401
        %5862 = vmatpush1.bf16.msra.mxu0 %v5400
        %5863 = vmatprep.subr.bf16.mxu0 %v5409
        %5864 = vmatpush1.bf16.msra.mxu0 %v5408
        %5865 = vmatprep.subr.bf16.mxu0 %v5417
        %5866 = vmatpush1.bf16.msra.mxu0 %v5416
        %5867 = vmatprep.subr.bf16.mxu0 %v5425
        %5868 = vmatpush1.bf16.msra.mxu0 %v5424
        %5869 = vmatprep.subr.bf16.mxu0 %v5433
        %5870 = vmatpush1.bf16.msra.mxu0 %v5432
        %5871 = vmatprep.subr.bf16.mxu0 %v5441
        %5872 = vmatpush1.bf16.msra.mxu0 %v5440
        %5873 = vmatprep.subr.bf16.mxu0 %v5449
        %5874 = vmatpush1.bf16.msra.mxu0 %v5448
        %5875 = vmatprep.subr.bf16.mxu0 %v5457
        %5876 = vmatpush1.bf16.msra.mxu0 %v5456
        %5877 = vmatprep.subr.bf16.mxu0 %v5465
        %5878 = vmatpush1.bf16.msra.mxu0 %v5464
        %5879 = vmatprep.subr.bf16.mxu0 %v5473
        %5880 = vmatpush1.bf16.msra.mxu0 %v5472
        %5881 = vmatprep.mubr.bf16.mxu0 %v4171
        %5882 = vmatmul.mubr.bf16.gmra.mrb[0].mxu0 %v4170
        %v5883 = vpop.f32.mrb[0].mxu0
        %v5884 = vadd.f32 %v5771, %v5883
        %v5885 = vpop.f32.mrb[0].mxu0
        %v5886 = vadd.f32 %v5773, %v5885
        %v5887 = vpop.f32.mrb[0].mxu0
        %v5888 = vadd.f32 %v5775, %v5887
        %v5889 = vpop.f32.mrb[0].mxu0
        %v5890 = vadd.f32 %v5777, %v5889
        %5891 = vmatprep.mubr.bf16.mxu0 %v4175
        %5892 = vmatmul.mubr.bf16.gmra.mrb[0].mxu0 %v4174
        %v5893 = vpop.f32.mrb[0].mxu0
        %v5894 = vadd.f32 %v5781, %v5893
        %v5895 = vpop.f32.mrb[0].mxu0
        %v5896 = vadd.f32 %v5783, %v5895
        %v5897 = vpop.f32.mrb[0].mxu0
        %v5898 = vadd.f32 %v5785, %v5897
        %v5899 = vpop.f32.mrb[0].mxu0
        %v5900 = vadd.f32 %v5787, %v5899
        %5901 = vmatprep.mubr.bf16.mxu0 %v4179
        %5902 = vmatmul.mubr.bf16.gmra.mrb[0].mxu0 %v4178
        %v5903 = vpop.f32.mrb[0].mxu0
        %v5904 = vadd.f32 %v5791, %v5903
        %v5905 = vpop.f32.mrb[0].mxu0
        %v5906 = vadd.f32 %v5793, %v5905
        %v5907 = vpop.f32.mrb[0].mxu0
        %v5908 = vadd.f32 %v5795, %v5907
        %v5909 = vpop.f32.mrb[0].mxu0
        %v5910 = vadd.f32 %v5797, %v5909
        %5911 = vmatprep.mubr.bf16.mxu0 %v4183
        %5912 = vmatmul.mubr.bf16.gmra.mrb[0].mxu0 %v4182
        %v5913 = vpop.f32.mrb[0].mxu0
        %v5914 = vadd.f32 %v5801, %v5913
        %v5915 = vpop.f32.mrb[0].mxu0
        %v5916 = vadd.f32 %v5803, %v5915
        %v5917 = vpop.f32.mrb[0].mxu0
        %v5918 = vadd.f32 %v5805, %v5917
        %v5919 = vpop.f32.mrb[0].mxu0
        %v5920 = vadd.f32 %v5807, %v5919
        %5921 = vmatprep.mubr.bf16.mxu0 %v4187
        %5922 = vmatmul.mubr.bf16.gmra.mrb[0].mxu0 %v4186
        %v5923 = vpop.f32.mrb[0].mxu0
        %v5924 = vadd.f32 %v5811, %v5923
        %v5925 = vpop.f32.mrb[0].mxu0
        %v5926 = vadd.f32 %v5813, %v5925
        %v5927 = vpop.f32.mrb[0].mxu0
        %v5928 = vadd.f32 %v5815, %v5927
        %v5929 = vpop.f32.mrb[0].mxu0
        %v5930 = vadd.f32 %v5817, %v5929
        %5931 = vmatprep.mubr.bf16.mxu0 %v4191
        %5932 = vmatmul.mubr.bf16.gmra.mrb[0].mxu0 %v4190
        %v5933 = vpop.f32.mrb[0].mxu0
        %v5934 = vadd.f32 %v5821, %v5933
        %v5935 = vpop.f32.mrb[0].mxu0
        %v5936 = vadd.f32 %v5823, %v5935
        %v5937 = vpop.f32.mrb[0].mxu0
        %v5938 = vadd.f32 %v5825, %v5937
        %v5939 = vpop.f32.mrb[0].mxu0
        %v5940 = vadd.f32 %v5827, %v5939
        %5941 = vmatprep.mubr.bf16.mxu0 %v4195
        %5942 = vmatmul.mubr.bf16.gmra.mrb[0].mxu0 %v4194
        %v5943 = vpop.f32.mrb[0].mxu0
        %v5944 = vadd.f32 %v5831, %v5943
        %v5945 = vpop.f32.mrb[0].mxu0
        %v5946 = vadd.f32 %v5833, %v5945
        %v5947 = vpop.f32.mrb[0].mxu0
        %v5948 = vadd.f32 %v5835, %v5947
        %v5949 = vpop.f32.mrb[0].mxu0
        %v5950 = vadd.f32 %v5837, %v5949
        %5951 = vmatprep.mubr.bf16.mxu0 %v4199
        %5952 = vmatmul.mubr.bf16.gmra.mrb[0].mxu0 %v4198
        %v5953 = vpop.f32.mrb[0].mxu0
        %v5954 = vadd.f32 %v5841, %v5953
        %v5955 = vpop.f32.mrb[0].mxu0
        %v5956 = vadd.f32 %v5843, %v5955
        %v5957 = vpop.f32.mrb[0].mxu0
        %v5958 = vadd.f32 %v5845, %v5957
        %v5959 = vpop.f32.mrb[0].mxu0
        %v5960 = vadd.f32 %v5847, %v5959
        %5961 = vdwg.mxu0
        %5962 = vmatprep.subr.bf16.mxu0 %v5227
        %5963 = vmatpush1.bf16.msra.mxu0 %v5226
        %5964 = vmatprep.subr.bf16.mxu0 %v5235
        %5965 = vmatpush1.bf16.msra.mxu0 %v5234
        %5966 = vmatprep.subr.bf16.mxu0 %v5243
        %5967 = vmatpush1.bf16.msra.mxu0 %v5242
        %5968 = vmatprep.subr.bf16.mxu0 %v5251
        %5969 = vmatpush1.bf16.msra.mxu0 %v5250
        %5970 = vmatprep.subr.bf16.mxu0 %v5259
        %5971 = vmatpush1.bf16.msra.mxu0 %v5258
        %5972 = vmatprep.subr.bf16.mxu0 %v5267
        %5973 = vmatpush1.bf16.msra.mxu0 %v5266
        %5974 = vmatprep.subr.bf16.mxu0 %v5275
        %5975 = vmatpush1.bf16.msra.mxu0 %v5274
        %5976 = vmatprep.subr.bf16.mxu0 %v5283
        %5977 = vmatpush1.bf16.msra.mxu0 %v5282
        %5978 = vmatprep.subr.bf16.mxu0 %v5291
        %5979 = vmatpush1.bf16.msra.mxu0 %v5290
        %5980 = vmatprep.subr.bf16.mxu0 %v5299
        %5981 = vmatpush1.bf16.msra.mxu0 %v5298
        %5982 = vmatprep.subr.bf16.mxu0 %v5307
        %5983 = vmatpush1.bf16.msra.mxu0 %v5306
        %5984 = vmatprep.subr.bf16.mxu0 %v5315
        %5985 = vmatpush1.bf16.msra.mxu0 %v5314
        %5986 = vmatprep.subr.bf16.mxu0 %v5323
        %5987 = vmatpush1.bf16.msra.mxu0 %v5322
        %5988 = vmatprep.subr.bf16.mxu0 %v5331
        %5989 = vmatpush1.bf16.msra.mxu0 %v5330
        %5990 = vmatprep.subr.bf16.mxu0 %v5339
        %5991 = vmatpush1.bf16.msra.mxu0 %v5338
        %5992 = vmatprep.subr.bf16.mxu0 %v5347
        %5993 = vmatpush1.bf16.msra.mxu0 %v5346
        %5994 = vmatprep.mubr.bf16.mxu0 %v4169
        %5995 = vmatmul.mubr.bf16.gmra.mrb[0].mxu0 %v4168
        %v5996 = vpop.f32.mrb[0].mxu0
        %v5997 = vadd.f32 0.0, %v5996
        %v5998 = vpop.f32.mrb[0].mxu0
        %v5999 = vadd.f32 0.0, %v5998
        %v6000 = vpop.f32.mrb[0].mxu0
        %v6001 = vadd.f32 0.0, %v6000
        %v6002 = vpop.f32.mrb[0].mxu0
        %v6003 = vadd.f32 0.0, %v6002
        %6004 = vmatprep.mubr.bf16.mxu0 %v4173
        %6005 = vmatmul.mubr.bf16.gmra.mrb[0].mxu0 %v4172
        %v6006 = vpop.f32.mrb[0].mxu0
        %v6007 = vadd.f32 0.0, %v6006
        %v6008 = vpop.f32.mrb[0].mxu0
        %v6009 = vadd.f32 0.0, %v6008
        %v6010 = vpop.f32.mrb[0].mxu0
        %v6011 = vadd.f32 0.0, %v6010
        %v6012 = vpop.f32.mrb[0].mxu0
        %v6013 = vadd.f32 0.0, %v6012
        %6014 = vmatprep.mubr.bf16.mxu0 %v4177
        %6015 = vmatmul.mubr.bf16.gmra.mrb[0].mxu0 %v4176
        %v6016 = vpop.f32.mrb[0].mxu0
        %v6017 = vadd.f32 0.0, %v6016
        %v6018 = vpop.f32.mrb[0].mxu0
        %v6019 = vadd.f32 0.0, %v6018
        %v6020 = vpop.f32.mrb[0].mxu0
        %v6021 = vadd.f32 0.0, %v6020
        %v6022 = vpop.f32.mrb[0].mxu0
        %v6023 = vadd.f32 0.0, %v6022
        %6024 = vmatprep.mubr.bf16.mxu0 %v4181
        %6025 = vmatmul.mubr.bf16.gmra.mrb[0].mxu0 %v4180
        %v6026 = vpop.f32.mrb[0].mxu0
        %v6027 = vadd.f32 0.0, %v6026
        %v6028 = vpop.f32.mrb[0].mxu0
        %v6029 = vadd.f32 0.0, %v6028
        %v6030 = vpop.f32.mrb[0].mxu0
        %v6031 = vadd.f32 0.0, %v6030
        %v6032 = vpop.f32.mrb[0].mxu0
        %v6033 = vadd.f32 0.0, %v6032
        %6034 = vmatprep.mubr.bf16.mxu0 %v4185
        %6035 = vmatmul.mubr.bf16.gmra.mrb[0].mxu0 %v4184
        %v6036 = vpop.f32.mrb[0].mxu0
        %v6037 = vadd.f32 0.0, %v6036
        %v6038 = vpop.f32.mrb[0].mxu0
        %v6039 = vadd.f32 0.0, %v6038
        %v6040 = vpop.f32.mrb[0].mxu0
        %v6041 = vadd.f32 0.0, %v6040
        %v6042 = vpop.f32.mrb[0].mxu0
        %v6043 = vadd.f32 0.0, %v6042
        %6044 = vmatprep.mubr.bf16.mxu0 %v4189
        %6045 = vmatmul.mubr.bf16.gmra.mrb[0].mxu0 %v4188
        %v6046 = vpop.f32.mrb[0].mxu0
        %v6047 = vadd.f32 0.0, %v6046
        %v6048 = vpop.f32.mrb[0].mxu0
        %v6049 = vadd.f32 0.0, %v6048
        %v6050 = vpop.f32.mrb[0].mxu0
        %v6051 = vadd.f32 0.0, %v6050
        %v6052 = vpop.f32.mrb[0].mxu0
        %v6053 = vadd.f32 0.0, %v6052
        %6054 = vmatprep.mubr.bf16.mxu0 %v4193
        %6055 = vmatmul.mubr.bf16.gmra.mrb[0].mxu0 %v4192
        %v6056 = vpop.f32.mrb[0].mxu0
        %v6057 = vadd.f32 0.0, %v6056
        %v6058 = vpop.f32.mrb[0].mxu0
        %v6059 = vadd.f32 0.0, %v6058
        %v6060 = vpop.f32.mrb[0].mxu0
        %v6061 = vadd.f32 0.0, %v6060
        %v6062 = vpop.f32.mrb[0].mxu0
        %v6063 = vadd.f32 0.0, %v6062
        %6064 = vmatprep.mubr.bf16.mxu0 %v4197
        %6065 = vmatmul.mubr.bf16.gmra.mrb[0].mxu0 %v4196
        %v6066 = vpop.f32.mrb[0].mxu0
        %v6067 = vadd.f32 0.0, %v6066
        %v6068 = vpop.f32.mrb[0].mxu0
        %v6069 = vadd.f32 0.0, %v6068
        %v6070 = vpop.f32.mrb[0].mxu0
        %v6071 = vadd.f32 0.0, %v6070
        %v6072 = vpop.f32.mrb[0].mxu0
        %v6073 = vadd.f32 0.0, %v6072
        %6074 = vdwg.mxu0
        %6075 = vmatprep.subr.bf16.mxu0 %v5355
        %6076 = vmatpush1.bf16.msra.mxu0 %v5354
        %6077 = vmatprep.subr.bf16.mxu0 %v5363
        %6078 = vmatpush1.bf16.msra.mxu0 %v5362
        %6079 = vmatprep.subr.bf16.mxu0 %v5371
        %6080 = vmatpush1.bf16.msra.mxu0 %v5370
        %6081 = vmatprep.subr.bf16.mxu0 %v5379
        %6082 = vmatpush1.bf16.msra.mxu0 %v5378
        %6083 = vmatprep.subr.bf16.mxu0 %v5387
        %6084 = vmatpush1.bf16.msra.mxu0 %v5386
        %6085 = vmatprep.subr.bf16.mxu0 %v5395
        %6086 = vmatpush1.bf16.msra.mxu0 %v5394
        %6087 = vmatprep.subr.bf16.mxu0 %v5403
        %6088 = vmatpush1.bf16.msra.mxu0 %v5402
        %6089 = vmatprep.subr.bf16.mxu0 %v5411
        %6090 = vmatpush1.bf16.msra.mxu0 %v5410
        %6091 = vmatprep.subr.bf16.mxu0 %v5419
        %6092 = vmatpush1.bf16.msra.mxu0 %v5418
        %6093 = vmatprep.subr.bf16.mxu0 %v5427
        %6094 = vmatpush1.bf16.msra.mxu0 %v5426
        %6095 = vmatprep.subr.bf16.mxu0 %v5435
        %6096 = vmatpush1.bf16.msra.mxu0 %v5434
        %6097 = vmatprep.subr.bf16.mxu0 %v5443
        %6098 = vmatpush1.bf16.msra.mxu0 %v5442
        %6099 = vmatprep.subr.bf16.mxu0 %v5451
        %6100 = vmatpush1.bf16.msra.mxu0 %v5450
        %6101 = vmatprep.subr.bf16.mxu0 %v5459
        %6102 = vmatpush1.bf16.msra.mxu0 %v5458
        %6103 = vmatprep.subr.bf16.mxu0 %v5467
        %6104 = vmatpush1.bf16.msra.mxu0 %v5466
        %6105 = vmatprep.subr.bf16.mxu0 %v5475
        %6106 = vmatpush1.bf16.msra.mxu0 %v5474
        %6107 = vmatprep.mubr.bf16.mxu0 %v4171
        %6108 = vmatmul.mubr.bf16.gmra.mrb[0].mxu0 %v4170
        %v6109 = vpop.f32.mrb[0].mxu0
        %v6110 = vadd.f32 %v5997, %v6109
        %v6111 = vpop.f32.mrb[0].mxu0
        %v6112 = vadd.f32 %v5999, %v6111
        %v6113 = vpop.f32.mrb[0].mxu0
        %v6114 = vadd.f32 %v6001, %v6113
        %v6115 = vpop.f32.mrb[0].mxu0
        %v6116 = vadd.f32 %v6003, %v6115
        %6117 = vmatprep.mubr.bf16.mxu0 %v4175
        %6118 = vmatmul.mubr.bf16.gmra.mrb[0].mxu0 %v4174
        %v6119 = vpop.f32.mrb[0].mxu0
        %v6120 = vadd.f32 %v6007, %v6119
        %v6121 = vpop.f32.mrb[0].mxu0
        %v6122 = vadd.f32 %v6009, %v6121
        %v6123 = vpop.f32.mrb[0].mxu0
        %v6124 = vadd.f32 %v6011, %v6123
        %v6125 = vpop.f32.mrb[0].mxu0
        %v6126 = vadd.f32 %v6013, %v6125
        %6127 = vmatprep.mubr.bf16.mxu0 %v4179
        %6128 = vmatmul.mubr.bf16.gmra.mrb[0].mxu0 %v4178
        %v6129 = vpop.f32.mrb[0].mxu0
        %v6130 = vadd.f32 %v6017, %v6129
        %v6131 = vpop.f32.mrb[0].mxu0
        %v6132 = vadd.f32 %v6019, %v6131
        %v6133 = vpop.f32.mrb[0].mxu0
        %v6134 = vadd.f32 %v6021, %v6133
        %v6135 = vpop.f32.mrb[0].mxu0
        %v6136 = vadd.f32 %v6023, %v6135
        %6137 = vmatprep.mubr.bf16.mxu0 %v4183
        %6138 = vmatmul.mubr.bf16.gmra.mrb[0].mxu0 %v4182
        %v6139 = vpop.f32.mrb[0].mxu0
        %v6140 = vadd.f32 %v6027, %v6139
        %v6141 = vpop.f32.mrb[0].mxu0
        %v6142 = vadd.f32 %v6029, %v6141
        %v6143 = vpop.f32.mrb[0].mxu0
        %v6144 = vadd.f32 %v6031, %v6143
        %v6145 = vpop.f32.mrb[0].mxu0
        %v6146 = vadd.f32 %v6033, %v6145
        %6147 = vmatprep.mubr.bf16.mxu0 %v4187
        %6148 = vmatmul.mubr.bf16.gmra.mrb[0].mxu0 %v4186
        %v6149 = vpop.f32.mrb[0].mxu0
        %v6150 = vadd.f32 %v6037, %v6149
        %v6151 = vpop.f32.mrb[0].mxu0
        %v6152 = vadd.f32 %v6039, %v6151
        %v6153 = vpop.f32.mrb[0].mxu0
        %v6154 = vadd.f32 %v6041, %v6153
        %v6155 = vpop.f32.mrb[0].mxu0
        %v6156 = vadd.f32 %v6043, %v6155
        %6157 = vmatprep.mubr.bf16.mxu0 %v4191
        %6158 = vmatmul.mubr.bf16.gmra.mrb[0].mxu0 %v4190
        %v6159 = vpop.f32.mrb[0].mxu0
        %v6160 = vadd.f32 %v6047, %v6159
        %v6161 = vpop.f32.mrb[0].mxu0
        %v6162 = vadd.f32 %v6049, %v6161
        %v6163 = vpop.f32.mrb[0].mxu0
        %v6164 = vadd.f32 %v6051, %v6163
        %v6165 = vpop.f32.mrb[0].mxu0
        %v6166 = vadd.f32 %v6053, %v6165
        %6167 = vmatprep.mubr.bf16.mxu0 %v4195
        %6168 = vmatmul.mubr.bf16.gmra.mrb[0].mxu0 %v4194
        %v6169 = vpop.f32.mrb[0].mxu0
        %v6170 = vadd.f32 %v6057, %v6169
        %v6171 = vpop.f32.mrb[0].mxu0
        %v6172 = vadd.f32 %v6059, %v6171
        %v6173 = vpop.f32.mrb[0].mxu0
        %v6174 = vadd.f32 %v6061, %v6173
        %v6175 = vpop.f32.mrb[0].mxu0
        %v6176 = vadd.f32 %v6063, %v6175
        %6177 = vmatprep.mubr.bf16.mxu0 %v4199
        %6178 = vmatmul.mubr.bf16.gmra.mrb[0].mxu0 %v4198
        %v6179 = vpop.f32.mrb[0].mxu0
        %v6180 = vadd.f32 %v6067, %v6179
        %v6181 = vpop.f32.mrb[0].mxu0
        %v6182 = vadd.f32 %v6069, %v6181
        %v6183 = vpop.f32.mrb[0].mxu0
        %v6184 = vadd.f32 %v6071, %v6183
        %v6185 = vpop.f32.mrb[0].mxu0
        %v6186 = vadd.f32 %v6073, %v6185
        %6187 = vdwg.mxu0
        %6188 = vmatprep.subr.bf16.mxu0 %v5229
        %6189 = vmatpush1.bf16.msra.mxu0 %v5228
        %6190 = vmatprep.subr.bf16.mxu0 %v5237
        %6191 = vmatpush1.bf16.msra.mxu0 %v5236
        %6192 = vmatprep.subr.bf16.mxu0 %v5245
        %6193 = vmatpush1.bf16.msra.mxu0 %v5244
        %6194 = vmatprep.subr.bf16.mxu0 %v5253
        %6195 = vmatpush1.bf16.msra.mxu0 %v5252
        %6196 = vmatprep.subr.bf16.mxu0 %v5261
        %6197 = vmatpush1.bf16.msra.mxu0 %v5260
        %6198 = vmatprep.subr.bf16.mxu0 %v5269
        %6199 = vmatpush1.bf16.msra.mxu0 %v5268
        %6200 = vmatprep.subr.bf16.mxu0 %v5277
        %6201 = vmatpush1.bf16.msra.mxu0 %v5276
        %6202 = vmatprep.subr.bf16.mxu0 %v5285
        %6203 = vmatpush1.bf16.msra.mxu0 %v5284
        %6204 = vmatprep.subr.bf16.mxu0 %v5293
        %6205 = vmatpush1.bf16.msra.mxu0 %v5292
        %6206 = vmatprep.subr.bf16.mxu0 %v5301
        %6207 = vmatpush1.bf16.msra.mxu0 %v5300
        %6208 = vmatprep.subr.bf16.mxu0 %v5309
        %6209 = vmatpush1.bf16.msra.mxu0 %v5308
        %6210 = vmatprep.subr.bf16.mxu0 %v5317
        %6211 = vmatpush1.bf16.msra.mxu0 %v5316
        %6212 = vmatprep.subr.bf16.mxu0 %v5325
        %6213 = vmatpush1.bf16.msra.mxu0 %v5324
        %6214 = vmatprep.subr.bf16.mxu0 %v5333
        %6215 = vmatpush1.bf16.msra.mxu0 %v5332
        %6216 = vmatprep.subr.bf16.mxu0 %v5341
        %6217 = vmatpush1.bf16.msra.mxu0 %v5340
        %6218 = vmatprep.subr.bf16.mxu0 %v5349
        %6219 = vmatpush1.bf16.msra.mxu0 %v5348
        %6220 = vmatprep.mubr.bf16.mxu0 %v4169
        %6221 = vmatmul.mubr.bf16.gmra.mrb[0].mxu0 %v4168
        %v6222 = vpop.f32.mrb[0].mxu0
        %v6223 = vadd.f32 0.0, %v6222
        %v6224 = vpop.f32.mrb[0].mxu0
        %v6225 = vadd.f32 0.0, %v6224
        %v6226 = vpop.f32.mrb[0].mxu0
        %v6227 = vadd.f32 0.0, %v6226
        %v6228 = vpop.f32.mrb[0].mxu0
        %v6229 = vadd.f32 0.0, %v6228
        %6230 = vmatprep.mubr.bf16.mxu0 %v4173
        %6231 = vmatmul.mubr.bf16.gmra.mrb[0].mxu0 %v4172
        %v6232 = vpop.f32.mrb[0].mxu0
        %v6233 = vadd.f32 0.0, %v6232
        %v6234 = vpop.f32.mrb[0].mxu0
        %v6235 = vadd.f32 0.0, %v6234
        %v6236 = vpop.f32.mrb[0].mxu0
        %v6237 = vadd.f32 0.0, %v6236
        %v6238 = vpop.f32.mrb[0].mxu0
        %v6239 = vadd.f32 0.0, %v6238
        %6240 = vmatprep.mubr.bf16.mxu0 %v4177
        %6241 = vmatmul.mubr.bf16.gmra.mrb[0].mxu0 %v4176
        %v6242 = vpop.f32.mrb[0].mxu0
        %v6243 = vadd.f32 0.0, %v6242
        %v6244 = vpop.f32.mrb[0].mxu0
        %v6245 = vadd.f32 0.0, %v6244
        %v6246 = vpop.f32.mrb[0].mxu0
        %v6247 = vadd.f32 0.0, %v6246
        %v6248 = vpop.f32.mrb[0].mxu0
        %v6249 = vadd.f32 0.0, %v6248
        %6250 = vmatprep.mubr.bf16.mxu0 %v4181
        %6251 = vmatmul.mubr.bf16.gmra.mrb[0].mxu0 %v4180
        %v6252 = vpop.f32.mrb[0].mxu0
        %v6253 = vadd.f32 0.0, %v6252
        %v6254 = vpop.f32.mrb[0].mxu0
        %v6255 = vadd.f32 0.0, %v6254
        %v6256 = vpop.f32.mrb[0].mxu0
        %v6257 = vadd.f32 0.0, %v6256
        %v6258 = vpop.f32.mrb[0].mxu0
        %v6259 = vadd.f32 0.0, %v6258
        %6260 = vmatprep.mubr.bf16.mxu0 %v4185
        %6261 = vmatmul.mubr.bf16.gmra.mrb[0].mxu0 %v4184
        %v6262 = vpop.f32.mrb[0].mxu0
        %v6263 = vadd.f32 0.0, %v6262
        %v6264 = vpop.f32.mrb[0].mxu0
        %v6265 = vadd.f32 0.0, %v6264
        %v6266 = vpop.f32.mrb[0].mxu0
        %v6267 = vadd.f32 0.0, %v6266
        %v6268 = vpop.f32.mrb[0].mxu0
        %v6269 = vadd.f32 0.0, %v6268
        %6270 = vmatprep.mubr.bf16.mxu0 %v4189
        %6271 = vmatmul.mubr.bf16.gmra.mrb[0].mxu0 %v4188
        %v6272 = vpop.f32.mrb[0].mxu0
        %v6273 = vadd.f32 0.0, %v6272
        %v6274 = vpop.f32.mrb[0].mxu0
        %v6275 = vadd.f32 0.0, %v6274
        %v6276 = vpop.f32.mrb[0].mxu0
        %v6277 = vadd.f32 0.0, %v6276
        %v6278 = vpop.f32.mrb[0].mxu0
        %v6279 = vadd.f32 0.0, %v6278
        %6280 = vmatprep.mubr.bf16.mxu0 %v4193
        %6281 = vmatmul.mubr.bf16.gmra.mrb[0].mxu0 %v4192
        %v6282 = vpop.f32.mrb[0].mxu0
        %v6283 = vadd.f32 0.0, %v6282
        %v6284 = vpop.f32.mrb[0].mxu0
        %v6285 = vadd.f32 0.0, %v6284
        %v6286 = vpop.f32.mrb[0].mxu0
        %v6287 = vadd.f32 0.0, %v6286
        %v6288 = vpop.f32.mrb[0].mxu0
        %v6289 = vadd.f32 0.0, %v6288
        %6290 = vmatprep.mubr.bf16.mxu0 %v4197
        %6291 = vmatmul.mubr.bf16.gmra.mrb[0].mxu0 %v4196
        %v6292 = vpop.f32.mrb[0].mxu0
        %v6293 = vadd.f32 0.0, %v6292
        %v6294 = vpop.f32.mrb[0].mxu0
        %v6295 = vadd.f32 0.0, %v6294
        %v6296 = vpop.f32.mrb[0].mxu0
        %v6297 = vadd.f32 0.0, %v6296
        %v6298 = vpop.f32.mrb[0].mxu0
        %v6299 = vadd.f32 0.0, %v6298
        %6300 = vdwg.mxu0
        %6301 = vmatprep.subr.bf16.mxu0 %v5357
        %6302 = vmatpush1.bf16.msra.mxu0 %v5356
        %6303 = vmatprep.subr.bf16.mxu0 %v5365
        %6304 = vmatpush1.bf16.msra.mxu0 %v5364
        %6305 = vmatprep.subr.bf16.mxu0 %v5373
        %6306 = vmatpush1.bf16.msra.mxu0 %v5372
        %6307 = vmatprep.subr.bf16.mxu0 %v5381
        %6308 = vmatpush1.bf16.msra.mxu0 %v5380
        %6309 = vmatprep.subr.bf16.mxu0 %v5389
        %6310 = vmatpush1.bf16.msra.mxu0 %v5388
        %6311 = vmatprep.subr.bf16.mxu0 %v5397
        %6312 = vmatpush1.bf16.msra.mxu0 %v5396
        %6313 = vmatprep.subr.bf16.mxu0 %v5405
        %6314 = vmatpush1.bf16.msra.mxu0 %v5404
        %6315 = vmatprep.subr.bf16.mxu0 %v5413
        %6316 = vmatpush1.bf16.msra.mxu0 %v5412
        %6317 = vmatprep.subr.bf16.mxu0 %v5421
        %6318 = vmatpush1.bf16.msra.mxu0 %v5420
        %6319 = vmatprep.subr.bf16.mxu0 %v5429
        %6320 = vmatpush1.bf16.msra.mxu0 %v5428
        %6321 = vmatprep.subr.bf16.mxu0 %v5437
        %6322 = vmatpush1.bf16.msra.mxu0 %v5436
        %6323 = vmatprep.subr.bf16.mxu0 %v5445
        %6324 = vmatpush1.bf16.msra.mxu0 %v5444
        %6325 = vmatprep.subr.bf16.mxu0 %v5453
        %6326 = vmatpush1.bf16.msra.mxu0 %v5452
        %6327 = vmatprep.subr.bf16.mxu0 %v5461
        %6328 = vmatpush1.bf16.msra.mxu0 %v5460
        %6329 = vmatprep.subr.bf16.mxu0 %v5469
        %6330 = vmatpush1.bf16.msra.mxu0 %v5468
        %6331 = vmatprep.subr.bf16.mxu0 %v5477
        %6332 = vmatpush1.bf16.msra.mxu0 %v5476
        %6333 = vmatprep.mubr.bf16.mxu0 %v4171
        %6334 = vmatmul.mubr.bf16.gmra.mrb[0].mxu0 %v4170
        %v6335 = vpop.f32.mrb[0].mxu0
        %v6336 = vadd.f32 %v6223, %v6335
        %v6337 = vpop.f32.mrb[0].mxu0
        %v6338 = vadd.f32 %v6225, %v6337
        %v6339 = vpop.f32.mrb[0].mxu0
        %v6340 = vadd.f32 %v6227, %v6339
        %v6341 = vpop.f32.mrb[0].mxu0
        %v6342 = vadd.f32 %v6229, %v6341
        %6343 = vmatprep.mubr.bf16.mxu0 %v4175
        %6344 = vmatmul.mubr.bf16.gmra.mrb[0].mxu0 %v4174
        %v6345 = vpop.f32.mrb[0].mxu0
        %v6346 = vadd.f32 %v6233, %v6345
        %v6347 = vpop.f32.mrb[0].mxu0
        %v6348 = vadd.f32 %v6235, %v6347
        %v6349 = vpop.f32.mrb[0].mxu0
        %v6350 = vadd.f32 %v6237, %v6349
        %v6351 = vpop.f32.mrb[0].mxu0
        %v6352 = vadd.f32 %v6239, %v6351
        %6353 = vmatprep.mubr.bf16.mxu0 %v4179
        %6354 = vmatmul.mubr.bf16.gmra.mrb[0].mxu0 %v4178
        %v6355 = vpop.f32.mrb[0].mxu0
        %v6356 = vadd.f32 %v6243, %v6355
        %v6357 = vpop.f32.mrb[0].mxu0
        %v6358 = vadd.f32 %v6245, %v6357
        %v6359 = vpop.f32.mrb[0].mxu0
        %v6360 = vadd.f32 %v6247, %v6359
        %v6361 = vpop.f32.mrb[0].mxu0
        %v6362 = vadd.f32 %v6249, %v6361
        %6363 = vmatprep.mubr.bf16.mxu0 %v4183
        %6364 = vmatmul.mubr.bf16.gmra.mrb[0].mxu0 %v4182
        %v6365 = vpop.f32.mrb[0].mxu0
        %v6366 = vadd.f32 %v6253, %v6365
        %v6367 = vpop.f32.mrb[0].mxu0
        %v6368 = vadd.f32 %v6255, %v6367
        %v6369 = vpop.f32.mrb[0].mxu0
        %v6370 = vadd.f32 %v6257, %v6369
        %v6371 = vpop.f32.mrb[0].mxu0
        %v6372 = vadd.f32 %v6259, %v6371
        %6373 = vmatprep.mubr.bf16.mxu0 %v4187
        %6374 = vmatmul.mubr.bf16.gmra.mrb[0].mxu0 %v4186
        %v6375 = vpop.f32.mrb[0].mxu0
        %v6376 = vadd.f32 %v6263, %v6375
        %v6377 = vpop.f32.mrb[0].mxu0
        %v6378 = vadd.f32 %v6265, %v6377
        %v6379 = vpop.f32.mrb[0].mxu0
        %v6380 = vadd.f32 %v6267, %v6379
        %v6381 = vpop.f32.mrb[0].mxu0
        %v6382 = vadd.f32 %v6269, %v6381
        %6383 = vmatprep.mubr.bf16.mxu0 %v4191
        %6384 = vmatmul.mubr.bf16.gmra.mrb[0].mxu0 %v4190
        %v6385 = vpop.f32.mrb[0].mxu0
        %v6386 = vadd.f32 %v6273, %v6385
        %v6387 = vpop.f32.mrb[0].mxu0
        %v6388 = vadd.f32 %v6275, %v6387
        %v6389 = vpop.f32.mrb[0].mxu0
        %v6390 = vadd.f32 %v6277, %v6389
        %v6391 = vpop.f32.mrb[0].mxu0
        %v6392 = vadd.f32 %v6279, %v6391
        %6393 = vmatprep.mubr.bf16.mxu0 %v4195
        %6394 = vmatmul.mubr.bf16.gmra.mrb[0].mxu0 %v4194
        %v6395 = vpop.f32.mrb[0].mxu0
        %v6396 = vadd.f32 %v6283, %v6395
        %v6397 = vpop.f32.mrb[0].mxu0
        %v6398 = vadd.f32 %v6285, %v6397
        %v6399 = vpop.f32.mrb[0].mxu0
        %v6400 = vadd.f32 %v6287, %v6399
        %v6401 = vpop.f32.mrb[0].mxu0
        %v6402 = vadd.f32 %v6289, %v6401
        %6403 = vmatprep.mubr.bf16.mxu0 %v4199
        %6404 = vmatmul.mubr.bf16.gmra.mrb[0].mxu0 %v4198
        %v6405 = vpop.f32.mrb[0].mxu0
        %v6406 = vadd.f32 %v6293, %v6405
        %v6407 = vpop.f32.mrb[0].mxu0
        %v6408 = vadd.f32 %v6295, %v6407
        %v6409 = vpop.f32.mrb[0].mxu0
        %v6410 = vadd.f32 %v6297, %v6409
        %v6411 = vpop.f32.mrb[0].mxu0
        %v6412 = vadd.f32 %v6299, %v6411
        %6413 = vdwg.mxu0
        %6414 = vmatprep.subr.bf16.mxu0 %v5231
        %6415 = vmatpush1.bf16.msra.mxu0 %v5230
        %6416 = vmatprep.subr.bf16.mxu0 %v5239
        %6417 = vmatpush1.bf16.msra.mxu0 %v5238
        %6418 = vmatprep.subr.bf16.mxu0 %v5247
        %6419 = vmatpush1.bf16.msra.mxu0 %v5246
        %6420 = vmatprep.subr.bf16.mxu0 %v5255
        %6421 = vmatpush1.bf16.msra.mxu0 %v5254
        %6422 = vmatprep.subr.bf16.mxu0 %v5263
        %6423 = vmatpush1.bf16.msra.mxu0 %v5262
        %6424 = vmatprep.subr.bf16.mxu0 %v5271
        %6425 = vmatpush1.bf16.msra.mxu0 %v5270
        %6426 = vmatprep.subr.bf16.mxu0 %v5279
        %6427 = vmatpush1.bf16.msra.mxu0 %v5278
        %6428 = vmatprep.subr.bf16.mxu0 %v5287
        %6429 = vmatpush1.bf16.msra.mxu0 %v5286
        %6430 = vmatprep.subr.bf16.mxu0 %v5295
        %6431 = vmatpush1.bf16.msra.mxu0 %v5294
        %6432 = vmatprep.subr.bf16.mxu0 %v5303
        %6433 = vmatpush1.bf16.msra.mxu0 %v5302
        %6434 = vmatprep.subr.bf16.mxu0 %v5311
        %6435 = vmatpush1.bf16.msra.mxu0 %v5310
        %6436 = vmatprep.subr.bf16.mxu0 %v5319
        %6437 = vmatpush1.bf16.msra.mxu0 %v5318
        %6438 = vmatprep.subr.bf16.mxu0 %v5327
        %6439 = vmatpush1.bf16.msra.mxu0 %v5326
        %6440 = vmatprep.subr.bf16.mxu0 %v5335
        %6441 = vmatpush1.bf16.msra.mxu0 %v5334
        %6442 = vmatprep.subr.bf16.mxu0 %v5343
        %6443 = vmatpush1.bf16.msra.mxu0 %v5342
        %6444 = vmatprep.subr.bf16.mxu0 %v5351
        %6445 = vmatpush1.bf16.msra.mxu0 %v5350
        %6446 = vmatprep.mubr.bf16.mxu0 %v4169
        %6447 = vmatmul.mubr.bf16.gmra.mrb[0].mxu0 %v4168
        %v6448 = vpop.f32.mrb[0].mxu0
        %v6449 = vadd.f32 0.0, %v6448
        %v6450 = vpop.f32.mrb[0].mxu0
        %v6451 = vadd.f32 0.0, %v6450
        %v6452 = vpop.f32.mrb[0].mxu0
        %v6453 = vadd.f32 0.0, %v6452
        %v6454 = vpop.f32.mrb[0].mxu0
        %v6455 = vadd.f32 0.0, %v6454
        %6456 = vmatprep.mubr.bf16.mxu0 %v4173
        %6457 = vmatmul.mubr.bf16.gmra.mrb[0].mxu0 %v4172
        %v6458 = vpop.f32.mrb[0].mxu0
        %v6459 = vadd.f32 0.0, %v6458
        %v6460 = vpop.f32.mrb[0].mxu0
        %v6461 = vadd.f32 0.0, %v6460
        %v6462 = vpop.f32.mrb[0].mxu0
        %v6463 = vadd.f32 0.0, %v6462
        %v6464 = vpop.f32.mrb[0].mxu0
        %v6465 = vadd.f32 0.0, %v6464
        %6466 = vmatprep.mubr.bf16.mxu0 %v4177
        %6467 = vmatmul.mubr.bf16.gmra.mrb[0].mxu0 %v4176
        %v6468 = vpop.f32.mrb[0].mxu0
        %v6469 = vadd.f32 0.0, %v6468
        %v6470 = vpop.f32.mrb[0].mxu0
        %v6471 = vadd.f32 0.0, %v6470
        %v6472 = vpop.f32.mrb[0].mxu0
        %v6473 = vadd.f32 0.0, %v6472
        %v6474 = vpop.f32.mrb[0].mxu0
        %v6475 = vadd.f32 0.0, %v6474
        %6476 = vmatprep.mubr.bf16.mxu0 %v4181
        %6477 = vmatmul.mubr.bf16.gmra.mrb[0].mxu0 %v4180
        %v6478 = vpop.f32.mrb[0].mxu0
        %v6479 = vadd.f32 0.0, %v6478
        %v6480 = vpop.f32.mrb[0].mxu0
        %v6481 = vadd.f32 0.0, %v6480
        %v6482 = vpop.f32.mrb[0].mxu0
        %v6483 = vadd.f32 0.0, %v6482
        %v6484 = vpop.f32.mrb[0].mxu0
        %v6485 = vadd.f32 0.0, %v6484
        %6486 = vmatprep.mubr.bf16.mxu0 %v4185
        %6487 = vmatmul.mubr.bf16.gmra.mrb[0].mxu0 %v4184
        %v6488 = vpop.f32.mrb[0].mxu0
        %v6489 = vadd.f32 0.0, %v6488
        %v6490 = vpop.f32.mrb[0].mxu0
        %v6491 = vadd.f32 0.0, %v6490
        %v6492 = vpop.f32.mrb[0].mxu0
        %v6493 = vadd.f32 0.0, %v6492
        %v6494 = vpop.f32.mrb[0].mxu0
        %v6495 = vadd.f32 0.0, %v6494
        %6496 = vmatprep.mubr.bf16.mxu0 %v4189
        %6497 = vmatmul.mubr.bf16.gmra.mrb[0].mxu0 %v4188
        %v6498 = vpop.f32.mrb[0].mxu0
        %v6499 = vadd.f32 0.0, %v6498
        %v6500 = vpop.f32.mrb[0].mxu0
        %v6501 = vadd.f32 0.0, %v6500
        %v6502 = vpop.f32.mrb[0].mxu0
        %v6503 = vadd.f32 0.0, %v6502
        %v6504 = vpop.f32.mrb[0].mxu0
        %v6505 = vadd.f32 0.0, %v6504
        %6506 = vmatprep.mubr.bf16.mxu0 %v4193
        %6507 = vmatmul.mubr.bf16.gmra.mrb[0].mxu0 %v4192
        %v6508 = vpop.f32.mrb[0].mxu0
        %v6509 = vadd.f32 0.0, %v6508
        %v6510 = vpop.f32.mrb[0].mxu0
        %v6511 = vadd.f32 0.0, %v6510
        %v6512 = vpop.f32.mrb[0].mxu0
        %v6513 = vadd.f32 0.0, %v6512
        %v6514 = vpop.f32.mrb[0].mxu0
        %v6515 = vadd.f32 0.0, %v6514
        %6516 = vmatprep.mubr.bf16.mxu0 %v4197
        %6517 = vmatmul.mubr.bf16.gmra.mrb[0].mxu0 %v4196
        %v6518 = vpop.f32.mrb[0].mxu0
        %v6519 = vadd.f32 0.0, %v6518
        %v6520 = vpop.f32.mrb[0].mxu0
        %v6521 = vadd.f32 0.0, %v6520
        %v6522 = vpop.f32.mrb[0].mxu0
        %v6523 = vadd.f32 0.0, %v6522
        %v6524 = vpop.f32.mrb[0].mxu0
        %v6525 = vadd.f32 0.0, %v6524
        %6526 = vdwg.mxu0
        %6527 = vmatprep.subr.bf16.mxu0 %v5359
        %6528 = vmatpush1.bf16.msra.mxu0 %v5358
        %6529 = vmatprep.subr.bf16.mxu0 %v5367
        %6530 = vmatpush1.bf16.msra.mxu0 %v5366
        %6531 = vmatprep.subr.bf16.mxu0 %v5375
        %6532 = vmatpush1.bf16.msra.mxu0 %v5374
        %6533 = vmatprep.subr.bf16.mxu0 %v5383
        %6534 = vmatpush1.bf16.msra.mxu0 %v5382
        %6535 = vmatprep.subr.bf16.mxu0 %v5391
        %6536 = vmatpush1.bf16.msra.mxu0 %v5390
        %6537 = vmatprep.subr.bf16.mxu0 %v5399
        %6538 = vmatpush1.bf16.msra.mxu0 %v5398
        %6539 = vmatprep.subr.bf16.mxu0 %v5407
        %6540 = vmatpush1.bf16.msra.mxu0 %v5406
        %6541 = vmatprep.subr.bf16.mxu0 %v5415
        %6542 = vmatpush1.bf16.msra.mxu0 %v5414
        %6543 = vmatprep.subr.bf16.mxu0 %v5423
        %6544 = vmatpush1.bf16.msra.mxu0 %v5422
        %6545 = vmatprep.subr.bf16.mxu0 %v5431
        %6546 = vmatpush1.bf16.msra.mxu0 %v5430
        %6547 = vmatprep.subr.bf16.mxu0 %v5439
        %6548 = vmatpush1.bf16.msra.mxu0 %v5438
        %6549 = vmatprep.subr.bf16.mxu0 %v5447
        %6550 = vmatpush1.bf16.msra.mxu0 %v5446
        %6551 = vmatprep.subr.bf16.mxu0 %v5455
        %6552 = vmatpush1.bf16.msra.mxu0 %v5454
        %6553 = vmatprep.subr.bf16.mxu0 %v5463
        %6554 = vmatpush1.bf16.msra.mxu0 %v5462
        %6555 = vmatprep.subr.bf16.mxu0 %v5471
        %6556 = vmatpush1.bf16.msra.mxu0 %v5470
        %6557 = vmatprep.subr.bf16.mxu0 %v5479
        %6558 = vmatpush1.bf16.msra.mxu0 %v5478
        %6559 = vmatprep.mubr.bf16.mxu0 %v4171
        %6560 = vmatmul.mubr.bf16.gmra.mrb[0].mxu0 %v4170
        %v6561 = vpop.f32.mrb[0].mxu0
        %v6562 = vadd.f32 %v6449, %v6561
        %v6563 = vpop.f32.mrb[0].mxu0
        %v6564 = vadd.f32 %v6451, %v6563
        %v6565 = vpop.f32.mrb[0].mxu0
        %v6566 = vadd.f32 %v6453, %v6565
        %v6567 = vpop.f32.mrb[0].mxu0
        %v6568 = vadd.f32 %v6455, %v6567
        %6569 = vmatprep.mubr.bf16.mxu0 %v4175
        %6570 = vmatmul.mubr.bf16.gmra.mrb[0].mxu0 %v4174
        %v6571 = vpop.f32.mrb[0].mxu0
        %v6572 = vadd.f32 %v6459, %v6571
        %v6573 = vpop.f32.mrb[0].mxu0
        %v6574 = vadd.f32 %v6461, %v6573
        %v6575 = vpop.f32.mrb[0].mxu0
        %v6576 = vadd.f32 %v6463, %v6575
        %v6577 = vpop.f32.mrb[0].mxu0
        %v6578 = vadd.f32 %v6465, %v6577
        %6579 = vmatprep.mubr.bf16.mxu0 %v4179
        %6580 = vmatmul.mubr.bf16.gmra.mrb[0].mxu0 %v4178
        %v6581 = vpop.f32.mrb[0].mxu0
        %v6582 = vadd.f32 %v6469, %v6581
        %v6583 = vpop.f32.mrb[0].mxu0
        %v6584 = vadd.f32 %v6471, %v6583
        %v6585 = vpop.f32.mrb[0].mxu0
        %v6586 = vadd.f32 %v6473, %v6585
        %v6587 = vpop.f32.mrb[0].mxu0
        %v6588 = vadd.f32 %v6475, %v6587
        %6589 = vmatprep.mubr.bf16.mxu0 %v4183
        %6590 = vmatmul.mubr.bf16.gmra.mrb[0].mxu0 %v4182
        %v6591 = vpop.f32.mrb[0].mxu0
        %v6592 = vadd.f32 %v6479, %v6591
        %v6593 = vpop.f32.mrb[0].mxu0
        %v6594 = vadd.f32 %v6481, %v6593
        %v6595 = vpop.f32.mrb[0].mxu0
        %v6596 = vadd.f32 %v6483, %v6595
        %v6597 = vpop.f32.mrb[0].mxu0
        %v6598 = vadd.f32 %v6485, %v6597
        %6599 = vmatprep.mubr.bf16.mxu0 %v4187
        %6600 = vmatmul.mubr.bf16.gmra.mrb[0].mxu0 %v4186
        %v6601 = vpop.f32.mrb[0].mxu0
        %v6602 = vadd.f32 %v6489, %v6601
        %v6603 = vpop.f32.mrb[0].mxu0
        %v6604 = vadd.f32 %v6491, %v6603
        %v6605 = vpop.f32.mrb[0].mxu0
        %v6606 = vadd.f32 %v6493, %v6605
        %v6607 = vpop.f32.mrb[0].mxu0
        %v6608 = vadd.f32 %v6495, %v6607
        %6609 = vmatprep.mubr.bf16.mxu0 %v4191
        %6610 = vmatmul.mubr.bf16.gmra.mrb[0].mxu0 %v4190
        %v6611 = vpop.f32.mrb[0].mxu0
        %v6612 = vadd.f32 %v6499, %v6611
        %v6613 = vpop.f32.mrb[0].mxu0
        %v6614 = vadd.f32 %v6501, %v6613
        %v6615 = vpop.f32.mrb[0].mxu0
        %v6616 = vadd.f32 %v6503, %v6615
        %v6617 = vpop.f32.mrb[0].mxu0
        %v6618 = vadd.f32 %v6505, %v6617
        %6619 = vmatprep.mubr.bf16.mxu0 %v4195
        %6620 = vmatmul.mubr.bf16.gmra.mrb[0].mxu0 %v4194
        %v6621 = vpop.f32.mrb[0].mxu0
        %v6622 = vadd.f32 %v6509, %v6621
        %v6623 = vpop.f32.mrb[0].mxu0
        %v6624 = vadd.f32 %v6511, %v6623
        %v6625 = vpop.f32.mrb[0].mxu0
        %v6626 = vadd.f32 %v6513, %v6625
        %v6627 = vpop.f32.mrb[0].mxu0
        %v6628 = vadd.f32 %v6515, %v6627
        %6629 = vmatprep.mubr.bf16.mxu0 %v4199
        %6630 = vmatmul.mubr.bf16.gmra.mrb[0].mxu0 %v4198
        %v6631 = vpop.f32.mrb[0].mxu0
        %v6632 = vadd.f32 %v6519, %v6631
        %v6633 = vpop.f32.mrb[0].mxu0
        %v6634 = vadd.f32 %v6521, %v6633
        %v6635 = vpop.f32.mrb[0].mxu0
        %v6636 = vadd.f32 %v6523, %v6635
        %v6637 = vpop.f32.mrb[0].mxu0
        %v6638 = vadd.f32 %v6525, %v6637
        %6639 = vdwg.mxu0
        %v6640 = vrot.slane %v5884, 4
        %v6641 = vadd.f32 %v5884, %v6640
        %v6642 = vrot.slane %v6641, 2
        %v6643 = vadd.f32 %v6641, %v6642
        %v6644 = vrot.slane %v6643, 1
        %v6645 = vadd.f32 %v6643, %v6644
        %v6646 = vrot.slane %v5886, 4
        %v6647 = vadd.f32 %v5886, %v6646
        %v6648 = vrot.slane %v6647, 2
        %v6649 = vadd.f32 %v6647, %v6648
        %v6650 = vrot.slane %v6649, 1
        %v6651 = vadd.f32 %v6649, %v6650
        %v6652 = vrot.slane %v6110, 4
        %v6653 = vadd.f32 %v6110, %v6652
        %v6654 = vrot.slane %v6653, 2
        %v6655 = vadd.f32 %v6653, %v6654
        %v6656 = vrot.slane %v6655, 1
        %v6657 = vadd.f32 %v6655, %v6656
        %v6658 = vrot.slane %v6112, 4
        %v6659 = vadd.f32 %v6112, %v6658
        %v6660 = vrot.slane %v6659, 2
        %v6661 = vadd.f32 %v6659, %v6660
        %v6662 = vrot.slane %v6661, 1
        %v6663 = vadd.f32 %v6661, %v6662
        %v6664 = vrot.slane %v6336, 4
        %v6665 = vadd.f32 %v6336, %v6664
        %v6666 = vrot.slane %v6665, 2
        %v6667 = vadd.f32 %v6665, %v6666
        %v6668 = vrot.slane %v6667, 1
        %v6669 = vadd.f32 %v6667, %v6668
        %v6670 = vrot.slane %v6338, 4
        %v6671 = vadd.f32 %v6338, %v6670
        %v6672 = vrot.slane %v6671, 2
        %v6673 = vadd.f32 %v6671, %v6672
        %v6674 = vrot.slane %v6673, 1
        %v6675 = vadd.f32 %v6673, %v6674
        %v6676 = vrot.slane %v6562, 4
        %v6677 = vadd.f32 %v6562, %v6676
        %v6678 = vrot.slane %v6677, 2
        %v6679 = vadd.f32 %v6677, %v6678
        %v6680 = vrot.slane %v6679, 1
        %v6681 = vadd.f32 %v6679, %v6680
        %v6682 = vrot.slane %v6564, 4
        %v6683 = vadd.f32 %v6564, %v6682
        %v6684 = vrot.slane %v6683, 2
        %v6685 = vadd.f32 %v6683, %v6684
        %v6686 = vrot.slane %v6685, 1
        %v6687 = vadd.f32 %v6685, %v6686
        %v6688 = vrot.slane %v5888, 4
        %v6689 = vadd.f32 %v5888, %v6688
        %v6690 = vrot.slane %v6689, 2
        %v6691 = vadd.f32 %v6689, %v6690
        %v6692 = vrot.slane %v6691, 1
        %v6693 = vadd.f32 %v6691, %v6692
        %v6694 = vrot.slane %v5890, 4
        %v6695 = vadd.f32 %v5890, %v6694
        %v6696 = vrot.slane %v6695, 2
        %v6697 = vadd.f32 %v6695, %v6696
        %v6698 = vrot.slane %v6697, 1
        %v6699 = vadd.f32 %v6697, %v6698
        %v6700 = vrot.slane %v6114, 4
        %v6701 = vadd.f32 %v6114, %v6700
        %v6702 = vrot.slane %v6701, 2
        %v6703 = vadd.f32 %v6701, %v6702
        %v6704 = vrot.slane %v6703, 1
        %v6705 = vadd.f32 %v6703, %v6704
        %v6706 = vrot.slane %v6116, 4
        %v6707 = vadd.f32 %v6116, %v6706
        %v6708 = vrot.slane %v6707, 2
        %v6709 = vadd.f32 %v6707, %v6708
        %v6710 = vrot.slane %v6709, 1
        %v6711 = vadd.f32 %v6709, %v6710
        %v6712 = vrot.slane %v6340, 4
        %v6713 = vadd.f32 %v6340, %v6712
        %v6714 = vrot.slane %v6713, 2
        %v6715 = vadd.f32 %v6713, %v6714
        %v6716 = vrot.slane %v6715, 1
        %v6717 = vadd.f32 %v6715, %v6716
        %v6718 = vrot.slane %v6342, 4
        %v6719 = vadd.f32 %v6342, %v6718
        %v6720 = vrot.slane %v6719, 2
        %v6721 = vadd.f32 %v6719, %v6720
        %v6722 = vrot.slane %v6721, 1
        %v6723 = vadd.f32 %v6721, %v6722
        %v6724 = vrot.slane %v6566, 4
        %v6725 = vadd.f32 %v6566, %v6724
        %v6726 = vrot.slane %v6725, 2
        %v6727 = vadd.f32 %v6725, %v6726
        %v6728 = vrot.slane %v6727, 1
        %v6729 = vadd.f32 %v6727, %v6728
        %v6730 = vrot.slane %v6568, 4
        %v6731 = vadd.f32 %v6568, %v6730
        %v6732 = vrot.slane %v6731, 2
        %v6733 = vadd.f32 %v6731, %v6732
        %v6734 = vrot.slane %v6733, 1
        %v6735 = vadd.f32 %v6733, %v6734
        %v6736 = vrot.slane %v5894, 4
        %v6737 = vadd.f32 %v5894, %v6736
        %v6738 = vrot.slane %v6737, 2
        %v6739 = vadd.f32 %v6737, %v6738
        %v6740 = vrot.slane %v6739, 1
        %v6741 = vadd.f32 %v6739, %v6740
        %v6742 = vrot.slane %v5896, 4
        %v6743 = vadd.f32 %v5896, %v6742
        %v6744 = vrot.slane %v6743, 2
        %v6745 = vadd.f32 %v6743, %v6744
        %v6746 = vrot.slane %v6745, 1
        %v6747 = vadd.f32 %v6745, %v6746
        %v6748 = vrot.slane %v6120, 4
        %v6749 = vadd.f32 %v6120, %v6748
        %v6750 = vrot.slane %v6749, 2
        %v6751 = vadd.f32 %v6749, %v6750
        %v6752 = vrot.slane %v6751, 1
        %v6753 = vadd.f32 %v6751, %v6752
        %v6754 = vrot.slane %v6122, 4
        %v6755 = vadd.f32 %v6122, %v6754
        %v6756 = vrot.slane %v6755, 2
        %v6757 = vadd.f32 %v6755, %v6756
        %v6758 = vrot.slane %v6757, 1
        %v6759 = vadd.f32 %v6757, %v6758
        %v6760 = vrot.slane %v6346, 4
        %v6761 = vadd.f32 %v6346, %v6760
        %v6762 = vrot.slane %v6761, 2
        %v6763 = vadd.f32 %v6761, %v6762
        %v6764 = vrot.slane %v6763, 1
        %v6765 = vadd.f32 %v6763, %v6764
        %v6766 = vrot.slane %v6348, 4
        %v6767 = vadd.f32 %v6348, %v6766
        %v6768 = vrot.slane %v6767, 2
        %v6769 = vadd.f32 %v6767, %v6768
        %v6770 = vrot.slane %v6769, 1
        %v6771 = vadd.f32 %v6769, %v6770
        %v6772 = vrot.slane %v6572, 4
        %v6773 = vadd.f32 %v6572, %v6772
        %v6774 = vrot.slane %v6773, 2
        %v6775 = vadd.f32 %v6773, %v6774
        %v6776 = vrot.slane %v6775, 1
        %v6777 = vadd.f32 %v6775, %v6776
        %v6778 = vrot.slane %v6574, 4
        %v6779 = vadd.f32 %v6574, %v6778
        %v6780 = vrot.slane %v6779, 2
        %v6781 = vadd.f32 %v6779, %v6780
        %v6782 = vrot.slane %v6781, 1
        %v6783 = vadd.f32 %v6781, %v6782
        %v6784 = vrot.slane %v5898, 4
        %v6785 = vadd.f32 %v5898, %v6784
        %v6786 = vrot.slane %v6785, 2
        %v6787 = vadd.f32 %v6785, %v6786
        %v6788 = vrot.slane %v6787, 1
        %v6789 = vadd.f32 %v6787, %v6788
        %v6790 = vrot.slane %v5900, 4
        %v6791 = vadd.f32 %v5900, %v6790
        %v6792 = vrot.slane %v6791, 2
        %v6793 = vadd.f32 %v6791, %v6792
        %v6794 = vrot.slane %v6793, 1
        %v6795 = vadd.f32 %v6793, %v6794
        %v6796 = vrot.slane %v6124, 4
        %v6797 = vadd.f32 %v6124, %v6796
        %v6798 = vrot.slane %v6797, 2
        %v6799 = vadd.f32 %v6797, %v6798
        %v6800 = vrot.slane %v6799, 1
        %v6801 = vadd.f32 %v6799, %v6800
        %v6802 = vrot.slane %v6126, 4
        %v6803 = vadd.f32 %v6126, %v6802
        %v6804 = vrot.slane %v6803, 2
        %v6805 = vadd.f32 %v6803, %v6804
        %v6806 = vrot.slane %v6805, 1
        %v6807 = vadd.f32 %v6805, %v6806
        %v6808 = vrot.slane %v6350, 4
        %v6809 = vadd.f32 %v6350, %v6808
        %v6810 = vrot.slane %v6809, 2
        %v6811 = vadd.f32 %v6809, %v6810
        %v6812 = vrot.slane %v6811, 1
        %v6813 = vadd.f32 %v6811, %v6812
        %v6814 = vrot.slane %v6352, 4
        %v6815 = vadd.f32 %v6352, %v6814
        %v6816 = vrot.slane %v6815, 2
        %v6817 = vadd.f32 %v6815, %v6816
        %v6818 = vrot.slane %v6817, 1
        %v6819 = vadd.f32 %v6817, %v6818
        %v6820 = vrot.slane %v6576, 4
        %v6821 = vadd.f32 %v6576, %v6820
        %v6822 = vrot.slane %v6821, 2
        %v6823 = vadd.f32 %v6821, %v6822
        %v6824 = vrot.slane %v6823, 1
        %v6825 = vadd.f32 %v6823, %v6824
        %v6826 = vrot.slane %v6578, 4
        %v6827 = vadd.f32 %v6578, %v6826
        %v6828 = vrot.slane %v6827, 2
        %v6829 = vadd.f32 %v6827, %v6828
        %v6830 = vrot.slane %v6829, 1
        %v6831 = vadd.f32 %v6829, %v6830
        %v6832 = vrot.slane %v5904, 4
        %v6833 = vadd.f32 %v5904, %v6832
        %v6834 = vrot.slane %v6833, 2
        %v6835 = vadd.f32 %v6833, %v6834
        %v6836 = vrot.slane %v6835, 1
        %v6837 = vadd.f32 %v6835, %v6836
        %v6838 = vrot.slane %v5906, 4
        %v6839 = vadd.f32 %v5906, %v6838
        %v6840 = vrot.slane %v6839, 2
        %v6841 = vadd.f32 %v6839, %v6840
        %v6842 = vrot.slane %v6841, 1
        %v6843 = vadd.f32 %v6841, %v6842
        %v6844 = vrot.slane %v6130, 4
        %v6845 = vadd.f32 %v6130, %v6844
        %v6846 = vrot.slane %v6845, 2
        %v6847 = vadd.f32 %v6845, %v6846
        %v6848 = vrot.slane %v6847, 1
        %v6849 = vadd.f32 %v6847, %v6848
        %v6850 = vrot.slane %v6132, 4
        %v6851 = vadd.f32 %v6132, %v6850
        %v6852 = vrot.slane %v6851, 2
        %v6853 = vadd.f32 %v6851, %v6852
        %v6854 = vrot.slane %v6853, 1
        %v6855 = vadd.f32 %v6853, %v6854
        %v6856 = vrot.slane %v6356, 4
        %v6857 = vadd.f32 %v6356, %v6856
        %v6858 = vrot.slane %v6857, 2
        %v6859 = vadd.f32 %v6857, %v6858
        %v6860 = vrot.slane %v6859, 1
        %v6861 = vadd.f32 %v6859, %v6860
        %v6862 = vrot.slane %v6358, 4
        %v6863 = vadd.f32 %v6358, %v6862
        %v6864 = vrot.slane %v6863, 2
        %v6865 = vadd.f32 %v6863, %v6864
        %v6866 = vrot.slane %v6865, 1
        %v6867 = vadd.f32 %v6865, %v6866
        %v6868 = vrot.slane %v6582, 4
        %v6869 = vadd.f32 %v6582, %v6868
        %v6870 = vrot.slane %v6869, 2
        %v6871 = vadd.f32 %v6869, %v6870
        %v6872 = vrot.slane %v6871, 1
        %v6873 = vadd.f32 %v6871, %v6872
        %v6874 = vrot.slane %v6584, 4
        %v6875 = vadd.f32 %v6584, %v6874
        %v6876 = vrot.slane %v6875, 2
        %v6877 = vadd.f32 %v6875, %v6876
        %v6878 = vrot.slane %v6877, 1
        %v6879 = vadd.f32 %v6877, %v6878
        %v6880 = vrot.slane %v5908, 4
        %v6881 = vadd.f32 %v5908, %v6880
        %v6882 = vrot.slane %v6881, 2
        %v6883 = vadd.f32 %v6881, %v6882
        %v6884 = vrot.slane %v6883, 1
        %v6885 = vadd.f32 %v6883, %v6884
        %v6886 = vrot.slane %v5910, 4
        %v6887 = vadd.f32 %v5910, %v6886
        %v6888 = vrot.slane %v6887, 2
        %v6889 = vadd.f32 %v6887, %v6888
        %v6890 = vrot.slane %v6889, 1
        %v6891 = vadd.f32 %v6889, %v6890
        %v6892 = vrot.slane %v6134, 4
        %v6893 = vadd.f32 %v6134, %v6892
        %v6894 = vrot.slane %v6893, 2
        %v6895 = vadd.f32 %v6893, %v6894
        %v6896 = vrot.slane %v6895, 1
        %v6897 = vadd.f32 %v6895, %v6896
        %v6898 = vrot.slane %v6136, 4
        %v6899 = vadd.f32 %v6136, %v6898
        %v6900 = vrot.slane %v6899, 2
        %v6901 = vadd.f32 %v6899, %v6900
        %v6902 = vrot.slane %v6901, 1
        %v6903 = vadd.f32 %v6901, %v6902
        %v6904 = vrot.slane %v6360, 4
        %v6905 = vadd.f32 %v6360, %v6904
        %v6906 = vrot.slane %v6905, 2
        %v6907 = vadd.f32 %v6905, %v6906
        %v6908 = vrot.slane %v6907, 1
        %v6909 = vadd.f32 %v6907, %v6908
        %v6910 = vrot.slane %v6362, 4
        %v6911 = vadd.f32 %v6362, %v6910
        %v6912 = vrot.slane %v6911, 2
        %v6913 = vadd.f32 %v6911, %v6912
        %v6914 = vrot.slane %v6913, 1
        %v6915 = vadd.f32 %v6913, %v6914
        %v6916 = vrot.slane %v6586, 4
        %v6917 = vadd.f32 %v6586, %v6916
        %v6918 = vrot.slane %v6917, 2
        %v6919 = vadd.f32 %v6917, %v6918
        %v6920 = vrot.slane %v6919, 1
        %v6921 = vadd.f32 %v6919, %v6920
        %v6922 = vrot.slane %v6588, 4
        %v6923 = vadd.f32 %v6588, %v6922
        %v6924 = vrot.slane %v6923, 2
        %v6925 = vadd.f32 %v6923, %v6924
        %v6926 = vrot.slane %v6925, 1
        %v6927 = vadd.f32 %v6925, %v6926
        %v6928 = vrot.slane %v5914, 4
        %v6929 = vadd.f32 %v5914, %v6928
        %v6930 = vrot.slane %v6929, 2
        %v6931 = vadd.f32 %v6929, %v6930
        %v6932 = vrot.slane %v6931, 1
        %v6933 = vadd.f32 %v6931, %v6932
        %v6934 = vrot.slane %v5916, 4
        %v6935 = vadd.f32 %v5916, %v6934
        %v6936 = vrot.slane %v6935, 2
        %v6937 = vadd.f32 %v6935, %v6936
        %v6938 = vrot.slane %v6937, 1
        %v6939 = vadd.f32 %v6937, %v6938
        %v6940 = vrot.slane %v6140, 4
        %v6941 = vadd.f32 %v6140, %v6940
        %v6942 = vrot.slane %v6941, 2
        %v6943 = vadd.f32 %v6941, %v6942
        %v6944 = vrot.slane %v6943, 1
        %v6945 = vadd.f32 %v6943, %v6944
        %v6946 = vrot.slane %v6142, 4
        %v6947 = vadd.f32 %v6142, %v6946
        %v6948 = vrot.slane %v6947, 2
        %v6949 = vadd.f32 %v6947, %v6948
        %v6950 = vrot.slane %v6949, 1
        %v6951 = vadd.f32 %v6949, %v6950
        %v6952 = vrot.slane %v6366, 4
        %v6953 = vadd.f32 %v6366, %v6952
        %v6954 = vrot.slane %v6953, 2
        %v6955 = vadd.f32 %v6953, %v6954
        %v6956 = vrot.slane %v6955, 1
        %v6957 = vadd.f32 %v6955, %v6956
        %v6958 = vrot.slane %v6368, 4
        %v6959 = vadd.f32 %v6368, %v6958
        %v6960 = vrot.slane %v6959, 2
        %v6961 = vadd.f32 %v6959, %v6960
        %v6962 = vrot.slane %v6961, 1
        %v6963 = vadd.f32 %v6961, %v6962
        %v6964 = vrot.slane %v6592, 4
        %v6965 = vadd.f32 %v6592, %v6964
        %v6966 = vrot.slane %v6965, 2
        %v6967 = vadd.f32 %v6965, %v6966
        %v6968 = vrot.slane %v6967, 1
        %v6969 = vadd.f32 %v6967, %v6968
        %v6970 = vrot.slane %v6594, 4
        %v6971 = vadd.f32 %v6594, %v6970
        %v6972 = vrot.slane %v6971, 2
        %v6973 = vadd.f32 %v6971, %v6972
        %v6974 = vrot.slane %v6973, 1
        %v6975 = vadd.f32 %v6973, %v6974
        %v6976 = vrot.slane %v5918, 4
        %v6977 = vadd.f32 %v5918, %v6976
        %v6978 = vrot.slane %v6977, 2
        %v6979 = vadd.f32 %v6977, %v6978
        %v6980 = vrot.slane %v6979, 1
        %v6981 = vadd.f32 %v6979, %v6980
        %v6982 = vrot.slane %v5920, 4
        %v6983 = vadd.f32 %v5920, %v6982
        %v6984 = vrot.slane %v6983, 2
        %v6985 = vadd.f32 %v6983, %v6984
        %v6986 = vrot.slane %v6985, 1
        %v6987 = vadd.f32 %v6985, %v6986
        %v6988 = vrot.slane %v6144, 4
        %v6989 = vadd.f32 %v6144, %v6988
        %v6990 = vrot.slane %v6989, 2
        %v6991 = vadd.f32 %v6989, %v6990
        %v6992 = vrot.slane %v6991, 1
        %v6993 = vadd.f32 %v6991, %v6992
        %v6994 = vrot.slane %v6146, 4
        %v6995 = vadd.f32 %v6146, %v6994
        %v6996 = vrot.slane %v6995, 2
        %v6997 = vadd.f32 %v6995, %v6996
        %v6998 = vrot.slane %v6997, 1
        %v6999 = vadd.f32 %v6997, %v6998
        %v7000 = vrot.slane %v6370, 4
        %v7001 = vadd.f32 %v6370, %v7000
        %v7002 = vrot.slane %v7001, 2
        %v7003 = vadd.f32 %v7001, %v7002
        %v7004 = vrot.slane %v7003, 1
        %v7005 = vadd.f32 %v7003, %v7004
        %v7006 = vrot.slane %v6372, 4
        %v7007 = vadd.f32 %v6372, %v7006
        %v7008 = vrot.slane %v7007, 2
        %v7009 = vadd.f32 %v7007, %v7008
        %v7010 = vrot.slane %v7009, 1
        %v7011 = vadd.f32 %v7009, %v7010
        %v7012 = vrot.slane %v6596, 4
        %v7013 = vadd.f32 %v6596, %v7012
        %v7014 = vrot.slane %v7013, 2
        %v7015 = vadd.f32 %v7013, %v7014
        %v7016 = vrot.slane %v7015, 1
        %v7017 = vadd.f32 %v7015, %v7016
        %v7018 = vrot.slane %v6598, 4
        %v7019 = vadd.f32 %v6598, %v7018
        %v7020 = vrot.slane %v7019, 2
        %v7021 = vadd.f32 %v7019, %v7020
        %v7022 = vrot.slane %v7021, 1
        %v7023 = vadd.f32 %v7021, %v7022
        %v7024 = vrot.slane %v5924, 4
        %v7025 = vadd.f32 %v5924, %v7024
        %v7026 = vrot.slane %v7025, 2
        %v7027 = vadd.f32 %v7025, %v7026
        %v7028 = vrot.slane %v7027, 1
        %v7029 = vadd.f32 %v7027, %v7028
        %v7030 = vrot.slane %v5926, 4
        %v7031 = vadd.f32 %v5926, %v7030
        %v7032 = vrot.slane %v7031, 2
        %v7033 = vadd.f32 %v7031, %v7032
        %v7034 = vrot.slane %v7033, 1
        %v7035 = vadd.f32 %v7033, %v7034
        %v7036 = vrot.slane %v6150, 4
        %v7037 = vadd.f32 %v6150, %v7036
        %v7038 = vrot.slane %v7037, 2
        %v7039 = vadd.f32 %v7037, %v7038
        %v7040 = vrot.slane %v7039, 1
        %v7041 = vadd.f32 %v7039, %v7040
        %v7042 = vrot.slane %v6152, 4
        %v7043 = vadd.f32 %v6152, %v7042
        %v7044 = vrot.slane %v7043, 2
        %v7045 = vadd.f32 %v7043, %v7044
        %v7046 = vrot.slane %v7045, 1
        %v7047 = vadd.f32 %v7045, %v7046
        %v7048 = vrot.slane %v6376, 4
        %v7049 = vadd.f32 %v6376, %v7048
        %v7050 = vrot.slane %v7049, 2
        %v7051 = vadd.f32 %v7049, %v7050
        %v7052 = vrot.slane %v7051, 1
        %v7053 = vadd.f32 %v7051, %v7052
        %v7054 = vrot.slane %v6378, 4
        %v7055 = vadd.f32 %v6378, %v7054
        %v7056 = vrot.slane %v7055, 2
        %v7057 = vadd.f32 %v7055, %v7056
        %v7058 = vrot.slane %v7057, 1
        %v7059 = vadd.f32 %v7057, %v7058
        %v7060 = vrot.slane %v6602, 4
        %v7061 = vadd.f32 %v6602, %v7060
        %v7062 = vrot.slane %v7061, 2
        %v7063 = vadd.f32 %v7061, %v7062
        %v7064 = vrot.slane %v7063, 1
        %v7065 = vadd.f32 %v7063, %v7064
        %v7066 = vrot.slane %v6604, 4
        %v7067 = vadd.f32 %v6604, %v7066
        %v7068 = vrot.slane %v7067, 2
        %v7069 = vadd.f32 %v7067, %v7068
        %v7070 = vrot.slane %v7069, 1
        %v7071 = vadd.f32 %v7069, %v7070
        %v7072 = vrot.slane %v5928, 4
        %v7073 = vadd.f32 %v5928, %v7072
        %v7074 = vrot.slane %v7073, 2
        %v7075 = vadd.f32 %v7073, %v7074
        %v7076 = vrot.slane %v7075, 1
        %v7077 = vadd.f32 %v7075, %v7076
        %v7078 = vrot.slane %v5930, 4
        %v7079 = vadd.f32 %v5930, %v7078
        %v7080 = vrot.slane %v7079, 2
        %v7081 = vadd.f32 %v7079, %v7080
        %v7082 = vrot.slane %v7081, 1
        %v7083 = vadd.f32 %v7081, %v7082
        %v7084 = vrot.slane %v6154, 4
        %v7085 = vadd.f32 %v6154, %v7084
        %v7086 = vrot.slane %v7085, 2
        %v7087 = vadd.f32 %v7085, %v7086
        %v7088 = vrot.slane %v7087, 1
        %v7089 = vadd.f32 %v7087, %v7088
        %v7090 = vrot.slane %v6156, 4
        %v7091 = vadd.f32 %v6156, %v7090
        %v7092 = vrot.slane %v7091, 2
        %v7093 = vadd.f32 %v7091, %v7092
        %v7094 = vrot.slane %v7093, 1
        %v7095 = vadd.f32 %v7093, %v7094
        %v7096 = vrot.slane %v6380, 4
        %v7097 = vadd.f32 %v6380, %v7096
        %v7098 = vrot.slane %v7097, 2
        %v7099 = vadd.f32 %v7097, %v7098
        %v7100 = vrot.slane %v7099, 1
        %v7101 = vadd.f32 %v7099, %v7100
        %v7102 = vrot.slane %v6382, 4
        %v7103 = vadd.f32 %v6382, %v7102
        %v7104 = vrot.slane %v7103, 2
        %v7105 = vadd.f32 %v7103, %v7104
        %v7106 = vrot.slane %v7105, 1
        %v7107 = vadd.f32 %v7105, %v7106
        %v7108 = vrot.slane %v6606, 4
        %v7109 = vadd.f32 %v6606, %v7108
        %v7110 = vrot.slane %v7109, 2
        %v7111 = vadd.f32 %v7109, %v7110
        %v7112 = vrot.slane %v7111, 1
        %v7113 = vadd.f32 %v7111, %v7112
        %v7114 = vrot.slane %v6608, 4
        %v7115 = vadd.f32 %v6608, %v7114
        %v7116 = vrot.slane %v7115, 2
        %v7117 = vadd.f32 %v7115, %v7116
        %v7118 = vrot.slane %v7117, 1
        %v7119 = vadd.f32 %v7117, %v7118
        %v7120 = vrot.slane %v5934, 4
        %v7121 = vadd.f32 %v5934, %v7120
        %v7122 = vrot.slane %v7121, 2
        %v7123 = vadd.f32 %v7121, %v7122
        %v7124 = vrot.slane %v7123, 1
        %v7125 = vadd.f32 %v7123, %v7124
        %v7126 = vrot.slane %v5936, 4
        %v7127 = vadd.f32 %v5936, %v7126
        %v7128 = vrot.slane %v7127, 2
        %v7129 = vadd.f32 %v7127, %v7128
        %v7130 = vrot.slane %v7129, 1
        %v7131 = vadd.f32 %v7129, %v7130
        %v7132 = vrot.slane %v6160, 4
        %v7133 = vadd.f32 %v6160, %v7132
        %v7134 = vrot.slane %v7133, 2
        %v7135 = vadd.f32 %v7133, %v7134
        %v7136 = vrot.slane %v7135, 1
        %v7137 = vadd.f32 %v7135, %v7136
        %v7138 = vrot.slane %v6162, 4
        %v7139 = vadd.f32 %v6162, %v7138
        %v7140 = vrot.slane %v7139, 2
        %v7141 = vadd.f32 %v7139, %v7140
        %v7142 = vrot.slane %v7141, 1
        %v7143 = vadd.f32 %v7141, %v7142
        %v7144 = vrot.slane %v6386, 4
        %v7145 = vadd.f32 %v6386, %v7144
        %v7146 = vrot.slane %v7145, 2
        %v7147 = vadd.f32 %v7145, %v7146
        %v7148 = vrot.slane %v7147, 1
        %v7149 = vadd.f32 %v7147, %v7148
        %v7150 = vrot.slane %v6388, 4
        %v7151 = vadd.f32 %v6388, %v7150
        %v7152 = vrot.slane %v7151, 2
        %v7153 = vadd.f32 %v7151, %v7152
        %v7154 = vrot.slane %v7153, 1
        %v7155 = vadd.f32 %v7153, %v7154
        %v7156 = vrot.slane %v6612, 4
        %v7157 = vadd.f32 %v6612, %v7156
        %v7158 = vrot.slane %v7157, 2
        %v7159 = vadd.f32 %v7157, %v7158
        %v7160 = vrot.slane %v7159, 1
        %v7161 = vadd.f32 %v7159, %v7160
        %v7162 = vrot.slane %v6614, 4
        %v7163 = vadd.f32 %v6614, %v7162
        %v7164 = vrot.slane %v7163, 2
        %v7165 = vadd.f32 %v7163, %v7164
        %v7166 = vrot.slane %v7165, 1
        %v7167 = vadd.f32 %v7165, %v7166
        %v7168 = vrot.slane %v5938, 4
        %v7169 = vadd.f32 %v5938, %v7168
        %v7170 = vrot.slane %v7169, 2
        %v7171 = vadd.f32 %v7169, %v7170
        %v7172 = vrot.slane %v7171, 1
        %v7173 = vadd.f32 %v7171, %v7172
        %v7174 = vrot.slane %v5940, 4
        %v7175 = vadd.f32 %v5940, %v7174
        %v7176 = vrot.slane %v7175, 2
        %v7177 = vadd.f32 %v7175, %v7176
        %v7178 = vrot.slane %v7177, 1
        %v7179 = vadd.f32 %v7177, %v7178
        %v7180 = vrot.slane %v6164, 4
        %v7181 = vadd.f32 %v6164, %v7180
        %v7182 = vrot.slane %v7181, 2
        %v7183 = vadd.f32 %v7181, %v7182
        %v7184 = vrot.slane %v7183, 1
        %v7185 = vadd.f32 %v7183, %v7184
        %v7186 = vrot.slane %v6166, 4
        %v7187 = vadd.f32 %v6166, %v7186
        %v7188 = vrot.slane %v7187, 2
        %v7189 = vadd.f32 %v7187, %v7188
        %v7190 = vrot.slane %v7189, 1
        %v7191 = vadd.f32 %v7189, %v7190
        %v7192 = vrot.slane %v6390, 4
        %v7193 = vadd.f32 %v6390, %v7192
        %v7194 = vrot.slane %v7193, 2
        %v7195 = vadd.f32 %v7193, %v7194
        %v7196 = vrot.slane %v7195, 1
        %v7197 = vadd.f32 %v7195, %v7196
        %v7198 = vrot.slane %v6392, 4
        %v7199 = vadd.f32 %v6392, %v7198
        %v7200 = vrot.slane %v7199, 2
        %v7201 = vadd.f32 %v7199, %v7200
        %v7202 = vrot.slane %v7201, 1
        %v7203 = vadd.f32 %v7201, %v7202
        %v7204 = vrot.slane %v6616, 4
        %v7205 = vadd.f32 %v6616, %v7204
        %v7206 = vrot.slane %v7205, 2
        %v7207 = vadd.f32 %v7205, %v7206
        %v7208 = vrot.slane %v7207, 1
        %v7209 = vadd.f32 %v7207, %v7208
        %v7210 = vrot.slane %v6618, 4
        %v7211 = vadd.f32 %v6618, %v7210
        %v7212 = vrot.slane %v7211, 2
        %v7213 = vadd.f32 %v7211, %v7212
        %v7214 = vrot.slane %v7213, 1
        %v7215 = vadd.f32 %v7213, %v7214
        %v7216 = vrot.slane %v5944, 4
        %v7217 = vadd.f32 %v5944, %v7216
        %v7218 = vrot.slane %v7217, 2
        %v7219 = vadd.f32 %v7217, %v7218
        %v7220 = vrot.slane %v7219, 1
        %v7221 = vadd.f32 %v7219, %v7220
        %v7222 = vrot.slane %v5946, 4
        %v7223 = vadd.f32 %v5946, %v7222
        %v7224 = vrot.slane %v7223, 2
        %v7225 = vadd.f32 %v7223, %v7224
        %v7226 = vrot.slane %v7225, 1
        %v7227 = vadd.f32 %v7225, %v7226
        %v7228 = vrot.slane %v6170, 4
        %v7229 = vadd.f32 %v6170, %v7228
        %v7230 = vrot.slane %v7229, 2
        %v7231 = vadd.f32 %v7229, %v7230
        %v7232 = vrot.slane %v7231, 1
        %v7233 = vadd.f32 %v7231, %v7232
        %v7234 = vrot.slane %v6172, 4
        %v7235 = vadd.f32 %v6172, %v7234
        %v7236 = vrot.slane %v7235, 2
        %v7237 = vadd.f32 %v7235, %v7236
        %v7238 = vrot.slane %v7237, 1
        %v7239 = vadd.f32 %v7237, %v7238
        %v7240 = vrot.slane %v6396, 4
        %v7241 = vadd.f32 %v6396, %v7240
        %v7242 = vrot.slane %v7241, 2
        %v7243 = vadd.f32 %v7241, %v7242
        %v7244 = vrot.slane %v7243, 1
        %v7245 = vadd.f32 %v7243, %v7244
        %v7246 = vrot.slane %v6398, 4
        %v7247 = vadd.f32 %v6398, %v7246
        %v7248 = vrot.slane %v7247, 2
        %v7249 = vadd.f32 %v7247, %v7248
        %v7250 = vrot.slane %v7249, 1
        %v7251 = vadd.f32 %v7249, %v7250
        %v7252 = vrot.slane %v6622, 4
        %v7253 = vadd.f32 %v6622, %v7252
        %v7254 = vrot.slane %v7253, 2
        %v7255 = vadd.f32 %v7253, %v7254
        %v7256 = vrot.slane %v7255, 1
        %v7257 = vadd.f32 %v7255, %v7256
        %v7258 = vrot.slane %v6624, 4
        %v7259 = vadd.f32 %v6624, %v7258
        %v7260 = vrot.slane %v7259, 2
        %v7261 = vadd.f32 %v7259, %v7260
        %v7262 = vrot.slane %v7261, 1
        %v7263 = vadd.f32 %v7261, %v7262
        %v7264 = vrot.slane %v5948, 4
        %v7265 = vadd.f32 %v5948, %v7264
        %v7266 = vrot.slane %v7265, 2
        %v7267 = vadd.f32 %v7265, %v7266
        %v7268 = vrot.slane %v7267, 1
        %v7269 = vadd.f32 %v7267, %v7268
        %v7270 = vrot.slane %v5950, 4
        %v7271 = vadd.f32 %v5950, %v7270
        %v7272 = vrot.slane %v7271, 2
        %v7273 = vadd.f32 %v7271, %v7272
        %v7274 = vrot.slane %v7273, 1
        %v7275 = vadd.f32 %v7273, %v7274
        %v7276 = vrot.slane %v6174, 4
        %v7277 = vadd.f32 %v6174, %v7276
        %v7278 = vrot.slane %v7277, 2
        %v7279 = vadd.f32 %v7277, %v7278
        %v7280 = vrot.slane %v7279, 1
        %v7281 = vadd.f32 %v7279, %v7280
        %v7282 = vrot.slane %v6176, 4
        %v7283 = vadd.f32 %v6176, %v7282
        %v7284 = vrot.slane %v7283, 2
        %v7285 = vadd.f32 %v7283, %v7284
        %v7286 = vrot.slane %v7285, 1
        %v7287 = vadd.f32 %v7285, %v7286
        %v7288 = vrot.slane %v6400, 4
        %v7289 = vadd.f32 %v6400, %v7288
        %v7290 = vrot.slane %v7289, 2
        %v7291 = vadd.f32 %v7289, %v7290
        %v7292 = vrot.slane %v7291, 1
        %v7293 = vadd.f32 %v7291, %v7292
        %v7294 = vrot.slane %v6402, 4
        %v7295 = vadd.f32 %v6402, %v7294
        %v7296 = vrot.slane %v7295, 2
        %v7297 = vadd.f32 %v7295, %v7296
        %v7298 = vrot.slane %v7297, 1
        %v7299 = vadd.f32 %v7297, %v7298
        %v7300 = vrot.slane %v6626, 4
        %v7301 = vadd.f32 %v6626, %v7300
        %v7302 = vrot.slane %v7301, 2
        %v7303 = vadd.f32 %v7301, %v7302
        %v7304 = vrot.slane %v7303, 1
        %v7305 = vadd.f32 %v7303, %v7304
        %v7306 = vrot.slane %v6628, 4
        %v7307 = vadd.f32 %v6628, %v7306
        %v7308 = vrot.slane %v7307, 2
        %v7309 = vadd.f32 %v7307, %v7308
        %v7310 = vrot.slane %v7309, 1
        %v7311 = vadd.f32 %v7309, %v7310
        %v7312 = vrot.slane %v5954, 4
        %v7313 = vadd.f32 %v5954, %v7312
        %v7314 = vrot.slane %v7313, 2
        %v7315 = vadd.f32 %v7313, %v7314
        %v7316 = vrot.slane %v7315, 1
        %v7317 = vadd.f32 %v7315, %v7316
        %v7318 = vrot.slane %v5956, 4
        %v7319 = vadd.f32 %v5956, %v7318
        %v7320 = vrot.slane %v7319, 2
        %v7321 = vadd.f32 %v7319, %v7320
        %v7322 = vrot.slane %v7321, 1
        %v7323 = vadd.f32 %v7321, %v7322
        %v7324 = vrot.slane %v6180, 4
        %v7325 = vadd.f32 %v6180, %v7324
        %v7326 = vrot.slane %v7325, 2
        %v7327 = vadd.f32 %v7325, %v7326
        %v7328 = vrot.slane %v7327, 1
        %v7329 = vadd.f32 %v7327, %v7328
        %v7330 = vrot.slane %v6182, 4
        %v7331 = vadd.f32 %v6182, %v7330
        %v7332 = vrot.slane %v7331, 2
        %v7333 = vadd.f32 %v7331, %v7332
        %v7334 = vrot.slane %v7333, 1
        %v7335 = vadd.f32 %v7333, %v7334
        %v7336 = vrot.slane %v6406, 4
        %v7337 = vadd.f32 %v6406, %v7336
        %v7338 = vrot.slane %v7337, 2
        %v7339 = vadd.f32 %v7337, %v7338
        %v7340 = vrot.slane %v7339, 1
        %v7341 = vadd.f32 %v7339, %v7340
        %v7342 = vrot.slane %v6408, 4
        %v7343 = vadd.f32 %v6408, %v7342
        %v7344 = vrot.slane %v7343, 2
        %v7345 = vadd.f32 %v7343, %v7344
        %v7346 = vrot.slane %v7345, 1
        %v7347 = vadd.f32 %v7345, %v7346
        %v7348 = vrot.slane %v6632, 4
        %v7349 = vadd.f32 %v6632, %v7348
        %v7350 = vrot.slane %v7349, 2
        %v7351 = vadd.f32 %v7349, %v7350
        %v7352 = vrot.slane %v7351, 1
        %v7353 = vadd.f32 %v7351, %v7352
        %v7354 = vrot.slane %v6634, 4
        %v7355 = vadd.f32 %v6634, %v7354
        %v7356 = vrot.slane %v7355, 2
        %v7357 = vadd.f32 %v7355, %v7356
        %v7358 = vrot.slane %v7357, 1
        %v7359 = vadd.f32 %v7357, %v7358
        %v7360 = vrot.slane %v5958, 4
        %v7361 = vadd.f32 %v5958, %v7360
        %v7362 = vrot.slane %v7361, 2
        %v7363 = vadd.f32 %v7361, %v7362
        %v7364 = vrot.slane %v7363, 1
        %v7365 = vadd.f32 %v7363, %v7364
        %v7366 = vrot.slane %v5960, 4
        %v7367 = vadd.f32 %v5960, %v7366
        %v7368 = vrot.slane %v7367, 2
        %v7369 = vadd.f32 %v7367, %v7368
        %v7370 = vrot.slane %v7369, 1
        %v7371 = vadd.f32 %v7369, %v7370
        %v7372 = vrot.slane %v6184, 4
        %v7373 = vadd.f32 %v6184, %v7372
        %v7374 = vrot.slane %v7373, 2
        %v7375 = vadd.f32 %v7373, %v7374
        %v7376 = vrot.slane %v7375, 1
        %v7377 = vadd.f32 %v7375, %v7376
        %v7378 = vrot.slane %v6186, 4
        %v7379 = vadd.f32 %v6186, %v7378
        %v7380 = vrot.slane %v7379, 2
        %v7381 = vadd.f32 %v7379, %v7380
        %v7382 = vrot.slane %v7381, 1
        %v7383 = vadd.f32 %v7381, %v7382
        %v7384 = vrot.slane %v6410, 4
        %v7385 = vadd.f32 %v6410, %v7384
        %v7386 = vrot.slane %v7385, 2
        %v7387 = vadd.f32 %v7385, %v7386
        %v7388 = vrot.slane %v7387, 1
        %v7389 = vadd.f32 %v7387, %v7388
        %v7390 = vrot.slane %v6412, 4
        %v7391 = vadd.f32 %v6412, %v7390
        %v7392 = vrot.slane %v7391, 2
        %v7393 = vadd.f32 %v7391, %v7392
        %v7394 = vrot.slane %v7393, 1
        %v7395 = vadd.f32 %v7393, %v7394
        %v7396 = vrot.slane %v6636, 4
        %v7397 = vadd.f32 %v6636, %v7396
        %v7398 = vrot.slane %v7397, 2
        %v7399 = vadd.f32 %v7397, %v7398
        %v7400 = vrot.slane %v7399, 1
        %v7401 = vadd.f32 %v7399, %v7400
        %v7402 = vrot.slane %v6638, 4
        %v7403 = vadd.f32 %v6638, %v7402
        %v7404 = vrot.slane %v7403, 2
        %v7405 = vadd.f32 %v7403, %v7404
        %v7406 = vrot.slane %v7405, 1
        %v7407 = vadd.f32 %v7405, %v7406
        %v7408 = vmul.f32 %v6645, 0.125
        %v7409 = vmul.f32 %v6651, 0.125
        %v7410 = vmul.f32 %v6657, 0.125
        %v7411 = vmul.f32 %v6663, 0.125
        %v7412 = vmul.f32 %v6669, 0.125
        %v7413 = vmul.f32 %v6675, 0.125
        %v7414 = vmul.f32 %v6681, 0.125
        %v7415 = vmul.f32 %v6687, 0.125
        %v7416 = vmul.f32 %v6693, 0.125
        %v7417 = vmul.f32 %v6699, 0.125
        %v7418 = vmul.f32 %v6705, 0.125
        %v7419 = vmul.f32 %v6711, 0.125
        %v7420 = vmul.f32 %v6717, 0.125
        %v7421 = vmul.f32 %v6723, 0.125
        %v7422 = vmul.f32 %v6729, 0.125
        %v7423 = vmul.f32 %v6735, 0.125
        %v7424 = vmul.f32 %v6741, 0.125
        %v7425 = vmul.f32 %v6747, 0.125
        %v7426 = vmul.f32 %v6753, 0.125
        %v7427 = vmul.f32 %v6759, 0.125
        %v7428 = vmul.f32 %v6765, 0.125
        %v7429 = vmul.f32 %v6771, 0.125
        %v7430 = vmul.f32 %v6777, 0.125
        %v7431 = vmul.f32 %v6783, 0.125
        %v7432 = vmul.f32 %v6789, 0.125
        %v7433 = vmul.f32 %v6795, 0.125
        %v7434 = vmul.f32 %v6801, 0.125
        %v7435 = vmul.f32 %v6807, 0.125
        %v7436 = vmul.f32 %v6813, 0.125
        %v7437 = vmul.f32 %v6819, 0.125
        %v7438 = vmul.f32 %v6825, 0.125
        %v7439 = vmul.f32 %v6831, 0.125
        %v7440 = vmul.f32 %v6837, 0.125
        %v7441 = vmul.f32 %v6843, 0.125
        %v7442 = vmul.f32 %v6849, 0.125
        %v7443 = vmul.f32 %v6855, 0.125
        %v7444 = vmul.f32 %v6861, 0.125
        %v7445 = vmul.f32 %v6867, 0.125
        %v7446 = vmul.f32 %v6873, 0.125
        %v7447 = vmul.f32 %v6879, 0.125
        %v7448 = vmul.f32 %v6885, 0.125
        %v7449 = vmul.f32 %v6891, 0.125
        %v7450 = vmul.f32 %v6897, 0.125
        %v7451 = vmul.f32 %v6903, 0.125
        %v7452 = vmul.f32 %v6909, 0.125
        %v7453 = vmul.f32 %v6915, 0.125
        %v7454 = vmul.f32 %v6921, 0.125
        %v7455 = vmul.f32 %v6927, 0.125
        %v7456 = vmul.f32 %v6933, 0.125
        %v7457 = vmul.f32 %v6939, 0.125
        %v7458 = vmul.f32 %v6945, 0.125
        %v7459 = vmul.f32 %v6951, 0.125
        %v7460 = vmul.f32 %v6957, 0.125
        %v7461 = vmul.f32 %v6963, 0.125
        %v7462 = vmul.f32 %v6969, 0.125
        %v7463 = vmul.f32 %v6975, 0.125
        %v7464 = vmul.f32 %v6981, 0.125
        %v7465 = vmul.f32 %v6987, 0.125
        %v7466 = vmul.f32 %v6993, 0.125
        %v7467 = vmul.f32 %v6999, 0.125
        %v7468 = vmul.f32 %v7005, 0.125
        %v7469 = vmul.f32 %v7011, 0.125
        %v7470 = vmul.f32 %v7017, 0.125
        %v7471 = vmul.f32 %v7023, 0.125
        %v7472 = vmul.f32 %v7029, 0.125
        %v7473 = vmul.f32 %v7035, 0.125
        %v7474 = vmul.f32 %v7041, 0.125
        %v7475 = vmul.f32 %v7047, 0.125
        %v7476 = vmul.f32 %v7053, 0.125
        %v7477 = vmul.f32 %v7059, 0.125
        %v7478 = vmul.f32 %v7065, 0.125
        %v7479 = vmul.f32 %v7071, 0.125
        %v7480 = vmul.f32 %v7077, 0.125
        %v7481 = vmul.f32 %v7083, 0.125
        %v7482 = vmul.f32 %v7089, 0.125
        %v7483 = vmul.f32 %v7095, 0.125
        %v7484 = vmul.f32 %v7101, 0.125
        %v7485 = vmul.f32 %v7107, 0.125
        %v7486 = vmul.f32 %v7113, 0.125
        %v7487 = vmul.f32 %v7119, 0.125
        %v7488 = vmul.f32 %v7125, 0.125
        %v7489 = vmul.f32 %v7131, 0.125
        %v7490 = vmul.f32 %v7137, 0.125
        %v7491 = vmul.f32 %v7143, 0.125
        %v7492 = vmul.f32 %v7149, 0.125
        %v7493 = vmul.f32 %v7155, 0.125
        %v7494 = vmul.f32 %v7161, 0.125
        %v7495 = vmul.f32 %v7167, 0.125
        %v7496 = vmul.f32 %v7173, 0.125
        %v7497 = vmul.f32 %v7179, 0.125
        %v7498 = vmul.f32 %v7185, 0.125
        %v7499 = vmul.f32 %v7191, 0.125
        %v7500 = vmul.f32 %v7197, 0.125
        %v7501 = vmul.f32 %v7203, 0.125
        %v7502 = vmul.f32 %v7209, 0.125
        %v7503 = vmul.f32 %v7215, 0.125
        %v7504 = vmul.f32 %v7221, 0.125
        %v7505 = vmul.f32 %v7227, 0.125
        %v7506 = vmul.f32 %v7233, 0.125
        %v7507 = vmul.f32 %v7239, 0.125
        %v7508 = vmul.f32 %v7245, 0.125
        %v7509 = vmul.f32 %v7251, 0.125
        %v7510 = vmul.f32 %v7257, 0.125
        %v7511 = vmul.f32 %v7263, 0.125
        %v7512 = vmul.f32 %v7269, 0.125
        %v7513 = vmul.f32 %v7275, 0.125
        %v7514 = vmul.f32 %v7281, 0.125
        %v7515 = vmul.f32 %v7287, 0.125
        %v7516 = vmul.f32 %v7293, 0.125
        %v7517 = vmul.f32 %v7299, 0.125
        %v7518 = vmul.f32 %v7305, 0.125
        %v7519 = vmul.f32 %v7311, 0.125
        %v7520 = vmul.f32 %v7317, 0.125
        %v7521 = vmul.f32 %v7323, 0.125
        %v7522 = vmul.f32 %v7329, 0.125
        %v7523 = vmul.f32 %v7335, 0.125
        %v7524 = vmul.f32 %v7341, 0.125
        %v7525 = vmul.f32 %v7347, 0.125
        %v7526 = vmul.f32 %v7353, 0.125
        %v7527 = vmul.f32 %v7359, 0.125
        %v7528 = vmul.f32 %v7365, 0.125
        %v7529 = vmul.f32 %v7371, 0.125
        %v7530 = vmul.f32 %v7377, 0.125
        %v7531 = vmul.f32 %v7383, 0.125
        %v7532 = vmul.f32 %v7389, 0.125
        %v7533 = vmul.f32 %v7395, 0.125
        %v7534 = vmul.f32 %v7401, 0.125
        %v7535 = vmul.f32 %v7407, 0.125
        %v7536 = vsub.f32 %v5884, %v7408
        %v7537 = vsub.f32 %v5886, %v7409
        %v7538 = vsub.f32 %v6110, %v7410
        %v7539 = vsub.f32 %v6112, %v7411
        %v7540 = vsub.f32 %v6336, %v7412
        %v7541 = vsub.f32 %v6338, %v7413
        %v7542 = vsub.f32 %v6562, %v7414
        %v7543 = vsub.f32 %v6564, %v7415
        %v7544 = vsub.f32 %v5888, %v7416
        %v7545 = vsub.f32 %v5890, %v7417
        %v7546 = vsub.f32 %v6114, %v7418
        %v7547 = vsub.f32 %v6116, %v7419
        %v7548 = vsub.f32 %v6340, %v7420
        %v7549 = vsub.f32 %v6342, %v7421
        %v7550 = vsub.f32 %v6566, %v7422
        %v7551 = vsub.f32 %v6568, %v7423
        %v7552 = vsub.f32 %v5894, %v7424
        %v7553 = vsub.f32 %v5896, %v7425
        %v7554 = vsub.f32 %v6120, %v7426
        %v7555 = vsub.f32 %v6122, %v7427
        %v7556 = vsub.f32 %v6346, %v7428
        %v7557 = vsub.f32 %v6348, %v7429
        %v7558 = vsub.f32 %v6572, %v7430
        %v7559 = vsub.f32 %v6574, %v7431
        %v7560 = vsub.f32 %v5898, %v7432
        %v7561 = vsub.f32 %v5900, %v7433
        %v7562 = vsub.f32 %v6124, %v7434
        %v7563 = vsub.f32 %v6126, %v7435
        %v7564 = vsub.f32 %v6350, %v7436
        %v7565 = vsub.f32 %v6352, %v7437
        %v7566 = vsub.f32 %v6576, %v7438
        %v7567 = vsub.f32 %v6578, %v7439
        %v7568 = vsub.f32 %v5904, %v7440
        %v7569 = vsub.f32 %v5906, %v7441
        %v7570 = vsub.f32 %v6130, %v7442
        %v7571 = vsub.f32 %v6132, %v7443
        %v7572 = vsub.f32 %v6356, %v7444
        %v7573 = vsub.f32 %v6358, %v7445
        %v7574 = vsub.f32 %v6582, %v7446
        %v7575 = vsub.f32 %v6584, %v7447
        %v7576 = vsub.f32 %v5908, %v7448
        %v7577 = vsub.f32 %v5910, %v7449
        %v7578 = vsub.f32 %v6134, %v7450
        %v7579 = vsub.f32 %v6136, %v7451
        %v7580 = vsub.f32 %v6360, %v7452
        %v7581 = vsub.f32 %v6362, %v7453
        %v7582 = vsub.f32 %v6586, %v7454
        %v7583 = vsub.f32 %v6588, %v7455
        %v7584 = vsub.f32 %v5914, %v7456
        %v7585 = vsub.f32 %v5916, %v7457
        %v7586 = vsub.f32 %v6140, %v7458
        %v7587 = vsub.f32 %v6142, %v7459
        %v7588 = vsub.f32 %v6366, %v7460
        %v7589 = vsub.f32 %v6368, %v7461
        %v7590 = vsub.f32 %v6592, %v7462
        %v7591 = vsub.f32 %v6594, %v7463
        %v7592 = vsub.f32 %v5918, %v7464
        %v7593 = vsub.f32 %v5920, %v7465
        %v7594 = vsub.f32 %v6144, %v7466
        %v7595 = vsub.f32 %v6146, %v7467
        %v7596 = vsub.f32 %v6370, %v7468
        %v7597 = vsub.f32 %v6372, %v7469
        %v7598 = vsub.f32 %v6596, %v7470
        %v7599 = vsub.f32 %v6598, %v7471
        %v7600 = vsub.f32 %v5924, %v7472
        %v7601 = vsub.f32 %v5926, %v7473
        %v7602 = vsub.f32 %v6150, %v7474
        %v7603 = vsub.f32 %v6152, %v7475
        %v7604 = vsub.f32 %v6376, %v7476
        %v7605 = vsub.f32 %v6378, %v7477
        %v7606 = vsub.f32 %v6602, %v7478
        %v7607 = vsub.f32 %v6604, %v7479
        %v7608 = vsub.f32 %v5928, %v7480
        %v7609 = vsub.f32 %v5930, %v7481
        %v7610 = vsub.f32 %v6154, %v7482
        %v7611 = vsub.f32 %v6156, %v7483
        %v7612 = vsub.f32 %v6380, %v7484
        %v7613 = vsub.f32 %v6382, %v7485
        %v7614 = vsub.f32 %v6606, %v7486
        %v7615 = vsub.f32 %v6608, %v7487
        %v7616 = vsub.f32 %v5934, %v7488
        %v7617 = vsub.f32 %v5936, %v7489
        %v7618 = vsub.f32 %v6160, %v7490
        %v7619 = vsub.f32 %v6162, %v7491
        %v7620 = vsub.f32 %v6386, %v7492
        %v7621 = vsub.f32 %v6388, %v7493
        %v7622 = vsub.f32 %v6612, %v7494
        %v7623 = vsub.f32 %v6614, %v7495
        %v7624 = vsub.f32 %v5938, %v7496
        %v7625 = vsub.f32 %v5940, %v7497
        %v7626 = vsub.f32 %v6164, %v7498
        %v7627 = vsub.f32 %v6166, %v7499
        %v7628 = vsub.f32 %v6390, %v7500
        %v7629 = vsub.f32 %v6392, %v7501
        %v7630 = vsub.f32 %v6616, %v7502
        %v7631 = vsub.f32 %v6618, %v7503
        %v7632 = vsub.f32 %v5944, %v7504
        %v7633 = vsub.f32 %v5946, %v7505
        %v7634 = vsub.f32 %v6170, %v7506
        %v7635 = vsub.f32 %v6172, %v7507
        %v7636 = vsub.f32 %v6396, %v7508
        %v7637 = vsub.f32 %v6398, %v7509
        %v7638 = vsub.f32 %v6622, %v7510
        %v7639 = vsub.f32 %v6624, %v7511
        %v7640 = vsub.f32 %v5948, %v7512
        %v7641 = vsub.f32 %v5950, %v7513
        %v7642 = vsub.f32 %v6174, %v7514
        %v7643 = vsub.f32 %v6176, %v7515
        %v7644 = vsub.f32 %v6400, %v7516
        %v7645 = vsub.f32 %v6402, %v7517
        %v7646 = vsub.f32 %v6626, %v7518
        %v7647 = vsub.f32 %v6628, %v7519
        %v7648 = vsub.f32 %v5954, %v7520
        %v7649 = vsub.f32 %v5956, %v7521
        %v7650 = vsub.f32 %v6180, %v7522
        %v7651 = vsub.f32 %v6182, %v7523
        %v7652 = vsub.f32 %v6406, %v7524
        %v7653 = vsub.f32 %v6408, %v7525
        %v7654 = vsub.f32 %v6632, %v7526
        %v7655 = vsub.f32 %v6634, %v7527
        %v7656 = vsub.f32 %v5958, %v7528
        %v7657 = vsub.f32 %v5960, %v7529
        %v7658 = vsub.f32 %v6184, %v7530
        %v7659 = vsub.f32 %v6186, %v7531
        %v7660 = vsub.f32 %v6410, %v7532
        %v7661 = vsub.f32 %v6412, %v7533
        %v7662 = vsub.f32 %v6636, %v7534
        %v7663 = vsub.f32 %v6638, %v7535
        %v7664 = vmul.f32 %v7536, %v7536
        %v7665 = vmul.f32 %v7537, %v7537
        %v7666 = vmul.f32 %v7538, %v7538
        %v7667 = vmul.f32 %v7539, %v7539
        %v7668 = vmul.f32 %v7540, %v7540
        %v7669 = vmul.f32 %v7541, %v7541
        %v7670 = vmul.f32 %v7542, %v7542
        %v7671 = vmul.f32 %v7543, %v7543
        %v7672 = vmul.f32 %v7544, %v7544
        %v7673 = vmul.f32 %v7545, %v7545
        %v7674 = vmul.f32 %v7546, %v7546
        %v7675 = vmul.f32 %v7547, %v7547
        %v7676 = vmul.f32 %v7548, %v7548
        %v7677 = vmul.f32 %v7549, %v7549
        %v7678 = vmul.f32 %v7550, %v7550
        %v7679 = vmul.f32 %v7551, %v7551
        %v7680 = vmul.f32 %v7552, %v7552
        %v7681 = vmul.f32 %v7553, %v7553
        %v7682 = vmul.f32 %v7554, %v7554
        %v7683 = vmul.f32 %v7555, %v7555
        %v7684 = vmul.f32 %v7556, %v7556
        %v7685 = vmul.f32 %v7557, %v7557
        %v7686 = vmul.f32 %v7558, %v7558
        %v7687 = vmul.f32 %v7559, %v7559
        %v7688 = vmul.f32 %v7560, %v7560
        %v7689 = vmul.f32 %v7561, %v7561
        %v7690 = vmul.f32 %v7562, %v7562
        %v7691 = vmul.f32 %v7563, %v7563
        %v7692 = vmul.f32 %v7564, %v7564
        %v7693 = vmul.f32 %v7565, %v7565
        %v7694 = vmul.f32 %v7566, %v7566
        %v7695 = vmul.f32 %v7567, %v7567
        %v7696 = vmul.f32 %v7568, %v7568
        %v7697 = vmul.f32 %v7569, %v7569
        %v7698 = vmul.f32 %v7570, %v7570
        %v7699 = vmul.f32 %v7571, %v7571
        %v7700 = vmul.f32 %v7572, %v7572
        %v7701 = vmul.f32 %v7573, %v7573
        %v7702 = vmul.f32 %v7574, %v7574
        %v7703 = vmul.f32 %v7575, %v7575
        %v7704 = vmul.f32 %v7576, %v7576
        %v7705 = vmul.f32 %v7577, %v7577
        %v7706 = vmul.f32 %v7578, %v7578
        %v7707 = vmul.f32 %v7579, %v7579
        %v7708 = vmul.f32 %v7580, %v7580
        %v7709 = vmul.f32 %v7581, %v7581
        %v7710 = vmul.f32 %v7582, %v7582
        %v7711 = vmul.f32 %v7583, %v7583
        %v7712 = vmul.f32 %v7584, %v7584
        %v7713 = vmul.f32 %v7585, %v7585
        %v7714 = vmul.f32 %v7586, %v7586
        %v7715 = vmul.f32 %v7587, %v7587
        %v7716 = vmul.f32 %v7588, %v7588
        %v7717 = vmul.f32 %v7589, %v7589
        %v7718 = vmul.f32 %v7590, %v7590
        %v7719 = vmul.f32 %v7591, %v7591
        %v7720 = vmul.f32 %v7592, %v7592
        %v7721 = vmul.f32 %v7593, %v7593
        %v7722 = vmul.f32 %v7594, %v7594
        %v7723 = vmul.f32 %v7595, %v7595
        %v7724 = vmul.f32 %v7596, %v7596
        %v7725 = vmul.f32 %v7597, %v7597
        %v7726 = vmul.f32 %v7598, %v7598
        %v7727 = vmul.f32 %v7599, %v7599
        %v7728 = vmul.f32 %v7600, %v7600
        %v7729 = vmul.f32 %v7601, %v7601
        %v7730 = vmul.f32 %v7602, %v7602
        %v7731 = vmul.f32 %v7603, %v7603
        %v7732 = vmul.f32 %v7604, %v7604
        %v7733 = vmul.f32 %v7605, %v7605
        %v7734 = vmul.f32 %v7606, %v7606
        %v7735 = vmul.f32 %v7607, %v7607
        %v7736 = vmul.f32 %v7608, %v7608
        %v7737 = vmul.f32 %v7609, %v7609
        %v7738 = vmul.f32 %v7610, %v7610
        %v7739 = vmul.f32 %v7611, %v7611
        %v7740 = vmul.f32 %v7612, %v7612
        %v7741 = vmul.f32 %v7613, %v7613
        %v7742 = vmul.f32 %v7614, %v7614
        %v7743 = vmul.f32 %v7615, %v7615
        %v7744 = vmul.f32 %v7616, %v7616
        %v7745 = vmul.f32 %v7617, %v7617
        %v7746 = vmul.f32 %v7618, %v7618
        %v7747 = vmul.f32 %v7619, %v7619
        %v7748 = vmul.f32 %v7620, %v7620
        %v7749 = vmul.f32 %v7621, %v7621
        %v7750 = vmul.f32 %v7622, %v7622
        %v7751 = vmul.f32 %v7623, %v7623
        %v7752 = vmul.f32 %v7624, %v7624
        %v7753 = vmul.f32 %v7625, %v7625
        %v7754 = vmul.f32 %v7626, %v7626
        %v7755 = vmul.f32 %v7627, %v7627
        %v7756 = vmul.f32 %v7628, %v7628
        %v7757 = vmul.f32 %v7629, %v7629
        %v7758 = vmul.f32 %v7630, %v7630
        %v7759 = vmul.f32 %v7631, %v7631
        %v7760 = vmul.f32 %v7632, %v7632
        %v7761 = vmul.f32 %v7633, %v7633
        %v7762 = vmul.f32 %v7634, %v7634
        %v7763 = vmul.f32 %v7635, %v7635
        %v7764 = vmul.f32 %v7636, %v7636
        %v7765 = vmul.f32 %v7637, %v7637
        %v7766 = vmul.f32 %v7638, %v7638
        %v7767 = vmul.f32 %v7639, %v7639
        %v7768 = vmul.f32 %v7640, %v7640
        %v7769 = vmul.f32 %v7641, %v7641
        %v7770 = vmul.f32 %v7642, %v7642
        %v7771 = vmul.f32 %v7643, %v7643
        %v7772 = vmul.f32 %v7644, %v7644
        %v7773 = vmul.f32 %v7645, %v7645
        %v7774 = vmul.f32 %v7646, %v7646
        %v7775 = vmul.f32 %v7647, %v7647
        %v7776 = vmul.f32 %v7648, %v7648
        %v7777 = vmul.f32 %v7649, %v7649
        %v7778 = vmul.f32 %v7650, %v7650
        %v7779 = vmul.f32 %v7651, %v7651
        %v7780 = vmul.f32 %v7652, %v7652
        %v7781 = vmul.f32 %v7653, %v7653
        %v7782 = vmul.f32 %v7654, %v7654
        %v7783 = vmul.f32 %v7655, %v7655
        %v7784 = vmul.f32 %v7656, %v7656
        %v7785 = vmul.f32 %v7657, %v7657
        %v7786 = vmul.f32 %v7658, %v7658
        %v7787 = vmul.f32 %v7659, %v7659
        %v7788 = vmul.f32 %v7660, %v7660
        %v7789 = vmul.f32 %v7661, %v7661
        %v7790 = vmul.f32 %v7662, %v7662
        %v7791 = vmul.f32 %v7663, %v7663
        %v7792 = vrot.slane %v7664, 4
        %v7793 = vadd.f32 %v7664, %v7792
        %v7794 = vrot.slane %v7793, 2
        %v7795 = vadd.f32 %v7793, %v7794
        %v7796 = vrot.slane %v7795, 1
        %v7797 = vadd.f32 %v7795, %v7796
        %v7798 = vrot.slane %v7665, 4
        %v7799 = vadd.f32 %v7665, %v7798
        %v7800 = vrot.slane %v7799, 2
        %v7801 = vadd.f32 %v7799, %v7800
        %v7802 = vrot.slane %v7801, 1
        %v7803 = vadd.f32 %v7801, %v7802
        %v7804 = vrot.slane %v7666, 4
        %v7805 = vadd.f32 %v7666, %v7804
        %v7806 = vrot.slane %v7805, 2
        %v7807 = vadd.f32 %v7805, %v7806
        %v7808 = vrot.slane %v7807, 1
        %v7809 = vadd.f32 %v7807, %v7808
        %v7810 = vrot.slane %v7667, 4
        %v7811 = vadd.f32 %v7667, %v7810
        %v7812 = vrot.slane %v7811, 2
        %v7813 = vadd.f32 %v7811, %v7812
        %v7814 = vrot.slane %v7813, 1
        %v7815 = vadd.f32 %v7813, %v7814
        %v7816 = vrot.slane %v7668, 4
        %v7817 = vadd.f32 %v7668, %v7816
        %v7818 = vrot.slane %v7817, 2
        %v7819 = vadd.f32 %v7817, %v7818
        %v7820 = vrot.slane %v7819, 1
        %v7821 = vadd.f32 %v7819, %v7820
        %v7822 = vrot.slane %v7669, 4
        %v7823 = vadd.f32 %v7669, %v7822
        %v7824 = vrot.slane %v7823, 2
        %v7825 = vadd.f32 %v7823, %v7824
        %v7826 = vrot.slane %v7825, 1
        %v7827 = vadd.f32 %v7825, %v7826
        %v7828 = vrot.slane %v7670, 4
        %v7829 = vadd.f32 %v7670, %v7828
        %v7830 = vrot.slane %v7829, 2
        %v7831 = vadd.f32 %v7829, %v7830
        %v7832 = vrot.slane %v7831, 1
        %v7833 = vadd.f32 %v7831, %v7832
        %v7834 = vrot.slane %v7671, 4
        %v7835 = vadd.f32 %v7671, %v7834
        %v7836 = vrot.slane %v7835, 2
        %v7837 = vadd.f32 %v7835, %v7836
        %v7838 = vrot.slane %v7837, 1
        %v7839 = vadd.f32 %v7837, %v7838
        %v7840 = vrot.slane %v7672, 4
        %v7841 = vadd.f32 %v7672, %v7840
        %v7842 = vrot.slane %v7841, 2
        %v7843 = vadd.f32 %v7841, %v7842
        %v7844 = vrot.slane %v7843, 1
        %v7845 = vadd.f32 %v7843, %v7844
        %v7846 = vrot.slane %v7673, 4
        %v7847 = vadd.f32 %v7673, %v7846
        %v7848 = vrot.slane %v7847, 2
        %v7849 = vadd.f32 %v7847, %v7848
        %v7850 = vrot.slane %v7849, 1
        %v7851 = vadd.f32 %v7849, %v7850
        %v7852 = vrot.slane %v7674, 4
        %v7853 = vadd.f32 %v7674, %v7852
        %v7854 = vrot.slane %v7853, 2
        %v7855 = vadd.f32 %v7853, %v7854
        %v7856 = vrot.slane %v7855, 1
        %v7857 = vadd.f32 %v7855, %v7856
        %v7858 = vrot.slane %v7675, 4
        %v7859 = vadd.f32 %v7675, %v7858
        %v7860 = vrot.slane %v7859, 2
        %v7861 = vadd.f32 %v7859, %v7860
        %v7862 = vrot.slane %v7861, 1
        %v7863 = vadd.f32 %v7861, %v7862
        %v7864 = vrot.slane %v7676, 4
        %v7865 = vadd.f32 %v7676, %v7864
        %v7866 = vrot.slane %v7865, 2
        %v7867 = vadd.f32 %v7865, %v7866
        %v7868 = vrot.slane %v7867, 1
        %v7869 = vadd.f32 %v7867, %v7868
        %v7870 = vrot.slane %v7677, 4
        %v7871 = vadd.f32 %v7677, %v7870
        %v7872 = vrot.slane %v7871, 2
        %v7873 = vadd.f32 %v7871, %v7872
        %v7874 = vrot.slane %v7873, 1
        %v7875 = vadd.f32 %v7873, %v7874
        %v7876 = vrot.slane %v7678, 4
        %v7877 = vadd.f32 %v7678, %v7876
        %v7878 = vrot.slane %v7877, 2
        %v7879 = vadd.f32 %v7877, %v7878
        %v7880 = vrot.slane %v7879, 1
        %v7881 = vadd.f32 %v7879, %v7880
        %v7882 = vrot.slane %v7679, 4
        %v7883 = vadd.f32 %v7679, %v7882
        %v7884 = vrot.slane %v7883, 2
        %v7885 = vadd.f32 %v7883, %v7884
        %v7886 = vrot.slane %v7885, 1
        %v7887 = vadd.f32 %v7885, %v7886
        %v7888 = vrot.slane %v7680, 4
        %v7889 = vadd.f32 %v7680, %v7888
        %v7890 = vrot.slane %v7889, 2
        %v7891 = vadd.f32 %v7889, %v7890
        %v7892 = vrot.slane %v7891, 1
        %v7893 = vadd.f32 %v7891, %v7892
        %v7894 = vrot.slane %v7681, 4
        %v7895 = vadd.f32 %v7681, %v7894
        %v7896 = vrot.slane %v7895, 2
        %v7897 = vadd.f32 %v7895, %v7896
        %v7898 = vrot.slane %v7897, 1
        %v7899 = vadd.f32 %v7897, %v7898
        %v7900 = vrot.slane %v7682, 4
        %v7901 = vadd.f32 %v7682, %v7900
        %v7902 = vrot.slane %v7901, 2
        %v7903 = vadd.f32 %v7901, %v7902
        %v7904 = vrot.slane %v7903, 1
        %v7905 = vadd.f32 %v7903, %v7904
        %v7906 = vrot.slane %v7683, 4
        %v7907 = vadd.f32 %v7683, %v7906
        %v7908 = vrot.slane %v7907, 2
        %v7909 = vadd.f32 %v7907, %v7908
        %v7910 = vrot.slane %v7909, 1
        %v7911 = vadd.f32 %v7909, %v7910
        %v7912 = vrot.slane %v7684, 4
        %v7913 = vadd.f32 %v7684, %v7912
        %v7914 = vrot.slane %v7913, 2
        %v7915 = vadd.f32 %v7913, %v7914
        %v7916 = vrot.slane %v7915, 1
        %v7917 = vadd.f32 %v7915, %v7916
        %v7918 = vrot.slane %v7685, 4
        %v7919 = vadd.f32 %v7685, %v7918
        %v7920 = vrot.slane %v7919, 2
        %v7921 = vadd.f32 %v7919, %v7920
        %v7922 = vrot.slane %v7921, 1
        %v7923 = vadd.f32 %v7921, %v7922
        %v7924 = vrot.slane %v7686, 4
        %v7925 = vadd.f32 %v7686, %v7924
        %v7926 = vrot.slane %v7925, 2
        %v7927 = vadd.f32 %v7925, %v7926
        %v7928 = vrot.slane %v7927, 1
        %v7929 = vadd.f32 %v7927, %v7928
        %v7930 = vrot.slane %v7687, 4
        %v7931 = vadd.f32 %v7687, %v7930
        %v7932 = vrot.slane %v7931, 2
        %v7933 = vadd.f32 %v7931, %v7932
        %v7934 = vrot.slane %v7933, 1
        %v7935 = vadd.f32 %v7933, %v7934
        %v7936 = vrot.slane %v7688, 4
        %v7937 = vadd.f32 %v7688, %v7936
        %v7938 = vrot.slane %v7937, 2
        %v7939 = vadd.f32 %v7937, %v7938
        %v7940 = vrot.slane %v7939, 1
        %v7941 = vadd.f32 %v7939, %v7940
        %v7942 = vrot.slane %v7689, 4
        %v7943 = vadd.f32 %v7689, %v7942
        %v7944 = vrot.slane %v7943, 2
        %v7945 = vadd.f32 %v7943, %v7944
        %v7946 = vrot.slane %v7945, 1
        %v7947 = vadd.f32 %v7945, %v7946
        %v7948 = vrot.slane %v7690, 4
        %v7949 = vadd.f32 %v7690, %v7948
        %v7950 = vrot.slane %v7949, 2
        %v7951 = vadd.f32 %v7949, %v7950
        %v7952 = vrot.slane %v7951, 1
        %v7953 = vadd.f32 %v7951, %v7952
        %v7954 = vrot.slane %v7691, 4
        %v7955 = vadd.f32 %v7691, %v7954
        %v7956 = vrot.slane %v7955, 2
        %v7957 = vadd.f32 %v7955, %v7956
        %v7958 = vrot.slane %v7957, 1
        %v7959 = vadd.f32 %v7957, %v7958
        %v7960 = vrot.slane %v7692, 4
        %v7961 = vadd.f32 %v7692, %v7960
        %v7962 = vrot.slane %v7961, 2
        %v7963 = vadd.f32 %v7961, %v7962
        %v7964 = vrot.slane %v7963, 1
        %v7965 = vadd.f32 %v7963, %v7964
        %v7966 = vrot.slane %v7693, 4
        %v7967 = vadd.f32 %v7693, %v7966
        %v7968 = vrot.slane %v7967, 2
        %v7969 = vadd.f32 %v7967, %v7968
        %v7970 = vrot.slane %v7969, 1
        %v7971 = vadd.f32 %v7969, %v7970
        %v7972 = vrot.slane %v7694, 4
        %v7973 = vadd.f32 %v7694, %v7972
        %v7974 = vrot.slane %v7973, 2
        %v7975 = vadd.f32 %v7973, %v7974
        %v7976 = vrot.slane %v7975, 1
        %v7977 = vadd.f32 %v7975, %v7976
        %v7978 = vrot.slane %v7695, 4
        %v7979 = vadd.f32 %v7695, %v7978
        %v7980 = vrot.slane %v7979, 2
        %v7981 = vadd.f32 %v7979, %v7980
        %v7982 = vrot.slane %v7981, 1
        %v7983 = vadd.f32 %v7981, %v7982
        %v7984 = vrot.slane %v7696, 4
        %v7985 = vadd.f32 %v7696, %v7984
        %v7986 = vrot.slane %v7985, 2
        %v7987 = vadd.f32 %v7985, %v7986
        %v7988 = vrot.slane %v7987, 1
        %v7989 = vadd.f32 %v7987, %v7988
        %v7990 = vrot.slane %v7697, 4
        %v7991 = vadd.f32 %v7697, %v7990
        %v7992 = vrot.slane %v7991, 2
        %v7993 = vadd.f32 %v7991, %v7992
        %v7994 = vrot.slane %v7993, 1
        %v7995 = vadd.f32 %v7993, %v7994
        %v7996 = vrot.slane %v7698, 4
        %v7997 = vadd.f32 %v7698, %v7996
        %v7998 = vrot.slane %v7997, 2
        %v7999 = vadd.f32 %v7997, %v7998
        %v8000 = vrot.slane %v7999, 1
        %v8001 = vadd.f32 %v7999, %v8000
        %v8002 = vrot.slane %v7699, 4
        %v8003 = vadd.f32 %v7699, %v8002
        %v8004 = vrot.slane %v8003, 2
        %v8005 = vadd.f32 %v8003, %v8004
        %v8006 = vrot.slane %v8005, 1
        %v8007 = vadd.f32 %v8005, %v8006
        %v8008 = vrot.slane %v7700, 4
        %v8009 = vadd.f32 %v7700, %v8008
        %v8010 = vrot.slane %v8009, 2
        %v8011 = vadd.f32 %v8009, %v8010
        %v8012 = vrot.slane %v8011, 1
        %v8013 = vadd.f32 %v8011, %v8012
        %v8014 = vrot.slane %v7701, 4
        %v8015 = vadd.f32 %v7701, %v8014
        %v8016 = vrot.slane %v8015, 2
        %v8017 = vadd.f32 %v8015, %v8016
        %v8018 = vrot.slane %v8017, 1
        %v8019 = vadd.f32 %v8017, %v8018
        %v8020 = vrot.slane %v7702, 4
        %v8021 = vadd.f32 %v7702, %v8020
        %v8022 = vrot.slane %v8021, 2
        %v8023 = vadd.f32 %v8021, %v8022
        %v8024 = vrot.slane %v8023, 1
        %v8025 = vadd.f32 %v8023, %v8024
        %v8026 = vrot.slane %v7703, 4
        %v8027 = vadd.f32 %v7703, %v8026
        %v8028 = vrot.slane %v8027, 2
        %v8029 = vadd.f32 %v8027, %v8028
        %v8030 = vrot.slane %v8029, 1
        %v8031 = vadd.f32 %v8029, %v8030
        %v8032 = vrot.slane %v7704, 4
        %v8033 = vadd.f32 %v7704, %v8032
        %v8034 = vrot.slane %v8033, 2
        %v8035 = vadd.f32 %v8033, %v8034
        %v8036 = vrot.slane %v8035, 1
        %v8037 = vadd.f32 %v8035, %v8036
        %v8038 = vrot.slane %v7705, 4
        %v8039 = vadd.f32 %v7705, %v8038
        %v8040 = vrot.slane %v8039, 2
        %v8041 = vadd.f32 %v8039, %v8040
        %v8042 = vrot.slane %v8041, 1
        %v8043 = vadd.f32 %v8041, %v8042
        %v8044 = vrot.slane %v7706, 4
        %v8045 = vadd.f32 %v7706, %v8044
        %v8046 = vrot.slane %v8045, 2
        %v8047 = vadd.f32 %v8045, %v8046
        %v8048 = vrot.slane %v8047, 1
        %v8049 = vadd.f32 %v8047, %v8048
        %v8050 = vrot.slane %v7707, 4
        %v8051 = vadd.f32 %v7707, %v8050
        %v8052 = vrot.slane %v8051, 2
        %v8053 = vadd.f32 %v8051, %v8052
        %v8054 = vrot.slane %v8053, 1
        %v8055 = vadd.f32 %v8053, %v8054
        %v8056 = vrot.slane %v7708, 4
        %v8057 = vadd.f32 %v7708, %v8056
        %v8058 = vrot.slane %v8057, 2
        %v8059 = vadd.f32 %v8057, %v8058
        %v8060 = vrot.slane %v8059, 1
        %v8061 = vadd.f32 %v8059, %v8060
        %v8062 = vrot.slane %v7709, 4
        %v8063 = vadd.f32 %v7709, %v8062
        %v8064 = vrot.slane %v8063, 2
        %v8065 = vadd.f32 %v8063, %v8064
        %v8066 = vrot.slane %v8065, 1
        %v8067 = vadd.f32 %v8065, %v8066
        %v8068 = vrot.slane %v7710, 4
        %v8069 = vadd.f32 %v7710, %v8068
        %v8070 = vrot.slane %v8069, 2
        %v8071 = vadd.f32 %v8069, %v8070
        %v8072 = vrot.slane %v8071, 1
        %v8073 = vadd.f32 %v8071, %v8072
        %v8074 = vrot.slane %v7711, 4
        %v8075 = vadd.f32 %v7711, %v8074
        %v8076 = vrot.slane %v8075, 2
        %v8077 = vadd.f32 %v8075, %v8076
        %v8078 = vrot.slane %v8077, 1
        %v8079 = vadd.f32 %v8077, %v8078
        %v8080 = vrot.slane %v7712, 4
        %v8081 = vadd.f32 %v7712, %v8080
        %v8082 = vrot.slane %v8081, 2
        %v8083 = vadd.f32 %v8081, %v8082
        %v8084 = vrot.slane %v8083, 1
        %v8085 = vadd.f32 %v8083, %v8084
        %v8086 = vrot.slane %v7713, 4
        %v8087 = vadd.f32 %v7713, %v8086
        %v8088 = vrot.slane %v8087, 2
        %v8089 = vadd.f32 %v8087, %v8088
        %v8090 = vrot.slane %v8089, 1
        %v8091 = vadd.f32 %v8089, %v8090
        %v8092 = vrot.slane %v7714, 4
        %v8093 = vadd.f32 %v7714, %v8092
        %v8094 = vrot.slane %v8093, 2
        %v8095 = vadd.f32 %v8093, %v8094
        %v8096 = vrot.slane %v8095, 1
        %v8097 = vadd.f32 %v8095, %v8096
        %v8098 = vrot.slane %v7715, 4
        %v8099 = vadd.f32 %v7715, %v8098
        %v8100 = vrot.slane %v8099, 2
        %v8101 = vadd.f32 %v8099, %v8100
        %v8102 = vrot.slane %v8101, 1
        %v8103 = vadd.f32 %v8101, %v8102
        %v8104 = vrot.slane %v7716, 4
        %v8105 = vadd.f32 %v7716, %v8104
        %v8106 = vrot.slane %v8105, 2
        %v8107 = vadd.f32 %v8105, %v8106
        %v8108 = vrot.slane %v8107, 1
        %v8109 = vadd.f32 %v8107, %v8108
        %v8110 = vrot.slane %v7717, 4
        %v8111 = vadd.f32 %v7717, %v8110
        %v8112 = vrot.slane %v8111, 2
        %v8113 = vadd.f32 %v8111, %v8112
        %v8114 = vrot.slane %v8113, 1
        %v8115 = vadd.f32 %v8113, %v8114
        %v8116 = vrot.slane %v7718, 4
        %v8117 = vadd.f32 %v7718, %v8116
        %v8118 = vrot.slane %v8117, 2
        %v8119 = vadd.f32 %v8117, %v8118
        %v8120 = vrot.slane %v8119, 1
        %v8121 = vadd.f32 %v8119, %v8120
        %v8122 = vrot.slane %v7719, 4
        %v8123 = vadd.f32 %v7719, %v8122
        %v8124 = vrot.slane %v8123, 2
        %v8125 = vadd.f32 %v8123, %v8124
        %v8126 = vrot.slane %v8125, 1
        %v8127 = vadd.f32 %v8125, %v8126
        %v8128 = vrot.slane %v7720, 4
        %v8129 = vadd.f32 %v7720, %v8128
        %v8130 = vrot.slane %v8129, 2
        %v8131 = vadd.f32 %v8129, %v8130
        %v8132 = vrot.slane %v8131, 1
        %v8133 = vadd.f32 %v8131, %v8132
        %v8134 = vrot.slane %v7721, 4
        %v8135 = vadd.f32 %v7721, %v8134
        %v8136 = vrot.slane %v8135, 2
        %v8137 = vadd.f32 %v8135, %v8136
        %v8138 = vrot.slane %v8137, 1
        %v8139 = vadd.f32 %v8137, %v8138
        %v8140 = vrot.slane %v7722, 4
        %v8141 = vadd.f32 %v7722, %v8140
        %v8142 = vrot.slane %v8141, 2
        %v8143 = vadd.f32 %v8141, %v8142
        %v8144 = vrot.slane %v8143, 1
        %v8145 = vadd.f32 %v8143, %v8144
        %v8146 = vrot.slane %v7723, 4
        %v8147 = vadd.f32 %v7723, %v8146
        %v8148 = vrot.slane %v8147, 2
        %v8149 = vadd.f32 %v8147, %v8148
        %v8150 = vrot.slane %v8149, 1
        %v8151 = vadd.f32 %v8149, %v8150
        %v8152 = vrot.slane %v7724, 4
        %v8153 = vadd.f32 %v7724, %v8152
        %v8154 = vrot.slane %v8153, 2
        %v8155 = vadd.f32 %v8153, %v8154
        %v8156 = vrot.slane %v8155, 1
        %v8157 = vadd.f32 %v8155, %v8156
        %v8158 = vrot.slane %v7725, 4
        %v8159 = vadd.f32 %v7725, %v8158
        %v8160 = vrot.slane %v8159, 2
        %v8161 = vadd.f32 %v8159, %v8160
        %v8162 = vrot.slane %v8161, 1
        %v8163 = vadd.f32 %v8161, %v8162
        %v8164 = vrot.slane %v7726, 4
        %v8165 = vadd.f32 %v7726, %v8164
        %v8166 = vrot.slane %v8165, 2
        %v8167 = vadd.f32 %v8165, %v8166
        %v8168 = vrot.slane %v8167, 1
        %v8169 = vadd.f32 %v8167, %v8168
        %v8170 = vrot.slane %v7727, 4
        %v8171 = vadd.f32 %v7727, %v8170
        %v8172 = vrot.slane %v8171, 2
        %v8173 = vadd.f32 %v8171, %v8172
        %v8174 = vrot.slane %v8173, 1
        %v8175 = vadd.f32 %v8173, %v8174
        %v8176 = vrot.slane %v7728, 4
        %v8177 = vadd.f32 %v7728, %v8176
        %v8178 = vrot.slane %v8177, 2
        %v8179 = vadd.f32 %v8177, %v8178
        %v8180 = vrot.slane %v8179, 1
        %v8181 = vadd.f32 %v8179, %v8180
        %v8182 = vrot.slane %v7729, 4
        %v8183 = vadd.f32 %v7729, %v8182
        %v8184 = vrot.slane %v8183, 2
        %v8185 = vadd.f32 %v8183, %v8184
        %v8186 = vrot.slane %v8185, 1
        %v8187 = vadd.f32 %v8185, %v8186
        %v8188 = vrot.slane %v7730, 4
        %v8189 = vadd.f32 %v7730, %v8188
        %v8190 = vrot.slane %v8189, 2
        %v8191 = vadd.f32 %v8189, %v8190
        %v8192 = vrot.slane %v8191, 1
        %v8193 = vadd.f32 %v8191, %v8192
        %v8194 = vrot.slane %v7731, 4
        %v8195 = vadd.f32 %v7731, %v8194
        %v8196 = vrot.slane %v8195, 2
        %v8197 = vadd.f32 %v8195, %v8196
        %v8198 = vrot.slane %v8197, 1
        %v8199 = vadd.f32 %v8197, %v8198
        %v8200 = vrot.slane %v7732, 4
        %v8201 = vadd.f32 %v7732, %v8200
        %v8202 = vrot.slane %v8201, 2
        %v8203 = vadd.f32 %v8201, %v8202
        %v8204 = vrot.slane %v8203, 1
        %v8205 = vadd.f32 %v8203, %v8204
        %v8206 = vrot.slane %v7733, 4
        %v8207 = vadd.f32 %v7733, %v8206
        %v8208 = vrot.slane %v8207, 2
        %v8209 = vadd.f32 %v8207, %v8208
        %v8210 = vrot.slane %v8209, 1
        %v8211 = vadd.f32 %v8209, %v8210
        %v8212 = vrot.slane %v7734, 4
        %v8213 = vadd.f32 %v7734, %v8212
        %v8214 = vrot.slane %v8213, 2
        %v8215 = vadd.f32 %v8213, %v8214
        %v8216 = vrot.slane %v8215, 1
        %v8217 = vadd.f32 %v8215, %v8216
        %v8218 = vrot.slane %v7735, 4
        %v8219 = vadd.f32 %v7735, %v8218
        %v8220 = vrot.slane %v8219, 2
        %v8221 = vadd.f32 %v8219, %v8220
        %v8222 = vrot.slane %v8221, 1
        %v8223 = vadd.f32 %v8221, %v8222
        %v8224 = vrot.slane %v7736, 4
        %v8225 = vadd.f32 %v7736, %v8224
        %v8226 = vrot.slane %v8225, 2
        %v8227 = vadd.f32 %v8225, %v8226
        %v8228 = vrot.slane %v8227, 1
        %v8229 = vadd.f32 %v8227, %v8228
        %v8230 = vrot.slane %v7737, 4
        %v8231 = vadd.f32 %v7737, %v8230
        %v8232 = vrot.slane %v8231, 2
        %v8233 = vadd.f32 %v8231, %v8232
        %v8234 = vrot.slane %v8233, 1
        %v8235 = vadd.f32 %v8233, %v8234
        %v8236 = vrot.slane %v7738, 4
        %v8237 = vadd.f32 %v7738, %v8236
        %v8238 = vrot.slane %v8237, 2
        %v8239 = vadd.f32 %v8237, %v8238
        %v8240 = vrot.slane %v8239, 1
        %v8241 = vadd.f32 %v8239, %v8240
        %v8242 = vrot.slane %v7739, 4
        %v8243 = vadd.f32 %v7739, %v8242
        %v8244 = vrot.slane %v8243, 2
        %v8245 = vadd.f32 %v8243, %v8244
        %v8246 = vrot.slane %v8245, 1
        %v8247 = vadd.f32 %v8245, %v8246
        %v8248 = vrot.slane %v7740, 4
        %v8249 = vadd.f32 %v7740, %v8248
        %v8250 = vrot.slane %v8249, 2
        %v8251 = vadd.f32 %v8249, %v8250
        %v8252 = vrot.slane %v8251, 1
        %v8253 = vadd.f32 %v8251, %v8252
        %v8254 = vrot.slane %v7741, 4
        %v8255 = vadd.f32 %v7741, %v8254
        %v8256 = vrot.slane %v8255, 2
        %v8257 = vadd.f32 %v8255, %v8256
        %v8258 = vrot.slane %v8257, 1
        %v8259 = vadd.f32 %v8257, %v8258
        %v8260 = vrot.slane %v7742, 4
        %v8261 = vadd.f32 %v7742, %v8260
        %v8262 = vrot.slane %v8261, 2
        %v8263 = vadd.f32 %v8261, %v8262
        %v8264 = vrot.slane %v8263, 1
        %v8265 = vadd.f32 %v8263, %v8264
        %v8266 = vrot.slane %v7743, 4
        %v8267 = vadd.f32 %v7743, %v8266
        %v8268 = vrot.slane %v8267, 2
        %v8269 = vadd.f32 %v8267, %v8268
        %v8270 = vrot.slane %v8269, 1
        %v8271 = vadd.f32 %v8269, %v8270
        %v8272 = vrot.slane %v7744, 4
        %v8273 = vadd.f32 %v7744, %v8272
        %v8274 = vrot.slane %v8273, 2
        %v8275 = vadd.f32 %v8273, %v8274
        %v8276 = vrot.slane %v8275, 1
        %v8277 = vadd.f32 %v8275, %v8276
        %v8278 = vrot.slane %v7745, 4
        %v8279 = vadd.f32 %v7745, %v8278
        %v8280 = vrot.slane %v8279, 2
        %v8281 = vadd.f32 %v8279, %v8280
        %v8282 = vrot.slane %v8281, 1
        %v8283 = vadd.f32 %v8281, %v8282
        %v8284 = vrot.slane %v7746, 4
        %v8285 = vadd.f32 %v7746, %v8284
        %v8286 = vrot.slane %v8285, 2
        %v8287 = vadd.f32 %v8285, %v8286
        %v8288 = vrot.slane %v8287, 1
        %v8289 = vadd.f32 %v8287, %v8288
        %v8290 = vrot.slane %v7747, 4
        %v8291 = vadd.f32 %v7747, %v8290
        %v8292 = vrot.slane %v8291, 2
        %v8293 = vadd.f32 %v8291, %v8292
        %v8294 = vrot.slane %v8293, 1
        %v8295 = vadd.f32 %v8293, %v8294
        %v8296 = vrot.slane %v7748, 4
        %v8297 = vadd.f32 %v7748, %v8296
        %v8298 = vrot.slane %v8297, 2
        %v8299 = vadd.f32 %v8297, %v8298
        %v8300 = vrot.slane %v8299, 1
        %v8301 = vadd.f32 %v8299, %v8300
        %v8302 = vrot.slane %v7749, 4
        %v8303 = vadd.f32 %v7749, %v8302
        %v8304 = vrot.slane %v8303, 2
        %v8305 = vadd.f32 %v8303, %v8304
        %v8306 = vrot.slane %v8305, 1
        %v8307 = vadd.f32 %v8305, %v8306
        %v8308 = vrot.slane %v7750, 4
        %v8309 = vadd.f32 %v7750, %v8308
        %v8310 = vrot.slane %v8309, 2
        %v8311 = vadd.f32 %v8309, %v8310
        %v8312 = vrot.slane %v8311, 1
        %v8313 = vadd.f32 %v8311, %v8312
        %v8314 = vrot.slane %v7751, 4
        %v8315 = vadd.f32 %v7751, %v8314
        %v8316 = vrot.slane %v8315, 2
        %v8317 = vadd.f32 %v8315, %v8316
        %v8318 = vrot.slane %v8317, 1
        %v8319 = vadd.f32 %v8317, %v8318
        %v8320 = vrot.slane %v7752, 4
        %v8321 = vadd.f32 %v7752, %v8320
        %v8322 = vrot.slane %v8321, 2
        %v8323 = vadd.f32 %v8321, %v8322
        %v8324 = vrot.slane %v8323, 1
        %v8325 = vadd.f32 %v8323, %v8324
        %v8326 = vrot.slane %v7753, 4
        %v8327 = vadd.f32 %v7753, %v8326
        %v8328 = vrot.slane %v8327, 2
        %v8329 = vadd.f32 %v8327, %v8328
        %v8330 = vrot.slane %v8329, 1
        %v8331 = vadd.f32 %v8329, %v8330
        %v8332 = vrot.slane %v7754, 4
        %v8333 = vadd.f32 %v7754, %v8332
        %v8334 = vrot.slane %v8333, 2
        %v8335 = vadd.f32 %v8333, %v8334
        %v8336 = vrot.slane %v8335, 1
        %v8337 = vadd.f32 %v8335, %v8336
        %v8338 = vrot.slane %v7755, 4
        %v8339 = vadd.f32 %v7755, %v8338
        %v8340 = vrot.slane %v8339, 2
        %v8341 = vadd.f32 %v8339, %v8340
        %v8342 = vrot.slane %v8341, 1
        %v8343 = vadd.f32 %v8341, %v8342
        %v8344 = vrot.slane %v7756, 4
        %v8345 = vadd.f32 %v7756, %v8344
        %v8346 = vrot.slane %v8345, 2
        %v8347 = vadd.f32 %v8345, %v8346
        %v8348 = vrot.slane %v8347, 1
        %v8349 = vadd.f32 %v8347, %v8348
        %v8350 = vrot.slane %v7757, 4
        %v8351 = vadd.f32 %v7757, %v8350
        %v8352 = vrot.slane %v8351, 2
        %v8353 = vadd.f32 %v8351, %v8352
        %v8354 = vrot.slane %v8353, 1
        %v8355 = vadd.f32 %v8353, %v8354
        %v8356 = vrot.slane %v7758, 4
        %v8357 = vadd.f32 %v7758, %v8356
        %v8358 = vrot.slane %v8357, 2
        %v8359 = vadd.f32 %v8357, %v8358
        %v8360 = vrot.slane %v8359, 1
        %v8361 = vadd.f32 %v8359, %v8360
        %v8362 = vrot.slane %v7759, 4
        %v8363 = vadd.f32 %v7759, %v8362
        %v8364 = vrot.slane %v8363, 2
        %v8365 = vadd.f32 %v8363, %v8364
        %v8366 = vrot.slane %v8365, 1
        %v8367 = vadd.f32 %v8365, %v8366
        %v8368 = vrot.slane %v7760, 4
        %v8369 = vadd.f32 %v7760, %v8368
        %v8370 = vrot.slane %v8369, 2
        %v8371 = vadd.f32 %v8369, %v8370
        %v8372 = vrot.slane %v8371, 1
        %v8373 = vadd.f32 %v8371, %v8372
        %v8374 = vrot.slane %v7761, 4
        %v8375 = vadd.f32 %v7761, %v8374
        %v8376 = vrot.slane %v8375, 2
        %v8377 = vadd.f32 %v8375, %v8376
        %v8378 = vrot.slane %v8377, 1
        %v8379 = vadd.f32 %v8377, %v8378
        %v8380 = vrot.slane %v7762, 4
        %v8381 = vadd.f32 %v7762, %v8380
        %v8382 = vrot.slane %v8381, 2
        %v8383 = vadd.f32 %v8381, %v8382
        %v8384 = vrot.slane %v8383, 1
        %v8385 = vadd.f32 %v8383, %v8384
        %v8386 = vrot.slane %v7763, 4
        %v8387 = vadd.f32 %v7763, %v8386
        %v8388 = vrot.slane %v8387, 2
        %v8389 = vadd.f32 %v8387, %v8388
        %v8390 = vrot.slane %v8389, 1
        %v8391 = vadd.f32 %v8389, %v8390
        %v8392 = vrot.slane %v7764, 4
        %v8393 = vadd.f32 %v7764, %v8392
        %v8394 = vrot.slane %v8393, 2
        %v8395 = vadd.f32 %v8393, %v8394
        %v8396 = vrot.slane %v8395, 1
        %v8397 = vadd.f32 %v8395, %v8396
        %v8398 = vrot.slane %v7765, 4
        %v8399 = vadd.f32 %v7765, %v8398
        %v8400 = vrot.slane %v8399, 2
        %v8401 = vadd.f32 %v8399, %v8400
        %v8402 = vrot.slane %v8401, 1
        %v8403 = vadd.f32 %v8401, %v8402
        %v8404 = vrot.slane %v7766, 4
        %v8405 = vadd.f32 %v7766, %v8404
        %v8406 = vrot.slane %v8405, 2
        %v8407 = vadd.f32 %v8405, %v8406
        %v8408 = vrot.slane %v8407, 1
        %v8409 = vadd.f32 %v8407, %v8408
        %v8410 = vrot.slane %v7767, 4
        %v8411 = vadd.f32 %v7767, %v8410
        %v8412 = vrot.slane %v8411, 2
        %v8413 = vadd.f32 %v8411, %v8412
        %v8414 = vrot.slane %v8413, 1
        %v8415 = vadd.f32 %v8413, %v8414
        %v8416 = vrot.slane %v7768, 4
        %v8417 = vadd.f32 %v7768, %v8416
        %v8418 = vrot.slane %v8417, 2
        %v8419 = vadd.f32 %v8417, %v8418
        %v8420 = vrot.slane %v8419, 1
        %v8421 = vadd.f32 %v8419, %v8420
        %v8422 = vrot.slane %v7769, 4
        %v8423 = vadd.f32 %v7769, %v8422
        %v8424 = vrot.slane %v8423, 2
        %v8425 = vadd.f32 %v8423, %v8424
        %v8426 = vrot.slane %v8425, 1
        %v8427 = vadd.f32 %v8425, %v8426
        %v8428 = vrot.slane %v7770, 4
        %v8429 = vadd.f32 %v7770, %v8428
        %v8430 = vrot.slane %v8429, 2
        %v8431 = vadd.f32 %v8429, %v8430
        %v8432 = vrot.slane %v8431, 1
        %v8433 = vadd.f32 %v8431, %v8432
        %v8434 = vrot.slane %v7771, 4
        %v8435 = vadd.f32 %v7771, %v8434
        %v8436 = vrot.slane %v8435, 2
        %v8437 = vadd.f32 %v8435, %v8436
        %v8438 = vrot.slane %v8437, 1
        %v8439 = vadd.f32 %v8437, %v8438
        %v8440 = vrot.slane %v7772, 4
        %v8441 = vadd.f32 %v7772, %v8440
        %v8442 = vrot.slane %v8441, 2
        %v8443 = vadd.f32 %v8441, %v8442
        %v8444 = vrot.slane %v8443, 1
        %v8445 = vadd.f32 %v8443, %v8444
        %v8446 = vrot.slane %v7773, 4
        %v8447 = vadd.f32 %v7773, %v8446
        %v8448 = vrot.slane %v8447, 2
        %v8449 = vadd.f32 %v8447, %v8448
        %v8450 = vrot.slane %v8449, 1
        %v8451 = vadd.f32 %v8449, %v8450
        %v8452 = vrot.slane %v7774, 4
        %v8453 = vadd.f32 %v7774, %v8452
        %v8454 = vrot.slane %v8453, 2
        %v8455 = vadd.f32 %v8453, %v8454
        %v8456 = vrot.slane %v8455, 1
        %v8457 = vadd.f32 %v8455, %v8456
        %v8458 = vrot.slane %v7775, 4
        %v8459 = vadd.f32 %v7775, %v8458
        %v8460 = vrot.slane %v8459, 2
        %v8461 = vadd.f32 %v8459, %v8460
        %v8462 = vrot.slane %v8461, 1
        %v8463 = vadd.f32 %v8461, %v8462
        %v8464 = vrot.slane %v7776, 4
        %v8465 = vadd.f32 %v7776, %v8464
        %v8466 = vrot.slane %v8465, 2
        %v8467 = vadd.f32 %v8465, %v8466
        %v8468 = vrot.slane %v8467, 1
        %v8469 = vadd.f32 %v8467, %v8468
        %v8470 = vrot.slane %v7777, 4
        %v8471 = vadd.f32 %v7777, %v8470
        %v8472 = vrot.slane %v8471, 2
        %v8473 = vadd.f32 %v8471, %v8472
        %v8474 = vrot.slane %v8473, 1
        %v8475 = vadd.f32 %v8473, %v8474
        %v8476 = vrot.slane %v7778, 4
        %v8477 = vadd.f32 %v7778, %v8476
        %v8478 = vrot.slane %v8477, 2
        %v8479 = vadd.f32 %v8477, %v8478
        %v8480 = vrot.slane %v8479, 1
        %v8481 = vadd.f32 %v8479, %v8480
        %v8482 = vrot.slane %v7779, 4
        %v8483 = vadd.f32 %v7779, %v8482
        %v8484 = vrot.slane %v8483, 2
        %v8485 = vadd.f32 %v8483, %v8484
        %v8486 = vrot.slane %v8485, 1
        %v8487 = vadd.f32 %v8485, %v8486
        %v8488 = vrot.slane %v7780, 4
        %v8489 = vadd.f32 %v7780, %v8488
        %v8490 = vrot.slane %v8489, 2
        %v8491 = vadd.f32 %v8489, %v8490
        %v8492 = vrot.slane %v8491, 1
        %v8493 = vadd.f32 %v8491, %v8492
        %v8494 = vrot.slane %v7781, 4
        %v8495 = vadd.f32 %v7781, %v8494
        %v8496 = vrot.slane %v8495, 2
        %v8497 = vadd.f32 %v8495, %v8496
        %v8498 = vrot.slane %v8497, 1
        %v8499 = vadd.f32 %v8497, %v8498
        %v8500 = vrot.slane %v7782, 4
        %v8501 = vadd.f32 %v7782, %v8500
        %v8502 = vrot.slane %v8501, 2
        %v8503 = vadd.f32 %v8501, %v8502
        %v8504 = vrot.slane %v8503, 1
        %v8505 = vadd.f32 %v8503, %v8504
        %v8506 = vrot.slane %v7783, 4
        %v8507 = vadd.f32 %v7783, %v8506
        %v8508 = vrot.slane %v8507, 2
        %v8509 = vadd.f32 %v8507, %v8508
        %v8510 = vrot.slane %v8509, 1
        %v8511 = vadd.f32 %v8509, %v8510
        %v8512 = vrot.slane %v7784, 4
        %v8513 = vadd.f32 %v7784, %v8512
        %v8514 = vrot.slane %v8513, 2
        %v8515 = vadd.f32 %v8513, %v8514
        %v8516 = vrot.slane %v8515, 1
        %v8517 = vadd.f32 %v8515, %v8516
        %v8518 = vrot.slane %v7785, 4
        %v8519 = vadd.f32 %v7785, %v8518
        %v8520 = vrot.slane %v8519, 2
        %v8521 = vadd.f32 %v8519, %v8520
        %v8522 = vrot.slane %v8521, 1
        %v8523 = vadd.f32 %v8521, %v8522
        %v8524 = vrot.slane %v7786, 4
        %v8525 = vadd.f32 %v7786, %v8524
        %v8526 = vrot.slane %v8525, 2
        %v8527 = vadd.f32 %v8525, %v8526
        %v8528 = vrot.slane %v8527, 1
        %v8529 = vadd.f32 %v8527, %v8528
        %v8530 = vrot.slane %v7787, 4
        %v8531 = vadd.f32 %v7787, %v8530
        %v8532 = vrot.slane %v8531, 2
        %v8533 = vadd.f32 %v8531, %v8532
        %v8534 = vrot.slane %v8533, 1
        %v8535 = vadd.f32 %v8533, %v8534
        %v8536 = vrot.slane %v7788, 4
        %v8537 = vadd.f32 %v7788, %v8536
        %v8538 = vrot.slane %v8537, 2
        %v8539 = vadd.f32 %v8537, %v8538
        %v8540 = vrot.slane %v8539, 1
        %v8541 = vadd.f32 %v8539, %v8540
        %v8542 = vrot.slane %v7789, 4
        %v8543 = vadd.f32 %v7789, %v8542
        %v8544 = vrot.slane %v8543, 2
        %v8545 = vadd.f32 %v8543, %v8544
        %v8546 = vrot.slane %v8545, 1
        %v8547 = vadd.f32 %v8545, %v8546
        %v8548 = vrot.slane %v7790, 4
        %v8549 = vadd.f32 %v7790, %v8548
        %v8550 = vrot.slane %v8549, 2
        %v8551 = vadd.f32 %v8549, %v8550
        %v8552 = vrot.slane %v8551, 1
        %v8553 = vadd.f32 %v8551, %v8552
        %v8554 = vrot.slane %v7791, 4
        %v8555 = vadd.f32 %v7791, %v8554
        %v8556 = vrot.slane %v8555, 2
        %v8557 = vadd.f32 %v8555, %v8556
        %v8558 = vrot.slane %v8557, 1
        %v8559 = vadd.f32 %v8557, %v8558
        %v8560 = vmul.f32 %v7797, 0.125
        %v8561 = vmul.f32 %v7803, 0.125
        %v8562 = vmul.f32 %v7809, 0.125
        %v8563 = vmul.f32 %v7815, 0.125
        %v8564 = vmul.f32 %v7821, 0.125
        %v8565 = vmul.f32 %v7827, 0.125
        %v8566 = vmul.f32 %v7833, 0.125
        %v8567 = vmul.f32 %v7839, 0.125
        %v8568 = vmul.f32 %v7845, 0.125
        %v8569 = vmul.f32 %v7851, 0.125
        %v8570 = vmul.f32 %v7857, 0.125
        %v8571 = vmul.f32 %v7863, 0.125
        %v8572 = vmul.f32 %v7869, 0.125
        %v8573 = vmul.f32 %v7875, 0.125
        %v8574 = vmul.f32 %v7881, 0.125
        %v8575 = vmul.f32 %v7887, 0.125
        %v8576 = vmul.f32 %v7893, 0.125
        %v8577 = vmul.f32 %v7899, 0.125
        %v8578 = vmul.f32 %v7905, 0.125
        %v8579 = vmul.f32 %v7911, 0.125
        %v8580 = vmul.f32 %v7917, 0.125
        %v8581 = vmul.f32 %v7923, 0.125
        %v8582 = vmul.f32 %v7929, 0.125
        %v8583 = vmul.f32 %v7935, 0.125
        %v8584 = vmul.f32 %v7941, 0.125
        %v8585 = vmul.f32 %v7947, 0.125
        %v8586 = vmul.f32 %v7953, 0.125
        %v8587 = vmul.f32 %v7959, 0.125
        %v8588 = vmul.f32 %v7965, 0.125
        %v8589 = vmul.f32 %v7971, 0.125
        %v8590 = vmul.f32 %v7977, 0.125
        %v8591 = vmul.f32 %v7983, 0.125
        %v8592 = vmul.f32 %v7989, 0.125
        %v8593 = vmul.f32 %v7995, 0.125
        %v8594 = vmul.f32 %v8001, 0.125
        %v8595 = vmul.f32 %v8007, 0.125
        %v8596 = vmul.f32 %v8013, 0.125
        %v8597 = vmul.f32 %v8019, 0.125
        %v8598 = vmul.f32 %v8025, 0.125
        %v8599 = vmul.f32 %v8031, 0.125
        %v8600 = vmul.f32 %v8037, 0.125
        %v8601 = vmul.f32 %v8043, 0.125
        %v8602 = vmul.f32 %v8049, 0.125
        %v8603 = vmul.f32 %v8055, 0.125
        %v8604 = vmul.f32 %v8061, 0.125
        %v8605 = vmul.f32 %v8067, 0.125
        %v8606 = vmul.f32 %v8073, 0.125
        %v8607 = vmul.f32 %v8079, 0.125
        %v8608 = vmul.f32 %v8085, 0.125
        %v8609 = vmul.f32 %v8091, 0.125
        %v8610 = vmul.f32 %v8097, 0.125
        %v8611 = vmul.f32 %v8103, 0.125
        %v8612 = vmul.f32 %v8109, 0.125
        %v8613 = vmul.f32 %v8115, 0.125
        %v8614 = vmul.f32 %v8121, 0.125
        %v8615 = vmul.f32 %v8127, 0.125
        %v8616 = vmul.f32 %v8133, 0.125
        %v8617 = vmul.f32 %v8139, 0.125
        %v8618 = vmul.f32 %v8145, 0.125
        %v8619 = vmul.f32 %v8151, 0.125
        %v8620 = vmul.f32 %v8157, 0.125
        %v8621 = vmul.f32 %v8163, 0.125
        %v8622 = vmul.f32 %v8169, 0.125
        %v8623 = vmul.f32 %v8175, 0.125
        %v8624 = vmul.f32 %v8181, 0.125
        %v8625 = vmul.f32 %v8187, 0.125
        %v8626 = vmul.f32 %v8193, 0.125
        %v8627 = vmul.f32 %v8199, 0.125
        %v8628 = vmul.f32 %v8205, 0.125
        %v8629 = vmul.f32 %v8211, 0.125
        %v8630 = vmul.f32 %v8217, 0.125
        %v8631 = vmul.f32 %v8223, 0.125
        %v8632 = vmul.f32 %v8229, 0.125
        %v8633 = vmul.f32 %v8235, 0.125
        %v8634 = vmul.f32 %v8241, 0.125
        %v8635 = vmul.f32 %v8247, 0.125
        %v8636 = vmul.f32 %v8253, 0.125
        %v8637 = vmul.f32 %v8259, 0.125
        %v8638 = vmul.f32 %v8265, 0.125
        %v8639 = vmul.f32 %v8271, 0.125
        %v8640 = vmul.f32 %v8277, 0.125
        %v8641 = vmul.f32 %v8283, 0.125
        %v8642 = vmul.f32 %v8289, 0.125
        %v8643 = vmul.f32 %v8295, 0.125
        %v8644 = vmul.f32 %v8301, 0.125
        %v8645 = vmul.f32 %v8307, 0.125
        %v8646 = vmul.f32 %v8313, 0.125
        %v8647 = vmul.f32 %v8319, 0.125
        %v8648 = vmul.f32 %v8325, 0.125
        %v8649 = vmul.f32 %v8331, 0.125
        %v8650 = vmul.f32 %v8337, 0.125
        %v8651 = vmul.f32 %v8343, 0.125
        %v8652 = vmul.f32 %v8349, 0.125
        %v8653 = vmul.f32 %v8355, 0.125
        %v8654 = vmul.f32 %v8361, 0.125
        %v8655 = vmul.f32 %v8367, 0.125
        %v8656 = vmul.f32 %v8373, 0.125
        %v8657 = vmul.f32 %v8379, 0.125
        %v8658 = vmul.f32 %v8385, 0.125
        %v8659 = vmul.f32 %v8391, 0.125
        %v8660 = vmul.f32 %v8397, 0.125
        %v8661 = vmul.f32 %v8403, 0.125
        %v8662 = vmul.f32 %v8409, 0.125
        %v8663 = vmul.f32 %v8415, 0.125
        %v8664 = vmul.f32 %v8421, 0.125
        %v8665 = vmul.f32 %v8427, 0.125
        %v8666 = vmul.f32 %v8433, 0.125
        %v8667 = vmul.f32 %v8439, 0.125
        %v8668 = vmul.f32 %v8445, 0.125
        %v8669 = vmul.f32 %v8451, 0.125
        %v8670 = vmul.f32 %v8457, 0.125
        %v8671 = vmul.f32 %v8463, 0.125
        %v8672 = vmul.f32 %v8469, 0.125
        %v8673 = vmul.f32 %v8475, 0.125
        %v8674 = vmul.f32 %v8481, 0.125
        %v8675 = vmul.f32 %v8487, 0.125
        %v8676 = vmul.f32 %v8493, 0.125
        %v8677 = vmul.f32 %v8499, 0.125
        %v8678 = vmul.f32 %v8505, 0.125
        %v8679 = vmul.f32 %v8511, 0.125
        %v8680 = vmul.f32 %v8517, 0.125
        %v8681 = vmul.f32 %v8523, 0.125
        %v8682 = vmul.f32 %v8529, 0.125
        %v8683 = vmul.f32 %v8535, 0.125
        %v8684 = vmul.f32 %v8541, 0.125
        %v8685 = vmul.f32 %v8547, 0.125
        %v8686 = vmul.f32 %v8553, 0.125
        %v8687 = vmul.f32 %v8559, 0.125
        %v8688 = vadd.f32 %v8560, 0.8
        %v8689 = vadd.f32 %v8561, 0.8
        %v8690 = vadd.f32 %v8562, 0.8
        %v8691 = vadd.f32 %v8563, 0.8
        %v8692 = vadd.f32 %v8564, 0.8
        %v8693 = vadd.f32 %v8565, 0.8
        %v8694 = vadd.f32 %v8566, 0.8
        %v8695 = vadd.f32 %v8567, 0.8
        %v8696 = vadd.f32 %v8568, 0.8
        %v8697 = vadd.f32 %v8569, 0.8
        %v8698 = vadd.f32 %v8570, 0.8
        %v8699 = vadd.f32 %v8571, 0.8
        %v8700 = vadd.f32 %v8572, 0.8
        %v8701 = vadd.f32 %v8573, 0.8
        %v8702 = vadd.f32 %v8574, 0.8
        %v8703 = vadd.f32 %v8575, 0.8
        %v8704 = vadd.f32 %v8576, 0.8
        %v8705 = vadd.f32 %v8577, 0.8
        %v8706 = vadd.f32 %v8578, 0.8
        %v8707 = vadd.f32 %v8579, 0.8
        %v8708 = vadd.f32 %v8580, 0.8
        %v8709 = vadd.f32 %v8581, 0.8
        %v8710 = vadd.f32 %v8582, 0.8
        %v8711 = vadd.f32 %v8583, 0.8
        %v8712 = vadd.f32 %v8584, 0.8
        %v8713 = vadd.f32 %v8585, 0.8
        %v8714 = vadd.f32 %v8586, 0.8
        %v8715 = vadd.f32 %v8587, 0.8
        %v8716 = vadd.f32 %v8588, 0.8
        %v8717 = vadd.f32 %v8589, 0.8
        %v8718 = vadd.f32 %v8590, 0.8
        %v8719 = vadd.f32 %v8591, 0.8
        %v8720 = vadd.f32 %v8592, 0.8
        %v8721 = vadd.f32 %v8593, 0.8
        %v8722 = vadd.f32 %v8594, 0.8
        %v8723 = vadd.f32 %v8595, 0.8
        %v8724 = vadd.f32 %v8596, 0.8
        %v8725 = vadd.f32 %v8597, 0.8
        %v8726 = vadd.f32 %v8598, 0.8
        %v8727 = vadd.f32 %v8599, 0.8
        %v8728 = vadd.f32 %v8600, 0.8
        %v8729 = vadd.f32 %v8601, 0.8
        %v8730 = vadd.f32 %v8602, 0.8
        %v8731 = vadd.f32 %v8603, 0.8
        %v8732 = vadd.f32 %v8604, 0.8
        %v8733 = vadd.f32 %v8605, 0.8
        %v8734 = vadd.f32 %v8606, 0.8
        %v8735 = vadd.f32 %v8607, 0.8
        %v8736 = vadd.f32 %v8608, 0.8
        %v8737 = vadd.f32 %v8609, 0.8
        %v8738 = vadd.f32 %v8610, 0.8
        %v8739 = vadd.f32 %v8611, 0.8
        %v8740 = vadd.f32 %v8612, 0.8
        %v8741 = vadd.f32 %v8613, 0.8
        %v8742 = vadd.f32 %v8614, 0.8
        %v8743 = vadd.f32 %v8615, 0.8
        %v8744 = vadd.f32 %v8616, 0.8
        %v8745 = vadd.f32 %v8617, 0.8
        %v8746 = vadd.f32 %v8618, 0.8
        %v8747 = vadd.f32 %v8619, 0.8
        %v8748 = vadd.f32 %v8620, 0.8
        %v8749 = vadd.f32 %v8621, 0.8
        %v8750 = vadd.f32 %v8622, 0.8
        %v8751 = vadd.f32 %v8623, 0.8
        %v8752 = vadd.f32 %v8624, 0.8
        %v8753 = vadd.f32 %v8625, 0.8
        %v8754 = vadd.f32 %v8626, 0.8
        %v8755 = vadd.f32 %v8627, 0.8
        %v8756 = vadd.f32 %v8628, 0.8
        %v8757 = vadd.f32 %v8629, 0.8
        %v8758 = vadd.f32 %v8630, 0.8
        %v8759 = vadd.f32 %v8631, 0.8
        %v8760 = vadd.f32 %v8632, 0.8
        %v8761 = vadd.f32 %v8633, 0.8
        %v8762 = vadd.f32 %v8634, 0.8
        %v8763 = vadd.f32 %v8635, 0.8
        %v8764 = vadd.f32 %v8636, 0.8
        %v8765 = vadd.f32 %v8637, 0.8
        %v8766 = vadd.f32 %v8638, 0.8
        %v8767 = vadd.f32 %v8639, 0.8
        %v8768 = vadd.f32 %v8640, 0.8
        %v8769 = vadd.f32 %v8641, 0.8
        %v8770 = vadd.f32 %v8642, 0.8
        %v8771 = vadd.f32 %v8643, 0.8
        %v8772 = vadd.f32 %v8644, 0.8
        %v8773 = vadd.f32 %v8645, 0.8
        %v8774 = vadd.f32 %v8646, 0.8
        %v8775 = vadd.f32 %v8647, 0.8
        %v8776 = vadd.f32 %v8648, 0.8
        %v8777 = vadd.f32 %v8649, 0.8
        %v8778 = vadd.f32 %v8650, 0.8
        %v8779 = vadd.f32 %v8651, 0.8
        %v8780 = vadd.f32 %v8652, 0.8
        %v8781 = vadd.f32 %v8653, 0.8
        %v8782 = vadd.f32 %v8654, 0.8
        %v8783 = vadd.f32 %v8655, 0.8
        %v8784 = vadd.f32 %v8656, 0.8
        %v8785 = vadd.f32 %v8657, 0.8
        %v8786 = vadd.f32 %v8658, 0.8
        %v8787 = vadd.f32 %v8659, 0.8
        %v8788 = vadd.f32 %v8660, 0.8
        %v8789 = vadd.f32 %v8661, 0.8
        %v8790 = vadd.f32 %v8662, 0.8
        %v8791 = vadd.f32 %v8663, 0.8
        %v8792 = vadd.f32 %v8664, 0.8
        %v8793 = vadd.f32 %v8665, 0.8
        %v8794 = vadd.f32 %v8666, 0.8
        %v8795 = vadd.f32 %v8667, 0.8
        %v8796 = vadd.f32 %v8668, 0.8
        %v8797 = vadd.f32 %v8669, 0.8
        %v8798 = vadd.f32 %v8670, 0.8
        %v8799 = vadd.f32 %v8671, 0.8
        %v8800 = vadd.f32 %v8672, 0.8
        %v8801 = vadd.f32 %v8673, 0.8
        %v8802 = vadd.f32 %v8674, 0.8
        %v8803 = vadd.f32 %v8675, 0.8
        %v8804 = vadd.f32 %v8676, 0.8
        %v8805 = vadd.f32 %v8677, 0.8
        %v8806 = vadd.f32 %v8678, 0.8
        %v8807 = vadd.f32 %v8679, 0.8
        %v8808 = vadd.f32 %v8680, 0.8
        %v8809 = vadd.f32 %v8681, 0.8
        %v8810 = vadd.f32 %v8682, 0.8
        %v8811 = vadd.f32 %v8683, 0.8
        %v8812 = vadd.f32 %v8684, 0.8
        %v8813 = vadd.f32 %v8685, 0.8
        %v8814 = vadd.f32 %v8686, 0.8
        %v8815 = vadd.f32 %v8687, 0.8
        %v8816 = vrsqrt.pop %v8688
        %v8817 = vrsqrt.pop %v8689
        %v8818 = vrsqrt.pop %v8690
        %v8819 = vrsqrt.pop %v8691
        %v8820 = vrsqrt.pop %v8692
        %v8821 = vrsqrt.pop %v8693
        %v8822 = vrsqrt.pop %v8694
        %v8823 = vrsqrt.pop %v8695
        %v8824 = vrsqrt.pop %v8696
        %v8825 = vrsqrt.pop %v8697
        %v8826 = vrsqrt.pop %v8698
        %v8827 = vrsqrt.pop %v8699
        %v8828 = vrsqrt.pop %v8700
        %v8829 = vrsqrt.pop %v8701
        %v8830 = vrsqrt.pop %v8702
        %v8831 = vrsqrt.pop %v8703
        %v8832 = vrsqrt.pop %v8704
        %v8833 = vrsqrt.pop %v8705
        %v8834 = vrsqrt.pop %v8706
        %v8835 = vrsqrt.pop %v8707
        %v8836 = vrsqrt.pop %v8708
        %v8837 = vrsqrt.pop %v8709
        %v8838 = vrsqrt.pop %v8710
        %v8839 = vrsqrt.pop %v8711
        %v8840 = vrsqrt.pop %v8712
        %v8841 = vrsqrt.pop %v8713
        %v8842 = vrsqrt.pop %v8714
        %v8843 = vrsqrt.pop %v8715
        %v8844 = vrsqrt.pop %v8716
        %v8845 = vrsqrt.pop %v8717
        %v8846 = vrsqrt.pop %v8718
        %v8847 = vrsqrt.pop %v8719
        %v8848 = vrsqrt.pop %v8720
        %v8849 = vrsqrt.pop %v8721
        %v8850 = vrsqrt.pop %v8722
        %v8851 = vrsqrt.pop %v8723
        %v8852 = vrsqrt.pop %v8724
        %v8853 = vrsqrt.pop %v8725
        %v8854 = vrsqrt.pop %v8726
        %v8855 = vrsqrt.pop %v8727
        %v8856 = vrsqrt.pop %v8728
        %v8857 = vrsqrt.pop %v8729
        %v8858 = vrsqrt.pop %v8730
        %v8859 = vrsqrt.pop %v8731
        %v8860 = vrsqrt.pop %v8732
        %v8861 = vrsqrt.pop %v8733
        %v8862 = vrsqrt.pop %v8734
        %v8863 = vrsqrt.pop %v8735
        %v8864 = vrsqrt.pop %v8736
        %v8865 = vrsqrt.pop %v8737
        %v8866 = vrsqrt.pop %v8738
        %v8867 = vrsqrt.pop %v8739
        %v8868 = vrsqrt.pop %v8740
        %v8869 = vrsqrt.pop %v8741
        %v8870 = vrsqrt.pop %v8742
        %v8871 = vrsqrt.pop %v8743
        %v8872 = vrsqrt.pop %v8744
        %v8873 = vrsqrt.pop %v8745
        %v8874 = vrsqrt.pop %v8746
        %v8875 = vrsqrt.pop %v8747
        %v8876 = vrsqrt.pop %v8748
        %v8877 = vrsqrt.pop %v8749
        %v8878 = vrsqrt.pop %v8750
        %v8879 = vrsqrt.pop %v8751
        %v8880 = vrsqrt.pop %v8752
        %v8881 = vrsqrt.pop %v8753
        %v8882 = vrsqrt.pop %v8754
        %v8883 = vrsqrt.pop %v8755
        %v8884 = vrsqrt.pop %v8756
        %v8885 = vrsqrt.pop %v8757
        %v8886 = vrsqrt.pop %v8758
        %v8887 = vrsqrt.pop %v8759
        %v8888 = vrsqrt.pop %v8760
        %v8889 = vrsqrt.pop %v8761
        %v8890 = vrsqrt.pop %v8762
        %v8891 = vrsqrt.pop %v8763
        %v8892 = vrsqrt.pop %v8764
        %v8893 = vrsqrt.pop %v8765
        %v8894 = vrsqrt.pop %v8766
        %v8895 = vrsqrt.pop %v8767
        %v8896 = vrsqrt.pop %v8768
        %v8897 = vrsqrt.pop %v8769
        %v8898 = vrsqrt.pop %v8770
        %v8899 = vrsqrt.pop %v8771
        %v8900 = vrsqrt.pop %v8772
        %v8901 = vrsqrt.pop %v8773
        %v8902 = vrsqrt.pop %v8774
        %v8903 = vrsqrt.pop %v8775
        %v8904 = vrsqrt.pop %v8776
        %v8905 = vrsqrt.pop %v8777
        %v8906 = vrsqrt.pop %v8778
        %v8907 = vrsqrt.pop %v8779
        %v8908 = vrsqrt.pop %v8780
        %v8909 = vrsqrt.pop %v8781
        %v8910 = vrsqrt.pop %v8782
        %v8911 = vrsqrt.pop %v8783
        %v8912 = vrsqrt.pop %v8784
        %v8913 = vrsqrt.pop %v8785
        %v8914 = vrsqrt.pop %v8786
        %v8915 = vrsqrt.pop %v8787
        %v8916 = vrsqrt.pop %v8788
        %v8917 = vrsqrt.pop %v8789
        %v8918 = vrsqrt.pop %v8790
        %v8919 = vrsqrt.pop %v8791
        %v8920 = vrsqrt.pop %v8792
        %v8921 = vrsqrt.pop %v8793
        %v8922 = vrsqrt.pop %v8794
        %v8923 = vrsqrt.pop %v8795
        %v8924 = vrsqrt.pop %v8796
        %v8925 = vrsqrt.pop %v8797
        %v8926 = vrsqrt.pop %v8798
        %v8927 = vrsqrt.pop %v8799
        %v8928 = vrsqrt.pop %v8800
        %v8929 = vrsqrt.pop %v8801
        %v8930 = vrsqrt.pop %v8802
        %v8931 = vrsqrt.pop %v8803
        %v8932 = vrsqrt.pop %v8804
        %v8933 = vrsqrt.pop %v8805
        %v8934 = vrsqrt.pop %v8806
        %v8935 = vrsqrt.pop %v8807
        %v8936 = vrsqrt.pop %v8808
        %v8937 = vrsqrt.pop %v8809
        %v8938 = vrsqrt.pop %v8810
        %v8939 = vrsqrt.pop %v8811
        %v8940 = vrsqrt.pop %v8812
        %v8941 = vrsqrt.pop %v8813
        %v8942 = vrsqrt.pop %v8814
        %v8943 = vrsqrt.pop %v8815
        %v8944 = vmul.f32 %v7536, %v8816
        %v8945 = vmul.f32 %v7537, %v8817
        %v8946 = vmul.f32 %v7538, %v8818
        %v8947 = vmul.f32 %v7539, %v8819
        %v8948 = vmul.f32 %v7540, %v8820
        %v8949 = vmul.f32 %v7541, %v8821
        %v8950 = vmul.f32 %v7542, %v8822
        %v8951 = vmul.f32 %v7543, %v8823
        %v8952 = vmul.f32 %v7544, %v8824
        %v8953 = vmul.f32 %v7545, %v8825
        %v8954 = vmul.f32 %v7546, %v8826
        %v8955 = vmul.f32 %v7547, %v8827
        %v8956 = vmul.f32 %v7548, %v8828
        %v8957 = vmul.f32 %v7549, %v8829
        %v8958 = vmul.f32 %v7550, %v8830
        %v8959 = vmul.f32 %v7551, %v8831
        %v8960 = vmul.f32 %v7552, %v8832
        %v8961 = vmul.f32 %v7553, %v8833
        %v8962 = vmul.f32 %v7554, %v8834
        %v8963 = vmul.f32 %v7555, %v8835
        %v8964 = vmul.f32 %v7556, %v8836
        %v8965 = vmul.f32 %v7557, %v8837
        %v8966 = vmul.f32 %v7558, %v8838
        %v8967 = vmul.f32 %v7559, %v8839
        %v8968 = vmul.f32 %v7560, %v8840
        %v8969 = vmul.f32 %v7561, %v8841
        %v8970 = vmul.f32 %v7562, %v8842
        %v8971 = vmul.f32 %v7563, %v8843
        %v8972 = vmul.f32 %v7564, %v8844
        %v8973 = vmul.f32 %v7565, %v8845
        %v8974 = vmul.f32 %v7566, %v8846
        %v8975 = vmul.f32 %v7567, %v8847
        %v8976 = vmul.f32 %v7568, %v8848
        %v8977 = vmul.f32 %v7569, %v8849
        %v8978 = vmul.f32 %v7570, %v8850
        %v8979 = vmul.f32 %v7571, %v8851
        %v8980 = vmul.f32 %v7572, %v8852
        %v8981 = vmul.f32 %v7573, %v8853
        %v8982 = vmul.f32 %v7574, %v8854
        %v8983 = vmul.f32 %v7575, %v8855
        %v8984 = vmul.f32 %v7576, %v8856
        %v8985 = vmul.f32 %v7577, %v8857
        %v8986 = vmul.f32 %v7578, %v8858
        %v8987 = vmul.f32 %v7579, %v8859
        %v8988 = vmul.f32 %v7580, %v8860
        %v8989 = vmul.f32 %v7581, %v8861
        %v8990 = vmul.f32 %v7582, %v8862
        %v8991 = vmul.f32 %v7583, %v8863
        %v8992 = vmul.f32 %v7584, %v8864
        %v8993 = vmul.f32 %v7585, %v8865
        %v8994 = vmul.f32 %v7586, %v8866
        %v8995 = vmul.f32 %v7587, %v8867
        %v8996 = vmul.f32 %v7588, %v8868
        %v8997 = vmul.f32 %v7589, %v8869
        %v8998 = vmul.f32 %v7590, %v8870
        %v8999 = vmul.f32 %v7591, %v8871
        %v9000 = vmul.f32 %v7592, %v8872
        %v9001 = vmul.f32 %v7593, %v8873
        %v9002 = vmul.f32 %v7594, %v8874
        %v9003 = vmul.f32 %v7595, %v8875
        %v9004 = vmul.f32 %v7596, %v8876
        %v9005 = vmul.f32 %v7597, %v8877
        %v9006 = vmul.f32 %v7598, %v8878
        %v9007 = vmul.f32 %v7599, %v8879
        %v9008 = vmul.f32 %v7600, %v8880
        %v9009 = vmul.f32 %v7601, %v8881
        %v9010 = vmul.f32 %v7602, %v8882
        %v9011 = vmul.f32 %v7603, %v8883
        %v9012 = vmul.f32 %v7604, %v8884
        %v9013 = vmul.f32 %v7605, %v8885
        %v9014 = vmul.f32 %v7606, %v8886
        %v9015 = vmul.f32 %v7607, %v8887
        %v9016 = vmul.f32 %v7608, %v8888
        %v9017 = vmul.f32 %v7609, %v8889
        %v9018 = vmul.f32 %v7610, %v8890
        %v9019 = vmul.f32 %v7611, %v8891
        %v9020 = vmul.f32 %v7612, %v8892
        %v9021 = vmul.f32 %v7613, %v8893
        %v9022 = vmul.f32 %v7614, %v8894
        %v9023 = vmul.f32 %v7615, %v8895
        %v9024 = vmul.f32 %v7616, %v8896
        %v9025 = vmul.f32 %v7617, %v8897
        %v9026 = vmul.f32 %v7618, %v8898
        %v9027 = vmul.f32 %v7619, %v8899
        %v9028 = vmul.f32 %v7620, %v8900
        %v9029 = vmul.f32 %v7621, %v8901
        %v9030 = vmul.f32 %v7622, %v8902
        %v9031 = vmul.f32 %v7623, %v8903
        %v9032 = vmul.f32 %v7624, %v8904
        %v9033 = vmul.f32 %v7625, %v8905
        %v9034 = vmul.f32 %v7626, %v8906
        %v9035 = vmul.f32 %v7627, %v8907
        %v9036 = vmul.f32 %v7628, %v8908
        %v9037 = vmul.f32 %v7629, %v8909
        %v9038 = vmul.f32 %v7630, %v8910
        %v9039 = vmul.f32 %v7631, %v8911
        %v9040 = vmul.f32 %v7632, %v8912
        %v9041 = vmul.f32 %v7633, %v8913
        %v9042 = vmul.f32 %v7634, %v8914
        %v9043 = vmul.f32 %v7635, %v8915
        %v9044 = vmul.f32 %v7636, %v8916
        %v9045 = vmul.f32 %v7637, %v8917
        %v9046 = vmul.f32 %v7638, %v8918
        %v9047 = vmul.f32 %v7639, %v8919
        %v9048 = vmul.f32 %v7640, %v8920
        %v9049 = vmul.f32 %v7641, %v8921
        %v9050 = vmul.f32 %v7642, %v8922
        %v9051 = vmul.f32 %v7643, %v8923
        %v9052 = vmul.f32 %v7644, %v8924
        %v9053 = vmul.f32 %v7645, %v8925
        %v9054 = vmul.f32 %v7646, %v8926
        %v9055 = vmul.f32 %v7647, %v8927
        %v9056 = vmul.f32 %v7648, %v8928
        %v9057 = vmul.f32 %v7649, %v8929
        %v9058 = vmul.f32 %v7650, %v8930
        %v9059 = vmul.f32 %v7651, %v8931
        %v9060 = vmul.f32 %v7652, %v8932
        %v9061 = vmul.f32 %v7653, %v8933
        %v9062 = vmul.f32 %v7654, %v8934
        %v9063 = vmul.f32 %v7655, %v8935
        %v9064 = vmul.f32 %v7656, %v8936
        %v9065 = vmul.f32 %v7657, %v8937
        %v9066 = vmul.f32 %v7658, %v8938
        %v9067 = vmul.f32 %v7659, %v8939
        %v9068 = vmul.f32 %v7660, %v8940
        %v9069 = vmul.f32 %v7661, %v8941
        %v9070 = vmul.f32 %v7662, %v8942
        %v9071 = vmul.f32 %v7663, %v8943
        %v9073 = vlaneseq
        %v9074 = vshrl.u32 %v9073, 7
        %v9075 = vsub.s32 0, %v9074
        %v9076 = vrot.slane %v426, %v9075
        %v9077 = vlaneseq
        %v9078 = vshrl.u32 %v9077, 7
        %v9079 = vsub.s32 1, %v9078
        %v9080 = vrot.slane %v426, %v9079
        %v9081 = vlaneseq
        %v9082 = vshrl.u32 %v9081, 7
        %v9083 = vsub.s32 2, %v9082
        %v9084 = vrot.slane %v426, %v9083
        %v9085 = vlaneseq
        %v9086 = vshrl.u32 %v9085, 7
        %v9087 = vsub.s32 3, %v9086
        %v9088 = vrot.slane %v426, %v9087
        %v9089 = vlaneseq
        %v9090 = vshrl.u32 %v9089, 7
        %v9091 = vsub.s32 4, %v9090
        %v9092 = vrot.slane %v426, %v9091
        %v9093 = vlaneseq
        %v9094 = vshrl.u32 %v9093, 7
        %v9095 = vsub.s32 5, %v9094
        %v9096 = vrot.slane %v426, %v9095
        %v9097 = vlaneseq
        %v9098 = vshrl.u32 %v9097, 7
        %v9099 = vsub.s32 6, %v9098
        %v9100 = vrot.slane %v426, %v9099
        %v9101 = vlaneseq
        %v9102 = vshrl.u32 %v9101, 7
        %v9103 = vsub.s32 7, %v9102
        %v9104 = vrot.slane %v426, %v9103
        %v9113 = vmul.f32 %v8944, %v9076
        %v9114 = vmul.f32 %v8945, %v9080
        %v9115 = vmul.f32 %v8946, %v9084
        %v9116 = vmul.f32 %v8947, %v9088
        %v9117 = vmul.f32 %v8948, %v9092
        %v9118 = vmul.f32 %v8949, %v9096
        %v9119 = vmul.f32 %v8950, %v9100
        %v9120 = vmul.f32 %v8951, %v9104
        %v9121 = vmul.f32 %v8952, %v9076
        %v9122 = vmul.f32 %v8953, %v9080
        %v9123 = vmul.f32 %v8954, %v9084
        %v9124 = vmul.f32 %v8955, %v9088
        %v9125 = vmul.f32 %v8956, %v9092
        %v9126 = vmul.f32 %v8957, %v9096
        %v9127 = vmul.f32 %v8958, %v9100
        %v9128 = vmul.f32 %v8959, %v9104
        %v9129 = vmul.f32 %v8960, %v9076
        %v9130 = vmul.f32 %v8961, %v9080
        %v9131 = vmul.f32 %v8962, %v9084
        %v9132 = vmul.f32 %v8963, %v9088
        %v9133 = vmul.f32 %v8964, %v9092
        %v9134 = vmul.f32 %v8965, %v9096
        %v9135 = vmul.f32 %v8966, %v9100
        %v9136 = vmul.f32 %v8967, %v9104
        %v9137 = vmul.f32 %v8968, %v9076
        %v9138 = vmul.f32 %v8969, %v9080
        %v9139 = vmul.f32 %v8970, %v9084
        %v9140 = vmul.f32 %v8971, %v9088
        %v9141 = vmul.f32 %v8972, %v9092
        %v9142 = vmul.f32 %v8973, %v9096
        %v9143 = vmul.f32 %v8974, %v9100
        %v9144 = vmul.f32 %v8975, %v9104
        %v9145 = vmul.f32 %v8976, %v9076
        %v9146 = vmul.f32 %v8977, %v9080
        %v9147 = vmul.f32 %v8978, %v9084
        %v9148 = vmul.f32 %v8979, %v9088
        %v9149 = vmul.f32 %v8980, %v9092
        %v9150 = vmul.f32 %v8981, %v9096
        %v9151 = vmul.f32 %v8982, %v9100
        %v9152 = vmul.f32 %v8983, %v9104
        %v9153 = vmul.f32 %v8984, %v9076
        %v9154 = vmul.f32 %v8985, %v9080
        %v9155 = vmul.f32 %v8986, %v9084
        %v9156 = vmul.f32 %v8987, %v9088
        %v9157 = vmul.f32 %v8988, %v9092
        %v9158 = vmul.f32 %v8989, %v9096
        %v9159 = vmul.f32 %v8990, %v9100
        %v9160 = vmul.f32 %v8991, %v9104
        %v9161 = vmul.f32 %v8992, %v9076
        %v9162 = vmul.f32 %v8993, %v9080
        %v9163 = vmul.f32 %v8994, %v9084
        %v9164 = vmul.f32 %v8995, %v9088
        %v9165 = vmul.f32 %v8996, %v9092
        %v9166 = vmul.f32 %v8997, %v9096
        %v9167 = vmul.f32 %v8998, %v9100
        %v9168 = vmul.f32 %v8999, %v9104
        %v9169 = vmul.f32 %v9000, %v9076
        %v9170 = vmul.f32 %v9001, %v9080
        %v9171 = vmul.f32 %v9002, %v9084
        %v9172 = vmul.f32 %v9003, %v9088
        %v9173 = vmul.f32 %v9004, %v9092
        %v9174 = vmul.f32 %v9005, %v9096
        %v9175 = vmul.f32 %v9006, %v9100
        %v9176 = vmul.f32 %v9007, %v9104
        %v9177 = vmul.f32 %v9008, %v9076
        %v9178 = vmul.f32 %v9009, %v9080
        %v9179 = vmul.f32 %v9010, %v9084
        %v9180 = vmul.f32 %v9011, %v9088
        %v9181 = vmul.f32 %v9012, %v9092
        %v9182 = vmul.f32 %v9013, %v9096
        %v9183 = vmul.f32 %v9014, %v9100
        %v9184 = vmul.f32 %v9015, %v9104
        %v9185 = vmul.f32 %v9016, %v9076
        %v9186 = vmul.f32 %v9017, %v9080
        %v9187 = vmul.f32 %v9018, %v9084
        %v9188 = vmul.f32 %v9019, %v9088
        %v9189 = vmul.f32 %v9020, %v9092
        %v9190 = vmul.f32 %v9021, %v9096
        %v9191 = vmul.f32 %v9022, %v9100
        %v9192 = vmul.f32 %v9023, %v9104
        %v9193 = vmul.f32 %v9024, %v9076
        %v9194 = vmul.f32 %v9025, %v9080
        %v9195 = vmul.f32 %v9026, %v9084
        %v9196 = vmul.f32 %v9027, %v9088
        %v9197 = vmul.f32 %v9028, %v9092
        %v9198 = vmul.f32 %v9029, %v9096
        %v9199 = vmul.f32 %v9030, %v9100
        %v9200 = vmul.f32 %v9031, %v9104
        %v9201 = vmul.f32 %v9032, %v9076
        %v9202 = vmul.f32 %v9033, %v9080
        %v9203 = vmul.f32 %v9034, %v9084
        %v9204 = vmul.f32 %v9035, %v9088
        %v9205 = vmul.f32 %v9036, %v9092
        %v9206 = vmul.f32 %v9037, %v9096
        %v9207 = vmul.f32 %v9038, %v9100
        %v9208 = vmul.f32 %v9039, %v9104
        %v9209 = vmul.f32 %v9040, %v9076
        %v9210 = vmul.f32 %v9041, %v9080
        %v9211 = vmul.f32 %v9042, %v9084
        %v9212 = vmul.f32 %v9043, %v9088
        %v9213 = vmul.f32 %v9044, %v9092
        %v9214 = vmul.f32 %v9045, %v9096
        %v9215 = vmul.f32 %v9046, %v9100
        %v9216 = vmul.f32 %v9047, %v9104
        %v9217 = vmul.f32 %v9048, %v9076
        %v9218 = vmul.f32 %v9049, %v9080
        %v9219 = vmul.f32 %v9050, %v9084
        %v9220 = vmul.f32 %v9051, %v9088
        %v9221 = vmul.f32 %v9052, %v9092
        %v9222 = vmul.f32 %v9053, %v9096
        %v9223 = vmul.f32 %v9054, %v9100
        %v9224 = vmul.f32 %v9055, %v9104
        %v9225 = vmul.f32 %v9056, %v9076
        %v9226 = vmul.f32 %v9057, %v9080
        %v9227 = vmul.f32 %v9058, %v9084
        %v9228 = vmul.f32 %v9059, %v9088
        %v9229 = vmul.f32 %v9060, %v9092
        %v9230 = vmul.f32 %v9061, %v9096
        %v9231 = vmul.f32 %v9062, %v9100
        %v9232 = vmul.f32 %v9063, %v9104
        %v9233 = vmul.f32 %v9064, %v9076
        %v9234 = vmul.f32 %v9065, %v9080
        %v9235 = vmul.f32 %v9066, %v9084
        %v9236 = vmul.f32 %v9067, %v9088
        %v9237 = vmul.f32 %v9068, %v9092
        %v9238 = vmul.f32 %v9069, %v9096
        %v9239 = vmul.f32 %v9070, %v9100
        %v9240 = vmul.f32 %v9071, %v9104
        %v9242 = vlaneseq
        %v9243 = vshrl.u32 %v9242, 7
        %v9244 = vsub.s32 0, %v9243
        %v9245 = vrot.slane %v430, %v9244
        %v9246 = vlaneseq
        %v9247 = vshrl.u32 %v9246, 7
        %v9248 = vsub.s32 1, %v9247
        %v9249 = vrot.slane %v430, %v9248
        %v9250 = vlaneseq
        %v9251 = vshrl.u32 %v9250, 7
        %v9252 = vsub.s32 2, %v9251
        %v9253 = vrot.slane %v430, %v9252
        %v9254 = vlaneseq
        %v9255 = vshrl.u32 %v9254, 7
        %v9256 = vsub.s32 3, %v9255
        %v9257 = vrot.slane %v430, %v9256
        %v9258 = vlaneseq
        %v9259 = vshrl.u32 %v9258, 7
        %v9260 = vsub.s32 4, %v9259
        %v9261 = vrot.slane %v430, %v9260
        %v9262 = vlaneseq
        %v9263 = vshrl.u32 %v9262, 7
        %v9264 = vsub.s32 5, %v9263
        %v9265 = vrot.slane %v430, %v9264
        %v9266 = vlaneseq
        %v9267 = vshrl.u32 %v9266, 7
        %v9268 = vsub.s32 6, %v9267
        %v9269 = vrot.slane %v430, %v9268
        %v9270 = vlaneseq
        %v9271 = vshrl.u32 %v9270, 7
        %v9272 = vsub.s32 7, %v9271
        %v9273 = vrot.slane %v430, %v9272
        %v9282 = vadd.f32 %v9113, %v9245
        %v9283 = vadd.f32 %v9114, %v9249
        %v9284 = vadd.f32 %v9115, %v9253
        %v9285 = vadd.f32 %v9116, %v9257
        %v9286 = vadd.f32 %v9117, %v9261
        %v9287 = vadd.f32 %v9118, %v9265
        %v9288 = vadd.f32 %v9119, %v9269
        %v9289 = vadd.f32 %v9120, %v9273
        %v9290 = vadd.f32 %v9121, %v9245
        %v9291 = vadd.f32 %v9122, %v9249
        %v9292 = vadd.f32 %v9123, %v9253
        %v9293 = vadd.f32 %v9124, %v9257
        %v9294 = vadd.f32 %v9125, %v9261
        %v9295 = vadd.f32 %v9126, %v9265
        %v9296 = vadd.f32 %v9127, %v9269
        %v9297 = vadd.f32 %v9128, %v9273
        %v9298 = vadd.f32 %v9129, %v9245
        %v9299 = vadd.f32 %v9130, %v9249
        %v9300 = vadd.f32 %v9131, %v9253
        %v9301 = vadd.f32 %v9132, %v9257
        %v9302 = vadd.f32 %v9133, %v9261
        %v9303 = vadd.f32 %v9134, %v9265
        %v9304 = vadd.f32 %v9135, %v9269
        %v9305 = vadd.f32 %v9136, %v9273
        %v9306 = vadd.f32 %v9137, %v9245
        %v9307 = vadd.f32 %v9138, %v9249
        %v9308 = vadd.f32 %v9139, %v9253
        %v9309 = vadd.f32 %v9140, %v9257
        %v9310 = vadd.f32 %v9141, %v9261
        %v9311 = vadd.f32 %v9142, %v9265
        %v9312 = vadd.f32 %v9143, %v9269
        %v9313 = vadd.f32 %v9144, %v9273
        %v9314 = vadd.f32 %v9145, %v9245
        %v9315 = vadd.f32 %v9146, %v9249
        %v9316 = vadd.f32 %v9147, %v9253
        %v9317 = vadd.f32 %v9148, %v9257
        %v9318 = vadd.f32 %v9149, %v9261
        %v9319 = vadd.f32 %v9150, %v9265
        %v9320 = vadd.f32 %v9151, %v9269
        %v9321 = vadd.f32 %v9152, %v9273
        %v9322 = vadd.f32 %v9153, %v9245
        %v9323 = vadd.f32 %v9154, %v9249
        %v9324 = vadd.f32 %v9155, %v9253
        %v9325 = vadd.f32 %v9156, %v9257
        %v9326 = vadd.f32 %v9157, %v9261
        %v9327 = vadd.f32 %v9158, %v9265
        %v9328 = vadd.f32 %v9159, %v9269
        %v9329 = vadd.f32 %v9160, %v9273
        %v9330 = vadd.f32 %v9161, %v9245
        %v9331 = vadd.f32 %v9162, %v9249
        %v9332 = vadd.f32 %v9163, %v9253
        %v9333 = vadd.f32 %v9164, %v9257
        %v9334 = vadd.f32 %v9165, %v9261
        %v9335 = vadd.f32 %v9166, %v9265
        %v9336 = vadd.f32 %v9167, %v9269
        %v9337 = vadd.f32 %v9168, %v9273
        %v9338 = vadd.f32 %v9169, %v9245
        %v9339 = vadd.f32 %v9170, %v9249
        %v9340 = vadd.f32 %v9171, %v9253
        %v9341 = vadd.f32 %v9172, %v9257
        %v9342 = vadd.f32 %v9173, %v9261
        %v9343 = vadd.f32 %v9174, %v9265
        %v9344 = vadd.f32 %v9175, %v9269
        %v9345 = vadd.f32 %v9176, %v9273
        %v9346 = vadd.f32 %v9177, %v9245
        %v9347 = vadd.f32 %v9178, %v9249
        %v9348 = vadd.f32 %v9179, %v9253
        %v9349 = vadd.f32 %v9180, %v9257
        %v9350 = vadd.f32 %v9181, %v9261
        %v9351 = vadd.f32 %v9182, %v9265
        %v9352 = vadd.f32 %v9183, %v9269
        %v9353 = vadd.f32 %v9184, %v9273
        %v9354 = vadd.f32 %v9185, %v9245
        %v9355 = vadd.f32 %v9186, %v9249
        %v9356 = vadd.f32 %v9187, %v9253
        %v9357 = vadd.f32 %v9188, %v9257
        %v9358 = vadd.f32 %v9189, %v9261
        %v9359 = vadd.f32 %v9190, %v9265
        %v9360 = vadd.f32 %v9191, %v9269
        %v9361 = vadd.f32 %v9192, %v9273
        %v9362 = vadd.f32 %v9193, %v9245
        %v9363 = vadd.f32 %v9194, %v9249
        %v9364 = vadd.f32 %v9195, %v9253
        %v9365 = vadd.f32 %v9196, %v9257
        %v9366 = vadd.f32 %v9197, %v9261
        %v9367 = vadd.f32 %v9198, %v9265
        %v9368 = vadd.f32 %v9199, %v9269
        %v9369 = vadd.f32 %v9200, %v9273
        %v9370 = vadd.f32 %v9201, %v9245
        %v9371 = vadd.f32 %v9202, %v9249
        %v9372 = vadd.f32 %v9203, %v9253
        %v9373 = vadd.f32 %v9204, %v9257
        %v9374 = vadd.f32 %v9205, %v9261
        %v9375 = vadd.f32 %v9206, %v9265
        %v9376 = vadd.f32 %v9207, %v9269
        %v9377 = vadd.f32 %v9208, %v9273
        %v9378 = vadd.f32 %v9209, %v9245
        %v9379 = vadd.f32 %v9210, %v9249
        %v9380 = vadd.f32 %v9211, %v9253
        %v9381 = vadd.f32 %v9212, %v9257
        %v9382 = vadd.f32 %v9213, %v9261
        %v9383 = vadd.f32 %v9214, %v9265
        %v9384 = vadd.f32 %v9215, %v9269
        %v9385 = vadd.f32 %v9216, %v9273
        %v9386 = vadd.f32 %v9217, %v9245
        %v9387 = vadd.f32 %v9218, %v9249
        %v9388 = vadd.f32 %v9219, %v9253
        %v9389 = vadd.f32 %v9220, %v9257
        %v9390 = vadd.f32 %v9221, %v9261
        %v9391 = vadd.f32 %v9222, %v9265
        %v9392 = vadd.f32 %v9223, %v9269
        %v9393 = vadd.f32 %v9224, %v9273
        %v9394 = vadd.f32 %v9225, %v9245
        %v9395 = vadd.f32 %v9226, %v9249
        %v9396 = vadd.f32 %v9227, %v9253
        %v9397 = vadd.f32 %v9228, %v9257
        %v9398 = vadd.f32 %v9229, %v9261
        %v9399 = vadd.f32 %v9230, %v9265
        %v9400 = vadd.f32 %v9231, %v9269
        %v9401 = vadd.f32 %v9232, %v9273
        %v9402 = vadd.f32 %v9233, %v9245
        %v9403 = vadd.f32 %v9234, %v9249
        %v9404 = vadd.f32 %v9235, %v9253
        %v9405 = vadd.f32 %v9236, %v9257
        %v9406 = vadd.f32 %v9237, %v9261
        %v9407 = vadd.f32 %v9238, %v9265
        %v9408 = vadd.f32 %v9239, %v9269
        %v9409 = vadd.f32 %v9240, %v9273
        %vm9410 = vcmp.gt.f32.partialorder %v9282, 0.0
        %vm9411 = vcmp.gt.f32.partialorder %v9283, 0.0
        %vm9412 = vcmp.gt.f32.partialorder %v9284, 0.0
        %vm9413 = vcmp.gt.f32.partialorder %v9285, 0.0
        %vm9414 = vcmp.gt.f32.partialorder %v9286, 0.0
        %vm9415 = vcmp.gt.f32.partialorder %v9287, 0.0
        %vm9416 = vcmp.gt.f32.partialorder %v9288, 0.0
        %vm9417 = vcmp.gt.f32.partialorder %v9289, 0.0
        %vm9418 = vcmp.gt.f32.partialorder %v9290, 0.0
        %vm9419 = vcmp.gt.f32.partialorder %v9291, 0.0
        %vm9420 = vcmp.gt.f32.partialorder %v9292, 0.0
        %vm9421 = vcmp.gt.f32.partialorder %v9293, 0.0
        %vm9422 = vcmp.gt.f32.partialorder %v9294, 0.0
        %vm9423 = vcmp.gt.f32.partialorder %v9295, 0.0
        %vm9424 = vcmp.gt.f32.partialorder %v9296, 0.0
        %vm9425 = vcmp.gt.f32.partialorder %v9297, 0.0
        %vm9426 = vcmp.gt.f32.partialorder %v9298, 0.0
        %vm9427 = vcmp.gt.f32.partialorder %v9299, 0.0
        %vm9428 = vcmp.gt.f32.partialorder %v9300, 0.0
        %vm9429 = vcmp.gt.f32.partialorder %v9301, 0.0
        %vm9430 = vcmp.gt.f32.partialorder %v9302, 0.0
        %vm9431 = vcmp.gt.f32.partialorder %v9303, 0.0
        %vm9432 = vcmp.gt.f32.partialorder %v9304, 0.0
        %vm9433 = vcmp.gt.f32.partialorder %v9305, 0.0
        %vm9434 = vcmp.gt.f32.partialorder %v9306, 0.0
        %vm9435 = vcmp.gt.f32.partialorder %v9307, 0.0
        %vm9436 = vcmp.gt.f32.partialorder %v9308, 0.0
        %vm9437 = vcmp.gt.f32.partialorder %v9309, 0.0
        %vm9438 = vcmp.gt.f32.partialorder %v9310, 0.0
        %vm9439 = vcmp.gt.f32.partialorder %v9311, 0.0
        %vm9440 = vcmp.gt.f32.partialorder %v9312, 0.0
        %vm9441 = vcmp.gt.f32.partialorder %v9313, 0.0
        %vm9442 = vcmp.gt.f32.partialorder %v9314, 0.0
        %vm9443 = vcmp.gt.f32.partialorder %v9315, 0.0
        %vm9444 = vcmp.gt.f32.partialorder %v9316, 0.0
        %vm9445 = vcmp.gt.f32.partialorder %v9317, 0.0
        %vm9446 = vcmp.gt.f32.partialorder %v9318, 0.0
        %vm9447 = vcmp.gt.f32.partialorder %v9319, 0.0
        %vm9448 = vcmp.gt.f32.partialorder %v9320, 0.0
        %vm9449 = vcmp.gt.f32.partialorder %v9321, 0.0
        %vm9450 = vcmp.gt.f32.partialorder %v9322, 0.0
        %vm9451 = vcmp.gt.f32.partialorder %v9323, 0.0
        %vm9452 = vcmp.gt.f32.partialorder %v9324, 0.0
        %vm9453 = vcmp.gt.f32.partialorder %v9325, 0.0
        %vm9454 = vcmp.gt.f32.partialorder %v9326, 0.0
        %vm9455 = vcmp.gt.f32.partialorder %v9327, 0.0
        %vm9456 = vcmp.gt.f32.partialorder %v9328, 0.0
        %vm9457 = vcmp.gt.f32.partialorder %v9329, 0.0
        %vm9458 = vcmp.gt.f32.partialorder %v9330, 0.0
        %vm9459 = vcmp.gt.f32.partialorder %v9331, 0.0
        %vm9460 = vcmp.gt.f32.partialorder %v9332, 0.0
        %vm9461 = vcmp.gt.f32.partialorder %v9333, 0.0
        %vm9462 = vcmp.gt.f32.partialorder %v9334, 0.0
        %vm9463 = vcmp.gt.f32.partialorder %v9335, 0.0
        %vm9464 = vcmp.gt.f32.partialorder %v9336, 0.0
        %vm9465 = vcmp.gt.f32.partialorder %v9337, 0.0
        %vm9466 = vcmp.gt.f32.partialorder %v9338, 0.0
        %vm9467 = vcmp.gt.f32.partialorder %v9339, 0.0
        %vm9468 = vcmp.gt.f32.partialorder %v9340, 0.0
        %vm9469 = vcmp.gt.f32.partialorder %v9341, 0.0
        %vm9470 = vcmp.gt.f32.partialorder %v9342, 0.0
        %vm9471 = vcmp.gt.f32.partialorder %v9343, 0.0
        %vm9472 = vcmp.gt.f32.partialorder %v9344, 0.0
        %vm9473 = vcmp.gt.f32.partialorder %v9345, 0.0
        %vm9474 = vcmp.gt.f32.partialorder %v9346, 0.0
        %vm9475 = vcmp.gt.f32.partialorder %v9347, 0.0
        %vm9476 = vcmp.gt.f32.partialorder %v9348, 0.0
        %vm9477 = vcmp.gt.f32.partialorder %v9349, 0.0
        %vm9478 = vcmp.gt.f32.partialorder %v9350, 0.0
        %vm9479 = vcmp.gt.f32.partialorder %v9351, 0.0
        %vm9480 = vcmp.gt.f32.partialorder %v9352, 0.0
        %vm9481 = vcmp.gt.f32.partialorder %v9353, 0.0
        %vm9482 = vcmp.gt.f32.partialorder %v9354, 0.0
        %vm9483 = vcmp.gt.f32.partialorder %v9355, 0.0
        %vm9484 = vcmp.gt.f32.partialorder %v9356, 0.0
        %vm9485 = vcmp.gt.f32.partialorder %v9357, 0.0
        %vm9486 = vcmp.gt.f32.partialorder %v9358, 0.0
        %vm9487 = vcmp.gt.f32.partialorder %v9359, 0.0
        %vm9488 = vcmp.gt.f32.partialorder %v9360, 0.0
        %vm9489 = vcmp.gt.f32.partialorder %v9361, 0.0
        %vm9490 = vcmp.gt.f32.partialorder %v9362, 0.0
        %vm9491 = vcmp.gt.f32.partialorder %v9363, 0.0
        %vm9492 = vcmp.gt.f32.partialorder %v9364, 0.0
        %vm9493 = vcmp.gt.f32.partialorder %v9365, 0.0
        %vm9494 = vcmp.gt.f32.partialorder %v9366, 0.0
        %vm9495 = vcmp.gt.f32.partialorder %v9367, 0.0
        %vm9496 = vcmp.gt.f32.partialorder %v9368, 0.0
        %vm9497 = vcmp.gt.f32.partialorder %v9369, 0.0
        %vm9498 = vcmp.gt.f32.partialorder %v9370, 0.0
        %vm9499 = vcmp.gt.f32.partialorder %v9371, 0.0
        %vm9500 = vcmp.gt.f32.partialorder %v9372, 0.0
        %vm9501 = vcmp.gt.f32.partialorder %v9373, 0.0
        %vm9502 = vcmp.gt.f32.partialorder %v9374, 0.0
        %vm9503 = vcmp.gt.f32.partialorder %v9375, 0.0
        %vm9504 = vcmp.gt.f32.partialorder %v9376, 0.0
        %vm9505 = vcmp.gt.f32.partialorder %v9377, 0.0
        %vm9506 = vcmp.gt.f32.partialorder %v9378, 0.0
        %vm9507 = vcmp.gt.f32.partialorder %v9379, 0.0
        %vm9508 = vcmp.gt.f32.partialorder %v9380, 0.0
        %vm9509 = vcmp.gt.f32.partialorder %v9381, 0.0
        %vm9510 = vcmp.gt.f32.partialorder %v9382, 0.0
        %vm9511 = vcmp.gt.f32.partialorder %v9383, 0.0
        %vm9512 = vcmp.gt.f32.partialorder %v9384, 0.0
        %vm9513 = vcmp.gt.f32.partialorder %v9385, 0.0
        %vm9514 = vcmp.gt.f32.partialorder %v9386, 0.0
        %vm9515 = vcmp.gt.f32.partialorder %v9387, 0.0
        %vm9516 = vcmp.gt.f32.partialorder %v9388, 0.0
        %vm9517 = vcmp.gt.f32.partialorder %v9389, 0.0
        %vm9518 = vcmp.gt.f32.partialorder %v9390, 0.0
        %vm9519 = vcmp.gt.f32.partialorder %v9391, 0.0
        %vm9520 = vcmp.gt.f32.partialorder %v9392, 0.0
        %vm9521 = vcmp.gt.f32.partialorder %v9393, 0.0
        %vm9522 = vcmp.gt.f32.partialorder %v9394, 0.0
        %vm9523 = vcmp.gt.f32.partialorder %v9395, 0.0
        %vm9524 = vcmp.gt.f32.partialorder %v9396, 0.0
        %vm9525 = vcmp.gt.f32.partialorder %v9397, 0.0
        %vm9526 = vcmp.gt.f32.partialorder %v9398, 0.0
        %vm9527 = vcmp.gt.f32.partialorder %v9399, 0.0
        %vm9528 = vcmp.gt.f32.partialorder %v9400, 0.0
        %vm9529 = vcmp.gt.f32.partialorder %v9401, 0.0
        %vm9530 = vcmp.gt.f32.partialorder %v9402, 0.0
        %vm9531 = vcmp.gt.f32.partialorder %v9403, 0.0
        %vm9532 = vcmp.gt.f32.partialorder %v9404, 0.0
        %vm9533 = vcmp.gt.f32.partialorder %v9405, 0.0
        %vm9534 = vcmp.gt.f32.partialorder %v9406, 0.0
        %vm9535 = vcmp.gt.f32.partialorder %v9407, 0.0
        %vm9536 = vcmp.gt.f32.partialorder %v9408, 0.0
        %vm9537 = vcmp.gt.f32.partialorder %v9409, 0.0
        %v9538 = vmul.f32 %v9282, 0.2
        %v9539 = vmul.f32 %v9283, 0.2
        %v9540 = vmul.f32 %v9284, 0.2
        %v9541 = vmul.f32 %v9285, 0.2
        %v9542 = vmul.f32 %v9286, 0.2
        %v9543 = vmul.f32 %v9287, 0.2
        %v9544 = vmul.f32 %v9288, 0.2
        %v9545 = vmul.f32 %v9289, 0.2
        %v9546 = vmul.f32 %v9290, 0.2
        %v9547 = vmul.f32 %v9291, 0.2
        %v9548 = vmul.f32 %v9292, 0.2
        %v9549 = vmul.f32 %v9293, 0.2
        %v9550 = vmul.f32 %v9294, 0.2
        %v9551 = vmul.f32 %v9295, 0.2
        %v9552 = vmul.f32 %v9296, 0.2
        %v9553 = vmul.f32 %v9297, 0.2
        %v9554 = vmul.f32 %v9298, 0.2
        %v9555 = vmul.f32 %v9299, 0.2
        %v9556 = vmul.f32 %v9300, 0.2
        %v9557 = vmul.f32 %v9301, 0.2
        %v9558 = vmul.f32 %v9302, 0.2
        %v9559 = vmul.f32 %v9303, 0.2
        %v9560 = vmul.f32 %v9304, 0.2
        %v9561 = vmul.f32 %v9305, 0.2
        %v9562 = vmul.f32 %v9306, 0.2
        %v9563 = vmul.f32 %v9307, 0.2
        %v9564 = vmul.f32 %v9308, 0.2
        %v9565 = vmul.f32 %v9309, 0.2
        %v9566 = vmul.f32 %v9310, 0.2
        %v9567 = vmul.f32 %v9311, 0.2
        %v9568 = vmul.f32 %v9312, 0.2
        %v9569 = vmul.f32 %v9313, 0.2
        %v9570 = vmul.f32 %v9314, 0.2
        %v9571 = vmul.f32 %v9315, 0.2
        %v9572 = vmul.f32 %v9316, 0.2
        %v9573 = vmul.f32 %v9317, 0.2
        %v9574 = vmul.f32 %v9318, 0.2
        %v9575 = vmul.f32 %v9319, 0.2
        %v9576 = vmul.f32 %v9320, 0.2
        %v9577 = vmul.f32 %v9321, 0.2
        %v9578 = vmul.f32 %v9322, 0.2
        %v9579 = vmul.f32 %v9323, 0.2
        %v9580 = vmul.f32 %v9324, 0.2
        %v9581 = vmul.f32 %v9325, 0.2
        %v9582 = vmul.f32 %v9326, 0.2
        %v9583 = vmul.f32 %v9327, 0.2
        %v9584 = vmul.f32 %v9328, 0.2
        %v9585 = vmul.f32 %v9329, 0.2
        %v9586 = vmul.f32 %v9330, 0.2
        %v9587 = vmul.f32 %v9331, 0.2
        %v9588 = vmul.f32 %v9332, 0.2
        %v9589 = vmul.f32 %v9333, 0.2
        %v9590 = vmul.f32 %v9334, 0.2
        %v9591 = vmul.f32 %v9335, 0.2
        %v9592 = vmul.f32 %v9336, 0.2
        %v9593 = vmul.f32 %v9337, 0.2
        %v9594 = vmul.f32 %v9338, 0.2
        %v9595 = vmul.f32 %v9339, 0.2
        %v9596 = vmul.f32 %v9340, 0.2
        %v9597 = vmul.f32 %v9341, 0.2
        %v9598 = vmul.f32 %v9342, 0.2
        %v9599 = vmul.f32 %v9343, 0.2
        %v9600 = vmul.f32 %v9344, 0.2
        %v9601 = vmul.f32 %v9345, 0.2
        %v9602 = vmul.f32 %v9346, 0.2
        %v9603 = vmul.f32 %v9347, 0.2
        %v9604 = vmul.f32 %v9348, 0.2
        %v9605 = vmul.f32 %v9349, 0.2
        %v9606 = vmul.f32 %v9350, 0.2
        %v9607 = vmul.f32 %v9351, 0.2
        %v9608 = vmul.f32 %v9352, 0.2
        %v9609 = vmul.f32 %v9353, 0.2
        %v9610 = vmul.f32 %v9354, 0.2
        %v9611 = vmul.f32 %v9355, 0.2
        %v9612 = vmul.f32 %v9356, 0.2
        %v9613 = vmul.f32 %v9357, 0.2
        %v9614 = vmul.f32 %v9358, 0.2
        %v9615 = vmul.f32 %v9359, 0.2
        %v9616 = vmul.f32 %v9360, 0.2
        %v9617 = vmul.f32 %v9361, 0.2
        %v9618 = vmul.f32 %v9362, 0.2
        %v9619 = vmul.f32 %v9363, 0.2
        %v9620 = vmul.f32 %v9364, 0.2
        %v9621 = vmul.f32 %v9365, 0.2
        %v9622 = vmul.f32 %v9366, 0.2
        %v9623 = vmul.f32 %v9367, 0.2
        %v9624 = vmul.f32 %v9368, 0.2
        %v9625 = vmul.f32 %v9369, 0.2
        %v9626 = vmul.f32 %v9370, 0.2
        %v9627 = vmul.f32 %v9371, 0.2
        %v9628 = vmul.f32 %v9372, 0.2
        %v9629 = vmul.f32 %v9373, 0.2
        %v9630 = vmul.f32 %v9374, 0.2
        %v9631 = vmul.f32 %v9375, 0.2
        %v9632 = vmul.f32 %v9376, 0.2
        %v9633 = vmul.f32 %v9377, 0.2
        %v9634 = vmul.f32 %v9378, 0.2
        %v9635 = vmul.f32 %v9379, 0.2
        %v9636 = vmul.f32 %v9380, 0.2
        %v9637 = vmul.f32 %v9381, 0.2
        %v9638 = vmul.f32 %v9382, 0.2
        %v9639 = vmul.f32 %v9383, 0.2
        %v9640 = vmul.f32 %v9384, 0.2
        %v9641 = vmul.f32 %v9385, 0.2
        %v9642 = vmul.f32 %v9386, 0.2
        %v9643 = vmul.f32 %v9387, 0.2
        %v9644 = vmul.f32 %v9388, 0.2
        %v9645 = vmul.f32 %v9389, 0.2
        %v9646 = vmul.f32 %v9390, 0.2
        %v9647 = vmul.f32 %v9391, 0.2
        %v9648 = vmul.f32 %v9392, 0.2
        %v9649 = vmul.f32 %v9393, 0.2
        %v9650 = vmul.f32 %v9394, 0.2
        %v9651 = vmul.f32 %v9395, 0.2
        %v9652 = vmul.f32 %v9396, 0.2
        %v9653 = vmul.f32 %v9397, 0.2
        %v9654 = vmul.f32 %v9398, 0.2
        %v9655 = vmul.f32 %v9399, 0.2
        %v9656 = vmul.f32 %v9400, 0.2
        %v9657 = vmul.f32 %v9401, 0.2
        %v9658 = vmul.f32 %v9402, 0.2
        %v9659 = vmul.f32 %v9403, 0.2
        %v9660 = vmul.f32 %v9404, 0.2
        %v9661 = vmul.f32 %v9405, 0.2
        %v9662 = vmul.f32 %v9406, 0.2
        %v9663 = vmul.f32 %v9407, 0.2
        %v9664 = vmul.f32 %v9408, 0.2
        %v9665 = vmul.f32 %v9409, 0.2
        %v9666 = vsel %vm9410, %v9282, %v9538
        %v9667 = vsel %vm9411, %v9283, %v9539
        %v9668 = vsel %vm9412, %v9284, %v9540
        %v9669 = vsel %vm9413, %v9285, %v9541
        %v9670 = vsel %vm9414, %v9286, %v9542
        %v9671 = vsel %vm9415, %v9287, %v9543
        %v9672 = vsel %vm9416, %v9288, %v9544
        %v9673 = vsel %vm9417, %v9289, %v9545
        %v9674 = vsel %vm9418, %v9290, %v9546
        %v9675 = vsel %vm9419, %v9291, %v9547
        %v9676 = vsel %vm9420, %v9292, %v9548
        %v9677 = vsel %vm9421, %v9293, %v9549
        %v9678 = vsel %vm9422, %v9294, %v9550
        %v9679 = vsel %vm9423, %v9295, %v9551
        %v9680 = vsel %vm9424, %v9296, %v9552
        %v9681 = vsel %vm9425, %v9297, %v9553
        %v9682 = vsel %vm9426, %v9298, %v9554
        %v9683 = vsel %vm9427, %v9299, %v9555
        %v9684 = vsel %vm9428, %v9300, %v9556
        %v9685 = vsel %vm9429, %v9301, %v9557
        %v9686 = vsel %vm9430, %v9302, %v9558
        %v9687 = vsel %vm9431, %v9303, %v9559
        %v9688 = vsel %vm9432, %v9304, %v9560
        %v9689 = vsel %vm9433, %v9305, %v9561
        %v9690 = vsel %vm9434, %v9306, %v9562
        %v9691 = vsel %vm9435, %v9307, %v9563
        %v9692 = vsel %vm9436, %v9308, %v9564
        %v9693 = vsel %vm9437, %v9309, %v9565
        %v9694 = vsel %vm9438, %v9310, %v9566
        %v9695 = vsel %vm9439, %v9311, %v9567
        %v9696 = vsel %vm9440, %v9312, %v9568
        %v9697 = vsel %vm9441, %v9313, %v9569
        %v9698 = vsel %vm9442, %v9314, %v9570
        %v9699 = vsel %vm9443, %v9315, %v9571
        %v9700 = vsel %vm9444, %v9316, %v9572
        %v9701 = vsel %vm9445, %v9317, %v9573
        %v9702 = vsel %vm9446, %v9318, %v9574
        %v9703 = vsel %vm9447, %v9319, %v9575
        %v9704 = vsel %vm9448, %v9320, %v9576
        %v9705 = vsel %vm9449, %v9321, %v9577
        %v9706 = vsel %vm9450, %v9322, %v9578
        %v9707 = vsel %vm9451, %v9323, %v9579
        %v9708 = vsel %vm9452, %v9324, %v9580
        %v9709 = vsel %vm9453, %v9325, %v9581
        %v9710 = vsel %vm9454, %v9326, %v9582
        %v9711 = vsel %vm9455, %v9327, %v9583
        %v9712 = vsel %vm9456, %v9328, %v9584
        %v9713 = vsel %vm9457, %v9329, %v9585
        %v9714 = vsel %vm9458, %v9330, %v9586
        %v9715 = vsel %vm9459, %v9331, %v9587
        %v9716 = vsel %vm9460, %v9332, %v9588
        %v9717 = vsel %vm9461, %v9333, %v9589
        %v9718 = vsel %vm9462, %v9334, %v9590
        %v9719 = vsel %vm9463, %v9335, %v9591
        %v9720 = vsel %vm9464, %v9336, %v9592
        %v9721 = vsel %vm9465, %v9337, %v9593
        %v9722 = vsel %vm9466, %v9338, %v9594
        %v9723 = vsel %vm9467, %v9339, %v9595
        %v9724 = vsel %vm9468, %v9340, %v9596
        %v9725 = vsel %vm9469, %v9341, %v9597
        %v9726 = vsel %vm9470, %v9342, %v9598
        %v9727 = vsel %vm9471, %v9343, %v9599
        %v9728 = vsel %vm9472, %v9344, %v9600
        %v9729 = vsel %vm9473, %v9345, %v9601
        %v9730 = vsel %vm9474, %v9346, %v9602
        %v9731 = vsel %vm9475, %v9347, %v9603
        %v9732 = vsel %vm9476, %v9348, %v9604
        %v9733 = vsel %vm9477, %v9349, %v9605
        %v9734 = vsel %vm9478, %v9350, %v9606
        %v9735 = vsel %vm9479, %v9351, %v9607
        %v9736 = vsel %vm9480, %v9352, %v9608
        %v9737 = vsel %vm9481, %v9353, %v9609
        %v9738 = vsel %vm9482, %v9354, %v9610
        %v9739 = vsel %vm9483, %v9355, %v9611
        %v9740 = vsel %vm9484, %v9356, %v9612
        %v9741 = vsel %vm9485, %v9357, %v9613
        %v9742 = vsel %vm9486, %v9358, %v9614
        %v9743 = vsel %vm9487, %v9359, %v9615
        %v9744 = vsel %vm9488, %v9360, %v9616
        %v9745 = vsel %vm9489, %v9361, %v9617
        %v9746 = vsel %vm9490, %v9362, %v9618
        %v9747 = vsel %vm9491, %v9363, %v9619
        %v9748 = vsel %vm9492, %v9364, %v9620
        %v9749 = vsel %vm9493, %v9365, %v9621
        %v9750 = vsel %vm9494, %v9366, %v9622
        %v9751 = vsel %vm9495, %v9367, %v9623
        %v9752 = vsel %vm9496, %v9368, %v9624
        %v9753 = vsel %vm9497, %v9369, %v9625
        %v9754 = vsel %vm9498, %v9370, %v9626
        %v9755 = vsel %vm9499, %v9371, %v9627
        %v9756 = vsel %vm9500, %v9372, %v9628
        %v9757 = vsel %vm9501, %v9373, %v9629
        %v9758 = vsel %vm9502, %v9374, %v9630
        %v9759 = vsel %vm9503, %v9375, %v9631
        %v9760 = vsel %vm9504, %v9376, %v9632
        %v9761 = vsel %vm9505, %v9377, %v9633
        %v9762 = vsel %vm9506, %v9378, %v9634
        %v9763 = vsel %vm9507, %v9379, %v9635
        %v9764 = vsel %vm9508, %v9380, %v9636
        %v9765 = vsel %vm9509, %v9381, %v9637
        %v9766 = vsel %vm9510, %v9382, %v9638
        %v9767 = vsel %vm9511, %v9383, %v9639
        %v9768 = vsel %vm9512, %v9384, %v9640
        %v9769 = vsel %vm9513, %v9385, %v9641
        %v9770 = vsel %vm9514, %v9386, %v9642
        %v9771 = vsel %vm9515, %v9387, %v9643
        %v9772 = vsel %vm9516, %v9388, %v9644
        %v9773 = vsel %vm9517, %v9389, %v9645
        %v9774 = vsel %vm9518, %v9390, %v9646
        %v9775 = vsel %vm9519, %v9391, %v9647
        %v9776 = vsel %vm9520, %v9392, %v9648
        %v9777 = vsel %vm9521, %v9393, %v9649
        %v9778 = vsel %vm9522, %v9394, %v9650
        %v9779 = vsel %vm9523, %v9395, %v9651
        %v9780 = vsel %vm9524, %v9396, %v9652
        %v9781 = vsel %vm9525, %v9397, %v9653
        %v9782 = vsel %vm9526, %v9398, %v9654
        %v9783 = vsel %vm9527, %v9399, %v9655
        %v9784 = vsel %vm9528, %v9400, %v9656
        %v9785 = vsel %vm9529, %v9401, %v9657
        %v9786 = vsel %vm9530, %v9402, %v9658
        %v9787 = vsel %vm9531, %v9403, %v9659
        %v9788 = vsel %vm9532, %v9404, %v9660
        %v9789 = vsel %vm9533, %v9405, %v9661
        %v9790 = vsel %vm9534, %v9406, %v9662
        %v9791 = vsel %vm9535, %v9407, %v9663
        %v9792 = vsel %vm9536, %v9408, %v9664
        %v9793 = vsel %vm9537, %v9409, %v9665
        %v9794 = vpack.c.bf16 %v9674, %v9666
        %v9795 = vpack.c.bf16 %v9675, %v9667
        %v9796 = vpack.c.bf16 %v9676, %v9668
        %v9797 = vpack.c.bf16 %v9677, %v9669
        %v9798 = vpack.c.bf16 %v9678, %v9670
        %v9799 = vpack.c.bf16 %v9679, %v9671
        %v9800 = vpack.c.bf16 %v9680, %v9672
        %v9801 = vpack.c.bf16 %v9681, %v9673
        %v9802 = vpack.c.bf16 %v9690, %v9682
        %v9803 = vpack.c.bf16 %v9691, %v9683
        %v9804 = vpack.c.bf16 %v9692, %v9684
        %v9805 = vpack.c.bf16 %v9693, %v9685
        %v9806 = vpack.c.bf16 %v9694, %v9686
        %v9807 = vpack.c.bf16 %v9695, %v9687
        %v9808 = vpack.c.bf16 %v9696, %v9688
        %v9809 = vpack.c.bf16 %v9697, %v9689
        %v9810 = vpack.c.bf16 %v9706, %v9698
        %v9811 = vpack.c.bf16 %v9707, %v9699
        %v9812 = vpack.c.bf16 %v9708, %v9700
        %v9813 = vpack.c.bf16 %v9709, %v9701
        %v9814 = vpack.c.bf16 %v9710, %v9702
        %v9815 = vpack.c.bf16 %v9711, %v9703
        %v9816 = vpack.c.bf16 %v9712, %v9704
        %v9817 = vpack.c.bf16 %v9713, %v9705
        %v9818 = vpack.c.bf16 %v9722, %v9714
        %v9819 = vpack.c.bf16 %v9723, %v9715
        %v9820 = vpack.c.bf16 %v9724, %v9716
        %v9821 = vpack.c.bf16 %v9725, %v9717
        %v9822 = vpack.c.bf16 %v9726, %v9718
        %v9823 = vpack.c.bf16 %v9727, %v9719
        %v9824 = vpack.c.bf16 %v9728, %v9720
        %v9825 = vpack.c.bf16 %v9729, %v9721
        %v9826 = vpack.c.bf16 %v9738, %v9730
        %v9827 = vpack.c.bf16 %v9739, %v9731
        %v9828 = vpack.c.bf16 %v9740, %v9732
        %v9829 = vpack.c.bf16 %v9741, %v9733
        %v9830 = vpack.c.bf16 %v9742, %v9734
        %v9831 = vpack.c.bf16 %v9743, %v9735
        %v9832 = vpack.c.bf16 %v9744, %v9736
        %v9833 = vpack.c.bf16 %v9745, %v9737
        %v9834 = vpack.c.bf16 %v9754, %v9746
        %v9835 = vpack.c.bf16 %v9755, %v9747
        %v9836 = vpack.c.bf16 %v9756, %v9748
        %v9837 = vpack.c.bf16 %v9757, %v9749
        %v9838 = vpack.c.bf16 %v9758, %v9750
        %v9839 = vpack.c.bf16 %v9759, %v9751
        %v9840 = vpack.c.bf16 %v9760, %v9752
        %v9841 = vpack.c.bf16 %v9761, %v9753
        %v9842 = vpack.c.bf16 %v9770, %v9762
        %v9843 = vpack.c.bf16 %v9771, %v9763
        %v9844 = vpack.c.bf16 %v9772, %v9764
        %v9845 = vpack.c.bf16 %v9773, %v9765
        %v9846 = vpack.c.bf16 %v9774, %v9766
        %v9847 = vpack.c.bf16 %v9775, %v9767
        %v9848 = vpack.c.bf16 %v9776, %v9768
        %v9849 = vpack.c.bf16 %v9777, %v9769
        %v9850 = vpack.c.bf16 %v9786, %v9778
        %v9851 = vpack.c.bf16 %v9787, %v9779
        %v9852 = vpack.c.bf16 %v9788, %v9780
        %v9853 = vpack.c.bf16 %v9789, %v9781
        %v9854 = vpack.c.bf16 %v9790, %v9782
        %v9855 = vpack.c.bf16 %v9791, %v9783
        %v9856 = vpack.c.bf16 %v9792, %v9784
        %v9857 = vpack.c.bf16 %v9793, %v9785
        %v9858 = vld [vmem:[#allocation8] sm:$0xff]
        %v9859 = vld [vmem:[#allocation8 + $0x8] sm:$0xff]
        %v9860 = vld [vmem:[#allocation8 + $0x10] sm:$0xff]
        %v9861 = vld [vmem:[#allocation8 + $0x18] sm:$0xff]
        %v9862 = vld [vmem:[#allocation8 + $0x20] sm:$0xff]
        %v9863 = vld [vmem:[#allocation8 + $0x28] sm:$0xff]
        %v9864 = vld [vmem:[#allocation8 + $0x30] sm:$0xff]
        %v9865 = vld [vmem:[#allocation8 + $0x38] sm:$0xff]
        %v9866 = vld [vmem:[#allocation8 + $0x40] sm:$0xff]
        %v9867 = vld [vmem:[#allocation8 + $0x48] sm:$0xff]
        %v9868 = vld [vmem:[#allocation8 + $0x50] sm:$0xff]
        %v9869 = vld [vmem:[#allocation8 + $0x58] sm:$0xff]
        %v9870 = vld [vmem:[#allocation8 + $0x60] sm:$0xff]
        %v9871 = vld [vmem:[#allocation8 + $0x68] sm:$0xff]
        %v9872 = vld [vmem:[#allocation8 + $0x70] sm:$0xff]
        %v9873 = vld [vmem:[#allocation8 + $0x78] sm:$0xff]
        %v9874 = vld [vmem:[#allocation8 + $0x80] sm:$0xff]
        %v9875 = vld [vmem:[#allocation8 + $0x88] sm:$0xff]
        %v9876 = vld [vmem:[#allocation8 + $0x90] sm:$0xff]
        %v9877 = vld [vmem:[#allocation8 + $0x98] sm:$0xff]
        %v9878 = vld [vmem:[#allocation8 + $0xa0] sm:$0xff]
        %v9879 = vld [vmem:[#allocation8 + $0xa8] sm:$0xff]
        %v9880 = vld [vmem:[#allocation8 + $0xb0] sm:$0xff]
        %v9881 = vld [vmem:[#allocation8 + $0xb8] sm:$0xff]
        %v9882 = vld [vmem:[#allocation8 + $0xc0] sm:$0xff]
        %v9883 = vld [vmem:[#allocation8 + $0xc8] sm:$0xff]
        %v9884 = vld [vmem:[#allocation8 + $0xd0] sm:$0xff]
        %v9885 = vld [vmem:[#allocation8 + $0xd8] sm:$0xff]
        %v9886 = vld [vmem:[#allocation8 + $0xe0] sm:$0xff]
        %v9887 = vld [vmem:[#allocation8 + $0xe8] sm:$0xff]
        %v9888 = vld [vmem:[#allocation8 + $0xf0] sm:$0xff]
        %v9889 = vld [vmem:[#allocation8 + $0xf8] sm:$0xff]
        %v9890 = vld [vmem:[#allocation8 + $0x100] sm:$0xff]
        %v9891 = vld [vmem:[#allocation8 + $0x108] sm:$0xff]
        %v9892 = vld [vmem:[#allocation8 + $0x110] sm:$0xff]
        %v9893 = vld [vmem:[#allocation8 + $0x118] sm:$0xff]
        %v9894 = vld [vmem:[#allocation8 + $0x120] sm:$0xff]
        %v9895 = vld [vmem:[#allocation8 + $0x128] sm:$0xff]
        %v9896 = vld [vmem:[#allocation8 + $0x130] sm:$0xff]
        %v9897 = vld [vmem:[#allocation8 + $0x138] sm:$0xff]
        %v9898 = vld [vmem:[#allocation8 + $0x140] sm:$0xff]
        %v9899 = vld [vmem:[#allocation8 + $0x148] sm:$0xff]
        %v9900 = vld [vmem:[#allocation8 + $0x150] sm:$0xff]
        %v9901 = vld [vmem:[#allocation8 + $0x158] sm:$0xff]
        %v9902 = vld [vmem:[#allocation8 + $0x160] sm:$0xff]
        %v9903 = vld [vmem:[#allocation8 + $0x168] sm:$0xff]
        %v9904 = vld [vmem:[#allocation8 + $0x170] sm:$0xff]
        %v9905 = vld [vmem:[#allocation8 + $0x178] sm:$0xff]
        %v9906 = vld [vmem:[#allocation8 + $0x180] sm:$0xff]
        %v9907 = vld [vmem:[#allocation8 + $0x188] sm:$0xff]
        %v9908 = vld [vmem:[#allocation8 + $0x190] sm:$0xff]
        %v9909 = vld [vmem:[#allocation8 + $0x198] sm:$0xff]
        %v9910 = vld [vmem:[#allocation8 + $0x1a0] sm:$0xff]
        %v9911 = vld [vmem:[#allocation8 + $0x1a8] sm:$0xff]
        %v9912 = vld [vmem:[#allocation8 + $0x1b0] sm:$0xff]
        %v9913 = vld [vmem:[#allocation8 + $0x1b8] sm:$0xff]
        %v9914 = vld [vmem:[#allocation8 + $0x1c0] sm:$0xff]
        %v9915 = vld [vmem:[#allocation8 + $0x1c8] sm:$0xff]
        %v9916 = vld [vmem:[#allocation8 + $0x1d0] sm:$0xff]
        %v9917 = vld [vmem:[#allocation8 + $0x1d8] sm:$0xff]
        %v9918 = vld [vmem:[#allocation8 + $0x1e0] sm:$0xff]
        %v9919 = vld [vmem:[#allocation8 + $0x1e8] sm:$0xff]
        %v9920 = vld [vmem:[#allocation8 + $0x1f0] sm:$0xff]
        %v9921 = vld [vmem:[#allocation8 + $0x1f8] sm:$0xff]
        %v9922 = vld [vmem:[#allocation8 + $0x200] sm:$0xff]
        %v9923 = vld [vmem:[#allocation8 + $0x208] sm:$0xff]
        %v9924 = vld [vmem:[#allocation8 + $0x210] sm:$0xff]
        %v9925 = vld [vmem:[#allocation8 + $0x218] sm:$0xff]
        %v9926 = vld [vmem:[#allocation8 + $0x220] sm:$0xff]
        %v9927 = vld [vmem:[#allocation8 + $0x228] sm:$0xff]
        %v9928 = vld [vmem:[#allocation8 + $0x230] sm:$0xff]
        %v9929 = vld [vmem:[#allocation8 + $0x238] sm:$0xff]
        %v9930 = vld [vmem:[#allocation8 + $0x240] sm:$0xff]
        %v9931 = vld [vmem:[#allocation8 + $0x248] sm:$0xff]
        %v9932 = vld [vmem:[#allocation8 + $0x250] sm:$0xff]
        %v9933 = vld [vmem:[#allocation8 + $0x258] sm:$0xff]
        %v9934 = vld [vmem:[#allocation8 + $0x260] sm:$0xff]
        %v9935 = vld [vmem:[#allocation8 + $0x268] sm:$0xff]
        %v9936 = vld [vmem:[#allocation8 + $0x270] sm:$0xff]
        %v9937 = vld [vmem:[#allocation8 + $0x278] sm:$0xff]
        %v9938 = vld [vmem:[#allocation8 + $0x280] sm:$0xff]
        %v9939 = vld [vmem:[#allocation8 + $0x288] sm:$0xff]
        %v9940 = vld [vmem:[#allocation8 + $0x290] sm:$0xff]
        %v9941 = vld [vmem:[#allocation8 + $0x298] sm:$0xff]
        %v9942 = vld [vmem:[#allocation8 + $0x2a0] sm:$0xff]
        %v9943 = vld [vmem:[#allocation8 + $0x2a8] sm:$0xff]
        %v9944 = vld [vmem:[#allocation8 + $0x2b0] sm:$0xff]
        %v9945 = vld [vmem:[#allocation8 + $0x2b8] sm:$0xff]
        %v9946 = vld [vmem:[#allocation8 + $0x2c0] sm:$0xff]
        %v9947 = vld [vmem:[#allocation8 + $0x2c8] sm:$0xff]
        %v9948 = vld [vmem:[#allocation8 + $0x2d0] sm:$0xff]
        %v9949 = vld [vmem:[#allocation8 + $0x2d8] sm:$0xff]
        %v9950 = vld [vmem:[#allocation8 + $0x2e0] sm:$0xff]
        %v9951 = vld [vmem:[#allocation8 + $0x2e8] sm:$0xff]
        %v9952 = vld [vmem:[#allocation8 + $0x2f0] sm:$0xff]
        %v9953 = vld [vmem:[#allocation8 + $0x2f8] sm:$0xff]
        %v9954 = vld [vmem:[#allocation8 + $0x300] sm:$0xff]
        %v9955 = vld [vmem:[#allocation8 + $0x308] sm:$0xff]
        %v9956 = vld [vmem:[#allocation8 + $0x310] sm:$0xff]
        %v9957 = vld [vmem:[#allocation8 + $0x318] sm:$0xff]
        %v9958 = vld [vmem:[#allocation8 + $0x320] sm:$0xff]
        %v9959 = vld [vmem:[#allocation8 + $0x328] sm:$0xff]
        %v9960 = vld [vmem:[#allocation8 + $0x330] sm:$0xff]
        %v9961 = vld [vmem:[#allocation8 + $0x338] sm:$0xff]
        %v9962 = vld [vmem:[#allocation8 + $0x340] sm:$0xff]
        %v9963 = vld [vmem:[#allocation8 + $0x348] sm:$0xff]
        %v9964 = vld [vmem:[#allocation8 + $0x350] sm:$0xff]
        %v9965 = vld [vmem:[#allocation8 + $0x358] sm:$0xff]
        %v9966 = vld [vmem:[#allocation8 + $0x360] sm:$0xff]
        %v9967 = vld [vmem:[#allocation8 + $0x368] sm:$0xff]
        %v9968 = vld [vmem:[#allocation8 + $0x370] sm:$0xff]
        %v9969 = vld [vmem:[#allocation8 + $0x378] sm:$0xff]
        %v9970 = vld [vmem:[#allocation8 + $0x380] sm:$0xff]
        %v9971 = vld [vmem:[#allocation8 + $0x388] sm:$0xff]
        %v9972 = vld [vmem:[#allocation8 + $0x390] sm:$0xff]
        %v9973 = vld [vmem:[#allocation8 + $0x398] sm:$0xff]
        %v9974 = vld [vmem:[#allocation8 + $0x3a0] sm:$0xff]
        %v9975 = vld [vmem:[#allocation8 + $0x3a8] sm:$0xff]
        %v9976 = vld [vmem:[#allocation8 + $0x3b0] sm:$0xff]
        %v9977 = vld [vmem:[#allocation8 + $0x3b8] sm:$0xff]
        %v9978 = vld [vmem:[#allocation8 + $0x3c0] sm:$0xff]
        %v9979 = vld [vmem:[#allocation8 + $0x3c8] sm:$0xff]
        %v9980 = vld [vmem:[#allocation8 + $0x3d0] sm:$0xff]
        %v9981 = vld [vmem:[#allocation8 + $0x3d8] sm:$0xff]
        %v9982 = vld [vmem:[#allocation8 + $0x3e0] sm:$0xff]
        %v9983 = vld [vmem:[#allocation8 + $0x3e8] sm:$0xff]
        %v9984 = vld [vmem:[#allocation8 + $0x3f0] sm:$0xff]
        %v9985 = vld [vmem:[#allocation8 + $0x3f8] sm:$0xff]
        %v9987 = vlaneseq
        %v9988 = vshrl.u32 %v9987, 7
        %v9989 = vsub.s32 0, %v9988
        %v9990 = vrot.slane %v432, %v9989
        %v9991 = vlaneseq
        %v9992 = vshrl.u32 %v9991, 7
        %v9993 = vsub.s32 1, %v9992
        %v9994 = vrot.slane %v432, %v9993
        %v10125 = vunpack.c.l.b16 %v9858
        %v10126 = vunpack.c.h.b16 %v9858
        %v10127 = vunpack.c.l.b16 %v9859
        %v10128 = vunpack.c.h.b16 %v9859
        %v10129 = vunpack.c.l.b16 %v9860
        %v10130 = vunpack.c.h.b16 %v9860
        %v10131 = vunpack.c.l.b16 %v9861
        %v10132 = vunpack.c.h.b16 %v9861
        %v10133 = vunpack.c.l.b16 %v9862
        %v10134 = vunpack.c.h.b16 %v9862
        %v10135 = vunpack.c.l.b16 %v9863
        %v10136 = vunpack.c.h.b16 %v9863
        %v10137 = vunpack.c.l.b16 %v9864
        %v10138 = vunpack.c.h.b16 %v9864
        %v10139 = vunpack.c.l.b16 %v9865
        %v10140 = vunpack.c.h.b16 %v9865
        %v10141 = vunpack.c.l.b16 %v9866
        %v10142 = vunpack.c.h.b16 %v9866
        %v10143 = vunpack.c.l.b16 %v9867
        %v10144 = vunpack.c.h.b16 %v9867
        %v10145 = vunpack.c.l.b16 %v9868
        %v10146 = vunpack.c.h.b16 %v9868
        %v10147 = vunpack.c.l.b16 %v9869
        %v10148 = vunpack.c.h.b16 %v9869
        %v10149 = vunpack.c.l.b16 %v9870
        %v10150 = vunpack.c.h.b16 %v9870
        %v10151 = vunpack.c.l.b16 %v9871
        %v10152 = vunpack.c.h.b16 %v9871
        %v10153 = vunpack.c.l.b16 %v9872
        %v10154 = vunpack.c.h.b16 %v9872
        %v10155 = vunpack.c.l.b16 %v9873
        %v10156 = vunpack.c.h.b16 %v9873
        %v10157 = vunpack.c.l.b16 %v9874
        %v10158 = vunpack.c.h.b16 %v9874
        %v10159 = vunpack.c.l.b16 %v9875
        %v10160 = vunpack.c.h.b16 %v9875
        %v10161 = vunpack.c.l.b16 %v9876
        %v10162 = vunpack.c.h.b16 %v9876
        %v10163 = vunpack.c.l.b16 %v9877
        %v10164 = vunpack.c.h.b16 %v9877
        %v10165 = vunpack.c.l.b16 %v9878
        %v10166 = vunpack.c.h.b16 %v9878
        %v10167 = vunpack.c.l.b16 %v9879
        %v10168 = vunpack.c.h.b16 %v9879
        %v10169 = vunpack.c.l.b16 %v9880
        %v10170 = vunpack.c.h.b16 %v9880
        %v10171 = vunpack.c.l.b16 %v9881
        %v10172 = vunpack.c.h.b16 %v9881
        %v10173 = vunpack.c.l.b16 %v9882
        %v10174 = vunpack.c.h.b16 %v9882
        %v10175 = vunpack.c.l.b16 %v9883
        %v10176 = vunpack.c.h.b16 %v9883
        %v10177 = vunpack.c.l.b16 %v9884
        %v10178 = vunpack.c.h.b16 %v9884
        %v10179 = vunpack.c.l.b16 %v9885
        %v10180 = vunpack.c.h.b16 %v9885
        %v10181 = vunpack.c.l.b16 %v9886
        %v10182 = vunpack.c.h.b16 %v9886
        %v10183 = vunpack.c.l.b16 %v9887
        %v10184 = vunpack.c.h.b16 %v9887
        %v10185 = vunpack.c.l.b16 %v9888
        %v10186 = vunpack.c.h.b16 %v9888
        %v10187 = vunpack.c.l.b16 %v9889
        %v10188 = vunpack.c.h.b16 %v9889
        %v10189 = vunpack.c.l.b16 %v9890
        %v10190 = vunpack.c.h.b16 %v9890
        %v10191 = vunpack.c.l.b16 %v9891
        %v10192 = vunpack.c.h.b16 %v9891
        %v10193 = vunpack.c.l.b16 %v9892
        %v10194 = vunpack.c.h.b16 %v9892
        %v10195 = vunpack.c.l.b16 %v9893
        %v10196 = vunpack.c.h.b16 %v9893
        %v10197 = vunpack.c.l.b16 %v9894
        %v10198 = vunpack.c.h.b16 %v9894
        %v10199 = vunpack.c.l.b16 %v9895
        %v10200 = vunpack.c.h.b16 %v9895
        %v10201 = vunpack.c.l.b16 %v9896
        %v10202 = vunpack.c.h.b16 %v9896
        %v10203 = vunpack.c.l.b16 %v9897
        %v10204 = vunpack.c.h.b16 %v9897
        %v10205 = vunpack.c.l.b16 %v9898
        %v10206 = vunpack.c.h.b16 %v9898
        %v10207 = vunpack.c.l.b16 %v9899
        %v10208 = vunpack.c.h.b16 %v9899
        %v10209 = vunpack.c.l.b16 %v9900
        %v10210 = vunpack.c.h.b16 %v9900
        %v10211 = vunpack.c.l.b16 %v9901
        %v10212 = vunpack.c.h.b16 %v9901
        %v10213 = vunpack.c.l.b16 %v9902
        %v10214 = vunpack.c.h.b16 %v9902
        %v10215 = vunpack.c.l.b16 %v9903
        %v10216 = vunpack.c.h.b16 %v9903
        %v10217 = vunpack.c.l.b16 %v9904
        %v10218 = vunpack.c.h.b16 %v9904
        %v10219 = vunpack.c.l.b16 %v9905
        %v10220 = vunpack.c.h.b16 %v9905
        %v10221 = vunpack.c.l.b16 %v9906
        %v10222 = vunpack.c.h.b16 %v9906
        %v10223 = vunpack.c.l.b16 %v9907
        %v10224 = vunpack.c.h.b16 %v9907
        %v10225 = vunpack.c.l.b16 %v9908
        %v10226 = vunpack.c.h.b16 %v9908
        %v10227 = vunpack.c.l.b16 %v9909
        %v10228 = vunpack.c.h.b16 %v9909
        %v10229 = vunpack.c.l.b16 %v9910
        %v10230 = vunpack.c.h.b16 %v9910
        %v10231 = vunpack.c.l.b16 %v9911
        %v10232 = vunpack.c.h.b16 %v9911
        %v10233 = vunpack.c.l.b16 %v9912
        %v10234 = vunpack.c.h.b16 %v9912
        %v10235 = vunpack.c.l.b16 %v9913
        %v10236 = vunpack.c.h.b16 %v9913
        %v10237 = vunpack.c.l.b16 %v9914
        %v10238 = vunpack.c.h.b16 %v9914
        %v10239 = vunpack.c.l.b16 %v9915
        %v10240 = vunpack.c.h.b16 %v9915
        %v10241 = vunpack.c.l.b16 %v9916
        %v10242 = vunpack.c.h.b16 %v9916
        %v10243 = vunpack.c.l.b16 %v9917
        %v10244 = vunpack.c.h.b16 %v9917
        %v10245 = vunpack.c.l.b16 %v9918
        %v10246 = vunpack.c.h.b16 %v9918
        %v10247 = vunpack.c.l.b16 %v9919
        %v10248 = vunpack.c.h.b16 %v9919
        %v10249 = vunpack.c.l.b16 %v9920
        %v10250 = vunpack.c.h.b16 %v9920
        %v10251 = vunpack.c.l.b16 %v9921
        %v10252 = vunpack.c.h.b16 %v9921
        %v10253 = vunpack.c.l.b16 %v9922
        %v10254 = vunpack.c.h.b16 %v9922
        %v10255 = vunpack.c.l.b16 %v9923
        %v10256 = vunpack.c.h.b16 %v9923
        %v10257 = vunpack.c.l.b16 %v9924
        %v10258 = vunpack.c.h.b16 %v9924
        %v10259 = vunpack.c.l.b16 %v9925
        %v10260 = vunpack.c.h.b16 %v9925
        %v10261 = vunpack.c.l.b16 %v9926
        %v10262 = vunpack.c.h.b16 %v9926
        %v10263 = vunpack.c.l.b16 %v9927
        %v10264 = vunpack.c.h.b16 %v9927
        %v10265 = vunpack.c.l.b16 %v9928
        %v10266 = vunpack.c.h.b16 %v9928
        %v10267 = vunpack.c.l.b16 %v9929
        %v10268 = vunpack.c.h.b16 %v9929
        %v10269 = vunpack.c.l.b16 %v9930
        %v10270 = vunpack.c.h.b16 %v9930
        %v10271 = vunpack.c.l.b16 %v9931
        %v10272 = vunpack.c.h.b16 %v9931
        %v10273 = vunpack.c.l.b16 %v9932
        %v10274 = vunpack.c.h.b16 %v9932
        %v10275 = vunpack.c.l.b16 %v9933
        %v10276 = vunpack.c.h.b16 %v9933
        %v10277 = vunpack.c.l.b16 %v9934
        %v10278 = vunpack.c.h.b16 %v9934
        %v10279 = vunpack.c.l.b16 %v9935
        %v10280 = vunpack.c.h.b16 %v9935
        %v10281 = vunpack.c.l.b16 %v9936
        %v10282 = vunpack.c.h.b16 %v9936
        %v10283 = vunpack.c.l.b16 %v9937
        %v10284 = vunpack.c.h.b16 %v9937
        %v10285 = vunpack.c.l.b16 %v9938
        %v10286 = vunpack.c.h.b16 %v9938
        %v10287 = vunpack.c.l.b16 %v9939
        %v10288 = vunpack.c.h.b16 %v9939
        %v10289 = vunpack.c.l.b16 %v9940
        %v10290 = vunpack.c.h.b16 %v9940
        %v10291 = vunpack.c.l.b16 %v9941
        %v10292 = vunpack.c.h.b16 %v9941
        %v10293 = vunpack.c.l.b16 %v9942
        %v10294 = vunpack.c.h.b16 %v9942
        %v10295 = vunpack.c.l.b16 %v9943
        %v10296 = vunpack.c.h.b16 %v9943
        %v10297 = vunpack.c.l.b16 %v9944
        %v10298 = vunpack.c.h.b16 %v9944
        %v10299 = vunpack.c.l.b16 %v9945
        %v10300 = vunpack.c.h.b16 %v9945
        %v10301 = vunpack.c.l.b16 %v9946
        %v10302 = vunpack.c.h.b16 %v9946
        %v10303 = vunpack.c.l.b16 %v9947
        %v10304 = vunpack.c.h.b16 %v9947
        %v10305 = vunpack.c.l.b16 %v9948
        %v10306 = vunpack.c.h.b16 %v9948
        %v10307 = vunpack.c.l.b16 %v9949
        %v10308 = vunpack.c.h.b16 %v9949
        %v10309 = vunpack.c.l.b16 %v9950
        %v10310 = vunpack.c.h.b16 %v9950
        %v10311 = vunpack.c.l.b16 %v9951
        %v10312 = vunpack.c.h.b16 %v9951
        %v10313 = vunpack.c.l.b16 %v9952
        %v10314 = vunpack.c.h.b16 %v9952
        %v10315 = vunpack.c.l.b16 %v9953
        %v10316 = vunpack.c.h.b16 %v9953
        %v10317 = vunpack.c.l.b16 %v9954
        %v10318 = vunpack.c.h.b16 %v9954
        %v10319 = vunpack.c.l.b16 %v9955
        %v10320 = vunpack.c.h.b16 %v9955
        %v10321 = vunpack.c.l.b16 %v9956
        %v10322 = vunpack.c.h.b16 %v9956
        %v10323 = vunpack.c.l.b16 %v9957
        %v10324 = vunpack.c.h.b16 %v9957
        %v10325 = vunpack.c.l.b16 %v9958
        %v10326 = vunpack.c.h.b16 %v9958
        %v10327 = vunpack.c.l.b16 %v9959
        %v10328 = vunpack.c.h.b16 %v9959
        %v10329 = vunpack.c.l.b16 %v9960
        %v10330 = vunpack.c.h.b16 %v9960
        %v10331 = vunpack.c.l.b16 %v9961
        %v10332 = vunpack.c.h.b16 %v9961
        %v10333 = vunpack.c.l.b16 %v9962
        %v10334 = vunpack.c.h.b16 %v9962
        %v10335 = vunpack.c.l.b16 %v9963
        %v10336 = vunpack.c.h.b16 %v9963
        %v10337 = vunpack.c.l.b16 %v9964
        %v10338 = vunpack.c.h.b16 %v9964
        %v10339 = vunpack.c.l.b16 %v9965
        %v10340 = vunpack.c.h.b16 %v9965
        %v10341 = vunpack.c.l.b16 %v9966
        %v10342 = vunpack.c.h.b16 %v9966
        %v10343 = vunpack.c.l.b16 %v9967
        %v10344 = vunpack.c.h.b16 %v9967
        %v10345 = vunpack.c.l.b16 %v9968
        %v10346 = vunpack.c.h.b16 %v9968
        %v10347 = vunpack.c.l.b16 %v9969
        %v10348 = vunpack.c.h.b16 %v9969
        %v10349 = vunpack.c.l.b16 %v9970
        %v10350 = vunpack.c.h.b16 %v9970
        %v10351 = vunpack.c.l.b16 %v9971
        %v10352 = vunpack.c.h.b16 %v9971
        %v10353 = vunpack.c.l.b16 %v9972
        %v10354 = vunpack.c.h.b16 %v9972
        %v10355 = vunpack.c.l.b16 %v9973
        %v10356 = vunpack.c.h.b16 %v9973
        %v10357 = vunpack.c.l.b16 %v9974
        %v10358 = vunpack.c.h.b16 %v9974
        %v10359 = vunpack.c.l.b16 %v9975
        %v10360 = vunpack.c.h.b16 %v9975
        %v10361 = vunpack.c.l.b16 %v9976
        %v10362 = vunpack.c.h.b16 %v9976
        %v10363 = vunpack.c.l.b16 %v9977
        %v10364 = vunpack.c.h.b16 %v9977
        %v10365 = vunpack.c.l.b16 %v9978
        %v10366 = vunpack.c.h.b16 %v9978
        %v10367 = vunpack.c.l.b16 %v9979
        %v10368 = vunpack.c.h.b16 %v9979
        %v10369 = vunpack.c.l.b16 %v9980
        %v10370 = vunpack.c.h.b16 %v9980
        %v10371 = vunpack.c.l.b16 %v9981
        %v10372 = vunpack.c.h.b16 %v9981
        %v10373 = vunpack.c.l.b16 %v9982
        %v10374 = vunpack.c.h.b16 %v9982
        %v10375 = vunpack.c.l.b16 %v9983
        %v10376 = vunpack.c.h.b16 %v9983
        %v10377 = vunpack.c.l.b16 %v9984
        %v10378 = vunpack.c.h.b16 %v9984
        %v10379 = vunpack.c.l.b16 %v9985
        %v10380 = vunpack.c.h.b16 %v9985
        %v10381 = vpack.c.b16 %v10127, %v10125
        %v10382 = vpack.c.b16 %v10128, %v10126
        %v10383 = vpack.c.b16 %v10131, %v10129
        %v10384 = vpack.c.b16 %v10132, %v10130
        %v10385 = vpack.c.b16 %v10135, %v10133
        %v10386 = vpack.c.b16 %v10136, %v10134
        %v10387 = vpack.c.b16 %v10139, %v10137
        %v10388 = vpack.c.b16 %v10140, %v10138
        %v10389 = vpack.c.b16 %v10143, %v10141
        %v10390 = vpack.c.b16 %v10144, %v10142
        %v10391 = vpack.c.b16 %v10147, %v10145
        %v10392 = vpack.c.b16 %v10148, %v10146
        %v10393 = vpack.c.b16 %v10151, %v10149
        %v10394 = vpack.c.b16 %v10152, %v10150
        %v10395 = vpack.c.b16 %v10155, %v10153
        %v10396 = vpack.c.b16 %v10156, %v10154
        %v10397 = vpack.c.b16 %v10159, %v10157
        %v10398 = vpack.c.b16 %v10160, %v10158
        %v10399 = vpack.c.b16 %v10163, %v10161
        %v10400 = vpack.c.b16 %v10164, %v10162
        %v10401 = vpack.c.b16 %v10167, %v10165
        %v10402 = vpack.c.b16 %v10168, %v10166
        %v10403 = vpack.c.b16 %v10171, %v10169
        %v10404 = vpack.c.b16 %v10172, %v10170
        %v10405 = vpack.c.b16 %v10175, %v10173
        %v10406 = vpack.c.b16 %v10176, %v10174
        %v10407 = vpack.c.b16 %v10179, %v10177
        %v10408 = vpack.c.b16 %v10180, %v10178
        %v10409 = vpack.c.b16 %v10183, %v10181
        %v10410 = vpack.c.b16 %v10184, %v10182
        %v10411 = vpack.c.b16 %v10187, %v10185
        %v10412 = vpack.c.b16 %v10188, %v10186
        %v10413 = vpack.c.b16 %v10191, %v10189
        %v10414 = vpack.c.b16 %v10192, %v10190
        %v10415 = vpack.c.b16 %v10195, %v10193
        %v10416 = vpack.c.b16 %v10196, %v10194
        %v10417 = vpack.c.b16 %v10199, %v10197
        %v10418 = vpack.c.b16 %v10200, %v10198
        %v10419 = vpack.c.b16 %v10203, %v10201
        %v10420 = vpack.c.b16 %v10204, %v10202
        %v10421 = vpack.c.b16 %v10207, %v10205
        %v10422 = vpack.c.b16 %v10208, %v10206
        %v10423 = vpack.c.b16 %v10211, %v10209
        %v10424 = vpack.c.b16 %v10212, %v10210
        %v10425 = vpack.c.b16 %v10215, %v10213
        %v10426 = vpack.c.b16 %v10216, %v10214
        %v10427 = vpack.c.b16 %v10219, %v10217
        %v10428 = vpack.c.b16 %v10220, %v10218
        %v10429 = vpack.c.b16 %v10223, %v10221
        %v10430 = vpack.c.b16 %v10224, %v10222
        %v10431 = vpack.c.b16 %v10227, %v10225
        %v10432 = vpack.c.b16 %v10228, %v10226
        %v10433 = vpack.c.b16 %v10231, %v10229
        %v10434 = vpack.c.b16 %v10232, %v10230
        %v10435 = vpack.c.b16 %v10235, %v10233
        %v10436 = vpack.c.b16 %v10236, %v10234
        %v10437 = vpack.c.b16 %v10239, %v10237
        %v10438 = vpack.c.b16 %v10240, %v10238
        %v10439 = vpack.c.b16 %v10243, %v10241
        %v10440 = vpack.c.b16 %v10244, %v10242
        %v10441 = vpack.c.b16 %v10247, %v10245
        %v10442 = vpack.c.b16 %v10248, %v10246
        %v10443 = vpack.c.b16 %v10251, %v10249
        %v10444 = vpack.c.b16 %v10252, %v10250
        %v10445 = vpack.c.b16 %v10255, %v10253
        %v10446 = vpack.c.b16 %v10256, %v10254
        %v10447 = vpack.c.b16 %v10259, %v10257
        %v10448 = vpack.c.b16 %v10260, %v10258
        %v10449 = vpack.c.b16 %v10263, %v10261
        %v10450 = vpack.c.b16 %v10264, %v10262
        %v10451 = vpack.c.b16 %v10267, %v10265
        %v10452 = vpack.c.b16 %v10268, %v10266
        %v10453 = vpack.c.b16 %v10271, %v10269
        %v10454 = vpack.c.b16 %v10272, %v10270
        %v10455 = vpack.c.b16 %v10275, %v10273
        %v10456 = vpack.c.b16 %v10276, %v10274
        %v10457 = vpack.c.b16 %v10279, %v10277
        %v10458 = vpack.c.b16 %v10280, %v10278
        %v10459 = vpack.c.b16 %v10283, %v10281
        %v10460 = vpack.c.b16 %v10284, %v10282
        %v10461 = vpack.c.b16 %v10287, %v10285
        %v10462 = vpack.c.b16 %v10288, %v10286
        %v10463 = vpack.c.b16 %v10291, %v10289
        %v10464 = vpack.c.b16 %v10292, %v10290
        %v10465 = vpack.c.b16 %v10295, %v10293
        %v10466 = vpack.c.b16 %v10296, %v10294
        %v10467 = vpack.c.b16 %v10299, %v10297
        %v10468 = vpack.c.b16 %v10300, %v10298
        %v10469 = vpack.c.b16 %v10303, %v10301
        %v10470 = vpack.c.b16 %v10304, %v10302
        %v10471 = vpack.c.b16 %v10307, %v10305
        %v10472 = vpack.c.b16 %v10308, %v10306
        %v10473 = vpack.c.b16 %v10311, %v10309
        %v10474 = vpack.c.b16 %v10312, %v10310
        %v10475 = vpack.c.b16 %v10315, %v10313
        %v10476 = vpack.c.b16 %v10316, %v10314
        %v10477 = vpack.c.b16 %v10319, %v10317
        %v10478 = vpack.c.b16 %v10320, %v10318
        %v10479 = vpack.c.b16 %v10323, %v10321
        %v10480 = vpack.c.b16 %v10324, %v10322
        %v10481 = vpack.c.b16 %v10327, %v10325
        %v10482 = vpack.c.b16 %v10328, %v10326
        %v10483 = vpack.c.b16 %v10331, %v10329
        %v10484 = vpack.c.b16 %v10332, %v10330
        %v10485 = vpack.c.b16 %v10335, %v10333
        %v10486 = vpack.c.b16 %v10336, %v10334
        %v10487 = vpack.c.b16 %v10339, %v10337
        %v10488 = vpack.c.b16 %v10340, %v10338
        %v10489 = vpack.c.b16 %v10343, %v10341
        %v10490 = vpack.c.b16 %v10344, %v10342
        %v10491 = vpack.c.b16 %v10347, %v10345
        %v10492 = vpack.c.b16 %v10348, %v10346
        %v10493 = vpack.c.b16 %v10351, %v10349
        %v10494 = vpack.c.b16 %v10352, %v10350
        %v10495 = vpack.c.b16 %v10355, %v10353
        %v10496 = vpack.c.b16 %v10356, %v10354
        %v10497 = vpack.c.b16 %v10359, %v10357
        %v10498 = vpack.c.b16 %v10360, %v10358
        %v10499 = vpack.c.b16 %v10363, %v10361
        %v10500 = vpack.c.b16 %v10364, %v10362
        %v10501 = vpack.c.b16 %v10367, %v10365
        %v10502 = vpack.c.b16 %v10368, %v10366
        %v10503 = vpack.c.b16 %v10371, %v10369
        %v10504 = vpack.c.b16 %v10372, %v10370
        %v10505 = vpack.c.b16 %v10375, %v10373
        %v10506 = vpack.c.b16 %v10376, %v10374
        %v10507 = vpack.c.b16 %v10379, %v10377
        %v10508 = vpack.c.b16 %v10380, %v10378
        %10637 = vmatprep.subr.bf16.mxu0 %v10382
        %10638 = vmatpush1.bf16.msra.mxu0 %v10381
        %10639 = vmatprep.subr.bf16.mxu0 %v10384
        %10640 = vmatpush1.bf16.msra.mxu0 %v10383
        %10641 = vmatprep.subr.bf16.mxu0 %v10386
        %10642 = vmatpush1.bf16.msra.mxu0 %v10385
        %10643 = vmatprep.subr.bf16.mxu0 %v10388
        %10644 = vmatpush1.bf16.msra.mxu0 %v10387
        %10645 = vmatprep.subr.bf16.mxu0 %v10390
        %10646 = vmatpush1.bf16.msra.mxu0 %v10389
        %10647 = vmatprep.subr.bf16.mxu0 %v10392
        %10648 = vmatpush1.bf16.msra.mxu0 %v10391
        %10649 = vmatprep.subr.bf16.mxu0 %v10394
        %10650 = vmatpush1.bf16.msra.mxu0 %v10393
        %10651 = vmatprep.subr.bf16.mxu0 %v10396
        %10652 = vmatpush1.bf16.msra.mxu0 %v10395
        %10653 = vmatprep.subr.bf16.mxu0 %v10398
        %10654 = vmatpush1.bf16.msra.mxu0 %v10397
        %10655 = vmatprep.subr.bf16.mxu0 %v10400
        %10656 = vmatpush1.bf16.msra.mxu0 %v10399
        %10657 = vmatprep.subr.bf16.mxu0 %v10402
        %10658 = vmatpush1.bf16.msra.mxu0 %v10401
        %10659 = vmatprep.subr.bf16.mxu0 %v10404
        %10660 = vmatpush1.bf16.msra.mxu0 %v10403
        %10661 = vmatprep.subr.bf16.mxu0 %v10406
        %10662 = vmatpush1.bf16.msra.mxu0 %v10405
        %10663 = vmatprep.subr.bf16.mxu0 %v10408
        %10664 = vmatpush1.bf16.msra.mxu0 %v10407
        %10665 = vmatprep.subr.bf16.mxu0 %v10410
        %10666 = vmatpush1.bf16.msra.mxu0 %v10409
        %10667 = vmatprep.subr.bf16.mxu0 %v10412
        %10668 = vmatpush1.bf16.msra.mxu0 %v10411
        %10669 = vmatprep.mubr.bf16.mxu0 %v9795
        %10670 = vmatmul.mubr.bf16.gmra.mrb[0].mxu0 %v9794
        %v10671 = vpop.f32.mrb[0].mxu0
        %v10672 = vadd.f32 %v9990, %v10671
        %v10673 = vpop.f32.mrb[0].mxu0
        %v10674 = vadd.f32 %v9994, %v10673
        %v10675 = vpop.f32.mrb[0].mxu0
        %v10676 = vadd.f32 %v9990, %v10675
        %v10677 = vpop.f32.mrb[0].mxu0
        %v10678 = vadd.f32 %v9994, %v10677
        %10679 = vmatprep.mubr.bf16.mxu0 %v9803
        %10680 = vmatmul.mubr.bf16.gmra.mrb[0].mxu0 %v9802
        %v10681 = vpop.f32.mrb[0].mxu0
        %v10682 = vadd.f32 %v9990, %v10681
        %v10683 = vpop.f32.mrb[0].mxu0
        %v10684 = vadd.f32 %v9994, %v10683
        %v10685 = vpop.f32.mrb[0].mxu0
        %v10686 = vadd.f32 %v9990, %v10685
        %v10687 = vpop.f32.mrb[0].mxu0
        %v10688 = vadd.f32 %v9994, %v10687
        %10689 = vmatprep.mubr.bf16.mxu0 %v9811
        %10690 = vmatmul.mubr.bf16.gmra.mrb[0].mxu0 %v9810
        %v10691 = vpop.f32.mrb[0].mxu0
        %v10692 = vadd.f32 %v9990, %v10691
        %v10693 = vpop.f32.mrb[0].mxu0
        %v10694 = vadd.f32 %v9994, %v10693
        %v10695 = vpop.f32.mrb[0].mxu0
        %v10696 = vadd.f32 %v9990, %v10695
        %v10697 = vpop.f32.mrb[0].mxu0
        %v10698 = vadd.f32 %v9994, %v10697
        %10699 = vmatprep.mubr.bf16.mxu0 %v9819
        %10700 = vmatmul.mubr.bf16.gmra.mrb[0].mxu0 %v9818
        %v10701 = vpop.f32.mrb[0].mxu0
        %v10702 = vadd.f32 %v9990, %v10701
        %v10703 = vpop.f32.mrb[0].mxu0
        %v10704 = vadd.f32 %v9994, %v10703
        %v10705 = vpop.f32.mrb[0].mxu0
        %v10706 = vadd.f32 %v9990, %v10705
        %v10707 = vpop.f32.mrb[0].mxu0
        %v10708 = vadd.f32 %v9994, %v10707
        %10709 = vmatprep.mubr.bf16.mxu0 %v9827
        %10710 = vmatmul.mubr.bf16.gmra.mrb[0].mxu0 %v9826
        %v10711 = vpop.f32.mrb[0].mxu0
        %v10712 = vadd.f32 %v9990, %v10711
        %v10713 = vpop.f32.mrb[0].mxu0
        %v10714 = vadd.f32 %v9994, %v10713
        %v10715 = vpop.f32.mrb[0].mxu0
        %v10716 = vadd.f32 %v9990, %v10715
        %v10717 = vpop.f32.mrb[0].mxu0
        %v10718 = vadd.f32 %v9994, %v10717
        %10719 = vmatprep.mubr.bf16.mxu0 %v9835
        %10720 = vmatmul.mubr.bf16.gmra.mrb[0].mxu0 %v9834
        %v10721 = vpop.f32.mrb[0].mxu0
        %v10722 = vadd.f32 %v9990, %v10721
        %v10723 = vpop.f32.mrb[0].mxu0
        %v10724 = vadd.f32 %v9994, %v10723
        %v10725 = vpop.f32.mrb[0].mxu0
        %v10726 = vadd.f32 %v9990, %v10725
        %v10727 = vpop.f32.mrb[0].mxu0
        %v10728 = vadd.f32 %v9994, %v10727
        %10729 = vmatprep.mubr.bf16.mxu0 %v9843
        %10730 = vmatmul.mubr.bf16.gmra.mrb[0].mxu0 %v9842
        %v10731 = vpop.f32.mrb[0].mxu0
        %v10732 = vadd.f32 %v9990, %v10731
        %v10733 = vpop.f32.mrb[0].mxu0
        %v10734 = vadd.f32 %v9994, %v10733
        %v10735 = vpop.f32.mrb[0].mxu0
        %v10736 = vadd.f32 %v9990, %v10735
        %v10737 = vpop.f32.mrb[0].mxu0
        %v10738 = vadd.f32 %v9994, %v10737
        %10739 = vmatprep.mubr.bf16.mxu0 %v9851
        %10740 = vmatmul.mubr.bf16.gmra.mrb[0].mxu0 %v9850
        %v10741 = vpop.f32.mrb[0].mxu0
        %v10742 = vadd.f32 %v9990, %v10741
        %v10743 = vpop.f32.mrb[0].mxu0
        %v10744 = vadd.f32 %v9994, %v10743
        %v10745 = vpop.f32.mrb[0].mxu0
        %v10746 = vadd.f32 %v9990, %v10745
        %v10747 = vpop.f32.mrb[0].mxu0
        %v10748 = vadd.f32 %v9994, %v10747
        %10749 = vdwg.mxu0
        %10750 = vmatprep.subr.bf16.mxu0 %v10414
        %10751 = vmatpush1.bf16.msra.mxu0 %v10413
        %10752 = vmatprep.subr.bf16.mxu0 %v10416
        %10753 = vmatpush1.bf16.msra.mxu0 %v10415
        %10754 = vmatprep.subr.bf16.mxu0 %v10418
        %10755 = vmatpush1.bf16.msra.mxu0 %v10417
        %10756 = vmatprep.subr.bf16.mxu0 %v10420
        %10757 = vmatpush1.bf16.msra.mxu0 %v10419
        %10758 = vmatprep.subr.bf16.mxu0 %v10422
        %10759 = vmatpush1.bf16.msra.mxu0 %v10421
        %10760 = vmatprep.subr.bf16.mxu0 %v10424
        %10761 = vmatpush1.bf16.msra.mxu0 %v10423
        %10762 = vmatprep.subr.bf16.mxu0 %v10426
        %10763 = vmatpush1.bf16.msra.mxu0 %v10425
        %10764 = vmatprep.subr.bf16.mxu0 %v10428
        %10765 = vmatpush1.bf16.msra.mxu0 %v10427
        %10766 = vmatprep.subr.bf16.mxu0 %v10430
        %10767 = vmatpush1.bf16.msra.mxu0 %v10429
        %10768 = vmatprep.subr.bf16.mxu0 %v10432
        %10769 = vmatpush1.bf16.msra.mxu0 %v10431
        %10770 = vmatprep.subr.bf16.mxu0 %v10434
        %10771 = vmatpush1.bf16.msra.mxu0 %v10433
        %10772 = vmatprep.subr.bf16.mxu0 %v10436
        %10773 = vmatpush1.bf16.msra.mxu0 %v10435
        %10774 = vmatprep.subr.bf16.mxu0 %v10438
        %10775 = vmatpush1.bf16.msra.mxu0 %v10437
        %10776 = vmatprep.subr.bf16.mxu0 %v10440
        %10777 = vmatpush1.bf16.msra.mxu0 %v10439
        %10778 = vmatprep.subr.bf16.mxu0 %v10442
        %10779 = vmatpush1.bf16.msra.mxu0 %v10441
        %10780 = vmatprep.subr.bf16.mxu0 %v10444
        %10781 = vmatpush1.bf16.msra.mxu0 %v10443
        %10782 = vmatprep.mubr.bf16.mxu0 %v9797
        %10783 = vmatmul.mubr.bf16.gmra.mrb[0].mxu0 %v9796
        %v10784 = vpop.f32.mrb[0].mxu0
        %v10785 = vadd.f32 %v10672, %v10784
        %v10786 = vpop.f32.mrb[0].mxu0
        %v10787 = vadd.f32 %v10674, %v10786
        %v10788 = vpop.f32.mrb[0].mxu0
        %v10789 = vadd.f32 %v10676, %v10788
        %v10790 = vpop.f32.mrb[0].mxu0
        %v10791 = vadd.f32 %v10678, %v10790
        %10792 = vmatprep.mubr.bf16.mxu0 %v9805
        %10793 = vmatmul.mubr.bf16.gmra.mrb[0].mxu0 %v9804
        %v10794 = vpop.f32.mrb[0].mxu0
        %v10795 = vadd.f32 %v10682, %v10794
        %v10796 = vpop.f32.mrb[0].mxu0
        %v10797 = vadd.f32 %v10684, %v10796
        %v10798 = vpop.f32.mrb[0].mxu0
        %v10799 = vadd.f32 %v10686, %v10798
        %v10800 = vpop.f32.mrb[0].mxu0
        %v10801 = vadd.f32 %v10688, %v10800
        %10802 = vmatprep.mubr.bf16.mxu0 %v9813
        %10803 = vmatmul.mubr.bf16.gmra.mrb[0].mxu0 %v9812
        %v10804 = vpop.f32.mrb[0].mxu0
        %v10805 = vadd.f32 %v10692, %v10804
        %v10806 = vpop.f32.mrb[0].mxu0
        %v10807 = vadd.f32 %v10694, %v10806
        %v10808 = vpop.f32.mrb[0].mxu0
        %v10809 = vadd.f32 %v10696, %v10808
        %v10810 = vpop.f32.mrb[0].mxu0
        %v10811 = vadd.f32 %v10698, %v10810
        %10812 = vmatprep.mubr.bf16.mxu0 %v9821
        %10813 = vmatmul.mubr.bf16.gmra.mrb[0].mxu0 %v9820
        %v10814 = vpop.f32.mrb[0].mxu0
        %v10815 = vadd.f32 %v10702, %v10814
        %v10816 = vpop.f32.mrb[0].mxu0
        %v10817 = vadd.f32 %v10704, %v10816
        %v10818 = vpop.f32.mrb[0].mxu0
        %v10819 = vadd.f32 %v10706, %v10818
        %v10820 = vpop.f32.mrb[0].mxu0
        %v10821 = vadd.f32 %v10708, %v10820
        %10822 = vmatprep.mubr.bf16.mxu0 %v9829
        %10823 = vmatmul.mubr.bf16.gmra.mrb[0].mxu0 %v9828
        %v10824 = vpop.f32.mrb[0].mxu0
        %v10825 = vadd.f32 %v10712, %v10824
        %v10826 = vpop.f32.mrb[0].mxu0
        %v10827 = vadd.f32 %v10714, %v10826
        %v10828 = vpop.f32.mrb[0].mxu0
        %v10829 = vadd.f32 %v10716, %v10828
        %v10830 = vpop.f32.mrb[0].mxu0
        %v10831 = vadd.f32 %v10718, %v10830
        %10832 = vmatprep.mubr.bf16.mxu0 %v9837
        %10833 = vmatmul.mubr.bf16.gmra.mrb[0].mxu0 %v9836
        %v10834 = vpop.f32.mrb[0].mxu0
        %v10835 = vadd.f32 %v10722, %v10834
        %v10836 = vpop.f32.mrb[0].mxu0
        %v10837 = vadd.f32 %v10724, %v10836
        %v10838 = vpop.f32.mrb[0].mxu0
        %v10839 = vadd.f32 %v10726, %v10838
        %v10840 = vpop.f32.mrb[0].mxu0
        %v10841 = vadd.f32 %v10728, %v10840
        %10842 = vmatprep.mubr.bf16.mxu0 %v9845
        %10843 = vmatmul.mubr.bf16.gmra.mrb[0].mxu0 %v9844
        %v10844 = vpop.f32.mrb[0].mxu0
        %v10845 = vadd.f32 %v10732, %v10844
        %v10846 = vpop.f32.mrb[0].mxu0
        %v10847 = vadd.f32 %v10734, %v10846
        %v10848 = vpop.f32.mrb[0].mxu0
        %v10849 = vadd.f32 %v10736, %v10848
        %v10850 = vpop.f32.mrb[0].mxu0
        %v10851 = vadd.f32 %v10738, %v10850
        %10852 = vmatprep.mubr.bf16.mxu0 %v9853
        %10853 = vmatmul.mubr.bf16.gmra.mrb[0].mxu0 %v9852
        %v10854 = vpop.f32.mrb[0].mxu0
        %v10855 = vadd.f32 %v10742, %v10854
        %v10856 = vpop.f32.mrb[0].mxu0
        %v10857 = vadd.f32 %v10744, %v10856
        %v10858 = vpop.f32.mrb[0].mxu0
        %v10859 = vadd.f32 %v10746, %v10858
        %v10860 = vpop.f32.mrb[0].mxu0
        %v10861 = vadd.f32 %v10748, %v10860
        %10862 = vdwg.mxu0
        %10863 = vmatprep.subr.bf16.mxu0 %v10446
        %10864 = vmatpush1.bf16.msra.mxu0 %v10445
        %10865 = vmatprep.subr.bf16.mxu0 %v10448
        %10866 = vmatpush1.bf16.msra.mxu0 %v10447
        %10867 = vmatprep.subr.bf16.mxu0 %v10450
        %10868 = vmatpush1.bf16.msra.mxu0 %v10449
        %10869 = vmatprep.subr.bf16.mxu0 %v10452
        %10870 = vmatpush1.bf16.msra.mxu0 %v10451
        %10871 = vmatprep.subr.bf16.mxu0 %v10454
        %10872 = vmatpush1.bf16.msra.mxu0 %v10453
        %10873 = vmatprep.subr.bf16.mxu0 %v10456
        %10874 = vmatpush1.bf16.msra.mxu0 %v10455
        %10875 = vmatprep.subr.bf16.mxu0 %v10458
        %10876 = vmatpush1.bf16.msra.mxu0 %v10457
        %10877 = vmatprep.subr.bf16.mxu0 %v10460
        %10878 = vmatpush1.bf16.msra.mxu0 %v10459
        %10879 = vmatprep.subr.bf16.mxu0 %v10462
        %10880 = vmatpush1.bf16.msra.mxu0 %v10461
        %10881 = vmatprep.subr.bf16.mxu0 %v10464
        %10882 = vmatpush1.bf16.msra.mxu0 %v10463
        %10883 = vmatprep.subr.bf16.mxu0 %v10466
        %10884 = vmatpush1.bf16.msra.mxu0 %v10465
        %10885 = vmatprep.subr.bf16.mxu0 %v10468
        %10886 = vmatpush1.bf16.msra.mxu0 %v10467
        %10887 = vmatprep.subr.bf16.mxu0 %v10470
        %10888 = vmatpush1.bf16.msra.mxu0 %v10469
        %10889 = vmatprep.subr.bf16.mxu0 %v10472
        %10890 = vmatpush1.bf16.msra.mxu0 %v10471
        %10891 = vmatprep.subr.bf16.mxu0 %v10474
        %10892 = vmatpush1.bf16.msra.mxu0 %v10473
        %10893 = vmatprep.subr.bf16.mxu0 %v10476
        %10894 = vmatpush1.bf16.msra.mxu0 %v10475
        %10895 = vmatprep.mubr.bf16.mxu0 %v9799
        %10896 = vmatmul.mubr.bf16.gmra.mrb[0].mxu0 %v9798
        %v10897 = vpop.f32.mrb[0].mxu0
        %v10898 = vadd.f32 %v10785, %v10897
        %v10899 = vpop.f32.mrb[0].mxu0
        %v10900 = vadd.f32 %v10787, %v10899
        %v10901 = vpop.f32.mrb[0].mxu0
        %v10902 = vadd.f32 %v10789, %v10901
        %v10903 = vpop.f32.mrb[0].mxu0
        %v10904 = vadd.f32 %v10791, %v10903
        %10905 = vmatprep.mubr.bf16.mxu0 %v9807
        %10906 = vmatmul.mubr.bf16.gmra.mrb[0].mxu0 %v9806
        %v10907 = vpop.f32.mrb[0].mxu0
        %v10908 = vadd.f32 %v10795, %v10907
        %v10909 = vpop.f32.mrb[0].mxu0
        %v10910 = vadd.f32 %v10797, %v10909
        %v10911 = vpop.f32.mrb[0].mxu0
        %v10912 = vadd.f32 %v10799, %v10911
        %v10913 = vpop.f32.mrb[0].mxu0
        %v10914 = vadd.f32 %v10801, %v10913
        %10915 = vmatprep.mubr.bf16.mxu0 %v9815
        %10916 = vmatmul.mubr.bf16.gmra.mrb[0].mxu0 %v9814
        %v10917 = vpop.f32.mrb[0].mxu0
        %v10918 = vadd.f32 %v10805, %v10917
        %v10919 = vpop.f32.mrb[0].mxu0
        %v10920 = vadd.f32 %v10807, %v10919
        %v10921 = vpop.f32.mrb[0].mxu0
        %v10922 = vadd.f32 %v10809, %v10921
        %v10923 = vpop.f32.mrb[0].mxu0
        %v10924 = vadd.f32 %v10811, %v10923
        %10925 = vmatprep.mubr.bf16.mxu0 %v9823
        %10926 = vmatmul.mubr.bf16.gmra.mrb[0].mxu0 %v9822
        %v10927 = vpop.f32.mrb[0].mxu0
        %v10928 = vadd.f32 %v10815, %v10927
        %v10929 = vpop.f32.mrb[0].mxu0
        %v10930 = vadd.f32 %v10817, %v10929
        %v10931 = vpop.f32.mrb[0].mxu0
        %v10932 = vadd.f32 %v10819, %v10931
        %v10933 = vpop.f32.mrb[0].mxu0
        %v10934 = vadd.f32 %v10821, %v10933
        %10935 = vmatprep.mubr.bf16.mxu0 %v9831
        %10936 = vmatmul.mubr.bf16.gmra.mrb[0].mxu0 %v9830
        %v10937 = vpop.f32.mrb[0].mxu0
        %v10938 = vadd.f32 %v10825, %v10937
        %v10939 = vpop.f32.mrb[0].mxu0
        %v10940 = vadd.f32 %v10827, %v10939
        %v10941 = vpop.f32.mrb[0].mxu0
        %v10942 = vadd.f32 %v10829, %v10941
        %v10943 = vpop.f32.mrb[0].mxu0
        %v10944 = vadd.f32 %v10831, %v10943
        %10945 = vmatprep.mubr.bf16.mxu0 %v9839
        %10946 = vmatmul.mubr.bf16.gmra.mrb[0].mxu0 %v9838
        %v10947 = vpop.f32.mrb[0].mxu0
        %v10948 = vadd.f32 %v10835, %v10947
        %v10949 = vpop.f32.mrb[0].mxu0
        %v10950 = vadd.f32 %v10837, %v10949
        %v10951 = vpop.f32.mrb[0].mxu0
        %v10952 = vadd.f32 %v10839, %v10951
        %v10953 = vpop.f32.mrb[0].mxu0
        %v10954 = vadd.f32 %v10841, %v10953
        %10955 = vmatprep.mubr.bf16.mxu0 %v9847
        %10956 = vmatmul.mubr.bf16.gmra.mrb[0].mxu0 %v9846
        %v10957 = vpop.f32.mrb[0].mxu0
        %v10958 = vadd.f32 %v10845, %v10957
        %v10959 = vpop.f32.mrb[0].mxu0
        %v10960 = vadd.f32 %v10847, %v10959
        %v10961 = vpop.f32.mrb[0].mxu0
        %v10962 = vadd.f32 %v10849, %v10961
        %v10963 = vpop.f32.mrb[0].mxu0
        %v10964 = vadd.f32 %v10851, %v10963
        %10965 = vmatprep.mubr.bf16.mxu0 %v9855
        %10966 = vmatmul.mubr.bf16.gmra.mrb[0].mxu0 %v9854
        %v10967 = vpop.f32.mrb[0].mxu0
        %v10968 = vadd.f32 %v10855, %v10967
        %v10969 = vpop.f32.mrb[0].mxu0
        %v10970 = vadd.f32 %v10857, %v10969
        %v10971 = vpop.f32.mrb[0].mxu0
        %v10972 = vadd.f32 %v10859, %v10971
        %v10973 = vpop.f32.mrb[0].mxu0
        %v10974 = vadd.f32 %v10861, %v10973
        %10975 = vdwg.mxu0
        %10976 = vmatprep.subr.bf16.mxu0 %v10478
        %10977 = vmatpush1.bf16.msra.mxu0 %v10477
        %10978 = vmatprep.subr.bf16.mxu0 %v10480
        %10979 = vmatpush1.bf16.msra.mxu0 %v10479
        %10980 = vmatprep.subr.bf16.mxu0 %v10482
        %10981 = vmatpush1.bf16.msra.mxu0 %v10481
        %10982 = vmatprep.subr.bf16.mxu0 %v10484
        %10983 = vmatpush1.bf16.msra.mxu0 %v10483
        %10984 = vmatprep.subr.bf16.mxu0 %v10486
        %10985 = vmatpush1.bf16.msra.mxu0 %v10485
        %10986 = vmatprep.subr.bf16.mxu0 %v10488
        %10987 = vmatpush1.bf16.msra.mxu0 %v10487
        %10988 = vmatprep.subr.bf16.mxu0 %v10490
        %10989 = vmatpush1.bf16.msra.mxu0 %v10489
        %10990 = vmatprep.subr.bf16.mxu0 %v10492
        %10991 = vmatpush1.bf16.msra.mxu0 %v10491
        %10992 = vmatprep.subr.bf16.mxu0 %v10494
        %10993 = vmatpush1.bf16.msra.mxu0 %v10493
        %10994 = vmatprep.subr.bf16.mxu0 %v10496
        %10995 = vmatpush1.bf16.msra.mxu0 %v10495
        %10996 = vmatprep.subr.bf16.mxu0 %v10498
        %10997 = vmatpush1.bf16.msra.mxu0 %v10497
        %10998 = vmatprep.subr.bf16.mxu0 %v10500
        %10999 = vmatpush1.bf16.msra.mxu0 %v10499
        %11000 = vmatprep.subr.bf16.mxu0 %v10502
        %11001 = vmatpush1.bf16.msra.mxu0 %v10501
        %11002 = vmatprep.subr.bf16.mxu0 %v10504
        %11003 = vmatpush1.bf16.msra.mxu0 %v10503
        %11004 = vmatprep.subr.bf16.mxu0 %v10506
        %11005 = vmatpush1.bf16.msra.mxu0 %v10505
        %11006 = vmatprep.subr.bf16.mxu0 %v10508
        %11007 = vmatpush1.bf16.msra.mxu0 %v10507
        %11008 = vmatprep.mubr.bf16.mxu0 %v9801
        %11009 = vmatmul.mubr.bf16.gmra.mrb[0].mxu0 %v9800
        %v11010 = vpop.f32.mrb[0].mxu0
        %v11011 = vadd.f32 %v10898, %v11010
        %v11012 = vpop.f32.mrb[0].mxu0
        %v11013 = vadd.f32 %v10900, %v11012
        %v11014 = vpop.f32.mrb[0].mxu0
        %v11015 = vadd.f32 %v10902, %v11014
        %v11016 = vpop.f32.mrb[0].mxu0
        %v11017 = vadd.f32 %v10904, %v11016
        %11018 = vmatprep.mubr.bf16.mxu0 %v9809
        %11019 = vmatmul.mubr.bf16.gmra.mrb[0].mxu0 %v9808
        %v11020 = vpop.f32.mrb[0].mxu0
        %v11021 = vadd.f32 %v10908, %v11020
        %v11022 = vpop.f32.mrb[0].mxu0
        %v11023 = vadd.f32 %v10910, %v11022
        %v11024 = vpop.f32.mrb[0].mxu0
        %v11025 = vadd.f32 %v10912, %v11024
        %v11026 = vpop.f32.mrb[0].mxu0
        %v11027 = vadd.f32 %v10914, %v11026
        %11028 = vmatprep.mubr.bf16.mxu0 %v9817
        %11029 = vmatmul.mubr.bf16.gmra.mrb[0].mxu0 %v9816
        %v11030 = vpop.f32.mrb[0].mxu0
        %v11031 = vadd.f32 %v10918, %v11030
        %v11032 = vpop.f32.mrb[0].mxu0
        %v11033 = vadd.f32 %v10920, %v11032
        %v11034 = vpop.f32.mrb[0].mxu0
        %v11035 = vadd.f32 %v10922, %v11034
        %v11036 = vpop.f32.mrb[0].mxu0
        %v11037 = vadd.f32 %v10924, %v11036
        %11038 = vmatprep.mubr.bf16.mxu0 %v9825
        %11039 = vmatmul.mubr.bf16.gmra.mrb[0].mxu0 %v9824
        %v11040 = vpop.f32.mrb[0].mxu0
        %v11041 = vadd.f32 %v10928, %v11040
        %v11042 = vpop.f32.mrb[0].mxu0
        %v11043 = vadd.f32 %v10930, %v11042
        %v11044 = vpop.f32.mrb[0].mxu0
        %v11045 = vadd.f32 %v10932, %v11044
        %v11046 = vpop.f32.mrb[0].mxu0
        %v11047 = vadd.f32 %v10934, %v11046
        %11048 = vmatprep.mubr.bf16.mxu0 %v9833
        %11049 = vmatmul.mubr.bf16.gmra.mrb[0].mxu0 %v9832
        %v11050 = vpop.f32.mrb[0].mxu0
        %v11051 = vadd.f32 %v10938, %v11050
        %v11052 = vpop.f32.mrb[0].mxu0
        %v11053 = vadd.f32 %v10940, %v11052
        %v11054 = vpop.f32.mrb[0].mxu0
        %v11055 = vadd.f32 %v10942, %v11054
        %v11056 = vpop.f32.mrb[0].mxu0
        %v11057 = vadd.f32 %v10944, %v11056
        %11058 = vmatprep.mubr.bf16.mxu0 %v9841
        %11059 = vmatmul.mubr.bf16.gmra.mrb[0].mxu0 %v9840
        %v11060 = vpop.f32.mrb[0].mxu0
        %v11061 = vadd.f32 %v10948, %v11060
        %v11062 = vpop.f32.mrb[0].mxu0
        %v11063 = vadd.f32 %v10950, %v11062
        %v11064 = vpop.f32.mrb[0].mxu0
        %v11065 = vadd.f32 %v10952, %v11064
        %v11066 = vpop.f32.mrb[0].mxu0
        %v11067 = vadd.f32 %v10954, %v11066
        %11068 = vmatprep.mubr.bf16.mxu0 %v9849
        %11069 = vmatmul.mubr.bf16.gmra.mrb[0].mxu0 %v9848
        %v11070 = vpop.f32.mrb[0].mxu0
        %v11071 = vadd.f32 %v10958, %v11070
        %v11072 = vpop.f32.mrb[0].mxu0
        %v11073 = vadd.f32 %v10960, %v11072
        %v11074 = vpop.f32.mrb[0].mxu0
        %v11075 = vadd.f32 %v10962, %v11074
        %v11076 = vpop.f32.mrb[0].mxu0
        %v11077 = vadd.f32 %v10964, %v11076
        %11078 = vmatprep.mubr.bf16.mxu0 %v9857
        %11079 = vmatmul.mubr.bf16.gmra.mrb[0].mxu0 %v9856
        %v11080 = vpop.f32.mrb[0].mxu0
        %v11081 = vadd.f32 %v10968, %v11080
        %v11082 = vpop.f32.mrb[0].mxu0
        %v11083 = vadd.f32 %v10970, %v11082
        %v11084 = vpop.f32.mrb[0].mxu0
        %v11085 = vadd.f32 %v10972, %v11084
        %v11086 = vpop.f32.mrb[0].mxu0
        %v11087 = vadd.f32 %v10974, %v11086
        %11088 = vdwg.mxu0
        %v11089 = vtanh.pop %v11011
        %v11090 = vtanh.pop %v11013
        %v11091 = vtanh.pop %v11015
        %v11092 = vtanh.pop %v11017
        %v11093 = vtanh.pop %v11021
        %v11094 = vtanh.pop %v11023
        %v11095 = vtanh.pop %v11025
        %v11096 = vtanh.pop %v11027
        %v11097 = vtanh.pop %v11031
        %v11098 = vtanh.pop %v11033
        %v11099 = vtanh.pop %v11035
        %v11100 = vtanh.pop %v11037
        %v11101 = vtanh.pop %v11041
        %v11102 = vtanh.pop %v11043
        %v11103 = vtanh.pop %v11045
        %v11104 = vtanh.pop %v11047
        %v11105 = vtanh.pop %v11051
        %v11106 = vtanh.pop %v11053
        %v11107 = vtanh.pop %v11055
        %v11108 = vtanh.pop %v11057
        %v11109 = vtanh.pop %v11061
        %v11110 = vtanh.pop %v11063
        %v11111 = vtanh.pop %v11065
        %v11112 = vtanh.pop %v11067
        %v11113 = vtanh.pop %v11071
        %v11114 = vtanh.pop %v11073
        %v11115 = vtanh.pop %v11075
        %v11116 = vtanh.pop %v11077
        %v11117 = vtanh.pop %v11081
        %v11118 = vtanh.pop %v11083
        %v11119 = vtanh.pop %v11085
        %v11120 = vtanh.pop %v11087
        %11121 = vst [vmem:[%s401] sm:$0xff] %v11089
        %11122 = vst [vmem:[%s401 + $0x8] sm:$0xff] %v11090
        %11123 = vst [vmem:[%s401 + $0x10] sm:$0xff] %v11091
        %11124 = vst [vmem:[%s401 + $0x18] sm:$0xff] %v11092
        %11125 = vst [vmem:[%s401 + $0x20] sm:$0xff] %v11093
        %11126 = vst [vmem:[%s401 + $0x28] sm:$0xff] %v11094
        %11127 = vst [vmem:[%s401 + $0x30] sm:$0xff] %v11095
        %11128 = vst [vmem:[%s401 + $0x38] sm:$0xff] %v11096
        %11129 = vst [vmem:[%s401 + $0x40] sm:$0xff] %v11097
        %11130 = vst [vmem:[%s401 + $0x48] sm:$0xff] %v11098
        %11131 = vst [vmem:[%s401 + $0x50] sm:$0xff] %v11099
        %11132 = vst [vmem:[%s401 + $0x58] sm:$0xff] %v11100
        %11133 = vst [vmem:[%s401 + $0x60] sm:$0xff] %v11101
        %11134 = vst [vmem:[%s401 + $0x68] sm:$0xff] %v11102
        %11135 = vst [vmem:[%s401 + $0x70] sm:$0xff] %v11103
        %11136 = vst [vmem:[%s401 + $0x78] sm:$0xff] %v11104
        %11137 = vst [vmem:[%s401 + $0x80] sm:$0xff] %v11105
        %11138 = vst [vmem:[%s401 + $0x88] sm:$0xff] %v11106
        %11139 = vst [vmem:[%s401 + $0x90] sm:$0xff] %v11107
        %11140 = vst [vmem:[%s401 + $0x98] sm:$0xff] %v11108
        %11141 = vst [vmem:[%s401 + $0xa0] sm:$0xff] %v11109
        %11142 = vst [vmem:[%s401 + $0xa8] sm:$0xff] %v11110
        %11143 = vst [vmem:[%s401 + $0xb0] sm:$0xff] %v11111
        %11144 = vst [vmem:[%s401 + $0xb8] sm:$0xff] %v11112
        %11145 = vst [vmem:[%s401 + $0xc0] sm:$0xff] %v11113
        %11146 = vst [vmem:[%s401 + $0xc8] sm:$0xff] %v11114
        %11147 = vst [vmem:[%s401 + $0xd0] sm:$0xff] %v11115
        %11148 = vst [vmem:[%s401 + $0xd8] sm:$0xff] %v11116
        %11149 = vst [vmem:[%s401 + $0xe0] sm:$0xff] %v11117
        %11150 = vst [vmem:[%s401 + $0xe8] sm:$0xff] %v11118
        %11151 = vst [vmem:[%s401 + $0xf0] sm:$0xff] %v11119
        %11152 = vst [vmem:[%s401 + $0xf8] sm:$0xff] %v11120
        %s11153 = sand.u32 %s233, 1
        %s11154 = scalar_lea.sflag [#allocation4], %s11153
        %s11155 = sand.u32 %s233, 1
        %s11156 = smul.addr %s11155, 256
        %s11157 = scalar_lea.vmem [#allocation10], %s11156
        // Predicated region
        $region73: #{tpu_custom_call.1} parent=55 // pred_check
          %p11158 = pneg %p243
        $region74: #{tpu_custom_call.1} parent=55 // pred_check_branch
          %11160 = sbr.rel (%p11158) target = $region76
        $region75: #{tpu_custom_call.1} parent=55 // pred_region
          %s11161 = smul.u32 16, %s26
          %s11163 = ssub.s32 4096, 4096
          %11164 = vsyncadd %s11154, %s11163
          %s11165 = smul.addr %s11161, 2
          %s11166 = smul.addr %s11165, 128
          %s11167 = scalar_lea.hbm %s9, %s11166
          %s11168 = sshll.u32 %s11157, 4
          %s11169 = int_to_ptr.vmem [resolvable:$true] %s11168
          %11174 = dma.vmem_to_hbm [thread:$0]  %s11169, 4096, %s11167, %s11154, 256, 256, 16
        $region76: #{tpu_custom_call.1} parent=55 // pred_fallthru
          _
      $region56: #{tpu_custom_call.1} parent=5 // pred_fallthru
        _
      %p11175 = scmp.le.s32.totalorder 2, %s21
      // Predicated region
      $region77: #{tpu_custom_call.1} parent=5 // pred_check
        %p11176 = pneg %p11175
      $region78: #{tpu_custom_call.1} parent=5 // pred_check_branch
        %11178 = sbr.rel (%p11176) target = $region80
      $region79: #{tpu_custom_call.1} parent=5 // pred_region
        %s11179 = ssub.s32 %s21, 2
        // Predicated region
        $region81: #{tpu_custom_call.1} parent=79 // pred_check
          %p11180 = pneg %p249
        $region82: #{tpu_custom_call.1} parent=79 // pred_check_branch
          %11182 = sbr.rel (%p11180) target = $region84
        $region83: #{tpu_custom_call.1} parent=79 // pred_region
          %s11183 = sand.u32 %s234, 1
          %s11184 = scalar_lea.sflag [#allocation4], %s11183
          %s11185 = sand.u32 %s234, 1
          %s11186 = smul.addr %s11185, 256
          %s11187 = scalar_lea.vmem [#allocation10], %s11186
          %11188 = dma.done %s11184, 4096
        $region84: #{tpu_custom_call.1} parent=79 // pred_fallthru
          _
      $region80: #{tpu_custom_call.1} parent=5 // pred_fallthru
        _
    $region6: #{tpu_custom_call.1} parent=1 // loop_footer
      %s25 = sadd.s32 1, %s21
    $region7: #{tpu_custom_call.1} parent=1 // loop_footer_branch
      %20 = sbr.rel target = $region3
    $region8: #{tpu_custom_call.1} parent=1 // loop_exit
      _
    %11189 = vsyncpa [#allocation3], 1
    %s11190 = scalar_lea.sflag [#allocation3], 1
    %11191 = vsyncpa %s11190, 1
    %11192 = vsyncpa [#allocation6], 1
    %11193 = vsyncpa [#allocation9], 1
    %11194 = vsyncpa [#allocation4], 1
    %s11195 = scalar_lea.sflag [#allocation4], 1
    %11196 = vsyncpa %s11195, 1

</llo_original>
